<compile_context>
chip_gen: v7x
topology: tpu7x:2x2x1
jax: 0.10.0
libtpu: 0.0.40
codegen_flags: <defaults>
</compile_context>

<pallas_src>
import functools

import jax
import jax.numpy as jnp
from jax import lax
from jax.experimental import pallas as pl
from jax.experimental.pallas import tpu as pltpu


# -----------------------------------------------------------------------------
# Fused Pallas kernel
# -----------------------------------------------------------------------------
def _lstmvae_kernel(
        # inputs
        x_ref, eps_ref,
        e0_wih, e0_whh, e0_b, e1_wih, e1_whh, e1_b,
        zm_w, zm_b, zs_w, zs_b,
        h0_wih, h0_whh, h0_b, h1_wih, h1_whh, h1_b,
        o0_wih, o0_whh, o0_b, o1_wih, o1_whh, o1_b,
        # outputs
        xhat_ref, mean_ref, sigma_ref,
        # VMEM scratch
        g_h, seq_a, seq_b, g_o, seq_c,
        *, T, B, H, I):
    """x_ref: (T*B, F) time-major (batch padded).  All weights pre-transposed.

    PyTorch gate order (i, f, g, o); bias = b_ih + b_hh folded.
    """
    f32 = jnp.float32

    def cell(gates, c, n):
        i_g = jax.nn.sigmoid(gates[:, 0 * n:1 * n])
        f_g = jax.nn.sigmoid(gates[:, 1 * n:2 * n])
        g_g = jnp.tanh(gates[:, 2 * n:3 * n])
        o_g = jax.nn.sigmoid(gates[:, 3 * n:4 * n])
        c_new = f_g * c + i_g * g_g
        h_new = o_g * jnp.tanh(c_new)
        return h_new, c_new

    def recur(n, whh_ref, h, c, gate_fn, store_fn):
        """One LSTM layer; input projection already folded into gate_fn(t)."""
        whh = whh_ref[...]                      # read once, reuse every step
        for t in range(T):                      # static, fully unrolled
            g = gate_fn(t) + jnp.dot(h, whh, preferred_element_type=f32)
            h, c = cell(g, c, n)
            store_fn(t, h)
        return h, c

    def rows(ref, t):                           # static sublane-aligned slice
        return ref[pl.ds(t * B, B), :]

    def set_rows(ref, t, v):
        ref[pl.ds(t * B, B), :] = v

    zeros_h = jnp.zeros((B, H), f32)
    zeros_i = jnp.zeros((B, I), f32)

    # --------------------------- encoder_LSTM -------------------------------
    # layer 0: hoisted input projection over all T*B rows (one MXU pass).
    g_h[...] = jnp.dot(x_ref[...], e0_wih[...],
                       preferred_element_type=f32) + e0_b[...]
    h_e0, c_e0 = recur(H, e0_whh, zeros_h, zeros_h,
                       lambda t: rows(g_h, t),
                       lambda t, h: set_rows(seq_a, t, h))

    # layer 1: hoisted input projection on layer-0 outputs.
    g_h[...] = jnp.dot(seq_a[...], e1_wih[...],
                       preferred_element_type=f32) + e1_b[...]
    h_e1, c_e1 = recur(H, e1_whh, zeros_h, zeros_h,
                       lambda t: rows(g_h, t),
                       lambda t, h: None)       # only final state needed

    # ------------------------------ VAE head --------------------------------
    enc_last = jnp.tanh(h_e1)                   # = tanh(encode_h)[:, -1, :]
    mean = jnp.maximum(
        jnp.dot(enc_last, zm_w[...], preferred_element_type=f32)
        + zm_b[...], 0.0)
    sigma = jnp.maximum(
        jnp.dot(enc_last, zs_w[...], preferred_element_type=f32)
        + zs_b[...], 0.0)
    z = mean + jnp.exp(sigma * 0.5) * eps_ref[...]
    mean_ref[...] = mean
    sigma_ref[...] = sigma

    # ------------- hidden_LSTM (init = encoder final states) ----------------
    # layer 0 input is z repeated over time -> its input gates are constant.
    gz = jnp.dot(z, h0_wih[...], preferred_element_type=f32) + h0_b[...]
    recur(H, h0_whh, h_e0, c_e0,
          lambda t: gz,
          lambda t, h: set_rows(seq_a, t, h))

    g_h[...] = jnp.dot(seq_a[...], h1_wih[...],
                       preferred_element_type=f32) + h1_b[...]
    recur(H, h1_whh, h_e1, c_e1,
          lambda t: rows(g_h, t),
          lambda t, h: set_rows(seq_b, t, jnp.tanh(h)))   # decode_h = tanh(.)

    # ---------------- output_LSTM (zero init, hidden = input_size) ----------
    g_o[...] = jnp.dot(seq_b[...], o0_wih[...],
                       preferred_element_type=f32) + o0_b[...]
    recur(I, o0_whh, zeros_i, zeros_i,
          lambda t: rows(g_o, t),
          lambda t, h: set_rows(seq_c, t, h))

    g_o[...] = jnp.dot(seq_c[...], o1_wih[...],
                       preferred_element_type=f32) + o1_b[...]
    recur(I, o1_whh, zeros_i, zeros_i,
          lambda t: rows(g_o, t),
          lambda t, h: set_rows(xhat_ref, t, jnp.tanh(h)))  # x_hat = tanh(.)


# -----------------------------------------------------------------------------
# Parameter construction (deterministic, mirrors nn.LSTM / nn.Linear shapes)
# -----------------------------------------------------------------------------
def _uniform(key, shape, scale):
    return jax.random.uniform(key, shape, jnp.float32, -scale, scale)


def _make_lstm_layer_params(key, in_size, hidden):
    """Returns (W_ih^T (I,4H), W_hh^T (H,4H), bias (1,4H))."""
    k = 1.0 / jnp.sqrt(jnp.float32(hidden))
    k1, k2, k3, k4 = jax.random.split(key, 4)
    w_ih = _uniform(k1, (4 * hidden, in_size), k)     # PyTorch (4H, I)
    w_hh = _uniform(k2, (4 * hidden, hidden), k)      # PyTorch (4H, H)
    b_ih = _uniform(k3, (4 * hidden,), k)
    b_hh = _uniform(k4, (4 * hidden,), k)
    return (jnp.transpose(w_ih), jnp.transpose(w_hh),
            (b_ih + b_hh).reshape(1, 4 * hidden))


def _make_linear_params(key, in_size, out_size):
    k = 1.0 / jnp.sqrt(jnp.float32(in_size))
    k1, k2 = jax.random.split(key)
    w = _uniform(k1, (out_size, in_size), k)          # PyTorch (out, in)
    b = _uniform(k2, (out_size,), k)
    return jnp.transpose(w), b.reshape(1, out_size)


def init_lstmvae_params(key, time_step, input_size, hidden_size,
                        latent_size, max_features):
    keys = jax.random.split(key, 16)
    return {
        "enc0": _make_lstm_layer_params(keys[0], max_features, hidden_size),
        "enc1": _make_lstm_layer_params(keys[1], hidden_size, hidden_size),
        "zm": _make_linear_params(keys[2], hidden_size, latent_size),
        "zs": _make_linear_params(keys[3], hidden_size, latent_size),
        "hid0": _make_lstm_layer_params(keys[4], latent_size, hidden_size),
        "hid1": _make_lstm_layer_params(keys[5], hidden_size, hidden_size),
        "out0": _make_lstm_layer_params(keys[6], hidden_size, input_size),
        "out1": _make_lstm_layer_params(keys[7], input_size, input_size),
        # np.random.choice(input_size, replace=False, size=max_features)
        "random_samples": jax.random.permutation(
            keys[8], input_size)[:max_features],
    }


# -----------------------------------------------------------------------------
# Forward pass (wrapper around the single fused kernel)
# -----------------------------------------------------------------------------
@functools.partial(jax.jit, static_argnames=("hidden_size", "input_size",
                                             "latent_size", "max_features"))
def lstmvae_forward(params, x, eps, *, hidden_size, input_size,
                    latent_size, max_features):
    """x: (B, T, input_size) batch-first.  Returns (x_hat, mean, sigma)."""
    B, T, _ = x.shape
    Bp = ((B + 7) // 8) * 8                 # pad batch to sublane height
    H, L, F, I = hidden_size, latent_size, max_features, input_size

    # x[:, :, random_samples]  ->  time-major  ->  (T*Bp, F) padded
    xs = jnp.take(x, params["random_samples"], axis=2)          # (B, T, F)
    x_tm = jnp.transpose(xs, (1, 0, 2)).astype(jnp.float32)     # (T, B, F)
    x_tm = jnp.pad(x_tm, ((0, 0), (0, Bp - B), (0, 0)))
    x2d = x_tm.reshape(T * Bp, F)
    eps_p = jnp.pad(eps.astype(jnp.float32), ((0, Bp - B), (0, 0)))

    kernel = functools.partial(_lstmvae_kernel, T=T, B=Bp, H=H, I=I)

    out_shape = (
        jax.ShapeDtypeStruct((T * Bp, I), jnp.float32),   # x_hat (time-major)
        jax.ShapeDtypeStruct((Bp, L), jnp.float32),       # mean
        jax.ShapeDtypeStruct((Bp, L), jnp.float32),       # sigma
    )
    scratch_shapes = [
        pltpu.VMEM((T * Bp, 4 * H), jnp.float32),   # gate buffer (H-wide layers)
        pltpu.VMEM((T * Bp, H), jnp.float32),       # sequence buffer A
        pltpu.VMEM((T * Bp, H), jnp.float32),       # sequence buffer B
        pltpu.VMEM((T * Bp, 4 * I), jnp.float32),   # gate buffer (output layers)
        pltpu.VMEM((T * Bp, I), jnp.float32),       # sequence buffer C
    ]

    xhat2d, mean_p, sigma_p = pl.pallas_call(
        kernel,
        out_shape=out_shape,
        scratch_shapes=scratch_shapes,
    )(x2d, eps_p,
      *params["enc0"], *params["enc1"],
      *params["zm"], *params["zs"],
      *params["hid0"], *params["hid1"],
      *params["out0"], *params["out1"])

    x_hat = xhat2d.reshape(T, Bp, I)[:, :B, :]
    x_hat = jnp.transpose(x_hat, (1, 0, 2))               # back to batch-first
    return x_hat, mean_p[:B], sigma_p[:B]


# -----------------------------------------------------------------------------
# Pure-JAX reference (for correctness check only)
# -----------------------------------------------------------------------------
def _ref_lstm_layer(x_tm, w_ih_t, w_hh_t, b, h0, c0):
    H = h0.shape[-1]

    def step(carry, x_t):
        h, c = carry
        g = x_t @ w_ih_t + h @ w_hh_t + b
        i = jax.nn.sigmoid(g[:, :H])
        f = jax.nn.sigmoid(g[:, H:2 * H])
        gg = jnp.tanh(g[:, 2 * H:3 * H])
        o = jax.nn.sigmoid(g[:, 3 * H:])
        c = f * c + i * gg
        h = o * jnp.tanh(c)
        return (h, c), h

    (hT, cT), ys = lax.scan(step, (h0, c0), x_tm)
    return ys, hT, cT


def lstmvae_reference(params, x, eps, *, hidden_size, input_size):
    B, T, _ = x.shape
    xs = jnp.take(x, params["random_samples"], axis=2)
    x_tm = jnp.transpose(xs, (1, 0, 2)).astype(jnp.float32)
    zh = jnp.zeros((B, hidden_size), jnp.float32)
    zi = jnp.zeros((B, input_size), jnp.float32)
    y0, h0f, c0f = _ref_lstm_layer(x_tm, *params["enc0"], zh, zh)
    y1, h1f, c1f = _ref_lstm_layer(y0, *params["enc1"], zh, zh)
    enc_last = jnp.tanh(y1)[-1]
    mean = jnp.maximum(enc_last @ params["zm"][0] + params["zm"][1], 0.0)
    sigma = jnp.maximum(enc_last @ params["zs"][0] + params["zs"][1], 0.0)
    z = mean + jnp.exp(sigma * 0.5) * eps
    rep = jnp.broadcast_to(z[None], (T,) + z.shape)
    d0, _, _ = _ref_lstm_layer(rep, *params["hid0"], h0f, c0f)
    d1, _, _ = _ref_lstm_layer(d0, *params["hid1"], h1f, c1f)
    dec = jnp.tanh(d1)
    o0, _, _ = _ref_lstm_layer(dec, *params["out0"], zi, zi)
    o1, _, _ = _ref_lstm_layer(o0, *params["out1"], zi, zi)
    return jnp.transpose(jnp.tanh(o1), (1, 0, 2)), mean, sigma


# -----------------------------------------------------------------------------
# Demo
# -----------------------------------------------------------------------------
if __name__ == "__main__":
    batch = 2
    time_step = 8
    input_size = 16
    hidden_size = 32
    latent_size = 16
    max_features = 8

    root = jax.random.PRNGKey(0)
    k_param, k_x, k_eps = jax.random.split(root, 3)

    params = init_lstmvae_params(k_param, time_step, input_size,
                                 hidden_size, latent_size, max_features)

    x = jax.random.normal(k_x, (batch, time_step, input_size), jnp.float32)
    # epsilon for re-parameterization (torch.randn equivalent, RNG kept outside)
    eps = jax.random.normal(k_eps, (batch, latent_size), jnp.float32)

    x_hat, mean, sigma = lstmvae_forward(
        params, x, eps, hidden_size=hidden_size, input_size=input_size,
        latent_size=latent_size, max_features=max_features)
    jax.block_until_ready((x_hat, mean, sigma))

    assert x_hat.shape == (batch, time_step, input_size)
    assert mean.shape == (batch, latent_size)
    assert sigma.shape == (batch, latent_size)
    assert bool(jnp.all(jnp.isfinite(x_hat)))

    # Correctness check against a pure-JAX reference of the same module.
    x_hat_r, mean_r, sigma_r = lstmvae_reference(
        params, x, eps, hidden_size=hidden_size, input_size=input_size)
    assert bool(jnp.allclose(x_hat, x_hat_r, atol=2e-3, rtol=0))
    assert bool(jnp.allclose(mean, mean_r, atol=2e-3, rtol=0))
    assert bool(jnp.allclose(sigma, sigma_r, atol=2e-3, rtol=0))

    print("KERNEL_OK")
</pallas_src>

<mosaic_0001>
module attributes {stable_mosaic.version = 11 : i64} {
  func.func @_lstmvae_kernel(%arg0: memref<64x8xf32, #tpu.memory_space<vmem>>, %arg1: memref<8x16xf32, #tpu.memory_space<vmem>>, %arg2: memref<8x128xf32, #tpu.memory_space<vmem>>, %arg3: memref<32x128xf32, #tpu.memory_space<vmem>>, %arg4: memref<1x128xf32, #tpu.memory_space<vmem>>, %arg5: memref<32x128xf32, #tpu.memory_space<vmem>>, %arg6: memref<32x128xf32, #tpu.memory_space<vmem>>, %arg7: memref<1x128xf32, #tpu.memory_space<vmem>>, %arg8: memref<32x16xf32, #tpu.memory_space<vmem>>, %arg9: memref<1x16xf32, #tpu.memory_space<vmem>>, %arg10: memref<32x16xf32, #tpu.memory_space<vmem>>, %arg11: memref<1x16xf32, #tpu.memory_space<vmem>>, %arg12: memref<16x128xf32, #tpu.memory_space<vmem>>, %arg13: memref<32x128xf32, #tpu.memory_space<vmem>>, %arg14: memref<1x128xf32, #tpu.memory_space<vmem>>, %arg15: memref<32x128xf32, #tpu.memory_space<vmem>>, %arg16: memref<32x128xf32, #tpu.memory_space<vmem>>, %arg17: memref<1x128xf32, #tpu.memory_space<vmem>>, %arg18: memref<32x64xf32, #tpu.memory_space<vmem>>, %arg19: memref<16x64xf32, #tpu.memory_space<vmem>>, %arg20: memref<1x64xf32, #tpu.memory_space<vmem>>, %arg21: memref<16x64xf32, #tpu.memory_space<vmem>>, %arg22: memref<16x64xf32, #tpu.memory_space<vmem>>, %arg23: memref<1x64xf32, #tpu.memory_space<vmem>>, %arg24: memref<64x16xf32, #tpu.memory_space<vmem>>, %arg25: memref<8x16xf32, #tpu.memory_space<vmem>>, %arg26: memref<8x16xf32, #tpu.memory_space<vmem>>, %arg27: memref<64x128xf32, #tpu.memory_space<vmem>>, %arg28: memref<64x32xf32, #tpu.memory_space<vmem>>, %arg29: memref<64x32xf32, #tpu.memory_space<vmem>>, %arg30: memref<64x64xf32, #tpu.memory_space<vmem>>, %arg31: memref<64x16xf32, #tpu.memory_space<vmem>>) attributes {dimension_semantics = [], scalar_prefetch = 0 : i64, scratch_operands = 5 : i64, tpu.core_type = #tpu.core_type<tc>} {
    %cst = arith.constant 0.000000e+00 : f32
    %0 = vector.broadcast %cst : f32 to vector<8x32xf32>
    %cst_0 = arith.constant 0.000000e+00 : f32
    %1 = vector.broadcast %cst_0 : f32 to vector<8x16xf32>
    %c0 = arith.constant 0 : index
    %c0_1 = arith.constant 0 : index
    %2 = vector.load %arg0[%c0, %c0_1] : memref<64x8xf32, #tpu.memory_space<vmem>>, vector<64x8xf32>
    %c0_2 = arith.constant 0 : index
    %c0_3 = arith.constant 0 : index
    %3 = vector.load %arg2[%c0_2, %c0_3] : memref<8x128xf32, #tpu.memory_space<vmem>>, vector<8x128xf32>
    %cst_4 = arith.constant dense<0.000000e+00> : vector<64x128xf32>
    %4 = tpu.matmul %2, %3, %cst_4 {dimension_numbers = #tpu.dot_dimension_numbers<[1], [0], [0], [1], [0, 0, 1, 1], [], []>} : vector<64x8xf32>, vector<8x128xf32>, vector<64x128xf32> -> vector<64x128xf32>
    %c0_5 = arith.constant 0 : index
    %c0_6 = arith.constant 0 : index
    %5 = vector.load %arg4[%c0_5, %c0_6] : memref<1x128xf32, #tpu.memory_space<vmem>>, vector<1x128xf32>
    %6 = vector.broadcast %5 : vector<1x128xf32> to vector<64x128xf32>
    %7 = arith.addf %4, %6 : vector<64x128xf32>
    %c0_7 = arith.constant 0 : index
    %c0_8 = arith.constant 0 : index
    %8 = vector.load %arg27[%c0_7, %c0_8] : memref<64x128xf32, #tpu.memory_space<vmem>>, vector<64x128xf32>
    tpu.vector_store %arg27[%c0_7, %c0_8], %7 {strides = array<i32>} : memref<64x128xf32, #tpu.memory_space<vmem>>, vector<64x128xf32>,
    %c0_9 = arith.constant 0 : index
    %c0_10 = arith.constant 0 : index
    %9 = vector.load %arg3[%c0_9, %c0_10] : memref<32x128xf32, #tpu.memory_space<vmem>>, vector<32x128xf32>
    %c0_11 = arith.constant 0 : index
    %c0_12 = arith.constant 0 : index
    %10 = vector.load %arg27[%c0_11, %c0_12] : memref<64x128xf32, #tpu.memory_space<vmem>>, vector<8x128xf32>
    %cst_13 = arith.constant dense<0.000000e+00> : vector<8x128xf32>
    %11 = tpu.matmul %0, %9, %cst_13 {dimension_numbers = #tpu.dot_dimension_numbers<[1], [0], [0], [1], [0, 0, 1, 1], [], []>} : vector<8x32xf32>, vector<32x128xf32>, vector<8x128xf32> -> vector<8x128xf32>
    %12 = arith.addf %10, %11 : vector<8x128xf32>
    %13 = vector.extract_strided_slice %12 {offsets = [0, 0], sizes = [8, 32], strides = [1, 1]} : vector<8x128xf32> to vector<8x32xf32>
    %14 = arith.negf %13 : vector<8x32xf32>
    %15 = math.exp %14 : vector<8x32xf32>
    %cst_14 = arith.constant 1.000000e+00 : f32
    %16 = vector.broadcast %cst_14 : f32 to vector<8x32xf32>
    %17 = arith.addf %16, %15 : vector<8x32xf32>
    %18 = arith.divf %16, %17 : vector<8x32xf32>
    %19 = vector.extract_strided_slice %12 {offsets = [0, 32], sizes = [8, 32], strides = [1, 1]} : vector<8x128xf32> to vector<8x32xf32>
    %20 = arith.negf %19 : vector<8x32xf32>
    %21 = math.exp %20 : vector<8x32xf32>
    %cst_15 = arith.constant 1.000000e+00 : f32
    %22 = vector.broadcast %cst_15 : f32 to vector<8x32xf32>
    %23 = arith.addf %22, %21 : vector<8x32xf32>
    %24 = arith.divf %22, %23 : vector<8x32xf32>
    %25 = vector.extract_strided_slice %12 {offsets = [0, 64], sizes = [8, 32], strides = [1, 1]} : vector<8x128xf32> to vector<8x32xf32>
    %26 = math.tanh %25 : vector<8x32xf32>
    %27 = vector.extract_strided_slice %12 {offsets = [0, 96], sizes = [8, 32], strides = [1, 1]} : vector<8x128xf32> to vector<8x32xf32>
    %28 = arith.negf %27 : vector<8x32xf32>
    %29 = math.exp %28 : vector<8x32xf32>
    %cst_16 = arith.constant 1.000000e+00 : f32
    %30 = vector.broadcast %cst_16 : f32 to vector<8x32xf32>
    %31 = arith.addf %30, %29 : vector<8x32xf32>
    %32 = arith.divf %30, %31 : vector<8x32xf32>
    %33 = arith.mulf %24, %0 : vector<8x32xf32>
    %34 = arith.mulf %18, %26 : vector<8x32xf32>
    %35 = arith.addf %33, %34 : vector<8x32xf32>
    %36 = math.tanh %35 : vector<8x32xf32>
    %37 = arith.mulf %32, %36 : vector<8x32xf32>
    %c0_17 = arith.constant 0 : index
    %c0_18 = arith.constant 0 : index
    %38 = vector.load %arg28[%c0_17, %c0_18] : memref<64x32xf32, #tpu.memory_space<vmem>>, vector<8x32xf32>
    tpu.vector_store %arg28[%c0_17, %c0_18], %37 {strides = array<i32>} : memref<64x32xf32, #tpu.memory_space<vmem>>, vector<8x32xf32>,
    %c8 = arith.constant 8 : index
    %c0_19 = arith.constant 0 : index
    %39 = vector.load %arg27[%c8, %c0_19] : memref<64x128xf32, #tpu.memory_space<vmem>>, vector<8x128xf32>
    %cst_20 = arith.constant dense<0.000000e+00> : vector<8x128xf32>
    %40 = tpu.matmul %37, %9, %cst_20 {dimension_numbers = #tpu.dot_dimension_numbers<[1], [0], [0], [1], [0, 0, 1, 1], [], []>} : vector<8x32xf32>, vector<32x128xf32>, vector<8x128xf32> -> vector<8x128xf32>
    %41 = arith.addf %39, %40 : vector<8x128xf32>
    %42 = vector.extract_strided_slice %41 {offsets = [0, 0], sizes = [8, 32], strides = [1, 1]} : vector<8x128xf32> to vector<8x32xf32>
    %43 = arith.negf %42 : vector<8x32xf32>
    %44 = math.exp %43 : vector<8x32xf32>
    %cst_21 = arith.constant 1.000000e+00 : f32
    %45 = vector.broadcast %cst_21 : f32 to vector<8x32xf32>
    %46 = arith.addf %45, %44 : vector<8x32xf32>
    %47 = arith.divf %45, %46 : vector<8x32xf32>
    %48 = vector.extract_strided_slice %41 {offsets = [0, 32], sizes = [8, 32], strides = [1, 1]} : vector<8x128xf32> to vector<8x32xf32>
    %49 = arith.negf %48 : vector<8x32xf32>
    %50 = math.exp %49 : vector<8x32xf32>
    %cst_22 = arith.constant 1.000000e+00 : f32
    %51 = vector.broadcast %cst_22 : f32 to vector<8x32xf32>
    %52 = arith.addf %51, %50 : vector<8x32xf32>
    %53 = arith.divf %51, %52 : vector<8x32xf32>
    %54 = vector.extract_strided_slice %41 {offsets = [0, 64], sizes = [8, 32], strides = [1, 1]} : vector<8x128xf32> to vector<8x32xf32>
    %55 = math.tanh %54 : vector<8x32xf32>
    %56 = vector.extract_strided_slice %41 {offsets = [0, 96], sizes = [8, 32], strides = [1, 1]} : vector<8x128xf32> to vector<8x32xf32>
    %57 = arith.negf %56 : vector<8x32xf32>
    %58 = math.exp %57 : vector<8x32xf32>
    %cst_23 = arith.constant 1.000000e+00 : f32
    %59 = vector.broadcast %cst_23 : f32 to vector<8x32xf32>
    %60 = arith.addf %59, %58 : vector<8x32xf32>
    %61 = arith.divf %59, %60 : vector<8x32xf32>
    %62 = arith.mulf %53, %35 : vector<8x32xf32>
    %63 = arith.mulf %47, %55 : vector<8x32xf32>
    %64 = arith.addf %62, %63 : vector<8x32xf32>
    %65 = math.tanh %64 : vector<8x32xf32>
    %66 = arith.mulf %61, %65 : vector<8x32xf32>
    %c8_24 = arith.constant 8 : index
    %c0_25 = arith.constant 0 : index
    %67 = vector.load %arg28[%c8_24, %c0_25] : memref<64x32xf32, #tpu.memory_space<vmem>>, vector<8x32xf32>
    tpu.vector_store %arg28[%c8_24, %c0_25], %66 {strides = array<i32>} : memref<64x32xf32, #tpu.memory_space<vmem>>, vector<8x32xf32>,
    %c16 = arith.constant 16 : index
    %c0_26 = arith.constant 0 : index
    %68 = vector.load %arg27[%c16, %c0_26] : memref<64x128xf32, #tpu.memory_space<vmem>>, vector<8x128xf32>
    %cst_27 = arith.constant dense<0.000000e+00> : vector<8x128xf32>
    %69 = tpu.matmul %66, %9, %cst_27 {dimension_numbers = #tpu.dot_dimension_numbers<[1], [0], [0], [1], [0, 0, 1, 1], [], []>} : vector<8x32xf32>, vector<32x128xf32>, vector<8x128xf32> -> vector<8x128xf32>
    %70 = arith.addf %68, %69 : vector<8x128xf32>
    %71 = vector.extract_strided_slice %70 {offsets = [0, 0], sizes = [8, 32], strides = [1, 1]} : vector<8x128xf32> to vector<8x32xf32>
    %72 = arith.negf %71 : vector<8x32xf32>
    %73 = math.exp %72 : vector<8x32xf32>
    %cst_28 = arith.constant 1.000000e+00 : f32
    %74 = vector.broadcast %cst_28 : f32 to vector<8x32xf32>
    %75 = arith.addf %74, %73 : vector<8x32xf32>
    %76 = arith.divf %74, %75 : vector<8x32xf32>
    %77 = vector.extract_strided_slice %70 {offsets = [0, 32], sizes = [8, 32], strides = [1, 1]} : vector<8x128xf32> to vector<8x32xf32>
    %78 = arith.negf %77 : vector<8x32xf32>
    %79 = math.exp %78 : vector<8x32xf32>
    %cst_29 = arith.constant 1.000000e+00 : f32
    %80 = vector.broadcast %cst_29 : f32 to vector<8x32xf32>
    %81 = arith.addf %80, %79 : vector<8x32xf32>
    %82 = arith.divf %80, %81 : vector<8x32xf32>
    %83 = vector.extract_strided_slice %70 {offsets = [0, 64], sizes = [8, 32], strides = [1, 1]} : vector<8x128xf32> to vector<8x32xf32>
    %84 = math.tanh %83 : vector<8x32xf32>
    %85 = vector.extract_strided_slice %70 {offsets = [0, 96], sizes = [8, 32], strides = [1, 1]} : vector<8x128xf32> to vector<8x32xf32>
    %86 = arith.negf %85 : vector<8x32xf32>
    %87 = math.exp %86 : vector<8x32xf32>
    %cst_30 = arith.constant 1.000000e+00 : f32
    %88 = vector.broadcast %cst_30 : f32 to vector<8x32xf32>
    %89 = arith.addf %88, %87 : vector<8x32xf32>
    %90 = arith.divf %88, %89 : vector<8x32xf32>
    %91 = arith.mulf %82, %64 : vector<8x32xf32>
    %92 = arith.mulf %76, %84 : vector<8x32xf32>
    %93 = arith.addf %91, %92 : vector<8x32xf32>
    %94 = math.tanh %93 : vector<8x32xf32>
    %95 = arith.mulf %90, %94 : vector<8x32xf32>
    %c16_31 = arith.constant 16 : index
    %c0_32 = arith.constant 0 : index
    %96 = vector.load %arg28[%c16_31, %c0_32] : memref<64x32xf32, #tpu.memory_space<vmem>>, vector<8x32xf32>
    tpu.vector_store %arg28[%c16_31, %c0_32], %95 {strides = array<i32>} : memref<64x32xf32, #tpu.memory_space<vmem>>, vector<8x32xf32>,
    %c24 = arith.constant 24 : index
    %c0_33 = arith.constant 0 : index
    %97 = vector.load %arg27[%c24, %c0_33] : memref<64x128xf32, #tpu.memory_space<vmem>>, vector<8x128xf32>
    %cst_34 = arith.constant dense<0.000000e+00> : vector<8x128xf32>
    %98 = tpu.matmul %95, %9, %cst_34 {dimension_numbers = #tpu.dot_dimension_numbers<[1], [0], [0], [1], [0, 0, 1, 1], [], []>} : vector<8x32xf32>, vector<32x128xf32>, vector<8x128xf32> -> vector<8x128xf32>
    %99 = arith.addf %97, %98 : vector<8x128xf32>
    %100 = vector.extract_strided_slice %99 {offsets = [0, 0], sizes = [8, 32], strides = [1, 1]} : vector<8x128xf32> to vector<8x32xf32>
    %101 = arith.negf %100 : vector<8x32xf32>
    %102 = math.exp %101 : vector<8x32xf32>
    %cst_35 = arith.constant 1.000000e+00 : f32
    %103 = vector.broadcast %cst_35 : f32 to vector<8x32xf32>
    %104 = arith.addf %103, %102 : vector<8x32xf32>
    %105 = arith.divf %103, %104 : vector<8x32xf32>
    %106 = vector.extract_strided_slice %99 {offsets = [0, 32], sizes = [8, 32], strides = [1, 1]} : vector<8x128xf32> to vector<8x32xf32>
    %107 = arith.negf %106 : vector<8x32xf32>
    %108 = math.exp %107 : vector<8x32xf32>
    %cst_36 = arith.constant 1.000000e+00 : f32
    %109 = vector.broadcast %cst_36 : f32 to vector<8x32xf32>
    %110 = arith.addf %109, %108 : vector<8x32xf32>
    %111 = arith.divf %109, %110 : vector<8x32xf32>
    %112 = vector.extract_strided_slice %99 {offsets = [0, 64], sizes = [8, 32], strides = [1, 1]} : vector<8x128xf32> to vector<8x32xf32>
    %113 = math.tanh %112 : vector<8x32xf32>
    %114 = vector.extract_strided_slice %99 {offsets = [0, 96], sizes = [8, 32], strides = [1, 1]} : vector<8x128xf32> to vector<8x32xf32>
    %115 = arith.negf %114 : vector<8x32xf32>
    %116 = math.exp %115 : vector<8x32xf32>
    %cst_37 = arith.constant 1.000000e+00 : f32
    %117 = vector.broadcast %cst_37 : f32 to vector<8x32xf32>
    %118 = arith.addf %117, %116 : vector<8x32xf32>
    %119 = arith.divf %117, %118 : vector<8x32xf32>
    %120 = arith.mulf %111, %93 : vector<8x32xf32>
    %121 = arith.mulf %105, %113 : vector<8x32xf32>
    %122 = arith.addf %120, %121 : vector<8x32xf32>
    %123 = math.tanh %122 : vector<8x32xf32>
    %124 = arith.mulf %119, %123 : vector<8x32xf32>
    %c24_38 = arith.constant 24 : index
    %c0_39 = arith.constant 0 : index
    %125 = vector.load %arg28[%c24_38, %c0_39] : memref<64x32xf32, #tpu.memory_space<vmem>>, vector<8x32xf32>
    tpu.vector_store %arg28[%c24_38, %c0_39], %124 {strides = array<i32>} : memref<64x32xf32, #tpu.memory_space<vmem>>, vector<8x32xf32>,
    %c32 = arith.constant 32 : index
    %c0_40 = arith.constant 0 : index
    %126 = vector.load %arg27[%c32, %c0_40] : memref<64x128xf32, #tpu.memory_space<vmem>>, vector<8x128xf32>
    %cst_41 = arith.constant dense<0.000000e+00> : vector<8x128xf32>
    %127 = tpu.matmul %124, %9, %cst_41 {dimension_numbers = #tpu.dot_dimension_numbers<[1], [0], [0], [1], [0, 0, 1, 1], [], []>} : vector<8x32xf32>, vector<32x128xf32>, vector<8x128xf32> -> vector<8x128xf32>
    %128 = arith.addf %126, %127 : vector<8x128xf32>
    %129 = vector.extract_strided_slice %128 {offsets = [0, 0], sizes = [8, 32], strides = [1, 1]} : vector<8x128xf32> to vector<8x32xf32>
    %130 = arith.negf %129 : vector<8x32xf32>
    %131 = math.exp %130 : vector<8x32xf32>
    %cst_42 = arith.constant 1.000000e+00 : f32
    %132 = vector.broadcast %cst_42 : f32 to vector<8x32xf32>
    %133 = arith.addf %132, %131 : vector<8x32xf32>
    %134 = arith.divf %132, %133 : vector<8x32xf32>
    %135 = vector.extract_strided_slice %128 {offsets = [0, 32], sizes = [8, 32], strides = [1, 1]} : vector<8x128xf32> to vector<8x32xf32>
    %136 = arith.negf %135 : vector<8x32xf32>
    %137 = math.exp %136 : vector<8x32xf32>
    %cst_43 = arith.constant 1.000000e+00 : f32
    %138 = vector.broadcast %cst_43 : f32 to vector<8x32xf32>
    %139 = arith.addf %138, %137 : vector<8x32xf32>
    %140 = arith.divf %138, %139 : vector<8x32xf32>
    %141 = vector.extract_strided_slice %128 {offsets = [0, 64], sizes = [8, 32], strides = [1, 1]} : vector<8x128xf32> to vector<8x32xf32>
    %142 = math.tanh %141 : vector<8x32xf32>
    %143 = vector.extract_strided_slice %128 {offsets = [0, 96], sizes = [8, 32], strides = [1, 1]} : vector<8x128xf32> to vector<8x32xf32>
    %144 = arith.negf %143 : vector<8x32xf32>
    %145 = math.exp %144 : vector<8x32xf32>
    %cst_44 = arith.constant 1.000000e+00 : f32
    %146 = vector.broadcast %cst_44 : f32 to vector<8x32xf32>
    %147 = arith.addf %146, %145 : vector<8x32xf32>
    %148 = arith.divf %146, %147 : vector<8x32xf32>
    %149 = arith.mulf %140, %122 : vector<8x32xf32>
    %150 = arith.mulf %134, %142 : vector<8x32xf32>
    %151 = arith.addf %149, %150 : vector<8x32xf32>
    %152 = math.tanh %151 : vector<8x32xf32>
    %153 = arith.mulf %148, %152 : vector<8x32xf32>
    %c32_45 = arith.constant 32 : index
    %c0_46 = arith.constant 0 : index
    %154 = vector.load %arg28[%c32_45, %c0_46] : memref<64x32xf32, #tpu.memory_space<vmem>>, vector<8x32xf32>
    tpu.vector_store %arg28[%c32_45, %c0_46], %153 {strides = array<i32>} : memref<64x32xf32, #tpu.memory_space<vmem>>, vector<8x32xf32>,
    %c40 = arith.constant 40 : index
    %c0_47 = arith.constant 0 : index
    %155 = vector.load %arg27[%c40, %c0_47] : memref<64x128xf32, #tpu.memory_space<vmem>>, vector<8x128xf32>
    %cst_48 = arith.constant dense<0.000000e+00> : vector<8x128xf32>
    %156 = tpu.matmul %153, %9, %cst_48 {dimension_numbers = #tpu.dot_dimension_numbers<[1], [0], [0], [1], [0, 0, 1, 1], [], []>} : vector<8x32xf32>, vector<32x128xf32>, vector<8x128xf32> -> vector<8x128xf32>
    %157 = arith.addf %155, %156 : vector<8x128xf32>
    %158 = vector.extract_strided_slice %157 {offsets = [0, 0], sizes = [8, 32], strides = [1, 1]} : vector<8x128xf32> to vector<8x32xf32>
    %159 = arith.negf %158 : vector<8x32xf32>
    %160 = math.exp %159 : vector<8x32xf32>
    %cst_49 = arith.constant 1.000000e+00 : f32
    %161 = vector.broadcast %cst_49 : f32 to vector<8x32xf32>
    %162 = arith.addf %161, %160 : vector<8x32xf32>
    %163 = arith.divf %161, %162 : vector<8x32xf32>
    %164 = vector.extract_strided_slice %157 {offsets = [0, 32], sizes = [8, 32], strides = [1, 1]} : vector<8x128xf32> to vector<8x32xf32>
    %165 = arith.negf %164 : vector<8x32xf32>
    %166 = math.exp %165 : vector<8x32xf32>
    %cst_50 = arith.constant 1.000000e+00 : f32
    %167 = vector.broadcast %cst_50 : f32 to vector<8x32xf32>
    %168 = arith.addf %167, %166 : vector<8x32xf32>
    %169 = arith.divf %167, %168 : vector<8x32xf32>
    %170 = vector.extract_strided_slice %157 {offsets = [0, 64], sizes = [8, 32], strides = [1, 1]} : vector<8x128xf32> to vector<8x32xf32>
    %171 = math.tanh %170 : vector<8x32xf32>
    %172 = vector.extract_strided_slice %157 {offsets = [0, 96], sizes = [8, 32], strides = [1, 1]} : vector<8x128xf32> to vector<8x32xf32>
    %173 = arith.negf %172 : vector<8x32xf32>
    %174 = math.exp %173 : vector<8x32xf32>
    %cst_51 = arith.constant 1.000000e+00 : f32
    %175 = vector.broadcast %cst_51 : f32 to vector<8x32xf32>
    %176 = arith.addf %175, %174 : vector<8x32xf32>
    %177 = arith.divf %175, %176 : vector<8x32xf32>
    %178 = arith.mulf %169, %151 : vector<8x32xf32>
    %179 = arith.mulf %163, %171 : vector<8x32xf32>
    %180 = arith.addf %178, %179 : vector<8x32xf32>
    %181 = math.tanh %180 : vector<8x32xf32>
    %182 = arith.mulf %177, %181 : vector<8x32xf32>
    %c40_52 = arith.constant 40 : index
    %c0_53 = arith.constant 0 : index
    %183 = vector.load %arg28[%c40_52, %c0_53] : memref<64x32xf32, #tpu.memory_space<vmem>>, vector<8x32xf32>
    tpu.vector_store %arg28[%c40_52, %c0_53], %182 {strides = array<i32>} : memref<64x32xf32, #tpu.memory_space<vmem>>, vector<8x32xf32>,
    %c48 = arith.constant 48 : index
    %c0_54 = arith.constant 0 : index
    %184 = vector.load %arg27[%c48, %c0_54] : memref<64x128xf32, #tpu.memory_space<vmem>>, vector<8x128xf32>
    %cst_55 = arith.constant dense<0.000000e+00> : vector<8x128xf32>
    %185 = tpu.matmul %182, %9, %cst_55 {dimension_numbers = #tpu.dot_dimension_numbers<[1], [0], [0], [1], [0, 0, 1, 1], [], []>} : vector<8x32xf32>, vector<32x128xf32>, vector<8x128xf32> -> vector<8x128xf32>
    %186 = arith.addf %184, %185 : vector<8x128xf32>
    %187 = vector.extract_strided_slice %186 {offsets = [0, 0], sizes = [8, 32], strides = [1, 1]} : vector<8x128xf32> to vector<8x32xf32>
    %188 = arith.negf %187 : vector<8x32xf32>
    %189 = math.exp %188 : vector<8x32xf32>
    %cst_56 = arith.constant 1.000000e+00 : f32
    %190 = vector.broadcast %cst_56 : f32 to vector<8x32xf32>
    %191 = arith.addf %190, %189 : vector<8x32xf32>
    %192 = arith.divf %190, %191 : vector<8x32xf32>
    %193 = vector.extract_strided_slice %186 {offsets = [0, 32], sizes = [8, 32], strides = [1, 1]} : vector<8x128xf32> to vector<8x32xf32>
    %194 = arith.negf %193 : vector<8x32xf32>
    %195 = math.exp %194 : vector<8x32xf32>
    %cst_57 = arith.constant 1.000000e+00 : f32
    %196 = vector.broadcast %cst_57 : f32 to vector<8x32xf32>
    %197 = arith.addf %196, %195 : vector<8x32xf32>
    %198 = arith.divf %196, %197 : vector<8x32xf32>
    %199 = vector.extract_strided_slice %186 {offsets = [0, 64], sizes = [8, 32], strides = [1, 1]} : vector<8x128xf32> to vector<8x32xf32>
    %200 = math.tanh %199 : vector<8x32xf32>
    %201 = vector.extract_strided_slice %186 {offsets = [0, 96], sizes = [8, 32], strides = [1, 1]} : vector<8x128xf32> to vector<8x32xf32>
    %202 = arith.negf %201 : vector<8x32xf32>
    %203 = math.exp %202 : vector<8x32xf32>
    %cst_58 = arith.constant 1.000000e+00 : f32
    %204 = vector.broadcast %cst_58 : f32 to vector<8x32xf32>
    %205 = arith.addf %204, %203 : vector<8x32xf32>
    %206 = arith.divf %204, %205 : vector<8x32xf32>
    %207 = arith.mulf %198, %180 : vector<8x32xf32>
    %208 = arith.mulf %192, %200 : vector<8x32xf32>
    %209 = arith.addf %207, %208 : vector<8x32xf32>
    %210 = math.tanh %209 : vector<8x32xf32>
    %211 = arith.mulf %206, %210 : vector<8x32xf32>
    %c48_59 = arith.constant 48 : index
    %c0_60 = arith.constant 0 : index
    %212 = vector.load %arg28[%c48_59, %c0_60] : memref<64x32xf32, #tpu.memory_space<vmem>>, vector<8x32xf32>
    tpu.vector_store %arg28[%c48_59, %c0_60], %211 {strides = array<i32>} : memref<64x32xf32, #tpu.memory_space<vmem>>, vector<8x32xf32>,
    %c56 = arith.constant 56 : index
    %c0_61 = arith.constant 0 : index
    %213 = vector.load %arg27[%c56, %c0_61] : memref<64x128xf32, #tpu.memory_space<vmem>>, vector<8x128xf32>
    %cst_62 = arith.constant dense<0.000000e+00> : vector<8x128xf32>
    %214 = tpu.matmul %211, %9, %cst_62 {dimension_numbers = #tpu.dot_dimension_numbers<[1], [0], [0], [1], [0, 0, 1, 1], [], []>} : vector<8x32xf32>, vector<32x128xf32>, vector<8x128xf32> -> vector<8x128xf32>
    %215 = arith.addf %213, %214 : vector<8x128xf32>
    %216 = vector.extract_strided_slice %215 {offsets = [0, 0], sizes = [8, 32], strides = [1, 1]} : vector<8x128xf32> to vector<8x32xf32>
    %217 = arith.negf %216 : vector<8x32xf32>
    %218 = math.exp %217 : vector<8x32xf32>
    %cst_63 = arith.constant 1.000000e+00 : f32
    %219 = vector.broadcast %cst_63 : f32 to vector<8x32xf32>
    %220 = arith.addf %219, %218 : vector<8x32xf32>
    %221 = arith.divf %219, %220 : vector<8x32xf32>
    %222 = vector.extract_strided_slice %215 {offsets = [0, 32], sizes = [8, 32], strides = [1, 1]} : vector<8x128xf32> to vector<8x32xf32>
    %223 = arith.negf %222 : vector<8x32xf32>
    %224 = math.exp %223 : vector<8x32xf32>
    %cst_64 = arith.constant 1.000000e+00 : f32
    %225 = vector.broadcast %cst_64 : f32 to vector<8x32xf32>
    %226 = arith.addf %225, %224 : vector<8x32xf32>
    %227 = arith.divf %225, %226 : vector<8x32xf32>
    %228 = vector.extract_strided_slice %215 {offsets = [0, 64], sizes = [8, 32], strides = [1, 1]} : vector<8x128xf32> to vector<8x32xf32>
    %229 = math.tanh %228 : vector<8x32xf32>
    %230 = vector.extract_strided_slice %215 {offsets = [0, 96], sizes = [8, 32], strides = [1, 1]} : vector<8x128xf32> to vector<8x32xf32>
    %231 = arith.negf %230 : vector<8x32xf32>
    %232 = math.exp %231 : vector<8x32xf32>
    %cst_65 = arith.constant 1.000000e+00 : f32
    %233 = vector.broadcast %cst_65 : f32 to vector<8x32xf32>
    %234 = arith.addf %233, %232 : vector<8x32xf32>
    %235 = arith.divf %233, %234 : vector<8x32xf32>
    %236 = arith.mulf %227, %209 : vector<8x32xf32>
    %237 = arith.mulf %221, %229 : vector<8x32xf32>
    %238 = arith.addf %236, %237 : vector<8x32xf32>
    %239 = math.tanh %238 : vector<8x32xf32>
    %240 = arith.mulf %235, %239 : vector<8x32xf32>
    %c56_66 = arith.constant 56 : index
    %c0_67 = arith.constant 0 : index
    %241 = vector.load %arg28[%c56_66, %c0_67] : memref<64x32xf32, #tpu.memory_space<vmem>>, vector<8x32xf32>
    tpu.vector_store %arg28[%c56_66, %c0_67], %240 {strides = array<i32>} : memref<64x32xf32, #tpu.memory_space<vmem>>, vector<8x32xf32>,
    %c0_68 = arith.constant 0 : index
    %c0_69 = arith.constant 0 : index
    %242 = vector.load %arg28[%c0_68, %c0_69] : memref<64x32xf32, #tpu.memory_space<vmem>>, vector<64x32xf32>
    %c0_70 = arith.constant 0 : index
    %c0_71 = arith.constant 0 : index
    %243 = vector.load %arg5[%c0_70, %c0_71] : memref<32x128xf32, #tpu.memory_space<vmem>>, vector<32x128xf32>
    %cst_72 = arith.constant dense<0.000000e+00> : vector<64x128xf32>
    %244 = tpu.matmul %242, %243, %cst_72 {dimension_numbers = #tpu.dot_dimension_numbers<[1], [0], [0], [1], [0, 0, 1, 1], [], []>} : vector<64x32xf32>, vector<32x128xf32>, vector<64x128xf32> -> vector<64x128xf32>
    %c0_73 = arith.constant 0 : index
    %c0_74 = arith.constant 0 : index
    %245 = vector.load %arg7[%c0_73, %c0_74] : memref<1x128xf32, #tpu.memory_space<vmem>>, vector<1x128xf32>
    %246 = vector.broadcast %245 : vector<1x128xf32> to vector<64x128xf32>
    %247 = arith.addf %244, %246 : vector<64x128xf32>
    %c0_75 = arith.constant 0 : index
    %c0_76 = arith.constant 0 : index
    %248 = vector.load %arg27[%c0_75, %c0_76] : memref<64x128xf32, #tpu.memory_space<vmem>>, vector<64x128xf32>
    tpu.vector_store %arg27[%c0_75, %c0_76], %247 {strides = array<i32>} : memref<64x128xf32, #tpu.memory_space<vmem>>, vector<64x128xf32>,
    %c0_77 = arith.constant 0 : index
    %c0_78 = arith.constant 0 : index
    %249 = vector.load %arg6[%c0_77, %c0_78] : memref<32x128xf32, #tpu.memory_space<vmem>>, vector<32x128xf32>
    %c0_79 = arith.constant 0 : index
    %c0_80 = arith.constant 0 : index
    %250 = vector.load %arg27[%c0_79, %c0_80] : memref<64x128xf32, #tpu.memory_space<vmem>>, vector<8x128xf32>
    %cst_81 = arith.constant dense<0.000000e+00> : vector<8x128xf32>
    %251 = tpu.matmul %0, %249, %cst_81 {dimension_numbers = #tpu.dot_dimension_numbers<[1], [0], [0], [1], [0, 0, 1, 1], [], []>} : vector<8x32xf32>, vector<32x128xf32>, vector<8x128xf32> -> vector<8x128xf32>
    %252 = arith.addf %250, %251 : vector<8x128xf32>
    %253 = vector.extract_strided_slice %252 {offsets = [0, 0], sizes = [8, 32], strides = [1, 1]} : vector<8x128xf32> to vector<8x32xf32>
    %254 = arith.negf %253 : vector<8x32xf32>
    %255 = math.exp %254 : vector<8x32xf32>
    %cst_82 = arith.constant 1.000000e+00 : f32
    %256 = vector.broadcast %cst_82 : f32 to vector<8x32xf32>
    %257 = arith.addf %256, %255 : vector<8x32xf32>
    %258 = arith.divf %256, %257 : vector<8x32xf32>
    %259 = vector.extract_strided_slice %252 {offsets = [0, 32], sizes = [8, 32], strides = [1, 1]} : vector<8x128xf32> to vector<8x32xf32>
    %260 = arith.negf %259 : vector<8x32xf32>
    %261 = math.exp %260 : vector<8x32xf32>
    %cst_83 = arith.constant 1.000000e+00 : f32
    %262 = vector.broadcast %cst_83 : f32 to vector<8x32xf32>
    %263 = arith.addf %262, %261 : vector<8x32xf32>
    %264 = arith.divf %262, %263 : vector<8x32xf32>
    %265 = vector.extract_strided_slice %252 {offsets = [0, 64], sizes = [8, 32], strides = [1, 1]} : vector<8x128xf32> to vector<8x32xf32>
    %266 = math.tanh %265 : vector<8x32xf32>
    %267 = vector.extract_strided_slice %252 {offsets = [0, 96], sizes = [8, 32], strides = [1, 1]} : vector<8x128xf32> to vector<8x32xf32>
    %268 = arith.negf %267 : vector<8x32xf32>
    %269 = math.exp %268 : vector<8x32xf32>
    %cst_84 = arith.constant 1.000000e+00 : f32
    %270 = vector.broadcast %cst_84 : f32 to vector<8x32xf32>
    %271 = arith.addf %270, %269 : vector<8x32xf32>
    %272 = arith.divf %270, %271 : vector<8x32xf32>
    %273 = arith.mulf %264, %0 : vector<8x32xf32>
    %274 = arith.mulf %258, %266 : vector<8x32xf32>
    %275 = arith.addf %273, %274 : vector<8x32xf32>
    %276 = math.tanh %275 : vector<8x32xf32>
    %277 = arith.mulf %272, %276 : vector<8x32xf32>
    %c8_85 = arith.constant 8 : index
    %c0_86 = arith.constant 0 : index
    %278 = vector.load %arg27[%c8_85, %c0_86] : memref<64x128xf32, #tpu.memory_space<vmem>>, vector<8x128xf32>
    %cst_87 = arith.constant dense<0.000000e+00> : vector<8x128xf32>
    %279 = tpu.matmul %277, %249, %cst_87 {dimension_numbers = #tpu.dot_dimension_numbers<[1], [0], [0], [1], [0, 0, 1, 1], [], []>} : vector<8x32xf32>, vector<32x128xf32>, vector<8x128xf32> -> vector<8x128xf32>
    %280 = arith.addf %278, %279 : vector<8x128xf32>
    %281 = vector.extract_strided_slice %280 {offsets = [0, 0], sizes = [8, 32], strides = [1, 1]} : vector<8x128xf32> to vector<8x32xf32>
    %282 = arith.negf %281 : vector<8x32xf32>
    %283 = math.exp %282 : vector<8x32xf32>
    %cst_88 = arith.constant 1.000000e+00 : f32
    %284 = vector.broadcast %cst_88 : f32 to vector<8x32xf32>
    %285 = arith.addf %284, %283 : vector<8x32xf32>
    %286 = arith.divf %284, %285 : vector<8x32xf32>
    %287 = vector.extract_strided_slice %280 {offsets = [0, 32], sizes = [8, 32], strides = [1, 1]} : vector<8x128xf32> to vector<8x32xf32>
    %288 = arith.negf %287 : vector<8x32xf32>
    %289 = math.exp %288 : vector<8x32xf32>
    %cst_89 = arith.constant 1.000000e+00 : f32
    %290 = vector.broadcast %cst_89 : f32 to vector<8x32xf32>
    %291 = arith.addf %290, %289 : vector<8x32xf32>
    %292 = arith.divf %290, %291 : vector<8x32xf32>
    %293 = vector.extract_strided_slice %280 {offsets = [0, 64], sizes = [8, 32], strides = [1, 1]} : vector<8x128xf32> to vector<8x32xf32>
    %294 = math.tanh %293 : vector<8x32xf32>
    %295 = vector.extract_strided_slice %280 {offsets = [0, 96], sizes = [8, 32], strides = [1, 1]} : vector<8x128xf32> to vector<8x32xf32>
    %296 = arith.negf %295 : vector<8x32xf32>
    %297 = math.exp %296 : vector<8x32xf32>
    %cst_90 = arith.constant 1.000000e+00 : f32
    %298 = vector.broadcast %cst_90 : f32 to vector<8x32xf32>
    %299 = arith.addf %298, %297 : vector<8x32xf32>
    %300 = arith.divf %298, %299 : vector<8x32xf32>
    %301 = arith.mulf %292, %275 : vector<8x32xf32>
    %302 = arith.mulf %286, %294 : vector<8x32xf32>
    %303 = arith.addf %301, %302 : vector<8x32xf32>
    %304 = math.tanh %303 : vector<8x32xf32>
    %305 = arith.mulf %300, %304 : vector<8x32xf32>
    %c16_91 = arith.constant 16 : index
    %c0_92 = arith.constant 0 : index
    %306 = vector.load %arg27[%c16_91, %c0_92] : memref<64x128xf32, #tpu.memory_space<vmem>>, vector<8x128xf32>
    %cst_93 = arith.constant dense<0.000000e+00> : vector<8x128xf32>
    %307 = tpu.matmul %305, %249, %cst_93 {dimension_numbers = #tpu.dot_dimension_numbers<[1], [0], [0], [1], [0, 0, 1, 1], [], []>} : vector<8x32xf32>, vector<32x128xf32>, vector<8x128xf32> -> vector<8x128xf32>
    %308 = arith.addf %306, %307 : vector<8x128xf32>
    %309 = vector.extract_strided_slice %308 {offsets = [0, 0], sizes = [8, 32], strides = [1, 1]} : vector<8x128xf32> to vector<8x32xf32>
    %310 = arith.negf %309 : vector<8x32xf32>
    %311 = math.exp %310 : vector<8x32xf32>
    %cst_94 = arith.constant 1.000000e+00 : f32
    %312 = vector.broadcast %cst_94 : f32 to vector<8x32xf32>
    %313 = arith.addf %312, %311 : vector<8x32xf32>
    %314 = arith.divf %312, %313 : vector<8x32xf32>
    %315 = vector.extract_strided_slice %308 {offsets = [0, 32], sizes = [8, 32], strides = [1, 1]} : vector<8x128xf32> to vector<8x32xf32>
    %316 = arith.negf %315 : vector<8x32xf32>
    %317 = math.exp %316 : vector<8x32xf32>
    %cst_95 = arith.constant 1.000000e+00 : f32
    %318 = vector.broadcast %cst_95 : f32 to vector<8x32xf32>
    %319 = arith.addf %318, %317 : vector<8x32xf32>
    %320 = arith.divf %318, %319 : vector<8x32xf32>
    %321 = vector.extract_strided_slice %308 {offsets = [0, 64], sizes = [8, 32], strides = [1, 1]} : vector<8x128xf32> to vector<8x32xf32>
    %322 = math.tanh %321 : vector<8x32xf32>
    %323 = vector.extract_strided_slice %308 {offsets = [0, 96], sizes = [8, 32], strides = [1, 1]} : vector<8x128xf32> to vector<8x32xf32>
    %324 = arith.negf %323 : vector<8x32xf32>
    %325 = math.exp %324 : vector<8x32xf32>
    %cst_96 = arith.constant 1.000000e+00 : f32
    %326 = vector.broadcast %cst_96 : f32 to vector<8x32xf32>
    %327 = arith.addf %326, %325 : vector<8x32xf32>
    %328 = arith.divf %326, %327 : vector<8x32xf32>
    %329 = arith.mulf %320, %303 : vector<8x32xf32>
    %330 = arith.mulf %314, %322 : vector<8x32xf32>
    %331 = arith.addf %329, %330 : vector<8x32xf32>
    %332 = math.tanh %331 : vector<8x32xf32>
    %333 = arith.mulf %328, %332 : vector<8x32xf32>
    %c24_97 = arith.constant 24 : index
    %c0_98 = arith.constant 0 : index
    %334 = vector.load %arg27[%c24_97, %c0_98] : memref<64x128xf32, #tpu.memory_space<vmem>>, vector<8x128xf32>
    %cst_99 = arith.constant dense<0.000000e+00> : vector<8x128xf32>
    %335 = tpu.matmul %333, %249, %cst_99 {dimension_numbers = #tpu.dot_dimension_numbers<[1], [0], [0], [1], [0, 0, 1, 1], [], []>} : vector<8x32xf32>, vector<32x128xf32>, vector<8x128xf32> -> vector<8x128xf32>
    %336 = arith.addf %334, %335 : vector<8x128xf32>
    %337 = vector.extract_strided_slice %336 {offsets = [0, 0], sizes = [8, 32], strides = [1, 1]} : vector<8x128xf32> to vector<8x32xf32>
    %338 = arith.negf %337 : vector<8x32xf32>
    %339 = math.exp %338 : vector<8x32xf32>
    %cst_100 = arith.constant 1.000000e+00 : f32
    %340 = vector.broadcast %cst_100 : f32 to vector<8x32xf32>
    %341 = arith.addf %340, %339 : vector<8x32xf32>
    %342 = arith.divf %340, %341 : vector<8x32xf32>
    %343 = vector.extract_strided_slice %336 {offsets = [0, 32], sizes = [8, 32], strides = [1, 1]} : vector<8x128xf32> to vector<8x32xf32>
    %344 = arith.negf %343 : vector<8x32xf32>
    %345 = math.exp %344 : vector<8x32xf32>
    %cst_101 = arith.constant 1.000000e+00 : f32
    %346 = vector.broadcast %cst_101 : f32 to vector<8x32xf32>
    %347 = arith.addf %346, %345 : vector<8x32xf32>
    %348 = arith.divf %346, %347 : vector<8x32xf32>
    %349 = vector.extract_strided_slice %336 {offsets = [0, 64], sizes = [8, 32], strides = [1, 1]} : vector<8x128xf32> to vector<8x32xf32>
    %350 = math.tanh %349 : vector<8x32xf32>
    %351 = vector.extract_strided_slice %336 {offsets = [0, 96], sizes = [8, 32], strides = [1, 1]} : vector<8x128xf32> to vector<8x32xf32>
    %352 = arith.negf %351 : vector<8x32xf32>
    %353 = math.exp %352 : vector<8x32xf32>
    %cst_102 = arith.constant 1.000000e+00 : f32
    %354 = vector.broadcast %cst_102 : f32 to vector<8x32xf32>
    %355 = arith.addf %354, %353 : vector<8x32xf32>
    %356 = arith.divf %354, %355 : vector<8x32xf32>
    %357 = arith.mulf %348, %331 : vector<8x32xf32>
    %358 = arith.mulf %342, %350 : vector<8x32xf32>
    %359 = arith.addf %357, %358 : vector<8x32xf32>
    %360 = math.tanh %359 : vector<8x32xf32>
    %361 = arith.mulf %356, %360 : vector<8x32xf32>
    %c32_103 = arith.constant 32 : index
    %c0_104 = arith.constant 0 : index
    %362 = vector.load %arg27[%c32_103, %c0_104] : memref<64x128xf32, #tpu.memory_space<vmem>>, vector<8x128xf32>
    %cst_105 = arith.constant dense<0.000000e+00> : vector<8x128xf32>
    %363 = tpu.matmul %361, %249, %cst_105 {dimension_numbers = #tpu.dot_dimension_numbers<[1], [0], [0], [1], [0, 0, 1, 1], [], []>} : vector<8x32xf32>, vector<32x128xf32>, vector<8x128xf32> -> vector<8x128xf32>
    %364 = arith.addf %362, %363 : vector<8x128xf32>
    %365 = vector.extract_strided_slice %364 {offsets = [0, 0], sizes = [8, 32], strides = [1, 1]} : vector<8x128xf32> to vector<8x32xf32>
    %366 = arith.negf %365 : vector<8x32xf32>
    %367 = math.exp %366 : vector<8x32xf32>
    %cst_106 = arith.constant 1.000000e+00 : f32
    %368 = vector.broadcast %cst_106 : f32 to vector<8x32xf32>
    %369 = arith.addf %368, %367 : vector<8x32xf32>
    %370 = arith.divf %368, %369 : vector<8x32xf32>
    %371 = vector.extract_strided_slice %364 {offsets = [0, 32], sizes = [8, 32], strides = [1, 1]} : vector<8x128xf32> to vector<8x32xf32>
    %372 = arith.negf %371 : vector<8x32xf32>
    %373 = math.exp %372 : vector<8x32xf32>
    %cst_107 = arith.constant 1.000000e+00 : f32
    %374 = vector.broadcast %cst_107 : f32 to vector<8x32xf32>
    %375 = arith.addf %374, %373 : vector<8x32xf32>
    %376 = arith.divf %374, %375 : vector<8x32xf32>
    %377 = vector.extract_strided_slice %364 {offsets = [0, 64], sizes = [8, 32], strides = [1, 1]} : vector<8x128xf32> to vector<8x32xf32>
    %378 = math.tanh %377 : vector<8x32xf32>
    %379 = vector.extract_strided_slice %364 {offsets = [0, 96], sizes = [8, 32], strides = [1, 1]} : vector<8x128xf32> to vector<8x32xf32>
    %380 = arith.negf %379 : vector<8x32xf32>
    %381 = math.exp %380 : vector<8x32xf32>
    %cst_108 = arith.constant 1.000000e+00 : f32
    %382 = vector.broadcast %cst_108 : f32 to vector<8x32xf32>
    %383 = arith.addf %382, %381 : vector<8x32xf32>
    %384 = arith.divf %382, %383 : vector<8x32xf32>
    %385 = arith.mulf %376, %359 : vector<8x32xf32>
    %386 = arith.mulf %370, %378 : vector<8x32xf32>
    %387 = arith.addf %385, %386 : vector<8x32xf32>
    %388 = math.tanh %387 : vector<8x32xf32>
    %389 = arith.mulf %384, %388 : vector<8x32xf32>
    %c40_109 = arith.constant 40 : index
    %c0_110 = arith.constant 0 : index
    %390 = vector.load %arg27[%c40_109, %c0_110] : memref<64x128xf32, #tpu.memory_space<vmem>>, vector<8x128xf32>
    %cst_111 = arith.constant dense<0.000000e+00> : vector<8x128xf32>
    %391 = tpu.matmul %389, %249, %cst_111 {dimension_numbers = #tpu.dot_dimension_numbers<[1], [0], [0], [1], [0, 0, 1, 1], [], []>} : vector<8x32xf32>, vector<32x128xf32>, vector<8x128xf32> -> vector<8x128xf32>
    %392 = arith.addf %390, %391 : vector<8x128xf32>
    %393 = vector.extract_strided_slice %392 {offsets = [0, 0], sizes = [8, 32], strides = [1, 1]} : vector<8x128xf32> to vector<8x32xf32>
    %394 = arith.negf %393 : vector<8x32xf32>
    %395 = math.exp %394 : vector<8x32xf32>
    %cst_112 = arith.constant 1.000000e+00 : f32
    %396 = vector.broadcast %cst_112 : f32 to vector<8x32xf32>
    %397 = arith.addf %396, %395 : vector<8x32xf32>
    %398 = arith.divf %396, %397 : vector<8x32xf32>
    %399 = vector.extract_strided_slice %392 {offsets = [0, 32], sizes = [8, 32], strides = [1, 1]} : vector<8x128xf32> to vector<8x32xf32>
    %400 = arith.negf %399 : vector<8x32xf32>
    %401 = math.exp %400 : vector<8x32xf32>
    %cst_113 = arith.constant 1.000000e+00 : f32
    %402 = vector.broadcast %cst_113 : f32 to vector<8x32xf32>
    %403 = arith.addf %402, %401 : vector<8x32xf32>
    %404 = arith.divf %402, %403 : vector<8x32xf32>
    %405 = vector.extract_strided_slice %392 {offsets = [0, 64], sizes = [8, 32], strides = [1, 1]} : vector<8x128xf32> to vector<8x32xf32>
    %406 = math.tanh %405 : vector<8x32xf32>
    %407 = vector.extract_strided_slice %392 {offsets = [0, 96], sizes = [8, 32], strides = [1, 1]} : vector<8x128xf32> to vector<8x32xf32>
    %408 = arith.negf %407 : vector<8x32xf32>
    %409 = math.exp %408 : vector<8x32xf32>
    %cst_114 = arith.constant 1.000000e+00 : f32
    %410 = vector.broadcast %cst_114 : f32 to vector<8x32xf32>
    %411 = arith.addf %410, %409 : vector<8x32xf32>
    %412 = arith.divf %410, %411 : vector<8x32xf32>
    %413 = arith.mulf %404, %387 : vector<8x32xf32>
    %414 = arith.mulf %398, %406 : vector<8x32xf32>
    %415 = arith.addf %413, %414 : vector<8x32xf32>
    %416 = math.tanh %415 : vector<8x32xf32>
    %417 = arith.mulf %412, %416 : vector<8x32xf32>
    %c48_115 = arith.constant 48 : index
    %c0_116 = arith.constant 0 : index
    %418 = vector.load %arg27[%c48_115, %c0_116] : memref<64x128xf32, #tpu.memory_space<vmem>>, vector<8x128xf32>
    %cst_117 = arith.constant dense<0.000000e+00> : vector<8x128xf32>
    %419 = tpu.matmul %417, %249, %cst_117 {dimension_numbers = #tpu.dot_dimension_numbers<[1], [0], [0], [1], [0, 0, 1, 1], [], []>} : vector<8x32xf32>, vector<32x128xf32>, vector<8x128xf32> -> vector<8x128xf32>
    %420 = arith.addf %418, %419 : vector<8x128xf32>
    %421 = vector.extract_strided_slice %420 {offsets = [0, 0], sizes = [8, 32], strides = [1, 1]} : vector<8x128xf32> to vector<8x32xf32>
    %422 = arith.negf %421 : vector<8x32xf32>
    %423 = math.exp %422 : vector<8x32xf32>
    %cst_118 = arith.constant 1.000000e+00 : f32
    %424 = vector.broadcast %cst_118 : f32 to vector<8x32xf32>
    %425 = arith.addf %424, %423 : vector<8x32xf32>
    %426 = arith.divf %424, %425 : vector<8x32xf32>
    %427 = vector.extract_strided_slice %420 {offsets = [0, 32], sizes = [8, 32], strides = [1, 1]} : vector<8x128xf32> to vector<8x32xf32>
    %428 = arith.negf %427 : vector<8x32xf32>
    %429 = math.exp %428 : vector<8x32xf32>
    %cst_119 = arith.constant 1.000000e+00 : f32
    %430 = vector.broadcast %cst_119 : f32 to vector<8x32xf32>
    %431 = arith.addf %430, %429 : vector<8x32xf32>
    %432 = arith.divf %430, %431 : vector<8x32xf32>
    %433 = vector.extract_strided_slice %420 {offsets = [0, 64], sizes = [8, 32], strides = [1, 1]} : vector<8x128xf32> to vector<8x32xf32>
    %434 = math.tanh %433 : vector<8x32xf32>
    %435 = vector.extract_strided_slice %420 {offsets = [0, 96], sizes = [8, 32], strides = [1, 1]} : vector<8x128xf32> to vector<8x32xf32>
    %436 = arith.negf %435 : vector<8x32xf32>
    %437 = math.exp %436 : vector<8x32xf32>
    %cst_120 = arith.constant 1.000000e+00 : f32
    %438 = vector.broadcast %cst_120 : f32 to vector<8x32xf32>
    %439 = arith.addf %438, %437 : vector<8x32xf32>
    %440 = arith.divf %438, %439 : vector<8x32xf32>
    %441 = arith.mulf %432, %415 : vector<8x32xf32>
    %442 = arith.mulf %426, %434 : vector<8x32xf32>
    %443 = arith.addf %441, %442 : vector<8x32xf32>
    %444 = math.tanh %443 : vector<8x32xf32>
    %445 = arith.mulf %440, %444 : vector<8x32xf32>
    %c56_121 = arith.constant 56 : index
    %c0_122 = arith.constant 0 : index
    %446 = vector.load %arg27[%c56_121, %c0_122] : memref<64x128xf32, #tpu.memory_space<vmem>>, vector<8x128xf32>
    %cst_123 = arith.constant dense<0.000000e+00> : vector<8x128xf32>
    %447 = tpu.matmul %445, %249, %cst_123 {dimension_numbers = #tpu.dot_dimension_numbers<[1], [0], [0], [1], [0, 0, 1, 1], [], []>} : vector<8x32xf32>, vector<32x128xf32>, vector<8x128xf32> -> vector<8x128xf32>
    %448 = arith.addf %446, %447 : vector<8x128xf32>
    %449 = vector.extract_strided_slice %448 {offsets = [0, 0], sizes = [8, 32], strides = [1, 1]} : vector<8x128xf32> to vector<8x32xf32>
    %450 = arith.negf %449 : vector<8x32xf32>
    %451 = math.exp %450 : vector<8x32xf32>
    %cst_124 = arith.constant 1.000000e+00 : f32
    %452 = vector.broadcast %cst_124 : f32 to vector<8x32xf32>
    %453 = arith.addf %452, %451 : vector<8x32xf32>
    %454 = arith.divf %452, %453 : vector<8x32xf32>
    %455 = vector.extract_strided_slice %448 {offsets = [0, 32], sizes = [8, 32], strides = [1, 1]} : vector<8x128xf32> to vector<8x32xf32>
    %456 = arith.negf %455 : vector<8x32xf32>
    %457 = math.exp %456 : vector<8x32xf32>
    %cst_125 = arith.constant 1.000000e+00 : f32
    %458 = vector.broadcast %cst_125 : f32 to vector<8x32xf32>
    %459 = arith.addf %458, %457 : vector<8x32xf32>
    %460 = arith.divf %458, %459 : vector<8x32xf32>
    %461 = vector.extract_strided_slice %448 {offsets = [0, 64], sizes = [8, 32], strides = [1, 1]} : vector<8x128xf32> to vector<8x32xf32>
    %462 = math.tanh %461 : vector<8x32xf32>
    %463 = vector.extract_strided_slice %448 {offsets = [0, 96], sizes = [8, 32], strides = [1, 1]} : vector<8x128xf32> to vector<8x32xf32>
    %464 = arith.negf %463 : vector<8x32xf32>
    %465 = math.exp %464 : vector<8x32xf32>
    %cst_126 = arith.constant 1.000000e+00 : f32
    %466 = vector.broadcast %cst_126 : f32 to vector<8x32xf32>
    %467 = arith.addf %466, %465 : vector<8x32xf32>
    %468 = arith.divf %466, %467 : vector<8x32xf32>
    %469 = arith.mulf %460, %443 : vector<8x32xf32>
    %470 = arith.mulf %454, %462 : vector<8x32xf32>
    %471 = arith.addf %469, %470 : vector<8x32xf32>
    %472 = math.tanh %471 : vector<8x32xf32>
    %473 = arith.mulf %468, %472 : vector<8x32xf32>
    %474 = math.tanh %473 : vector<8x32xf32>
    %c0_127 = arith.constant 0 : index
    %c0_128 = arith.constant 0 : index
    %475 = vector.load %arg8[%c0_127, %c0_128] : memref<32x16xf32, #tpu.memory_space<vmem>>, vector<32x16xf32>
    %cst_129 = arith.constant dense<0.000000e+00> : vector<8x16xf32>
    %476 = tpu.matmul %474, %475, %cst_129 {dimension_numbers = #tpu.dot_dimension_numbers<[1], [0], [0], [1], [0, 0, 1, 1], [], []>} : vector<8x32xf32>, vector<32x16xf32>, vector<8x16xf32> -> vector<8x16xf32>
    %c0_130 = arith.constant 0 : index
    %c0_131 = arith.constant 0 : index
    %477 = vector.load %arg9[%c0_130, %c0_131] : memref<1x16xf32, #tpu.memory_space<vmem>>, vector<1x16xf32>
    %478 = vector.broadcast %477 : vector<1x16xf32> to vector<8x16xf32>
    %479 = arith.addf %476, %478 : vector<8x16xf32>
    %cst_132 = arith.constant 0.000000e+00 : f32
    %480 = vector.broadcast %cst_132 : f32 to vector<8x16xf32>
    %481 = arith.maximumf %479, %480 : vector<8x16xf32>
    %c0_133 = arith.constant 0 : index
    %c0_134 = arith.constant 0 : index
    %482 = vector.load %arg10[%c0_133, %c0_134] : memref<32x16xf32, #tpu.memory_space<vmem>>, vector<32x16xf32>
    %cst_135 = arith.constant dense<0.000000e+00> : vector<8x16xf32>
    %483 = tpu.matmul %474, %482, %cst_135 {dimension_numbers = #tpu.dot_dimension_numbers<[1], [0], [0], [1], [0, 0, 1, 1], [], []>} : vector<8x32xf32>, vector<32x16xf32>, vector<8x16xf32> -> vector<8x16xf32>
    %c0_136 = arith.constant 0 : index
    %c0_137 = arith.constant 0 : index
    %484 = vector.load %arg11[%c0_136, %c0_137] : memref<1x16xf32, #tpu.memory_space<vmem>>, vector<1x16xf32>
    %485 = vector.broadcast %484 : vector<1x16xf32> to vector<8x16xf32>
    %486 = arith.addf %483, %485 : vector<8x16xf32>
    %cst_138 = arith.constant 0.000000e+00 : f32
    %487 = vector.broadcast %cst_138 : f32 to vector<8x16xf32>
    %488 = arith.maximumf %486, %487 : vector<8x16xf32>
    %cst_139 = arith.constant 5.000000e-01 : f32
    %489 = vector.broadcast %cst_139 : f32 to vector<8x16xf32>
    %490 = arith.mulf %488, %489 : vector<8x16xf32>
    %491 = math.exp %490 : vector<8x16xf32>
    %c0_140 = arith.constant 0 : index
    %c0_141 = arith.constant 0 : index
    %492 = vector.load %arg1[%c0_140, %c0_141] : memref<8x16xf32, #tpu.memory_space<vmem>>, vector<8x16xf32>
    %493 = arith.mulf %491, %492 : vector<8x16xf32>
    %494 = arith.addf %481, %493 : vector<8x16xf32>
    %c0_142 = arith.constant 0 : index
    %c0_143 = arith.constant 0 : index
    %495 = vector.load %arg25[%c0_142, %c0_143] : memref<8x16xf32, #tpu.memory_space<vmem>>, vector<8x16xf32>
    tpu.vector_store %arg25[%c0_142, %c0_143], %481 {strides = array<i32>} : memref<8x16xf32, #tpu.memory_space<vmem>>, vector<8x16xf32>,
    %c0_144 = arith.constant 0 : index
    %c0_145 = arith.constant 0 : index
    %496 = vector.load %arg26[%c0_144, %c0_145] : memref<8x16xf32, #tpu.memory_space<vmem>>, vector<8x16xf32>
    tpu.vector_store %arg26[%c0_144, %c0_145], %488 {strides = array<i32>} : memref<8x16xf32, #tpu.memory_space<vmem>>, vector<8x16xf32>,
    %c0_146 = arith.constant 0 : index
    %c0_147 = arith.constant 0 : index
    %497 = vector.load %arg12[%c0_146, %c0_147] : memref<16x128xf32, #tpu.memory_space<vmem>>, vector<16x128xf32>
    %cst_148 = arith.constant dense<0.000000e+00> : vector<8x128xf32>
    %498 = tpu.matmul %494, %497, %cst_148 {dimension_numbers = #tpu.dot_dimension_numbers<[1], [0], [0], [1], [0, 0, 1, 1], [], []>} : vector<8x16xf32>, vector<16x128xf32>, vector<8x128xf32> -> vector<8x128xf32>
    %c0_149 = arith.constant 0 : index
    %c0_150 = arith.constant 0 : index
    %499 = vector.load %arg14[%c0_149, %c0_150] : memref<1x128xf32, #tpu.memory_space<vmem>>, vector<1x128xf32>
    %500 = vector.broadcast %499 : vector<1x128xf32> to vector<8x128xf32>
    %501 = arith.addf %498, %500 : vector<8x128xf32>
    %c0_151 = arith.constant 0 : index
    %c0_152 = arith.constant 0 : index
    %502 = vector.load %arg13[%c0_151, %c0_152] : memref<32x128xf32, #tpu.memory_space<vmem>>, vector<32x128xf32>
    %cst_153 = arith.constant dense<0.000000e+00> : vector<8x128xf32>
    %503 = tpu.matmul %240, %502, %cst_153 {dimension_numbers = #tpu.dot_dimension_numbers<[1], [0], [0], [1], [0, 0, 1, 1], [], []>} : vector<8x32xf32>, vector<32x128xf32>, vector<8x128xf32> -> vector<8x128xf32>
    %504 = arith.addf %501, %503 : vector<8x128xf32>
    %505 = vector.extract_strided_slice %504 {offsets = [0, 0], sizes = [8, 32], strides = [1, 1]} : vector<8x128xf32> to vector<8x32xf32>
    %506 = arith.negf %505 : vector<8x32xf32>
    %507 = math.exp %506 : vector<8x32xf32>
    %cst_154 = arith.constant 1.000000e+00 : f32
    %508 = vector.broadcast %cst_154 : f32 to vector<8x32xf32>
    %509 = arith.addf %508, %507 : vector<8x32xf32>
    %510 = arith.divf %508, %509 : vector<8x32xf32>
    %511 = vector.extract_strided_slice %504 {offsets = [0, 32], sizes = [8, 32], strides = [1, 1]} : vector<8x128xf32> to vector<8x32xf32>
    %512 = arith.negf %511 : vector<8x32xf32>
    %513 = math.exp %512 : vector<8x32xf32>
    %cst_155 = arith.constant 1.000000e+00 : f32
    %514 = vector.broadcast %cst_155 : f32 to vector<8x32xf32>
    %515 = arith.addf %514, %513 : vector<8x32xf32>
    %516 = arith.divf %514, %515 : vector<8x32xf32>
    %517 = vector.extract_strided_slice %504 {offsets = [0, 64], sizes = [8, 32], strides = [1, 1]} : vector<8x128xf32> to vector<8x32xf32>
    %518 = math.tanh %517 : vector<8x32xf32>
    %519 = vector.extract_strided_slice %504 {offsets = [0, 96], sizes = [8, 32], strides = [1, 1]} : vector<8x128xf32> to vector<8x32xf32>
    %520 = arith.negf %519 : vector<8x32xf32>
    %521 = math.exp %520 : vector<8x32xf32>
    %cst_156 = arith.constant 1.000000e+00 : f32
    %522 = vector.broadcast %cst_156 : f32 to vector<8x32xf32>
    %523 = arith.addf %522, %521 : vector<8x32xf32>
    %524 = arith.divf %522, %523 : vector<8x32xf32>
    %525 = arith.mulf %516, %238 : vector<8x32xf32>
    %526 = arith.mulf %510, %518 : vector<8x32xf32>
    %527 = arith.addf %525, %526 : vector<8x32xf32>
    %528 = math.tanh %527 : vector<8x32xf32>
    %529 = arith.mulf %524, %528 : vector<8x32xf32>
    %c0_157 = arith.constant 0 : index
    %c0_158 = arith.constant 0 : index
    %530 = vector.load %arg28[%c0_157, %c0_158] : memref<64x32xf32, #tpu.memory_space<vmem>>, vector<8x32xf32>
    tpu.vector_store %arg28[%c0_157, %c0_158], %529 {strides = array<i32>} : memref<64x32xf32, #tpu.memory_space<vmem>>, vector<8x32xf32>,
    %cst_159 = arith.constant dense<0.000000e+00> : vector<8x128xf32>
    %531 = tpu.matmul %529, %502, %cst_159 {dimension_numbers = #tpu.dot_dimension_numbers<[1], [0], [0], [1], [0, 0, 1, 1], [], []>} : vector<8x32xf32>, vector<32x128xf32>, vector<8x128xf32> -> vector<8x128xf32>
    %532 = arith.addf %501, %531 : vector<8x128xf32>
    %533 = vector.extract_strided_slice %532 {offsets = [0, 0], sizes = [8, 32], strides = [1, 1]} : vector<8x128xf32> to vector<8x32xf32>
    %534 = arith.negf %533 : vector<8x32xf32>
    %535 = math.exp %534 : vector<8x32xf32>
    %cst_160 = arith.constant 1.000000e+00 : f32
    %536 = vector.broadcast %cst_160 : f32 to vector<8x32xf32>
    %537 = arith.addf %536, %535 : vector<8x32xf32>
    %538 = arith.divf %536, %537 : vector<8x32xf32>
    %539 = vector.extract_strided_slice %532 {offsets = [0, 32], sizes = [8, 32], strides = [1, 1]} : vector<8x128xf32> to vector<8x32xf32>
    %540 = arith.negf %539 : vector<8x32xf32>
    %541 = math.exp %540 : vector<8x32xf32>
    %cst_161 = arith.constant 1.000000e+00 : f32
    %542 = vector.broadcast %cst_161 : f32 to vector<8x32xf32>
    %543 = arith.addf %542, %541 : vector<8x32xf32>
    %544 = arith.divf %542, %543 : vector<8x32xf32>
    %545 = vector.extract_strided_slice %532 {offsets = [0, 64], sizes = [8, 32], strides = [1, 1]} : vector<8x128xf32> to vector<8x32xf32>
    %546 = math.tanh %545 : vector<8x32xf32>
    %547 = vector.extract_strided_slice %532 {offsets = [0, 96], sizes = [8, 32], strides = [1, 1]} : vector<8x128xf32> to vector<8x32xf32>
    %548 = arith.negf %547 : vector<8x32xf32>
    %549 = math.exp %548 : vector<8x32xf32>
    %cst_162 = arith.constant 1.000000e+00 : f32
    %550 = vector.broadcast %cst_162 : f32 to vector<8x32xf32>
    %551 = arith.addf %550, %549 : vector<8x32xf32>
    %552 = arith.divf %550, %551 : vector<8x32xf32>
    %553 = arith.mulf %544, %527 : vector<8x32xf32>
    %554 = arith.mulf %538, %546 : vector<8x32xf32>
    %555 = arith.addf %553, %554 : vector<8x32xf32>
    %556 = math.tanh %555 : vector<8x32xf32>
    %557 = arith.mulf %552, %556 : vector<8x32xf32>
    %c8_163 = arith.constant 8 : index
    %c0_164 = arith.constant 0 : index
    %558 = vector.load %arg28[%c8_163, %c0_164] : memref<64x32xf32, #tpu.memory_space<vmem>>, vector<8x32xf32>
    tpu.vector_store %arg28[%c8_163, %c0_164], %557 {strides = array<i32>} : memref<64x32xf32, #tpu.memory_space<vmem>>, vector<8x32xf32>,
    %cst_165 = arith.constant dense<0.000000e+00> : vector<8x128xf32>
    %559 = tpu.matmul %557, %502, %cst_165 {dimension_numbers = #tpu.dot_dimension_numbers<[1], [0], [0], [1], [0, 0, 1, 1], [], []>} : vector<8x32xf32>, vector<32x128xf32>, vector<8x128xf32> -> vector<8x128xf32>
    %560 = arith.addf %501, %559 : vector<8x128xf32>
    %561 = vector.extract_strided_slice %560 {offsets = [0, 0], sizes = [8, 32], strides = [1, 1]} : vector<8x128xf32> to vector<8x32xf32>
    %562 = arith.negf %561 : vector<8x32xf32>
    %563 = math.exp %562 : vector<8x32xf32>
    %cst_166 = arith.constant 1.000000e+00 : f32
    %564 = vector.broadcast %cst_166 : f32 to vector<8x32xf32>
    %565 = arith.addf %564, %563 : vector<8x32xf32>
    %566 = arith.divf %564, %565 : vector<8x32xf32>
    %567 = vector.extract_strided_slice %560 {offsets = [0, 32], sizes = [8, 32], strides = [1, 1]} : vector<8x128xf32> to vector<8x32xf32>
    %568 = arith.negf %567 : vector<8x32xf32>
    %569 = math.exp %568 : vector<8x32xf32>
    %cst_167 = arith.constant 1.000000e+00 : f32
    %570 = vector.broadcast %cst_167 : f32 to vector<8x32xf32>
    %571 = arith.addf %570, %569 : vector<8x32xf32>
    %572 = arith.divf %570, %571 : vector<8x32xf32>
    %573 = vector.extract_strided_slice %560 {offsets = [0, 64], sizes = [8, 32], strides = [1, 1]} : vector<8x128xf32> to vector<8x32xf32>
    %574 = math.tanh %573 : vector<8x32xf32>
    %575 = vector.extract_strided_slice %560 {offsets = [0, 96], sizes = [8, 32], strides = [1, 1]} : vector<8x128xf32> to vector<8x32xf32>
    %576 = arith.negf %575 : vector<8x32xf32>
    %577 = math.exp %576 : vector<8x32xf32>
    %cst_168 = arith.constant 1.000000e+00 : f32
    %578 = vector.broadcast %cst_168 : f32 to vector<8x32xf32>
    %579 = arith.addf %578, %577 : vector<8x32xf32>
    %580 = arith.divf %578, %579 : vector<8x32xf32>
    %581 = arith.mulf %572, %555 : vector<8x32xf32>
    %582 = arith.mulf %566, %574 : vector<8x32xf32>
    %583 = arith.addf %581, %582 : vector<8x32xf32>
    %584 = math.tanh %583 : vector<8x32xf32>
    %585 = arith.mulf %580, %584 : vector<8x32xf32>
    %c16_169 = arith.constant 16 : index
    %c0_170 = arith.constant 0 : index
    %586 = vector.load %arg28[%c16_169, %c0_170] : memref<64x32xf32, #tpu.memory_space<vmem>>, vector<8x32xf32>
    tpu.vector_store %arg28[%c16_169, %c0_170], %585 {strides = array<i32>} : memref<64x32xf32, #tpu.memory_space<vmem>>, vector<8x32xf32>,
    %cst_171 = arith.constant dense<0.000000e+00> : vector<8x128xf32>
    %587 = tpu.matmul %585, %502, %cst_171 {dimension_numbers = #tpu.dot_dimension_numbers<[1], [0], [0], [1], [0, 0, 1, 1], [], []>} : vector<8x32xf32>, vector<32x128xf32>, vector<8x128xf32> -> vector<8x128xf32>
    %588 = arith.addf %501, %587 : vector<8x128xf32>
    %589 = vector.extract_strided_slice %588 {offsets = [0, 0], sizes = [8, 32], strides = [1, 1]} : vector<8x128xf32> to vector<8x32xf32>
    %590 = arith.negf %589 : vector<8x32xf32>
    %591 = math.exp %590 : vector<8x32xf32>
    %cst_172 = arith.constant 1.000000e+00 : f32
    %592 = vector.broadcast %cst_172 : f32 to vector<8x32xf32>
    %593 = arith.addf %592, %591 : vector<8x32xf32>
    %594 = arith.divf %592, %593 : vector<8x32xf32>
    %595 = vector.extract_strided_slice %588 {offsets = [0, 32], sizes = [8, 32], strides = [1, 1]} : vector<8x128xf32> to vector<8x32xf32>
    %596 = arith.negf %595 : vector<8x32xf32>
    %597 = math.exp %596 : vector<8x32xf32>
    %cst_173 = arith.constant 1.000000e+00 : f32
    %598 = vector.broadcast %cst_173 : f32 to vector<8x32xf32>
    %599 = arith.addf %598, %597 : vector<8x32xf32>
    %600 = arith.divf %598, %599 : vector<8x32xf32>
    %601 = vector.extract_strided_slice %588 {offsets = [0, 64], sizes = [8, 32], strides = [1, 1]} : vector<8x128xf32> to vector<8x32xf32>
    %602 = math.tanh %601 : vector<8x32xf32>
    %603 = vector.extract_strided_slice %588 {offsets = [0, 96], sizes = [8, 32], strides = [1, 1]} : vector<8x128xf32> to vector<8x32xf32>
    %604 = arith.negf %603 : vector<8x32xf32>
    %605 = math.exp %604 : vector<8x32xf32>
    %cst_174 = arith.constant 1.000000e+00 : f32
    %606 = vector.broadcast %cst_174 : f32 to vector<8x32xf32>
    %607 = arith.addf %606, %605 : vector<8x32xf32>
    %608 = arith.divf %606, %607 : vector<8x32xf32>
    %609 = arith.mulf %600, %583 : vector<8x32xf32>
    %610 = arith.mulf %594, %602 : vector<8x32xf32>
    %611 = arith.addf %609, %610 : vector<8x32xf32>
    %612 = math.tanh %611 : vector<8x32xf32>
    %613 = arith.mulf %608, %612 : vector<8x32xf32>
    %c24_175 = arith.constant 24 : index
    %c0_176 = arith.constant 0 : index
    %614 = vector.load %arg28[%c24_175, %c0_176] : memref<64x32xf32, #tpu.memory_space<vmem>>, vector<8x32xf32>
    tpu.vector_store %arg28[%c24_175, %c0_176], %613 {strides = array<i32>} : memref<64x32xf32, #tpu.memory_space<vmem>>, vector<8x32xf32>,
    %cst_177 = arith.constant dense<0.000000e+00> : vector<8x128xf32>
    %615 = tpu.matmul %613, %502, %cst_177 {dimension_numbers = #tpu.dot_dimension_numbers<[1], [0], [0], [1], [0, 0, 1, 1], [], []>} : vector<8x32xf32>, vector<32x128xf32>, vector<8x128xf32> -> vector<8x128xf32>
    %616 = arith.addf %501, %615 : vector<8x128xf32>
    %617 = vector.extract_strided_slice %616 {offsets = [0, 0], sizes = [8, 32], strides = [1, 1]} : vector<8x128xf32> to vector<8x32xf32>
    %618 = arith.negf %617 : vector<8x32xf32>
    %619 = math.exp %618 : vector<8x32xf32>
    %cst_178 = arith.constant 1.000000e+00 : f32
    %620 = vector.broadcast %cst_178 : f32 to vector<8x32xf32>
    %621 = arith.addf %620, %619 : vector<8x32xf32>
    %622 = arith.divf %620, %621 : vector<8x32xf32>
    %623 = vector.extract_strided_slice %616 {offsets = [0, 32], sizes = [8, 32], strides = [1, 1]} : vector<8x128xf32> to vector<8x32xf32>
    %624 = arith.negf %623 : vector<8x32xf32>
    %625 = math.exp %624 : vector<8x32xf32>
    %cst_179 = arith.constant 1.000000e+00 : f32
    %626 = vector.broadcast %cst_179 : f32 to vector<8x32xf32>
    %627 = arith.addf %626, %625 : vector<8x32xf32>
    %628 = arith.divf %626, %627 : vector<8x32xf32>
    %629 = vector.extract_strided_slice %616 {offsets = [0, 64], sizes = [8, 32], strides = [1, 1]} : vector<8x128xf32> to vector<8x32xf32>
    %630 = math.tanh %629 : vector<8x32xf32>
    %631 = vector.extract_strided_slice %616 {offsets = [0, 96], sizes = [8, 32], strides = [1, 1]} : vector<8x128xf32> to vector<8x32xf32>
    %632 = arith.negf %631 : vector<8x32xf32>
    %633 = math.exp %632 : vector<8x32xf32>
    %cst_180 = arith.constant 1.000000e+00 : f32
    %634 = vector.broadcast %cst_180 : f32 to vector<8x32xf32>
    %635 = arith.addf %634, %633 : vector<8x32xf32>
    %636 = arith.divf %634, %635 : vector<8x32xf32>
    %637 = arith.mulf %628, %611 : vector<8x32xf32>
    %638 = arith.mulf %622, %630 : vector<8x32xf32>
    %639 = arith.addf %637, %638 : vector<8x32xf32>
    %640 = math.tanh %639 : vector<8x32xf32>
    %641 = arith.mulf %636, %640 : vector<8x32xf32>
    %c32_181 = arith.constant 32 : index
    %c0_182 = arith.constant 0 : index
    %642 = vector.load %arg28[%c32_181, %c0_182] : memref<64x32xf32, #tpu.memory_space<vmem>>, vector<8x32xf32>
    tpu.vector_store %arg28[%c32_181, %c0_182], %641 {strides = array<i32>} : memref<64x32xf32, #tpu.memory_space<vmem>>, vector<8x32xf32>,
    %cst_183 = arith.constant dense<0.000000e+00> : vector<8x128xf32>
    %643 = tpu.matmul %641, %502, %cst_183 {dimension_numbers = #tpu.dot_dimension_numbers<[1], [0], [0], [1], [0, 0, 1, 1], [], []>} : vector<8x32xf32>, vector<32x128xf32>, vector<8x128xf32> -> vector<8x128xf32>
    %644 = arith.addf %501, %643 : vector<8x128xf32>
    %645 = vector.extract_strided_slice %644 {offsets = [0, 0], sizes = [8, 32], strides = [1, 1]} : vector<8x128xf32> to vector<8x32xf32>
    %646 = arith.negf %645 : vector<8x32xf32>
    %647 = math.exp %646 : vector<8x32xf32>
    %cst_184 = arith.constant 1.000000e+00 : f32
    %648 = vector.broadcast %cst_184 : f32 to vector<8x32xf32>
    %649 = arith.addf %648, %647 : vector<8x32xf32>
    %650 = arith.divf %648, %649 : vector<8x32xf32>
    %651 = vector.extract_strided_slice %644 {offsets = [0, 32], sizes = [8, 32], strides = [1, 1]} : vector<8x128xf32> to vector<8x32xf32>
    %652 = arith.negf %651 : vector<8x32xf32>
    %653 = math.exp %652 : vector<8x32xf32>
    %cst_185 = arith.constant 1.000000e+00 : f32
    %654 = vector.broadcast %cst_185 : f32 to vector<8x32xf32>
    %655 = arith.addf %654, %653 : vector<8x32xf32>
    %656 = arith.divf %654, %655 : vector<8x32xf32>
    %657 = vector.extract_strided_slice %644 {offsets = [0, 64], sizes = [8, 32], strides = [1, 1]} : vector<8x128xf32> to vector<8x32xf32>
    %658 = math.tanh %657 : vector<8x32xf32>
    %659 = vector.extract_strided_slice %644 {offsets = [0, 96], sizes = [8, 32], strides = [1, 1]} : vector<8x128xf32> to vector<8x32xf32>
    %660 = arith.negf %659 : vector<8x32xf32>
    %661 = math.exp %660 : vector<8x32xf32>
    %cst_186 = arith.constant 1.000000e+00 : f32
    %662 = vector.broadcast %cst_186 : f32 to vector<8x32xf32>
    %663 = arith.addf %662, %661 : vector<8x32xf32>
    %664 = arith.divf %662, %663 : vector<8x32xf32>
    %665 = arith.mulf %656, %639 : vector<8x32xf32>
    %666 = arith.mulf %650, %658 : vector<8x32xf32>
    %667 = arith.addf %665, %666 : vector<8x32xf32>
    %668 = math.tanh %667 : vector<8x32xf32>
    %669 = arith.mulf %664, %668 : vector<8x32xf32>
    %c40_187 = arith.constant 40 : index
    %c0_188 = arith.constant 0 : index
    %670 = vector.load %arg28[%c40_187, %c0_188] : memref<64x32xf32, #tpu.memory_space<vmem>>, vector<8x32xf32>
    tpu.vector_store %arg28[%c40_187, %c0_188], %669 {strides = array<i32>} : memref<64x32xf32, #tpu.memory_space<vmem>>, vector<8x32xf32>,
    %cst_189 = arith.constant dense<0.000000e+00> : vector<8x128xf32>
    %671 = tpu.matmul %669, %502, %cst_189 {dimension_numbers = #tpu.dot_dimension_numbers<[1], [0], [0], [1], [0, 0, 1, 1], [], []>} : vector<8x32xf32>, vector<32x128xf32>, vector<8x128xf32> -> vector<8x128xf32>
    %672 = arith.addf %501, %671 : vector<8x128xf32>
    %673 = vector.extract_strided_slice %672 {offsets = [0, 0], sizes = [8, 32], strides = [1, 1]} : vector<8x128xf32> to vector<8x32xf32>
    %674 = arith.negf %673 : vector<8x32xf32>
    %675 = math.exp %674 : vector<8x32xf32>
    %cst_190 = arith.constant 1.000000e+00 : f32
    %676 = vector.broadcast %cst_190 : f32 to vector<8x32xf32>
    %677 = arith.addf %676, %675 : vector<8x32xf32>
    %678 = arith.divf %676, %677 : vector<8x32xf32>
    %679 = vector.extract_strided_slice %672 {offsets = [0, 32], sizes = [8, 32], strides = [1, 1]} : vector<8x128xf32> to vector<8x32xf32>
    %680 = arith.negf %679 : vector<8x32xf32>
    %681 = math.exp %680 : vector<8x32xf32>
    %cst_191 = arith.constant 1.000000e+00 : f32
    %682 = vector.broadcast %cst_191 : f32 to vector<8x32xf32>
    %683 = arith.addf %682, %681 : vector<8x32xf32>
    %684 = arith.divf %682, %683 : vector<8x32xf32>
    %685 = vector.extract_strided_slice %672 {offsets = [0, 64], sizes = [8, 32], strides = [1, 1]} : vector<8x128xf32> to vector<8x32xf32>
    %686 = math.tanh %685 : vector<8x32xf32>
    %687 = vector.extract_strided_slice %672 {offsets = [0, 96], sizes = [8, 32], strides = [1, 1]} : vector<8x128xf32> to vector<8x32xf32>
    %688 = arith.negf %687 : vector<8x32xf32>
    %689 = math.exp %688 : vector<8x32xf32>
    %cst_192 = arith.constant 1.000000e+00 : f32
    %690 = vector.broadcast %cst_192 : f32 to vector<8x32xf32>
    %691 = arith.addf %690, %689 : vector<8x32xf32>
    %692 = arith.divf %690, %691 : vector<8x32xf32>
    %693 = arith.mulf %684, %667 : vector<8x32xf32>
    %694 = arith.mulf %678, %686 : vector<8x32xf32>
    %695 = arith.addf %693, %694 : vector<8x32xf32>
    %696 = math.tanh %695 : vector<8x32xf32>
    %697 = arith.mulf %692, %696 : vector<8x32xf32>
    %c48_193 = arith.constant 48 : index
    %c0_194 = arith.constant 0 : index
    %698 = vector.load %arg28[%c48_193, %c0_194] : memref<64x32xf32, #tpu.memory_space<vmem>>, vector<8x32xf32>
    tpu.vector_store %arg28[%c48_193, %c0_194], %697 {strides = array<i32>} : memref<64x32xf32, #tpu.memory_space<vmem>>, vector<8x32xf32>,
    %cst_195 = arith.constant dense<0.000000e+00> : vector<8x128xf32>
    %699 = tpu.matmul %697, %502, %cst_195 {dimension_numbers = #tpu.dot_dimension_numbers<[1], [0], [0], [1], [0, 0, 1, 1], [], []>} : vector<8x32xf32>, vector<32x128xf32>, vector<8x128xf32> -> vector<8x128xf32>
    %700 = arith.addf %501, %699 : vector<8x128xf32>
    %701 = vector.extract_strided_slice %700 {offsets = [0, 0], sizes = [8, 32], strides = [1, 1]} : vector<8x128xf32> to vector<8x32xf32>
    %702 = arith.negf %701 : vector<8x32xf32>
    %703 = math.exp %702 : vector<8x32xf32>
    %cst_196 = arith.constant 1.000000e+00 : f32
    %704 = vector.broadcast %cst_196 : f32 to vector<8x32xf32>
    %705 = arith.addf %704, %703 : vector<8x32xf32>
    %706 = arith.divf %704, %705 : vector<8x32xf32>
    %707 = vector.extract_strided_slice %700 {offsets = [0, 32], sizes = [8, 32], strides = [1, 1]} : vector<8x128xf32> to vector<8x32xf32>
    %708 = arith.negf %707 : vector<8x32xf32>
    %709 = math.exp %708 : vector<8x32xf32>
    %cst_197 = arith.constant 1.000000e+00 : f32
    %710 = vector.broadcast %cst_197 : f32 to vector<8x32xf32>
    %711 = arith.addf %710, %709 : vector<8x32xf32>
    %712 = arith.divf %710, %711 : vector<8x32xf32>
    %713 = vector.extract_strided_slice %700 {offsets = [0, 64], sizes = [8, 32], strides = [1, 1]} : vector<8x128xf32> to vector<8x32xf32>
    %714 = math.tanh %713 : vector<8x32xf32>
    %715 = vector.extract_strided_slice %700 {offsets = [0, 96], sizes = [8, 32], strides = [1, 1]} : vector<8x128xf32> to vector<8x32xf32>
    %716 = arith.negf %715 : vector<8x32xf32>
    %717 = math.exp %716 : vector<8x32xf32>
    %cst_198 = arith.constant 1.000000e+00 : f32
    %718 = vector.broadcast %cst_198 : f32 to vector<8x32xf32>
    %719 = arith.addf %718, %717 : vector<8x32xf32>
    %720 = arith.divf %718, %719 : vector<8x32xf32>
    %721 = arith.mulf %712, %695 : vector<8x32xf32>
    %722 = arith.mulf %706, %714 : vector<8x32xf32>
    %723 = arith.addf %721, %722 : vector<8x32xf32>
    %724 = math.tanh %723 : vector<8x32xf32>
    %725 = arith.mulf %720, %724 : vector<8x32xf32>
    %c56_199 = arith.constant 56 : index
    %c0_200 = arith.constant 0 : index
    %726 = vector.load %arg28[%c56_199, %c0_200] : memref<64x32xf32, #tpu.memory_space<vmem>>, vector<8x32xf32>
    tpu.vector_store %arg28[%c56_199, %c0_200], %725 {strides = array<i32>} : memref<64x32xf32, #tpu.memory_space<vmem>>, vector<8x32xf32>,
    %c0_201 = arith.constant 0 : index
    %c0_202 = arith.constant 0 : index
    %727 = vector.load %arg28[%c0_201, %c0_202] : memref<64x32xf32, #tpu.memory_space<vmem>>, vector<64x32xf32>
    %c0_203 = arith.constant 0 : index
    %c0_204 = arith.constant 0 : index
    %728 = vector.load %arg15[%c0_203, %c0_204] : memref<32x128xf32, #tpu.memory_space<vmem>>, vector<32x128xf32>
    %cst_205 = arith.constant dense<0.000000e+00> : vector<64x128xf32>
    %729 = tpu.matmul %727, %728, %cst_205 {dimension_numbers = #tpu.dot_dimension_numbers<[1], [0], [0], [1], [0, 0, 1, 1], [], []>} : vector<64x32xf32>, vector<32x128xf32>, vector<64x128xf32> -> vector<64x128xf32>
    %c0_206 = arith.constant 0 : index
    %c0_207 = arith.constant 0 : index
    %730 = vector.load %arg17[%c0_206, %c0_207] : memref<1x128xf32, #tpu.memory_space<vmem>>, vector<1x128xf32>
    %731 = vector.broadcast %730 : vector<1x128xf32> to vector<64x128xf32>
    %732 = arith.addf %729, %731 : vector<64x128xf32>
    %c0_208 = arith.constant 0 : index
    %c0_209 = arith.constant 0 : index
    %733 = vector.load %arg27[%c0_208, %c0_209] : memref<64x128xf32, #tpu.memory_space<vmem>>, vector<64x128xf32>
    tpu.vector_store %arg27[%c0_208, %c0_209], %732 {strides = array<i32>} : memref<64x128xf32, #tpu.memory_space<vmem>>, vector<64x128xf32>,
    %c0_210 = arith.constant 0 : index
    %c0_211 = arith.constant 0 : index
    %734 = vector.load %arg16[%c0_210, %c0_211] : memref<32x128xf32, #tpu.memory_space<vmem>>, vector<32x128xf32>
    %c0_212 = arith.constant 0 : index
    %c0_213 = arith.constant 0 : index
    %735 = vector.load %arg27[%c0_212, %c0_213] : memref<64x128xf32, #tpu.memory_space<vmem>>, vector<8x128xf32>
    %cst_214 = arith.constant dense<0.000000e+00> : vector<8x128xf32>
    %736 = tpu.matmul %473, %734, %cst_214 {dimension_numbers = #tpu.dot_dimension_numbers<[1], [0], [0], [1], [0, 0, 1, 1], [], []>} : vector<8x32xf32>, vector<32x128xf32>, vector<8x128xf32> -> vector<8x128xf32>
    %737 = arith.addf %735, %736 : vector<8x128xf32>
    %738 = vector.extract_strided_slice %737 {offsets = [0, 0], sizes = [8, 32], strides = [1, 1]} : vector<8x128xf32> to vector<8x32xf32>
    %739 = arith.negf %738 : vector<8x32xf32>
    %740 = math.exp %739 : vector<8x32xf32>
    %cst_215 = arith.constant 1.000000e+00 : f32
    %741 = vector.broadcast %cst_215 : f32 to vector<8x32xf32>
    %742 = arith.addf %741, %740 : vector<8x32xf32>
    %743 = arith.divf %741, %742 : vector<8x32xf32>
    %744 = vector.extract_strided_slice %737 {offsets = [0, 32], sizes = [8, 32], strides = [1, 1]} : vector<8x128xf32> to vector<8x32xf32>
    %745 = arith.negf %744 : vector<8x32xf32>
    %746 = math.exp %745 : vector<8x32xf32>
    %cst_216 = arith.constant 1.000000e+00 : f32
    %747 = vector.broadcast %cst_216 : f32 to vector<8x32xf32>
    %748 = arith.addf %747, %746 : vector<8x32xf32>
    %749 = arith.divf %747, %748 : vector<8x32xf32>
    %750 = vector.extract_strided_slice %737 {offsets = [0, 64], sizes = [8, 32], strides = [1, 1]} : vector<8x128xf32> to vector<8x32xf32>
    %751 = math.tanh %750 : vector<8x32xf32>
    %752 = vector.extract_strided_slice %737 {offsets = [0, 96], sizes = [8, 32], strides = [1, 1]} : vector<8x128xf32> to vector<8x32xf32>
    %753 = arith.negf %752 : vector<8x32xf32>
    %754 = math.exp %753 : vector<8x32xf32>
    %cst_217 = arith.constant 1.000000e+00 : f32
    %755 = vector.broadcast %cst_217 : f32 to vector<8x32xf32>
    %756 = arith.addf %755, %754 : vector<8x32xf32>
    %757 = arith.divf %755, %756 : vector<8x32xf32>
    %758 = arith.mulf %749, %471 : vector<8x32xf32>
    %759 = arith.mulf %743, %751 : vector<8x32xf32>
    %760 = arith.addf %758, %759 : vector<8x32xf32>
    %761 = math.tanh %760 : vector<8x32xf32>
    %762 = arith.mulf %757, %761 : vector<8x32xf32>
    %763 = math.tanh %762 : vector<8x32xf32>
    %c0_218 = arith.constant 0 : index
    %c0_219 = arith.constant 0 : index
    %764 = vector.load %arg29[%c0_218, %c0_219] : memref<64x32xf32, #tpu.memory_space<vmem>>, vector<8x32xf32>
    tpu.vector_store %arg29[%c0_218, %c0_219], %763 {strides = array<i32>} : memref<64x32xf32, #tpu.memory_space<vmem>>, vector<8x32xf32>,
    %c8_220 = arith.constant 8 : index
    %c0_221 = arith.constant 0 : index
    %765 = vector.load %arg27[%c8_220, %c0_221] : memref<64x128xf32, #tpu.memory_space<vmem>>, vector<8x128xf32>
    %cst_222 = arith.constant dense<0.000000e+00> : vector<8x128xf32>
    %766 = tpu.matmul %762, %734, %cst_222 {dimension_numbers = #tpu.dot_dimension_numbers<[1], [0], [0], [1], [0, 0, 1, 1], [], []>} : vector<8x32xf32>, vector<32x128xf32>, vector<8x128xf32> -> vector<8x128xf32>
    %767 = arith.addf %765, %766 : vector<8x128xf32>
    %768 = vector.extract_strided_slice %767 {offsets = [0, 0], sizes = [8, 32], strides = [1, 1]} : vector<8x128xf32> to vector<8x32xf32>
    %769 = arith.negf %768 : vector<8x32xf32>
    %770 = math.exp %769 : vector<8x32xf32>
    %cst_223 = arith.constant 1.000000e+00 : f32
    %771 = vector.broadcast %cst_223 : f32 to vector<8x32xf32>
    %772 = arith.addf %771, %770 : vector<8x32xf32>
    %773 = arith.divf %771, %772 : vector<8x32xf32>
    %774 = vector.extract_strided_slice %767 {offsets = [0, 32], sizes = [8, 32], strides = [1, 1]} : vector<8x128xf32> to vector<8x32xf32>
    %775 = arith.negf %774 : vector<8x32xf32>
    %776 = math.exp %775 : vector<8x32xf32>
    %cst_224 = arith.constant 1.000000e+00 : f32
    %777 = vector.broadcast %cst_224 : f32 to vector<8x32xf32>
    %778 = arith.addf %777, %776 : vector<8x32xf32>
    %779 = arith.divf %777, %778 : vector<8x32xf32>
    %780 = vector.extract_strided_slice %767 {offsets = [0, 64], sizes = [8, 32], strides = [1, 1]} : vector<8x128xf32> to vector<8x32xf32>
    %781 = math.tanh %780 : vector<8x32xf32>
    %782 = vector.extract_strided_slice %767 {offsets = [0, 96], sizes = [8, 32], strides = [1, 1]} : vector<8x128xf32> to vector<8x32xf32>
    %783 = arith.negf %782 : vector<8x32xf32>
    %784 = math.exp %783 : vector<8x32xf32>
    %cst_225 = arith.constant 1.000000e+00 : f32
    %785 = vector.broadcast %cst_225 : f32 to vector<8x32xf32>
    %786 = arith.addf %785, %784 : vector<8x32xf32>
    %787 = arith.divf %785, %786 : vector<8x32xf32>
    %788 = arith.mulf %779, %760 : vector<8x32xf32>
    %789 = arith.mulf %773, %781 : vector<8x32xf32>
    %790 = arith.addf %788, %789 : vector<8x32xf32>
    %791 = math.tanh %790 : vector<8x32xf32>
    %792 = arith.mulf %787, %791 : vector<8x32xf32>
    %793 = math.tanh %792 : vector<8x32xf32>
    %c8_226 = arith.constant 8 : index
    %c0_227 = arith.constant 0 : index
    %794 = vector.load %arg29[%c8_226, %c0_227] : memref<64x32xf32, #tpu.memory_space<vmem>>, vector<8x32xf32>
    tpu.vector_store %arg29[%c8_226, %c0_227], %793 {strides = array<i32>} : memref<64x32xf32, #tpu.memory_space<vmem>>, vector<8x32xf32>,
    %c16_228 = arith.constant 16 : index
    %c0_229 = arith.constant 0 : index
    %795 = vector.load %arg27[%c16_228, %c0_229] : memref<64x128xf32, #tpu.memory_space<vmem>>, vector<8x128xf32>
    %cst_230 = arith.constant dense<0.000000e+00> : vector<8x128xf32>
    %796 = tpu.matmul %792, %734, %cst_230 {dimension_numbers = #tpu.dot_dimension_numbers<[1], [0], [0], [1], [0, 0, 1, 1], [], []>} : vector<8x32xf32>, vector<32x128xf32>, vector<8x128xf32> -> vector<8x128xf32>
    %797 = arith.addf %795, %796 : vector<8x128xf32>
    %798 = vector.extract_strided_slice %797 {offsets = [0, 0], sizes = [8, 32], strides = [1, 1]} : vector<8x128xf32> to vector<8x32xf32>
    %799 = arith.negf %798 : vector<8x32xf32>
    %800 = math.exp %799 : vector<8x32xf32>
    %cst_231 = arith.constant 1.000000e+00 : f32
    %801 = vector.broadcast %cst_231 : f32 to vector<8x32xf32>
    %802 = arith.addf %801, %800 : vector<8x32xf32>
    %803 = arith.divf %801, %802 : vector<8x32xf32>
    %804 = vector.extract_strided_slice %797 {offsets = [0, 32], sizes = [8, 32], strides = [1, 1]} : vector<8x128xf32> to vector<8x32xf32>
    %805 = arith.negf %804 : vector<8x32xf32>
    %806 = math.exp %805 : vector<8x32xf32>
    %cst_232 = arith.constant 1.000000e+00 : f32
    %807 = vector.broadcast %cst_232 : f32 to vector<8x32xf32>
    %808 = arith.addf %807, %806 : vector<8x32xf32>
    %809 = arith.divf %807, %808 : vector<8x32xf32>
    %810 = vector.extract_strided_slice %797 {offsets = [0, 64], sizes = [8, 32], strides = [1, 1]} : vector<8x128xf32> to vector<8x32xf32>
    %811 = math.tanh %810 : vector<8x32xf32>
    %812 = vector.extract_strided_slice %797 {offsets = [0, 96], sizes = [8, 32], strides = [1, 1]} : vector<8x128xf32> to vector<8x32xf32>
    %813 = arith.negf %812 : vector<8x32xf32>
    %814 = math.exp %813 : vector<8x32xf32>
    %cst_233 = arith.constant 1.000000e+00 : f32
    %815 = vector.broadcast %cst_233 : f32 to vector<8x32xf32>
    %816 = arith.addf %815, %814 : vector<8x32xf32>
    %817 = arith.divf %815, %816 : vector<8x32xf32>
    %818 = arith.mulf %809, %790 : vector<8x32xf32>
    %819 = arith.mulf %803, %811 : vector<8x32xf32>
    %820 = arith.addf %818, %819 : vector<8x32xf32>
    %821 = math.tanh %820 : vector<8x32xf32>
    %822 = arith.mulf %817, %821 : vector<8x32xf32>
    %823 = math.tanh %822 : vector<8x32xf32>
    %c16_234 = arith.constant 16 : index
    %c0_235 = arith.constant 0 : index
    %824 = vector.load %arg29[%c16_234, %c0_235] : memref<64x32xf32, #tpu.memory_space<vmem>>, vector<8x32xf32>
    tpu.vector_store %arg29[%c16_234, %c0_235], %823 {strides = array<i32>} : memref<64x32xf32, #tpu.memory_space<vmem>>, vector<8x32xf32>,
    %c24_236 = arith.constant 24 : index
    %c0_237 = arith.constant 0 : index
    %825 = vector.load %arg27[%c24_236, %c0_237] : memref<64x128xf32, #tpu.memory_space<vmem>>, vector<8x128xf32>
    %cst_238 = arith.constant dense<0.000000e+00> : vector<8x128xf32>
    %826 = tpu.matmul %822, %734, %cst_238 {dimension_numbers = #tpu.dot_dimension_numbers<[1], [0], [0], [1], [0, 0, 1, 1], [], []>} : vector<8x32xf32>, vector<32x128xf32>, vector<8x128xf32> -> vector<8x128xf32>
    %827 = arith.addf %825, %826 : vector<8x128xf32>
    %828 = vector.extract_strided_slice %827 {offsets = [0, 0], sizes = [8, 32], strides = [1, 1]} : vector<8x128xf32> to vector<8x32xf32>
    %829 = arith.negf %828 : vector<8x32xf32>
    %830 = math.exp %829 : vector<8x32xf32>
    %cst_239 = arith.constant 1.000000e+00 : f32
    %831 = vector.broadcast %cst_239 : f32 to vector<8x32xf32>
    %832 = arith.addf %831, %830 : vector<8x32xf32>
    %833 = arith.divf %831, %832 : vector<8x32xf32>
    %834 = vector.extract_strided_slice %827 {offsets = [0, 32], sizes = [8, 32], strides = [1, 1]} : vector<8x128xf32> to vector<8x32xf32>
    %835 = arith.negf %834 : vector<8x32xf32>
    %836 = math.exp %835 : vector<8x32xf32>
    %cst_240 = arith.constant 1.000000e+00 : f32
    %837 = vector.broadcast %cst_240 : f32 to vector<8x32xf32>
    %838 = arith.addf %837, %836 : vector<8x32xf32>
    %839 = arith.divf %837, %838 : vector<8x32xf32>
    %840 = vector.extract_strided_slice %827 {offsets = [0, 64], sizes = [8, 32], strides = [1, 1]} : vector<8x128xf32> to vector<8x32xf32>
    %841 = math.tanh %840 : vector<8x32xf32>
    %842 = vector.extract_strided_slice %827 {offsets = [0, 96], sizes = [8, 32], strides = [1, 1]} : vector<8x128xf32> to vector<8x32xf32>
    %843 = arith.negf %842 : vector<8x32xf32>
    %844 = math.exp %843 : vector<8x32xf32>
    %cst_241 = arith.constant 1.000000e+00 : f32
    %845 = vector.broadcast %cst_241 : f32 to vector<8x32xf32>
    %846 = arith.addf %845, %844 : vector<8x32xf32>
    %847 = arith.divf %845, %846 : vector<8x32xf32>
    %848 = arith.mulf %839, %820 : vector<8x32xf32>
    %849 = arith.mulf %833, %841 : vector<8x32xf32>
    %850 = arith.addf %848, %849 : vector<8x32xf32>
    %851 = math.tanh %850 : vector<8x32xf32>
    %852 = arith.mulf %847, %851 : vector<8x32xf32>
    %853 = math.tanh %852 : vector<8x32xf32>
    %c24_242 = arith.constant 24 : index
    %c0_243 = arith.constant 0 : index
    %854 = vector.load %arg29[%c24_242, %c0_243] : memref<64x32xf32, #tpu.memory_space<vmem>>, vector<8x32xf32>
    tpu.vector_store %arg29[%c24_242, %c0_243], %853 {strides = array<i32>} : memref<64x32xf32, #tpu.memory_space<vmem>>, vector<8x32xf32>,
    %c32_244 = arith.constant 32 : index
    %c0_245 = arith.constant 0 : index
    %855 = vector.load %arg27[%c32_244, %c0_245] : memref<64x128xf32, #tpu.memory_space<vmem>>, vector<8x128xf32>
    %cst_246 = arith.constant dense<0.000000e+00> : vector<8x128xf32>
    %856 = tpu.matmul %852, %734, %cst_246 {dimension_numbers = #tpu.dot_dimension_numbers<[1], [0], [0], [1], [0, 0, 1, 1], [], []>} : vector<8x32xf32>, vector<32x128xf32>, vector<8x128xf32> -> vector<8x128xf32>
    %857 = arith.addf %855, %856 : vector<8x128xf32>
    %858 = vector.extract_strided_slice %857 {offsets = [0, 0], sizes = [8, 32], strides = [1, 1]} : vector<8x128xf32> to vector<8x32xf32>
    %859 = arith.negf %858 : vector<8x32xf32>
    %860 = math.exp %859 : vector<8x32xf32>
    %cst_247 = arith.constant 1.000000e+00 : f32
    %861 = vector.broadcast %cst_247 : f32 to vector<8x32xf32>
    %862 = arith.addf %861, %860 : vector<8x32xf32>
    %863 = arith.divf %861, %862 : vector<8x32xf32>
    %864 = vector.extract_strided_slice %857 {offsets = [0, 32], sizes = [8, 32], strides = [1, 1]} : vector<8x128xf32> to vector<8x32xf32>
    %865 = arith.negf %864 : vector<8x32xf32>
    %866 = math.exp %865 : vector<8x32xf32>
    %cst_248 = arith.constant 1.000000e+00 : f32
    %867 = vector.broadcast %cst_248 : f32 to vector<8x32xf32>
    %868 = arith.addf %867, %866 : vector<8x32xf32>
    %869 = arith.divf %867, %868 : vector<8x32xf32>
    %870 = vector.extract_strided_slice %857 {offsets = [0, 64], sizes = [8, 32], strides = [1, 1]} : vector<8x128xf32> to vector<8x32xf32>
    %871 = math.tanh %870 : vector<8x32xf32>
    %872 = vector.extract_strided_slice %857 {offsets = [0, 96], sizes = [8, 32], strides = [1, 1]} : vector<8x128xf32> to vector<8x32xf32>
    %873 = arith.negf %872 : vector<8x32xf32>
    %874 = math.exp %873 : vector<8x32xf32>
    %cst_249 = arith.constant 1.000000e+00 : f32
    %875 = vector.broadcast %cst_249 : f32 to vector<8x32xf32>
    %876 = arith.addf %875, %874 : vector<8x32xf32>
    %877 = arith.divf %875, %876 : vector<8x32xf32>
    %878 = arith.mulf %869, %850 : vector<8x32xf32>
    %879 = arith.mulf %863, %871 : vector<8x32xf32>
    %880 = arith.addf %878, %879 : vector<8x32xf32>
    %881 = math.tanh %880 : vector<8x32xf32>
    %882 = arith.mulf %877, %881 : vector<8x32xf32>
    %883 = math.tanh %882 : vector<8x32xf32>
    %c32_250 = arith.constant 32 : index
    %c0_251 = arith.constant 0 : index
    %884 = vector.load %arg29[%c32_250, %c0_251] : memref<64x32xf32, #tpu.memory_space<vmem>>, vector<8x32xf32>
    tpu.vector_store %arg29[%c32_250, %c0_251], %883 {strides = array<i32>} : memref<64x32xf32, #tpu.memory_space<vmem>>, vector<8x32xf32>,
    %c40_252 = arith.constant 40 : index
    %c0_253 = arith.constant 0 : index
    %885 = vector.load %arg27[%c40_252, %c0_253] : memref<64x128xf32, #tpu.memory_space<vmem>>, vector<8x128xf32>
    %cst_254 = arith.constant dense<0.000000e+00> : vector<8x128xf32>
    %886 = tpu.matmul %882, %734, %cst_254 {dimension_numbers = #tpu.dot_dimension_numbers<[1], [0], [0], [1], [0, 0, 1, 1], [], []>} : vector<8x32xf32>, vector<32x128xf32>, vector<8x128xf32> -> vector<8x128xf32>
    %887 = arith.addf %885, %886 : vector<8x128xf32>
    %888 = vector.extract_strided_slice %887 {offsets = [0, 0], sizes = [8, 32], strides = [1, 1]} : vector<8x128xf32> to vector<8x32xf32>
    %889 = arith.negf %888 : vector<8x32xf32>
    %890 = math.exp %889 : vector<8x32xf32>
    %cst_255 = arith.constant 1.000000e+00 : f32
    %891 = vector.broadcast %cst_255 : f32 to vector<8x32xf32>
    %892 = arith.addf %891, %890 : vector<8x32xf32>
    %893 = arith.divf %891, %892 : vector<8x32xf32>
    %894 = vector.extract_strided_slice %887 {offsets = [0, 32], sizes = [8, 32], strides = [1, 1]} : vector<8x128xf32> to vector<8x32xf32>
    %895 = arith.negf %894 : vector<8x32xf32>
    %896 = math.exp %895 : vector<8x32xf32>
    %cst_256 = arith.constant 1.000000e+00 : f32
    %897 = vector.broadcast %cst_256 : f32 to vector<8x32xf32>
    %898 = arith.addf %897, %896 : vector<8x32xf32>
    %899 = arith.divf %897, %898 : vector<8x32xf32>
    %900 = vector.extract_strided_slice %887 {offsets = [0, 64], sizes = [8, 32], strides = [1, 1]} : vector<8x128xf32> to vector<8x32xf32>
    %901 = math.tanh %900 : vector<8x32xf32>
    %902 = vector.extract_strided_slice %887 {offsets = [0, 96], sizes = [8, 32], strides = [1, 1]} : vector<8x128xf32> to vector<8x32xf32>
    %903 = arith.negf %902 : vector<8x32xf32>
    %904 = math.exp %903 : vector<8x32xf32>
    %cst_257 = arith.constant 1.000000e+00 : f32
    %905 = vector.broadcast %cst_257 : f32 to vector<8x32xf32>
    %906 = arith.addf %905, %904 : vector<8x32xf32>
    %907 = arith.divf %905, %906 : vector<8x32xf32>
    %908 = arith.mulf %899, %880 : vector<8x32xf32>
    %909 = arith.mulf %893, %901 : vector<8x32xf32>
    %910 = arith.addf %908, %909 : vector<8x32xf32>
    %911 = math.tanh %910 : vector<8x32xf32>
    %912 = arith.mulf %907, %911 : vector<8x32xf32>
    %913 = math.tanh %912 : vector<8x32xf32>
    %c40_258 = arith.constant 40 : index
    %c0_259 = arith.constant 0 : index
    %914 = vector.load %arg29[%c40_258, %c0_259] : memref<64x32xf32, #tpu.memory_space<vmem>>, vector<8x32xf32>
    tpu.vector_store %arg29[%c40_258, %c0_259], %913 {strides = array<i32>} : memref<64x32xf32, #tpu.memory_space<vmem>>, vector<8x32xf32>,
    %c48_260 = arith.constant 48 : index
    %c0_261 = arith.constant 0 : index
    %915 = vector.load %arg27[%c48_260, %c0_261] : memref<64x128xf32, #tpu.memory_space<vmem>>, vector<8x128xf32>
    %cst_262 = arith.constant dense<0.000000e+00> : vector<8x128xf32>
    %916 = tpu.matmul %912, %734, %cst_262 {dimension_numbers = #tpu.dot_dimension_numbers<[1], [0], [0], [1], [0, 0, 1, 1], [], []>} : vector<8x32xf32>, vector<32x128xf32>, vector<8x128xf32> -> vector<8x128xf32>
    %917 = arith.addf %915, %916 : vector<8x128xf32>
    %918 = vector.extract_strided_slice %917 {offsets = [0, 0], sizes = [8, 32], strides = [1, 1]} : vector<8x128xf32> to vector<8x32xf32>
    %919 = arith.negf %918 : vector<8x32xf32>
    %920 = math.exp %919 : vector<8x32xf32>
    %cst_263 = arith.constant 1.000000e+00 : f32
    %921 = vector.broadcast %cst_263 : f32 to vector<8x32xf32>
    %922 = arith.addf %921, %920 : vector<8x32xf32>
    %923 = arith.divf %921, %922 : vector<8x32xf32>
    %924 = vector.extract_strided_slice %917 {offsets = [0, 32], sizes = [8, 32], strides = [1, 1]} : vector<8x128xf32> to vector<8x32xf32>
    %925 = arith.negf %924 : vector<8x32xf32>
    %926 = math.exp %925 : vector<8x32xf32>
    %cst_264 = arith.constant 1.000000e+00 : f32
    %927 = vector.broadcast %cst_264 : f32 to vector<8x32xf32>
    %928 = arith.addf %927, %926 : vector<8x32xf32>
    %929 = arith.divf %927, %928 : vector<8x32xf32>
    %930 = vector.extract_strided_slice %917 {offsets = [0, 64], sizes = [8, 32], strides = [1, 1]} : vector<8x128xf32> to vector<8x32xf32>
    %931 = math.tanh %930 : vector<8x32xf32>
    %932 = vector.extract_strided_slice %917 {offsets = [0, 96], sizes = [8, 32], strides = [1, 1]} : vector<8x128xf32> to vector<8x32xf32>
    %933 = arith.negf %932 : vector<8x32xf32>
    %934 = math.exp %933 : vector<8x32xf32>
    %cst_265 = arith.constant 1.000000e+00 : f32
    %935 = vector.broadcast %cst_265 : f32 to vector<8x32xf32>
    %936 = arith.addf %935, %934 : vector<8x32xf32>
    %937 = arith.divf %935, %936 : vector<8x32xf32>
    %938 = arith.mulf %929, %910 : vector<8x32xf32>
    %939 = arith.mulf %923, %931 : vector<8x32xf32>
    %940 = arith.addf %938, %939 : vector<8x32xf32>
    %941 = math.tanh %940 : vector<8x32xf32>
    %942 = arith.mulf %937, %941 : vector<8x32xf32>
    %943 = math.tanh %942 : vector<8x32xf32>
    %c48_266 = arith.constant 48 : index
    %c0_267 = arith.constant 0 : index
    %944 = vector.load %arg29[%c48_266, %c0_267] : memref<64x32xf32, #tpu.memory_space<vmem>>, vector<8x32xf32>
    tpu.vector_store %arg29[%c48_266, %c0_267], %943 {strides = array<i32>} : memref<64x32xf32, #tpu.memory_space<vmem>>, vector<8x32xf32>,
    %c56_268 = arith.constant 56 : index
    %c0_269 = arith.constant 0 : index
    %945 = vector.load %arg27[%c56_268, %c0_269] : memref<64x128xf32, #tpu.memory_space<vmem>>, vector<8x128xf32>
    %cst_270 = arith.constant dense<0.000000e+00> : vector<8x128xf32>
    %946 = tpu.matmul %942, %734, %cst_270 {dimension_numbers = #tpu.dot_dimension_numbers<[1], [0], [0], [1], [0, 0, 1, 1], [], []>} : vector<8x32xf32>, vector<32x128xf32>, vector<8x128xf32> -> vector<8x128xf32>
    %947 = arith.addf %945, %946 : vector<8x128xf32>
    %948 = vector.extract_strided_slice %947 {offsets = [0, 0], sizes = [8, 32], strides = [1, 1]} : vector<8x128xf32> to vector<8x32xf32>
    %949 = arith.negf %948 : vector<8x32xf32>
    %950 = math.exp %949 : vector<8x32xf32>
    %cst_271 = arith.constant 1.000000e+00 : f32
    %951 = vector.broadcast %cst_271 : f32 to vector<8x32xf32>
    %952 = arith.addf %951, %950 : vector<8x32xf32>
    %953 = arith.divf %951, %952 : vector<8x32xf32>
    %954 = vector.extract_strided_slice %947 {offsets = [0, 32], sizes = [8, 32], strides = [1, 1]} : vector<8x128xf32> to vector<8x32xf32>
    %955 = arith.negf %954 : vector<8x32xf32>
    %956 = math.exp %955 : vector<8x32xf32>
    %cst_272 = arith.constant 1.000000e+00 : f32
    %957 = vector.broadcast %cst_272 : f32 to vector<8x32xf32>
    %958 = arith.addf %957, %956 : vector<8x32xf32>
    %959 = arith.divf %957, %958 : vector<8x32xf32>
    %960 = vector.extract_strided_slice %947 {offsets = [0, 64], sizes = [8, 32], strides = [1, 1]} : vector<8x128xf32> to vector<8x32xf32>
    %961 = math.tanh %960 : vector<8x32xf32>
    %962 = vector.extract_strided_slice %947 {offsets = [0, 96], sizes = [8, 32], strides = [1, 1]} : vector<8x128xf32> to vector<8x32xf32>
    %963 = arith.negf %962 : vector<8x32xf32>
    %964 = math.exp %963 : vector<8x32xf32>
    %cst_273 = arith.constant 1.000000e+00 : f32
    %965 = vector.broadcast %cst_273 : f32 to vector<8x32xf32>
    %966 = arith.addf %965, %964 : vector<8x32xf32>
    %967 = arith.divf %965, %966 : vector<8x32xf32>
    %968 = arith.mulf %959, %940 : vector<8x32xf32>
    %969 = arith.mulf %953, %961 : vector<8x32xf32>
    %970 = arith.addf %968, %969 : vector<8x32xf32>
    %971 = math.tanh %970 : vector<8x32xf32>
    %972 = arith.mulf %967, %971 : vector<8x32xf32>
    %973 = math.tanh %972 : vector<8x32xf32>
    %c56_274 = arith.constant 56 : index
    %c0_275 = arith.constant 0 : index
    %974 = vector.load %arg29[%c56_274, %c0_275] : memref<64x32xf32, #tpu.memory_space<vmem>>, vector<8x32xf32>
    tpu.vector_store %arg29[%c56_274, %c0_275], %973 {strides = array<i32>} : memref<64x32xf32, #tpu.memory_space<vmem>>, vector<8x32xf32>,
    %c0_276 = arith.constant 0 : index
    %c0_277 = arith.constant 0 : index
    %975 = vector.load %arg29[%c0_276, %c0_277] : memref<64x32xf32, #tpu.memory_space<vmem>>, vector<64x32xf32>
    %c0_278 = arith.constant 0 : index
    %c0_279 = arith.constant 0 : index
    %976 = vector.load %arg18[%c0_278, %c0_279] : memref<32x64xf32, #tpu.memory_space<vmem>>, vector<32x64xf32>
    %cst_280 = arith.constant dense<0.000000e+00> : vector<64x64xf32>
    %977 = tpu.matmul %975, %976, %cst_280 {dimension_numbers = #tpu.dot_dimension_numbers<[1], [0], [0], [1], [0, 0, 1, 1], [], []>} : vector<64x32xf32>, vector<32x64xf32>, vector<64x64xf32> -> vector<64x64xf32>
    %c0_281 = arith.constant 0 : index
    %c0_282 = arith.constant 0 : index
    %978 = vector.load %arg20[%c0_281, %c0_282] : memref<1x64xf32, #tpu.memory_space<vmem>>, vector<1x64xf32>
    %979 = vector.broadcast %978 : vector<1x64xf32> to vector<64x64xf32>
    %980 = arith.addf %977, %979 : vector<64x64xf32>
    %c0_283 = arith.constant 0 : index
    %c0_284 = arith.constant 0 : index
    %981 = vector.load %arg30[%c0_283, %c0_284] : memref<64x64xf32, #tpu.memory_space<vmem>>, vector<64x64xf32>
    tpu.vector_store %arg30[%c0_283, %c0_284], %980 {strides = array<i32>} : memref<64x64xf32, #tpu.memory_space<vmem>>, vector<64x64xf32>,
    %c0_285 = arith.constant 0 : index
    %c0_286 = arith.constant 0 : index
    %982 = vector.load %arg19[%c0_285, %c0_286] : memref<16x64xf32, #tpu.memory_space<vmem>>, vector<16x64xf32>
    %c0_287 = arith.constant 0 : index
    %c0_288 = arith.constant 0 : index
    %983 = vector.load %arg30[%c0_287, %c0_288] : memref<64x64xf32, #tpu.memory_space<vmem>>, vector<8x64xf32>
    %cst_289 = arith.constant dense<0.000000e+00> : vector<8x64xf32>
    %984 = tpu.matmul %1, %982, %cst_289 {dimension_numbers = #tpu.dot_dimension_numbers<[1], [0], [0], [1], [0, 0, 1, 1], [], []>} : vector<8x16xf32>, vector<16x64xf32>, vector<8x64xf32> -> vector<8x64xf32>
    %985 = arith.addf %983, %984 : vector<8x64xf32>
    %986 = vector.extract_strided_slice %985 {offsets = [0, 0], sizes = [8, 16], strides = [1, 1]} : vector<8x64xf32> to vector<8x16xf32>
    %987 = arith.negf %986 : vector<8x16xf32>
    %988 = math.exp %987 : vector<8x16xf32>
    %cst_290 = arith.constant 1.000000e+00 : f32
    %989 = vector.broadcast %cst_290 : f32 to vector<8x16xf32>
    %990 = arith.addf %989, %988 : vector<8x16xf32>
    %991 = arith.divf %989, %990 : vector<8x16xf32>
    %992 = vector.extract_strided_slice %985 {offsets = [0, 16], sizes = [8, 16], strides = [1, 1]} : vector<8x64xf32> to vector<8x16xf32>
    %993 = arith.negf %992 : vector<8x16xf32>
    %994 = math.exp %993 : vector<8x16xf32>
    %cst_291 = arith.constant 1.000000e+00 : f32
    %995 = vector.broadcast %cst_291 : f32 to vector<8x16xf32>
    %996 = arith.addf %995, %994 : vector<8x16xf32>
    %997 = arith.divf %995, %996 : vector<8x16xf32>
    %998 = vector.extract_strided_slice %985 {offsets = [0, 32], sizes = [8, 16], strides = [1, 1]} : vector<8x64xf32> to vector<8x16xf32>
    %999 = math.tanh %998 : vector<8x16xf32>
    %1000 = vector.extract_strided_slice %985 {offsets = [0, 48], sizes = [8, 16], strides = [1, 1]} : vector<8x64xf32> to vector<8x16xf32>
    %1001 = arith.negf %1000 : vector<8x16xf32>
    %1002 = math.exp %1001 : vector<8x16xf32>
    %cst_292 = arith.constant 1.000000e+00 : f32
    %1003 = vector.broadcast %cst_292 : f32 to vector<8x16xf32>
    %1004 = arith.addf %1003, %1002 : vector<8x16xf32>
    %1005 = arith.divf %1003, %1004 : vector<8x16xf32>
    %1006 = arith.mulf %997, %1 : vector<8x16xf32>
    %1007 = arith.mulf %991, %999 : vector<8x16xf32>
    %1008 = arith.addf %1006, %1007 : vector<8x16xf32>
    %1009 = math.tanh %1008 : vector<8x16xf32>
    %1010 = arith.mulf %1005, %1009 : vector<8x16xf32>
    %c0_293 = arith.constant 0 : index
    %c0_294 = arith.constant 0 : index
    %1011 = vector.load %arg31[%c0_293, %c0_294] : memref<64x16xf32, #tpu.memory_space<vmem>>, vector<8x16xf32>
    tpu.vector_store %arg31[%c0_293, %c0_294], %1010 {strides = array<i32>} : memref<64x16xf32, #tpu.memory_space<vmem>>, vector<8x16xf32>,
    %c8_295 = arith.constant 8 : index
    %c0_296 = arith.constant 0 : index
    %1012 = vector.load %arg30[%c8_295, %c0_296] : memref<64x64xf32, #tpu.memory_space<vmem>>, vector<8x64xf32>
    %cst_297 = arith.constant dense<0.000000e+00> : vector<8x64xf32>
    %1013 = tpu.matmul %1010, %982, %cst_297 {dimension_numbers = #tpu.dot_dimension_numbers<[1], [0], [0], [1], [0, 0, 1, 1], [], []>} : vector<8x16xf32>, vector<16x64xf32>, vector<8x64xf32> -> vector<8x64xf32>
    %1014 = arith.addf %1012, %1013 : vector<8x64xf32>
    %1015 = vector.extract_strided_slice %1014 {offsets = [0, 0], sizes = [8, 16], strides = [1, 1]} : vector<8x64xf32> to vector<8x16xf32>
    %1016 = arith.negf %1015 : vector<8x16xf32>
    %1017 = math.exp %1016 : vector<8x16xf32>
    %cst_298 = arith.constant 1.000000e+00 : f32
    %1018 = vector.broadcast %cst_298 : f32 to vector<8x16xf32>
    %1019 = arith.addf %1018, %1017 : vector<8x16xf32>
    %1020 = arith.divf %1018, %1019 : vector<8x16xf32>
    %1021 = vector.extract_strided_slice %1014 {offsets = [0, 16], sizes = [8, 16], strides = [1, 1]} : vector<8x64xf32> to vector<8x16xf32>
    %1022 = arith.negf %1021 : vector<8x16xf32>
    %1023 = math.exp %1022 : vector<8x16xf32>
    %cst_299 = arith.constant 1.000000e+00 : f32
    %1024 = vector.broadcast %cst_299 : f32 to vector<8x16xf32>
    %1025 = arith.addf %1024, %1023 : vector<8x16xf32>
    %1026 = arith.divf %1024, %1025 : vector<8x16xf32>
    %1027 = vector.extract_strided_slice %1014 {offsets = [0, 32], sizes = [8, 16], strides = [1, 1]} : vector<8x64xf32> to vector<8x16xf32>
    %1028 = math.tanh %1027 : vector<8x16xf32>
    %1029 = vector.extract_strided_slice %1014 {offsets = [0, 48], sizes = [8, 16], strides = [1, 1]} : vector<8x64xf32> to vector<8x16xf32>
    %1030 = arith.negf %1029 : vector<8x16xf32>
    %1031 = math.exp %1030 : vector<8x16xf32>
    %cst_300 = arith.constant 1.000000e+00 : f32
    %1032 = vector.broadcast %cst_300 : f32 to vector<8x16xf32>
    %1033 = arith.addf %1032, %1031 : vector<8x16xf32>
    %1034 = arith.divf %1032, %1033 : vector<8x16xf32>
    %1035 = arith.mulf %1026, %1008 : vector<8x16xf32>
    %1036 = arith.mulf %1020, %1028 : vector<8x16xf32>
    %1037 = arith.addf %1035, %1036 : vector<8x16xf32>
    %1038 = math.tanh %1037 : vector<8x16xf32>
    %1039 = arith.mulf %1034, %1038 : vector<8x16xf32>
    %c8_301 = arith.constant 8 : index
    %c0_302 = arith.constant 0 : index
    %1040 = vector.load %arg31[%c8_301, %c0_302] : memref<64x16xf32, #tpu.memory_space<vmem>>, vector<8x16xf32>
    tpu.vector_store %arg31[%c8_301, %c0_302], %1039 {strides = array<i32>} : memref<64x16xf32, #tpu.memory_space<vmem>>, vector<8x16xf32>,
    %c16_303 = arith.constant 16 : index
    %c0_304 = arith.constant 0 : index
    %1041 = vector.load %arg30[%c16_303, %c0_304] : memref<64x64xf32, #tpu.memory_space<vmem>>, vector<8x64xf32>
    %cst_305 = arith.constant dense<0.000000e+00> : vector<8x64xf32>
    %1042 = tpu.matmul %1039, %982, %cst_305 {dimension_numbers = #tpu.dot_dimension_numbers<[1], [0], [0], [1], [0, 0, 1, 1], [], []>} : vector<8x16xf32>, vector<16x64xf32>, vector<8x64xf32> -> vector<8x64xf32>
    %1043 = arith.addf %1041, %1042 : vector<8x64xf32>
    %1044 = vector.extract_strided_slice %1043 {offsets = [0, 0], sizes = [8, 16], strides = [1, 1]} : vector<8x64xf32> to vector<8x16xf32>
    %1045 = arith.negf %1044 : vector<8x16xf32>
    %1046 = math.exp %1045 : vector<8x16xf32>
    %cst_306 = arith.constant 1.000000e+00 : f32
    %1047 = vector.broadcast %cst_306 : f32 to vector<8x16xf32>
    %1048 = arith.addf %1047, %1046 : vector<8x16xf32>
    %1049 = arith.divf %1047, %1048 : vector<8x16xf32>
    %1050 = vector.extract_strided_slice %1043 {offsets = [0, 16], sizes = [8, 16], strides = [1, 1]} : vector<8x64xf32> to vector<8x16xf32>
    %1051 = arith.negf %1050 : vector<8x16xf32>
    %1052 = math.exp %1051 : vector<8x16xf32>
    %cst_307 = arith.constant 1.000000e+00 : f32
    %1053 = vector.broadcast %cst_307 : f32 to vector<8x16xf32>
    %1054 = arith.addf %1053, %1052 : vector<8x16xf32>
    %1055 = arith.divf %1053, %1054 : vector<8x16xf32>
    %1056 = vector.extract_strided_slice %1043 {offsets = [0, 32], sizes = [8, 16], strides = [1, 1]} : vector<8x64xf32> to vector<8x16xf32>
    %1057 = math.tanh %1056 : vector<8x16xf32>
    %1058 = vector.extract_strided_slice %1043 {offsets = [0, 48], sizes = [8, 16], strides = [1, 1]} : vector<8x64xf32> to vector<8x16xf32>
    %1059 = arith.negf %1058 : vector<8x16xf32>
    %1060 = math.exp %1059 : vector<8x16xf32>
    %cst_308 = arith.constant 1.000000e+00 : f32
    %1061 = vector.broadcast %cst_308 : f32 to vector<8x16xf32>
    %1062 = arith.addf %1061, %1060 : vector<8x16xf32>
    %1063 = arith.divf %1061, %1062 : vector<8x16xf32>
    %1064 = arith.mulf %1055, %1037 : vector<8x16xf32>
    %1065 = arith.mulf %1049, %1057 : vector<8x16xf32>
    %1066 = arith.addf %1064, %1065 : vector<8x16xf32>
    %1067 = math.tanh %1066 : vector<8x16xf32>
    %1068 = arith.mulf %1063, %1067 : vector<8x16xf32>
    %c16_309 = arith.constant 16 : index
    %c0_310 = arith.constant 0 : index
    %1069 = vector.load %arg31[%c16_309, %c0_310] : memref<64x16xf32, #tpu.memory_space<vmem>>, vector<8x16xf32>
    tpu.vector_store %arg31[%c16_309, %c0_310], %1068 {strides = array<i32>} : memref<64x16xf32, #tpu.memory_space<vmem>>, vector<8x16xf32>,
    %c24_311 = arith.constant 24 : index
    %c0_312 = arith.constant 0 : index
    %1070 = vector.load %arg30[%c24_311, %c0_312] : memref<64x64xf32, #tpu.memory_space<vmem>>, vector<8x64xf32>
    %cst_313 = arith.constant dense<0.000000e+00> : vector<8x64xf32>
    %1071 = tpu.matmul %1068, %982, %cst_313 {dimension_numbers = #tpu.dot_dimension_numbers<[1], [0], [0], [1], [0, 0, 1, 1], [], []>} : vector<8x16xf32>, vector<16x64xf32>, vector<8x64xf32> -> vector<8x64xf32>
    %1072 = arith.addf %1070, %1071 : vector<8x64xf32>
    %1073 = vector.extract_strided_slice %1072 {offsets = [0, 0], sizes = [8, 16], strides = [1, 1]} : vector<8x64xf32> to vector<8x16xf32>
    %1074 = arith.negf %1073 : vector<8x16xf32>
    %1075 = math.exp %1074 : vector<8x16xf32>
    %cst_314 = arith.constant 1.000000e+00 : f32
    %1076 = vector.broadcast %cst_314 : f32 to vector<8x16xf32>
    %1077 = arith.addf %1076, %1075 : vector<8x16xf32>
    %1078 = arith.divf %1076, %1077 : vector<8x16xf32>
    %1079 = vector.extract_strided_slice %1072 {offsets = [0, 16], sizes = [8, 16], strides = [1, 1]} : vector<8x64xf32> to vector<8x16xf32>
    %1080 = arith.negf %1079 : vector<8x16xf32>
    %1081 = math.exp %1080 : vector<8x16xf32>
    %cst_315 = arith.constant 1.000000e+00 : f32
    %1082 = vector.broadcast %cst_315 : f32 to vector<8x16xf32>
    %1083 = arith.addf %1082, %1081 : vector<8x16xf32>
    %1084 = arith.divf %1082, %1083 : vector<8x16xf32>
    %1085 = vector.extract_strided_slice %1072 {offsets = [0, 32], sizes = [8, 16], strides = [1, 1]} : vector<8x64xf32> to vector<8x16xf32>
    %1086 = math.tanh %1085 : vector<8x16xf32>
    %1087 = vector.extract_strided_slice %1072 {offsets = [0, 48], sizes = [8, 16], strides = [1, 1]} : vector<8x64xf32> to vector<8x16xf32>
    %1088 = arith.negf %1087 : vector<8x16xf32>
    %1089 = math.exp %1088 : vector<8x16xf32>
    %cst_316 = arith.constant 1.000000e+00 : f32
    %1090 = vector.broadcast %cst_316 : f32 to vector<8x16xf32>
    %1091 = arith.addf %1090, %1089 : vector<8x16xf32>
    %1092 = arith.divf %1090, %1091 : vector<8x16xf32>
    %1093 = arith.mulf %1084, %1066 : vector<8x16xf32>
    %1094 = arith.mulf %1078, %1086 : vector<8x16xf32>
    %1095 = arith.addf %1093, %1094 : vector<8x16xf32>
    %1096 = math.tanh %1095 : vector<8x16xf32>
    %1097 = arith.mulf %1092, %1096 : vector<8x16xf32>
    %c24_317 = arith.constant 24 : index
    %c0_318 = arith.constant 0 : index
    %1098 = vector.load %arg31[%c24_317, %c0_318] : memref<64x16xf32, #tpu.memory_space<vmem>>, vector<8x16xf32>
    tpu.vector_store %arg31[%c24_317, %c0_318], %1097 {strides = array<i32>} : memref<64x16xf32, #tpu.memory_space<vmem>>, vector<8x16xf32>,
    %c32_319 = arith.constant 32 : index
    %c0_320 = arith.constant 0 : index
    %1099 = vector.load %arg30[%c32_319, %c0_320] : memref<64x64xf32, #tpu.memory_space<vmem>>, vector<8x64xf32>
    %cst_321 = arith.constant dense<0.000000e+00> : vector<8x64xf32>
    %1100 = tpu.matmul %1097, %982, %cst_321 {dimension_numbers = #tpu.dot_dimension_numbers<[1], [0], [0], [1], [0, 0, 1, 1], [], []>} : vector<8x16xf32>, vector<16x64xf32>, vector<8x64xf32> -> vector<8x64xf32>
    %1101 = arith.addf %1099, %1100 : vector<8x64xf32>
    %1102 = vector.extract_strided_slice %1101 {offsets = [0, 0], sizes = [8, 16], strides = [1, 1]} : vector<8x64xf32> to vector<8x16xf32>
    %1103 = arith.negf %1102 : vector<8x16xf32>
    %1104 = math.exp %1103 : vector<8x16xf32>
    %cst_322 = arith.constant 1.000000e+00 : f32
    %1105 = vector.broadcast %cst_322 : f32 to vector<8x16xf32>
    %1106 = arith.addf %1105, %1104 : vector<8x16xf32>
    %1107 = arith.divf %1105, %1106 : vector<8x16xf32>
    %1108 = vector.extract_strided_slice %1101 {offsets = [0, 16], sizes = [8, 16], strides = [1, 1]} : vector<8x64xf32> to vector<8x16xf32>
    %1109 = arith.negf %1108 : vector<8x16xf32>
    %1110 = math.exp %1109 : vector<8x16xf32>
    %cst_323 = arith.constant 1.000000e+00 : f32
    %1111 = vector.broadcast %cst_323 : f32 to vector<8x16xf32>
    %1112 = arith.addf %1111, %1110 : vector<8x16xf32>
    %1113 = arith.divf %1111, %1112 : vector<8x16xf32>
    %1114 = vector.extract_strided_slice %1101 {offsets = [0, 32], sizes = [8, 16], strides = [1, 1]} : vector<8x64xf32> to vector<8x16xf32>
    %1115 = math.tanh %1114 : vector<8x16xf32>
    %1116 = vector.extract_strided_slice %1101 {offsets = [0, 48], sizes = [8, 16], strides = [1, 1]} : vector<8x64xf32> to vector<8x16xf32>
    %1117 = arith.negf %1116 : vector<8x16xf32>
    %1118 = math.exp %1117 : vector<8x16xf32>
    %cst_324 = arith.constant 1.000000e+00 : f32
    %1119 = vector.broadcast %cst_324 : f32 to vector<8x16xf32>
    %1120 = arith.addf %1119, %1118 : vector<8x16xf32>
    %1121 = arith.divf %1119, %1120 : vector<8x16xf32>
    %1122 = arith.mulf %1113, %1095 : vector<8x16xf32>
    %1123 = arith.mulf %1107, %1115 : vector<8x16xf32>
    %1124 = arith.addf %1122, %1123 : vector<8x16xf32>
    %1125 = math.tanh %1124 : vector<8x16xf32>
    %1126 = arith.mulf %1121, %1125 : vector<8x16xf32>
    %c32_325 = arith.constant 32 : index
    %c0_326 = arith.constant 0 : index
    %1127 = vector.load %arg31[%c32_325, %c0_326] : memref<64x16xf32, #tpu.memory_space<vmem>>, vector<8x16xf32>
    tpu.vector_store %arg31[%c32_325, %c0_326], %1126 {strides = array<i32>} : memref<64x16xf32, #tpu.memory_space<vmem>>, vector<8x16xf32>,
    %c40_327 = arith.constant 40 : index
    %c0_328 = arith.constant 0 : index
    %1128 = vector.load %arg30[%c40_327, %c0_328] : memref<64x64xf32, #tpu.memory_space<vmem>>, vector<8x64xf32>
    %cst_329 = arith.constant dense<0.000000e+00> : vector<8x64xf32>
    %1129 = tpu.matmul %1126, %982, %cst_329 {dimension_numbers = #tpu.dot_dimension_numbers<[1], [0], [0], [1], [0, 0, 1, 1], [], []>} : vector<8x16xf32>, vector<16x64xf32>, vector<8x64xf32> -> vector<8x64xf32>
    %1130 = arith.addf %1128, %1129 : vector<8x64xf32>
    %1131 = vector.extract_strided_slice %1130 {offsets = [0, 0], sizes = [8, 16], strides = [1, 1]} : vector<8x64xf32> to vector<8x16xf32>
    %1132 = arith.negf %1131 : vector<8x16xf32>
    %1133 = math.exp %1132 : vector<8x16xf32>
    %cst_330 = arith.constant 1.000000e+00 : f32
    %1134 = vector.broadcast %cst_330 : f32 to vector<8x16xf32>
    %1135 = arith.addf %1134, %1133 : vector<8x16xf32>
    %1136 = arith.divf %1134, %1135 : vector<8x16xf32>
    %1137 = vector.extract_strided_slice %1130 {offsets = [0, 16], sizes = [8, 16], strides = [1, 1]} : vector<8x64xf32> to vector<8x16xf32>
    %1138 = arith.negf %1137 : vector<8x16xf32>
    %1139 = math.exp %1138 : vector<8x16xf32>
    %cst_331 = arith.constant 1.000000e+00 : f32
    %1140 = vector.broadcast %cst_331 : f32 to vector<8x16xf32>
    %1141 = arith.addf %1140, %1139 : vector<8x16xf32>
    %1142 = arith.divf %1140, %1141 : vector<8x16xf32>
    %1143 = vector.extract_strided_slice %1130 {offsets = [0, 32], sizes = [8, 16], strides = [1, 1]} : vector<8x64xf32> to vector<8x16xf32>
    %1144 = math.tanh %1143 : vector<8x16xf32>
    %1145 = vector.extract_strided_slice %1130 {offsets = [0, 48], sizes = [8, 16], strides = [1, 1]} : vector<8x64xf32> to vector<8x16xf32>
    %1146 = arith.negf %1145 : vector<8x16xf32>
    %1147 = math.exp %1146 : vector<8x16xf32>
    %cst_332 = arith.constant 1.000000e+00 : f32
    %1148 = vector.broadcast %cst_332 : f32 to vector<8x16xf32>
    %1149 = arith.addf %1148, %1147 : vector<8x16xf32>
    %1150 = arith.divf %1148, %1149 : vector<8x16xf32>
    %1151 = arith.mulf %1142, %1124 : vector<8x16xf32>
    %1152 = arith.mulf %1136, %1144 : vector<8x16xf32>
    %1153 = arith.addf %1151, %1152 : vector<8x16xf32>
    %1154 = math.tanh %1153 : vector<8x16xf32>
    %1155 = arith.mulf %1150, %1154 : vector<8x16xf32>
    %c40_333 = arith.constant 40 : index
    %c0_334 = arith.constant 0 : index
    %1156 = vector.load %arg31[%c40_333, %c0_334] : memref<64x16xf32, #tpu.memory_space<vmem>>, vector<8x16xf32>
    tpu.vector_store %arg31[%c40_333, %c0_334], %1155 {strides = array<i32>} : memref<64x16xf32, #tpu.memory_space<vmem>>, vector<8x16xf32>,
    %c48_335 = arith.constant 48 : index
    %c0_336 = arith.constant 0 : index
    %1157 = vector.load %arg30[%c48_335, %c0_336] : memref<64x64xf32, #tpu.memory_space<vmem>>, vector<8x64xf32>
    %cst_337 = arith.constant dense<0.000000e+00> : vector<8x64xf32>
    %1158 = tpu.matmul %1155, %982, %cst_337 {dimension_numbers = #tpu.dot_dimension_numbers<[1], [0], [0], [1], [0, 0, 1, 1], [], []>} : vector<8x16xf32>, vector<16x64xf32>, vector<8x64xf32> -> vector<8x64xf32>
    %1159 = arith.addf %1157, %1158 : vector<8x64xf32>
    %1160 = vector.extract_strided_slice %1159 {offsets = [0, 0], sizes = [8, 16], strides = [1, 1]} : vector<8x64xf32> to vector<8x16xf32>
    %1161 = arith.negf %1160 : vector<8x16xf32>
    %1162 = math.exp %1161 : vector<8x16xf32>
    %cst_338 = arith.constant 1.000000e+00 : f32
    %1163 = vector.broadcast %cst_338 : f32 to vector<8x16xf32>
    %1164 = arith.addf %1163, %1162 : vector<8x16xf32>
    %1165 = arith.divf %1163, %1164 : vector<8x16xf32>
    %1166 = vector.extract_strided_slice %1159 {offsets = [0, 16], sizes = [8, 16], strides = [1, 1]} : vector<8x64xf32> to vector<8x16xf32>
    %1167 = arith.negf %1166 : vector<8x16xf32>
    %1168 = math.exp %1167 : vector<8x16xf32>
    %cst_339 = arith.constant 1.000000e+00 : f32
    %1169 = vector.broadcast %cst_339 : f32 to vector<8x16xf32>
    %1170 = arith.addf %1169, %1168 : vector<8x16xf32>
    %1171 = arith.divf %1169, %1170 : vector<8x16xf32>
    %1172 = vector.extract_strided_slice %1159 {offsets = [0, 32], sizes = [8, 16], strides = [1, 1]} : vector<8x64xf32> to vector<8x16xf32>
    %1173 = math.tanh %1172 : vector<8x16xf32>
    %1174 = vector.extract_strided_slice %1159 {offsets = [0, 48], sizes = [8, 16], strides = [1, 1]} : vector<8x64xf32> to vector<8x16xf32>
    %1175 = arith.negf %1174 : vector<8x16xf32>
    %1176 = math.exp %1175 : vector<8x16xf32>
    %cst_340 = arith.constant 1.000000e+00 : f32
    %1177 = vector.broadcast %cst_340 : f32 to vector<8x16xf32>
    %1178 = arith.addf %1177, %1176 : vector<8x16xf32>
    %1179 = arith.divf %1177, %1178 : vector<8x16xf32>
    %1180 = arith.mulf %1171, %1153 : vector<8x16xf32>
    %1181 = arith.mulf %1165, %1173 : vector<8x16xf32>
    %1182 = arith.addf %1180, %1181 : vector<8x16xf32>
    %1183 = math.tanh %1182 : vector<8x16xf32>
    %1184 = arith.mulf %1179, %1183 : vector<8x16xf32>
    %c48_341 = arith.constant 48 : index
    %c0_342 = arith.constant 0 : index
    %1185 = vector.load %arg31[%c48_341, %c0_342] : memref<64x16xf32, #tpu.memory_space<vmem>>, vector<8x16xf32>
    tpu.vector_store %arg31[%c48_341, %c0_342], %1184 {strides = array<i32>} : memref<64x16xf32, #tpu.memory_space<vmem>>, vector<8x16xf32>,
    %c56_343 = arith.constant 56 : index
    %c0_344 = arith.constant 0 : index
    %1186 = vector.load %arg30[%c56_343, %c0_344] : memref<64x64xf32, #tpu.memory_space<vmem>>, vector<8x64xf32>
    %cst_345 = arith.constant dense<0.000000e+00> : vector<8x64xf32>
    %1187 = tpu.matmul %1184, %982, %cst_345 {dimension_numbers = #tpu.dot_dimension_numbers<[1], [0], [0], [1], [0, 0, 1, 1], [], []>} : vector<8x16xf32>, vector<16x64xf32>, vector<8x64xf32> -> vector<8x64xf32>
    %1188 = arith.addf %1186, %1187 : vector<8x64xf32>
    %1189 = vector.extract_strided_slice %1188 {offsets = [0, 0], sizes = [8, 16], strides = [1, 1]} : vector<8x64xf32> to vector<8x16xf32>
    %1190 = arith.negf %1189 : vector<8x16xf32>
    %1191 = math.exp %1190 : vector<8x16xf32>
    %cst_346 = arith.constant 1.000000e+00 : f32
    %1192 = vector.broadcast %cst_346 : f32 to vector<8x16xf32>
    %1193 = arith.addf %1192, %1191 : vector<8x16xf32>
    %1194 = arith.divf %1192, %1193 : vector<8x16xf32>
    %1195 = vector.extract_strided_slice %1188 {offsets = [0, 16], sizes = [8, 16], strides = [1, 1]} : vector<8x64xf32> to vector<8x16xf32>
    %1196 = arith.negf %1195 : vector<8x16xf32>
    %1197 = math.exp %1196 : vector<8x16xf32>
    %cst_347 = arith.constant 1.000000e+00 : f32
    %1198 = vector.broadcast %cst_347 : f32 to vector<8x16xf32>
    %1199 = arith.addf %1198, %1197 : vector<8x16xf32>
    %1200 = arith.divf %1198, %1199 : vector<8x16xf32>
    %1201 = vector.extract_strided_slice %1188 {offsets = [0, 32], sizes = [8, 16], strides = [1, 1]} : vector<8x64xf32> to vector<8x16xf32>
    %1202 = math.tanh %1201 : vector<8x16xf32>
    %1203 = vector.extract_strided_slice %1188 {offsets = [0, 48], sizes = [8, 16], strides = [1, 1]} : vector<8x64xf32> to vector<8x16xf32>
    %1204 = arith.negf %1203 : vector<8x16xf32>
    %1205 = math.exp %1204 : vector<8x16xf32>
    %cst_348 = arith.constant 1.000000e+00 : f32
    %1206 = vector.broadcast %cst_348 : f32 to vector<8x16xf32>
    %1207 = arith.addf %1206, %1205 : vector<8x16xf32>
    %1208 = arith.divf %1206, %1207 : vector<8x16xf32>
    %1209 = arith.mulf %1200, %1182 : vector<8x16xf32>
    %1210 = arith.mulf %1194, %1202 : vector<8x16xf32>
    %1211 = arith.addf %1209, %1210 : vector<8x16xf32>
    %1212 = math.tanh %1211 : vector<8x16xf32>
    %1213 = arith.mulf %1208, %1212 : vector<8x16xf32>
    %c56_349 = arith.constant 56 : index
    %c0_350 = arith.constant 0 : index
    %1214 = vector.load %arg31[%c56_349, %c0_350] : memref<64x16xf32, #tpu.memory_space<vmem>>, vector<8x16xf32>
    tpu.vector_store %arg31[%c56_349, %c0_350], %1213 {strides = array<i32>} : memref<64x16xf32, #tpu.memory_space<vmem>>, vector<8x16xf32>,
    %c0_351 = arith.constant 0 : index
    %c0_352 = arith.constant 0 : index
    %1215 = vector.load %arg31[%c0_351, %c0_352] : memref<64x16xf32, #tpu.memory_space<vmem>>, vector<64x16xf32>
    %c0_353 = arith.constant 0 : index
    %c0_354 = arith.constant 0 : index
    %1216 = vector.load %arg21[%c0_353, %c0_354] : memref<16x64xf32, #tpu.memory_space<vmem>>, vector<16x64xf32>
    %cst_355 = arith.constant dense<0.000000e+00> : vector<64x64xf32>
    %1217 = tpu.matmul %1215, %1216, %cst_355 {dimension_numbers = #tpu.dot_dimension_numbers<[1], [0], [0], [1], [0, 0, 1, 1], [], []>} : vector<64x16xf32>, vector<16x64xf32>, vector<64x64xf32> -> vector<64x64xf32>
    %c0_356 = arith.constant 0 : index
    %c0_357 = arith.constant 0 : index
    %1218 = vector.load %arg23[%c0_356, %c0_357] : memref<1x64xf32, #tpu.memory_space<vmem>>, vector<1x64xf32>
    %1219 = vector.broadcast %1218 : vector<1x64xf32> to vector<64x64xf32>
    %1220 = arith.addf %1217, %1219 : vector<64x64xf32>
    %c0_358 = arith.constant 0 : index
    %c0_359 = arith.constant 0 : index
    %1221 = vector.load %arg30[%c0_358, %c0_359] : memref<64x64xf32, #tpu.memory_space<vmem>>, vector<64x64xf32>
    tpu.vector_store %arg30[%c0_358, %c0_359], %1220 {strides = array<i32>} : memref<64x64xf32, #tpu.memory_space<vmem>>, vector<64x64xf32>,
    %c0_360 = arith.constant 0 : index
    %c0_361 = arith.constant 0 : index
    %1222 = vector.load %arg22[%c0_360, %c0_361] : memref<16x64xf32, #tpu.memory_space<vmem>>, vector<16x64xf32>
    %c0_362 = arith.constant 0 : index
    %c0_363 = arith.constant 0 : index
    %1223 = vector.load %arg30[%c0_362, %c0_363] : memref<64x64xf32, #tpu.memory_space<vmem>>, vector<8x64xf32>
    %cst_364 = arith.constant dense<0.000000e+00> : vector<8x64xf32>
    %1224 = tpu.matmul %1, %1222, %cst_364 {dimension_numbers = #tpu.dot_dimension_numbers<[1], [0], [0], [1], [0, 0, 1, 1], [], []>} : vector<8x16xf32>, vector<16x64xf32>, vector<8x64xf32> -> vector<8x64xf32>
    %1225 = arith.addf %1223, %1224 : vector<8x64xf32>
    %1226 = vector.extract_strided_slice %1225 {offsets = [0, 0], sizes = [8, 16], strides = [1, 1]} : vector<8x64xf32> to vector<8x16xf32>
    %1227 = arith.negf %1226 : vector<8x16xf32>
    %1228 = math.exp %1227 : vector<8x16xf32>
    %cst_365 = arith.constant 1.000000e+00 : f32
    %1229 = vector.broadcast %cst_365 : f32 to vector<8x16xf32>
    %1230 = arith.addf %1229, %1228 : vector<8x16xf32>
    %1231 = arith.divf %1229, %1230 : vector<8x16xf32>
    %1232 = vector.extract_strided_slice %1225 {offsets = [0, 16], sizes = [8, 16], strides = [1, 1]} : vector<8x64xf32> to vector<8x16xf32>
    %1233 = arith.negf %1232 : vector<8x16xf32>
    %1234 = math.exp %1233 : vector<8x16xf32>
    %cst_366 = arith.constant 1.000000e+00 : f32
    %1235 = vector.broadcast %cst_366 : f32 to vector<8x16xf32>
    %1236 = arith.addf %1235, %1234 : vector<8x16xf32>
    %1237 = arith.divf %1235, %1236 : vector<8x16xf32>
    %1238 = vector.extract_strided_slice %1225 {offsets = [0, 32], sizes = [8, 16], strides = [1, 1]} : vector<8x64xf32> to vector<8x16xf32>
    %1239 = math.tanh %1238 : vector<8x16xf32>
    %1240 = vector.extract_strided_slice %1225 {offsets = [0, 48], sizes = [8, 16], strides = [1, 1]} : vector<8x64xf32> to vector<8x16xf32>
    %1241 = arith.negf %1240 : vector<8x16xf32>
    %1242 = math.exp %1241 : vector<8x16xf32>
    %cst_367 = arith.constant 1.000000e+00 : f32
    %1243 = vector.broadcast %cst_367 : f32 to vector<8x16xf32>
    %1244 = arith.addf %1243, %1242 : vector<8x16xf32>
    %1245 = arith.divf %1243, %1244 : vector<8x16xf32>
    %1246 = arith.mulf %1237, %1 : vector<8x16xf32>
    %1247 = arith.mulf %1231, %1239 : vector<8x16xf32>
    %1248 = arith.addf %1246, %1247 : vector<8x16xf32>
    %1249 = math.tanh %1248 : vector<8x16xf32>
    %1250 = arith.mulf %1245, %1249 : vector<8x16xf32>
    %1251 = math.tanh %1250 : vector<8x16xf32>
    %c0_368 = arith.constant 0 : index
    %c0_369 = arith.constant 0 : index
    %1252 = vector.load %arg24[%c0_368, %c0_369] : memref<64x16xf32, #tpu.memory_space<vmem>>, vector<8x16xf32>
    tpu.vector_store %arg24[%c0_368, %c0_369], %1251 {strides = array<i32>} : memref<64x16xf32, #tpu.memory_space<vmem>>, vector<8x16xf32>,
    %c8_370 = arith.constant 8 : index
    %c0_371 = arith.constant 0 : index
    %1253 = vector.load %arg30[%c8_370, %c0_371] : memref<64x64xf32, #tpu.memory_space<vmem>>, vector<8x64xf32>
    %cst_372 = arith.constant dense<0.000000e+00> : vector<8x64xf32>
    %1254 = tpu.matmul %1250, %1222, %cst_372 {dimension_numbers = #tpu.dot_dimension_numbers<[1], [0], [0], [1], [0, 0, 1, 1], [], []>} : vector<8x16xf32>, vector<16x64xf32>, vector<8x64xf32> -> vector<8x64xf32>
    %1255 = arith.addf %1253, %1254 : vector<8x64xf32>
    %1256 = vector.extract_strided_slice %1255 {offsets = [0, 0], sizes = [8, 16], strides = [1, 1]} : vector<8x64xf32> to vector<8x16xf32>
    %1257 = arith.negf %1256 : vector<8x16xf32>
    %1258 = math.exp %1257 : vector<8x16xf32>
    %cst_373 = arith.constant 1.000000e+00 : f32
    %1259 = vector.broadcast %cst_373 : f32 to vector<8x16xf32>
    %1260 = arith.addf %1259, %1258 : vector<8x16xf32>
    %1261 = arith.divf %1259, %1260 : vector<8x16xf32>
    %1262 = vector.extract_strided_slice %1255 {offsets = [0, 16], sizes = [8, 16], strides = [1, 1]} : vector<8x64xf32> to vector<8x16xf32>
    %1263 = arith.negf %1262 : vector<8x16xf32>
    %1264 = math.exp %1263 : vector<8x16xf32>
    %cst_374 = arith.constant 1.000000e+00 : f32
    %1265 = vector.broadcast %cst_374 : f32 to vector<8x16xf32>
    %1266 = arith.addf %1265, %1264 : vector<8x16xf32>
    %1267 = arith.divf %1265, %1266 : vector<8x16xf32>
    %1268 = vector.extract_strided_slice %1255 {offsets = [0, 32], sizes = [8, 16], strides = [1, 1]} : vector<8x64xf32> to vector<8x16xf32>
    %1269 = math.tanh %1268 : vector<8x16xf32>
    %1270 = vector.extract_strided_slice %1255 {offsets = [0, 48], sizes = [8, 16], strides = [1, 1]} : vector<8x64xf32> to vector<8x16xf32>
    %1271 = arith.negf %1270 : vector<8x16xf32>
    %1272 = math.exp %1271 : vector<8x16xf32>
    %cst_375 = arith.constant 1.000000e+00 : f32
    %1273 = vector.broadcast %cst_375 : f32 to vector<8x16xf32>
    %1274 = arith.addf %1273, %1272 : vector<8x16xf32>
    %1275 = arith.divf %1273, %1274 : vector<8x16xf32>
    %1276 = arith.mulf %1267, %1248 : vector<8x16xf32>
    %1277 = arith.mulf %1261, %1269 : vector<8x16xf32>
    %1278 = arith.addf %1276, %1277 : vector<8x16xf32>
    %1279 = math.tanh %1278 : vector<8x16xf32>
    %1280 = arith.mulf %1275, %1279 : vector<8x16xf32>
    %1281 = math.tanh %1280 : vector<8x16xf32>
    %c8_376 = arith.constant 8 : index
    %c0_377 = arith.constant 0 : index
    %1282 = vector.load %arg24[%c8_376, %c0_377] : memref<64x16xf32, #tpu.memory_space<vmem>>, vector<8x16xf32>
    tpu.vector_store %arg24[%c8_376, %c0_377], %1281 {strides = array<i32>} : memref<64x16xf32, #tpu.memory_space<vmem>>, vector<8x16xf32>,
    %c16_378 = arith.constant 16 : index
    %c0_379 = arith.constant 0 : index
    %1283 = vector.load %arg30[%c16_378, %c0_379] : memref<64x64xf32, #tpu.memory_space<vmem>>, vector<8x64xf32>
    %cst_380 = arith.constant dense<0.000000e+00> : vector<8x64xf32>
    %1284 = tpu.matmul %1280, %1222, %cst_380 {dimension_numbers = #tpu.dot_dimension_numbers<[1], [0], [0], [1], [0, 0, 1, 1], [], []>} : vector<8x16xf32>, vector<16x64xf32>, vector<8x64xf32> -> vector<8x64xf32>
    %1285 = arith.addf %1283, %1284 : vector<8x64xf32>
    %1286 = vector.extract_strided_slice %1285 {offsets = [0, 0], sizes = [8, 16], strides = [1, 1]} : vector<8x64xf32> to vector<8x16xf32>
    %1287 = arith.negf %1286 : vector<8x16xf32>
    %1288 = math.exp %1287 : vector<8x16xf32>
    %cst_381 = arith.constant 1.000000e+00 : f32
    %1289 = vector.broadcast %cst_381 : f32 to vector<8x16xf32>
    %1290 = arith.addf %1289, %1288 : vector<8x16xf32>
    %1291 = arith.divf %1289, %1290 : vector<8x16xf32>
    %1292 = vector.extract_strided_slice %1285 {offsets = [0, 16], sizes = [8, 16], strides = [1, 1]} : vector<8x64xf32> to vector<8x16xf32>
    %1293 = arith.negf %1292 : vector<8x16xf32>
    %1294 = math.exp %1293 : vector<8x16xf32>
    %cst_382 = arith.constant 1.000000e+00 : f32
    %1295 = vector.broadcast %cst_382 : f32 to vector<8x16xf32>
    %1296 = arith.addf %1295, %1294 : vector<8x16xf32>
    %1297 = arith.divf %1295, %1296 : vector<8x16xf32>
    %1298 = vector.extract_strided_slice %1285 {offsets = [0, 32], sizes = [8, 16], strides = [1, 1]} : vector<8x64xf32> to vector<8x16xf32>
    %1299 = math.tanh %1298 : vector<8x16xf32>
    %1300 = vector.extract_strided_slice %1285 {offsets = [0, 48], sizes = [8, 16], strides = [1, 1]} : vector<8x64xf32> to vector<8x16xf32>
    %1301 = arith.negf %1300 : vector<8x16xf32>
    %1302 = math.exp %1301 : vector<8x16xf32>
    %cst_383 = arith.constant 1.000000e+00 : f32
    %1303 = vector.broadcast %cst_383 : f32 to vector<8x16xf32>
    %1304 = arith.addf %1303, %1302 : vector<8x16xf32>
    %1305 = arith.divf %1303, %1304 : vector<8x16xf32>
    %1306 = arith.mulf %1297, %1278 : vector<8x16xf32>
    %1307 = arith.mulf %1291, %1299 : vector<8x16xf32>
    %1308 = arith.addf %1306, %1307 : vector<8x16xf32>
    %1309 = math.tanh %1308 : vector<8x16xf32>
    %1310 = arith.mulf %1305, %1309 : vector<8x16xf32>
    %1311 = math.tanh %1310 : vector<8x16xf32>
    %c16_384 = arith.constant 16 : index
    %c0_385 = arith.constant 0 : index
    %1312 = vector.load %arg24[%c16_384, %c0_385] : memref<64x16xf32, #tpu.memory_space<vmem>>, vector<8x16xf32>
    tpu.vector_store %arg24[%c16_384, %c0_385], %1311 {strides = array<i32>} : memref<64x16xf32, #tpu.memory_space<vmem>>, vector<8x16xf32>,
    %c24_386 = arith.constant 24 : index
    %c0_387 = arith.constant 0 : index
    %1313 = vector.load %arg30[%c24_386, %c0_387] : memref<64x64xf32, #tpu.memory_space<vmem>>, vector<8x64xf32>
    %cst_388 = arith.constant dense<0.000000e+00> : vector<8x64xf32>
    %1314 = tpu.matmul %1310, %1222, %cst_388 {dimension_numbers = #tpu.dot_dimension_numbers<[1], [0], [0], [1], [0, 0, 1, 1], [], []>} : vector<8x16xf32>, vector<16x64xf32>, vector<8x64xf32> -> vector<8x64xf32>
    %1315 = arith.addf %1313, %1314 : vector<8x64xf32>
    %1316 = vector.extract_strided_slice %1315 {offsets = [0, 0], sizes = [8, 16], strides = [1, 1]} : vector<8x64xf32> to vector<8x16xf32>
    %1317 = arith.negf %1316 : vector<8x16xf32>
    %1318 = math.exp %1317 : vector<8x16xf32>
    %cst_389 = arith.constant 1.000000e+00 : f32
    %1319 = vector.broadcast %cst_389 : f32 to vector<8x16xf32>
    %1320 = arith.addf %1319, %1318 : vector<8x16xf32>
    %1321 = arith.divf %1319, %1320 : vector<8x16xf32>
    %1322 = vector.extract_strided_slice %1315 {offsets = [0, 16], sizes = [8, 16], strides = [1, 1]} : vector<8x64xf32> to vector<8x16xf32>
    %1323 = arith.negf %1322 : vector<8x16xf32>
    %1324 = math.exp %1323 : vector<8x16xf32>
    %cst_390 = arith.constant 1.000000e+00 : f32
    %1325 = vector.broadcast %cst_390 : f32 to vector<8x16xf32>
    %1326 = arith.addf %1325, %1324 : vector<8x16xf32>
    %1327 = arith.divf %1325, %1326 : vector<8x16xf32>
    %1328 = vector.extract_strided_slice %1315 {offsets = [0, 32], sizes = [8, 16], strides = [1, 1]} : vector<8x64xf32> to vector<8x16xf32>
    %1329 = math.tanh %1328 : vector<8x16xf32>
    %1330 = vector.extract_strided_slice %1315 {offsets = [0, 48], sizes = [8, 16], strides = [1, 1]} : vector<8x64xf32> to vector<8x16xf32>
    %1331 = arith.negf %1330 : vector<8x16xf32>
    %1332 = math.exp %1331 : vector<8x16xf32>
    %cst_391 = arith.constant 1.000000e+00 : f32
    %1333 = vector.broadcast %cst_391 : f32 to vector<8x16xf32>
    %1334 = arith.addf %1333, %1332 : vector<8x16xf32>
    %1335 = arith.divf %1333, %1334 : vector<8x16xf32>
    %1336 = arith.mulf %1327, %1308 : vector<8x16xf32>
    %1337 = arith.mulf %1321, %1329 : vector<8x16xf32>
    %1338 = arith.addf %1336, %1337 : vector<8x16xf32>
    %1339 = math.tanh %1338 : vector<8x16xf32>
    %1340 = arith.mulf %1335, %1339 : vector<8x16xf32>
    %1341 = math.tanh %1340 : vector<8x16xf32>
    %c24_392 = arith.constant 24 : index
    %c0_393 = arith.constant 0 : index
    %1342 = vector.load %arg24[%c24_392, %c0_393] : memref<64x16xf32, #tpu.memory_space<vmem>>, vector<8x16xf32>
    tpu.vector_store %arg24[%c24_392, %c0_393], %1341 {strides = array<i32>} : memref<64x16xf32, #tpu.memory_space<vmem>>, vector<8x16xf32>,
    %c32_394 = arith.constant 32 : index
    %c0_395 = arith.constant 0 : index
    %1343 = vector.load %arg30[%c32_394, %c0_395] : memref<64x64xf32, #tpu.memory_space<vmem>>, vector<8x64xf32>
    %cst_396 = arith.constant dense<0.000000e+00> : vector<8x64xf32>
    %1344 = tpu.matmul %1340, %1222, %cst_396 {dimension_numbers = #tpu.dot_dimension_numbers<[1], [0], [0], [1], [0, 0, 1, 1], [], []>} : vector<8x16xf32>, vector<16x64xf32>, vector<8x64xf32> -> vector<8x64xf32>
    %1345 = arith.addf %1343, %1344 : vector<8x64xf32>
    %1346 = vector.extract_strided_slice %1345 {offsets = [0, 0], sizes = [8, 16], strides = [1, 1]} : vector<8x64xf32> to vector<8x16xf32>
    %1347 = arith.negf %1346 : vector<8x16xf32>
    %1348 = math.exp %1347 : vector<8x16xf32>
    %cst_397 = arith.constant 1.000000e+00 : f32
    %1349 = vector.broadcast %cst_397 : f32 to vector<8x16xf32>
    %1350 = arith.addf %1349, %1348 : vector<8x16xf32>
    %1351 = arith.divf %1349, %1350 : vector<8x16xf32>
    %1352 = vector.extract_strided_slice %1345 {offsets = [0, 16], sizes = [8, 16], strides = [1, 1]} : vector<8x64xf32> to vector<8x16xf32>
    %1353 = arith.negf %1352 : vector<8x16xf32>
    %1354 = math.exp %1353 : vector<8x16xf32>
    %cst_398 = arith.constant 1.000000e+00 : f32
    %1355 = vector.broadcast %cst_398 : f32 to vector<8x16xf32>
    %1356 = arith.addf %1355, %1354 : vector<8x16xf32>
    %1357 = arith.divf %1355, %1356 : vector<8x16xf32>
    %1358 = vector.extract_strided_slice %1345 {offsets = [0, 32], sizes = [8, 16], strides = [1, 1]} : vector<8x64xf32> to vector<8x16xf32>
    %1359 = math.tanh %1358 : vector<8x16xf32>
    %1360 = vector.extract_strided_slice %1345 {offsets = [0, 48], sizes = [8, 16], strides = [1, 1]} : vector<8x64xf32> to vector<8x16xf32>
    %1361 = arith.negf %1360 : vector<8x16xf32>
    %1362 = math.exp %1361 : vector<8x16xf32>
    %cst_399 = arith.constant 1.000000e+00 : f32
    %1363 = vector.broadcast %cst_399 : f32 to vector<8x16xf32>
    %1364 = arith.addf %1363, %1362 : vector<8x16xf32>
    %1365 = arith.divf %1363, %1364 : vector<8x16xf32>
    %1366 = arith.mulf %1357, %1338 : vector<8x16xf32>
    %1367 = arith.mulf %1351, %1359 : vector<8x16xf32>
    %1368 = arith.addf %1366, %1367 : vector<8x16xf32>
    %1369 = math.tanh %1368 : vector<8x16xf32>
    %1370 = arith.mulf %1365, %1369 : vector<8x16xf32>
    %1371 = math.tanh %1370 : vector<8x16xf32>
    %c32_400 = arith.constant 32 : index
    %c0_401 = arith.constant 0 : index
    %1372 = vector.load %arg24[%c32_400, %c0_401] : memref<64x16xf32, #tpu.memory_space<vmem>>, vector<8x16xf32>
    tpu.vector_store %arg24[%c32_400, %c0_401], %1371 {strides = array<i32>} : memref<64x16xf32, #tpu.memory_space<vmem>>, vector<8x16xf32>,
    %c40_402 = arith.constant 40 : index
    %c0_403 = arith.constant 0 : index
    %1373 = vector.load %arg30[%c40_402, %c0_403] : memref<64x64xf32, #tpu.memory_space<vmem>>, vector<8x64xf32>
    %cst_404 = arith.constant dense<0.000000e+00> : vector<8x64xf32>
    %1374 = tpu.matmul %1370, %1222, %cst_404 {dimension_numbers = #tpu.dot_dimension_numbers<[1], [0], [0], [1], [0, 0, 1, 1], [], []>} : vector<8x16xf32>, vector<16x64xf32>, vector<8x64xf32> -> vector<8x64xf32>
    %1375 = arith.addf %1373, %1374 : vector<8x64xf32>
    %1376 = vector.extract_strided_slice %1375 {offsets = [0, 0], sizes = [8, 16], strides = [1, 1]} : vector<8x64xf32> to vector<8x16xf32>
    %1377 = arith.negf %1376 : vector<8x16xf32>
    %1378 = math.exp %1377 : vector<8x16xf32>
    %cst_405 = arith.constant 1.000000e+00 : f32
    %1379 = vector.broadcast %cst_405 : f32 to vector<8x16xf32>
    %1380 = arith.addf %1379, %1378 : vector<8x16xf32>
    %1381 = arith.divf %1379, %1380 : vector<8x16xf32>
    %1382 = vector.extract_strided_slice %1375 {offsets = [0, 16], sizes = [8, 16], strides = [1, 1]} : vector<8x64xf32> to vector<8x16xf32>
    %1383 = arith.negf %1382 : vector<8x16xf32>
    %1384 = math.exp %1383 : vector<8x16xf32>
    %cst_406 = arith.constant 1.000000e+00 : f32
    %1385 = vector.broadcast %cst_406 : f32 to vector<8x16xf32>
    %1386 = arith.addf %1385, %1384 : vector<8x16xf32>
    %1387 = arith.divf %1385, %1386 : vector<8x16xf32>
    %1388 = vector.extract_strided_slice %1375 {offsets = [0, 32], sizes = [8, 16], strides = [1, 1]} : vector<8x64xf32> to vector<8x16xf32>
    %1389 = math.tanh %1388 : vector<8x16xf32>
    %1390 = vector.extract_strided_slice %1375 {offsets = [0, 48], sizes = [8, 16], strides = [1, 1]} : vector<8x64xf32> to vector<8x16xf32>
    %1391 = arith.negf %1390 : vector<8x16xf32>
    %1392 = math.exp %1391 : vector<8x16xf32>
    %cst_407 = arith.constant 1.000000e+00 : f32
    %1393 = vector.broadcast %cst_407 : f32 to vector<8x16xf32>
    %1394 = arith.addf %1393, %1392 : vector<8x16xf32>
    %1395 = arith.divf %1393, %1394 : vector<8x16xf32>
    %1396 = arith.mulf %1387, %1368 : vector<8x16xf32>
    %1397 = arith.mulf %1381, %1389 : vector<8x16xf32>
    %1398 = arith.addf %1396, %1397 : vector<8x16xf32>
    %1399 = math.tanh %1398 : vector<8x16xf32>
    %1400 = arith.mulf %1395, %1399 : vector<8x16xf32>
    %1401 = math.tanh %1400 : vector<8x16xf32>
    %c40_408 = arith.constant 40 : index
    %c0_409 = arith.constant 0 : index
    %1402 = vector.load %arg24[%c40_408, %c0_409] : memref<64x16xf32, #tpu.memory_space<vmem>>, vector<8x16xf32>
    tpu.vector_store %arg24[%c40_408, %c0_409], %1401 {strides = array<i32>} : memref<64x16xf32, #tpu.memory_space<vmem>>, vector<8x16xf32>,
    %c48_410 = arith.constant 48 : index
    %c0_411 = arith.constant 0 : index
    %1403 = vector.load %arg30[%c48_410, %c0_411] : memref<64x64xf32, #tpu.memory_space<vmem>>, vector<8x64xf32>
    %cst_412 = arith.constant dense<0.000000e+00> : vector<8x64xf32>
    %1404 = tpu.matmul %1400, %1222, %cst_412 {dimension_numbers = #tpu.dot_dimension_numbers<[1], [0], [0], [1], [0, 0, 1, 1], [], []>} : vector<8x16xf32>, vector<16x64xf32>, vector<8x64xf32> -> vector<8x64xf32>
    %1405 = arith.addf %1403, %1404 : vector<8x64xf32>
    %1406 = vector.extract_strided_slice %1405 {offsets = [0, 0], sizes = [8, 16], strides = [1, 1]} : vector<8x64xf32> to vector<8x16xf32>
    %1407 = arith.negf %1406 : vector<8x16xf32>
    %1408 = math.exp %1407 : vector<8x16xf32>
    %cst_413 = arith.constant 1.000000e+00 : f32
    %1409 = vector.broadcast %cst_413 : f32 to vector<8x16xf32>
    %1410 = arith.addf %1409, %1408 : vector<8x16xf32>
    %1411 = arith.divf %1409, %1410 : vector<8x16xf32>
    %1412 = vector.extract_strided_slice %1405 {offsets = [0, 16], sizes = [8, 16], strides = [1, 1]} : vector<8x64xf32> to vector<8x16xf32>
    %1413 = arith.negf %1412 : vector<8x16xf32>
    %1414 = math.exp %1413 : vector<8x16xf32>
    %cst_414 = arith.constant 1.000000e+00 : f32
    %1415 = vector.broadcast %cst_414 : f32 to vector<8x16xf32>
    %1416 = arith.addf %1415, %1414 : vector<8x16xf32>
    %1417 = arith.divf %1415, %1416 : vector<8x16xf32>
    %1418 = vector.extract_strided_slice %1405 {offsets = [0, 32], sizes = [8, 16], strides = [1, 1]} : vector<8x64xf32> to vector<8x16xf32>
    %1419 = math.tanh %1418 : vector<8x16xf32>
    %1420 = vector.extract_strided_slice %1405 {offsets = [0, 48], sizes = [8, 16], strides = [1, 1]} : vector<8x64xf32> to vector<8x16xf32>
    %1421 = arith.negf %1420 : vector<8x16xf32>
    %1422 = math.exp %1421 : vector<8x16xf32>
    %cst_415 = arith.constant 1.000000e+00 : f32
    %1423 = vector.broadcast %cst_415 : f32 to vector<8x16xf32>
    %1424 = arith.addf %1423, %1422 : vector<8x16xf32>
    %1425 = arith.divf %1423, %1424 : vector<8x16xf32>
    %1426 = arith.mulf %1417, %1398 : vector<8x16xf32>
    %1427 = arith.mulf %1411, %1419 : vector<8x16xf32>
    %1428 = arith.addf %1426, %1427 : vector<8x16xf32>
    %1429 = math.tanh %1428 : vector<8x16xf32>
    %1430 = arith.mulf %1425, %1429 : vector<8x16xf32>
    %1431 = math.tanh %1430 : vector<8x16xf32>
    %c48_416 = arith.constant 48 : index
    %c0_417 = arith.constant 0 : index
    %1432 = vector.load %arg24[%c48_416, %c0_417] : memref<64x16xf32, #tpu.memory_space<vmem>>, vector<8x16xf32>
    tpu.vector_store %arg24[%c48_416, %c0_417], %1431 {strides = array<i32>} : memref<64x16xf32, #tpu.memory_space<vmem>>, vector<8x16xf32>,
    %c56_418 = arith.constant 56 : index
    %c0_419 = arith.constant 0 : index
    %1433 = vector.load %arg30[%c56_418, %c0_419] : memref<64x64xf32, #tpu.memory_space<vmem>>, vector<8x64xf32>
    %cst_420 = arith.constant dense<0.000000e+00> : vector<8x64xf32>
    %1434 = tpu.matmul %1430, %1222, %cst_420 {dimension_numbers = #tpu.dot_dimension_numbers<[1], [0], [0], [1], [0, 0, 1, 1], [], []>} : vector<8x16xf32>, vector<16x64xf32>, vector<8x64xf32> -> vector<8x64xf32>
    %1435 = arith.addf %1433, %1434 : vector<8x64xf32>
    %1436 = vector.extract_strided_slice %1435 {offsets = [0, 0], sizes = [8, 16], strides = [1, 1]} : vector<8x64xf32> to vector<8x16xf32>
    %1437 = arith.negf %1436 : vector<8x16xf32>
    %1438 = math.exp %1437 : vector<8x16xf32>
    %cst_421 = arith.constant 1.000000e+00 : f32
    %1439 = vector.broadcast %cst_421 : f32 to vector<8x16xf32>
    %1440 = arith.addf %1439, %1438 : vector<8x16xf32>
    %1441 = arith.divf %1439, %1440 : vector<8x16xf32>
    %1442 = vector.extract_strided_slice %1435 {offsets = [0, 16], sizes = [8, 16], strides = [1, 1]} : vector<8x64xf32> to vector<8x16xf32>
    %1443 = arith.negf %1442 : vector<8x16xf32>
    %1444 = math.exp %1443 : vector<8x16xf32>
    %cst_422 = arith.constant 1.000000e+00 : f32
    %1445 = vector.broadcast %cst_422 : f32 to vector<8x16xf32>
    %1446 = arith.addf %1445, %1444 : vector<8x16xf32>
    %1447 = arith.divf %1445, %1446 : vector<8x16xf32>
    %1448 = vector.extract_strided_slice %1435 {offsets = [0, 32], sizes = [8, 16], strides = [1, 1]} : vector<8x64xf32> to vector<8x16xf32>
    %1449 = math.tanh %1448 : vector<8x16xf32>
    %1450 = vector.extract_strided_slice %1435 {offsets = [0, 48], sizes = [8, 16], strides = [1, 1]} : vector<8x64xf32> to vector<8x16xf32>
    %1451 = arith.negf %1450 : vector<8x16xf32>
    %1452 = math.exp %1451 : vector<8x16xf32>
    %cst_423 = arith.constant 1.000000e+00 : f32
    %1453 = vector.broadcast %cst_423 : f32 to vector<8x16xf32>
    %1454 = arith.addf %1453, %1452 : vector<8x16xf32>
    %1455 = arith.divf %1453, %1454 : vector<8x16xf32>
    %1456 = arith.mulf %1447, %1428 : vector<8x16xf32>
    %1457 = arith.mulf %1441, %1449 : vector<8x16xf32>
    %1458 = arith.addf %1456, %1457 : vector<8x16xf32>
    %1459 = math.tanh %1458 : vector<8x16xf32>
    %1460 = arith.mulf %1455, %1459 : vector<8x16xf32>
    %1461 = math.tanh %1460 : vector<8x16xf32>
    %c56_424 = arith.constant 56 : index
    %c0_425 = arith.constant 0 : index
    %1462 = vector.load %arg24[%c56_424, %c0_425] : memref<64x16xf32, #tpu.memory_space<vmem>>, vector<8x16xf32>
    tpu.vector_store %arg24[%c56_424, %c0_425], %1461 {strides = array<i32>} : memref<64x16xf32, #tpu.memory_space<vmem>>, vector<8x16xf32>,
    return
  }
}

</mosaic_0001>

<llo_original>
// kernel: lstmvae_forward.1
$region0: #{lstmvae_forward.1}
  #allocation0 [shape = 'u32[]', space=smem, size = 0x4, offset = 0x4, fixed_abs, tag = 'smem constant byte address 0x4 - core index']
  #allocation1 [shape = 'u32[144,128]{1,0:T(1,128)}', space=vmem, size = 0x12000, scoped, tag = 'internal scratch']
  #allocation2 [shape = 'f32[64,128]{1,0:T(8,128)}', space=vmem, size = 0x8000, scoped, tag = 'scratch operand']
  #allocation3 [shape = 'f32[64,32]{1,0:T(8,128)}', space=vmem, size = 0x8000, scoped, tag = 'scratch operand']
  #allocation4 [shape = 'f32[64,32]{1,0:T(8,128)}', space=vmem, size = 0x8000, scoped, tag = 'scratch operand']
  #allocation5 [shape = 'f32[64,64]{1,0:T(8,128)}', space=vmem, size = 0x8000, scoped, tag = 'scratch operand']
  #allocation6 [shape = 'f32[64,16]{1,0:T(8,128)}', space=vmem, size = 0x8000, scoped, tag = 'scratch operand']
  %s0 = inlined_call_operand.vmem [shape: f32[64,8], index: 0, kind: input, shape index: {}]
  %s1 = inlined_call_operand.vmem [shape: f32[8,16], index: 1, kind: input, shape index: {}]
  %s2 = inlined_call_operand.vmem [shape: f32[8,128], index: 2, kind: input, shape index: {}]
  %s3 = inlined_call_operand.vmem [shape: f32[32,128], index: 3, kind: input, shape index: {}]
  %s4 = inlined_call_operand.vmem [shape: f32[1,128], index: 4, kind: input, shape index: {}]
  %s5 = inlined_call_operand.vmem [shape: f32[32,128], index: 5, kind: input, shape index: {}]
  %s6 = inlined_call_operand.vmem [shape: f32[32,128], index: 6, kind: input, shape index: {}]
  %s7 = inlined_call_operand.vmem [shape: f32[1,128], index: 7, kind: input, shape index: {}]
  %s8 = inlined_call_operand.vmem [shape: f32[32,16], index: 8, kind: input, shape index: {}]
  %s9 = inlined_call_operand.vmem [shape: f32[1,16], index: 9, kind: input, shape index: {}]
  %s10 = inlined_call_operand.vmem [shape: f32[32,16], index: 10, kind: input, shape index: {}]
  %s11 = inlined_call_operand.vmem [shape: f32[1,16], index: 11, kind: input, shape index: {}]
  %s12 = inlined_call_operand.vmem [shape: f32[16,128], index: 12, kind: input, shape index: {}]
  %s13 = inlined_call_operand.vmem [shape: f32[32,128], index: 13, kind: input, shape index: {}]
  %s14 = inlined_call_operand.vmem [shape: f32[1,128], index: 14, kind: input, shape index: {}]
  %s15 = inlined_call_operand.vmem [shape: f32[32,128], index: 15, kind: input, shape index: {}]
  %s16 = inlined_call_operand.vmem [shape: f32[32,128], index: 16, kind: input, shape index: {}]
  %s17 = inlined_call_operand.vmem [shape: f32[1,128], index: 17, kind: input, shape index: {}]
  %s18 = inlined_call_operand.vmem [shape: f32[32,64], index: 18, kind: input, shape index: {}]
  %s19 = inlined_call_operand.vmem [shape: f32[16,64], index: 19, kind: input, shape index: {}]
  %s20 = inlined_call_operand.vmem [shape: f32[1,64], index: 20, kind: input, shape index: {}]
  %s21 = inlined_call_operand.vmem [shape: f32[16,64], index: 21, kind: input, shape index: {}]
  %s22 = inlined_call_operand.vmem [shape: f32[16,64], index: 22, kind: input, shape index: {}]
  %s23 = inlined_call_operand.vmem [shape: f32[1,64], index: 23, kind: input, shape index: {}]
  %s24 = inlined_call_operand.vmem [shape: f32[64,16], index: 24, kind: output, shape index: {0}]
  %s25 = inlined_call_operand.vmem [shape: f32[8,16], index: 25, kind: output, shape index: {1}]
  %s26 = inlined_call_operand.vmem [shape: f32[8,16], index: 26, kind: output, shape index: {2}]
  %27 = xla_tuple %s24, %s25, %s26
  %s28 = sld [smem:[#allocation0]]
  $region122: #{lstmvae_forward.1} parent=0
    _
  %s30 = ssub.s32 1, %s28
  %s31 = scalar_select 0, %s30, %s28
  // Predicated region
  $region2: #{lstmvae_forward.1} parent=0 // pred_check
    _
  $region3: #{lstmvae_forward.1} parent=0 // pred_check_branch
    %33 = sbr.rel (0) target = $region5
  $region4: #{lstmvae_forward.1} parent=0 // pred_region
    _
  $region5: #{lstmvae_forward.1} parent=0 // pred_fallthru
    _
  // Predicated region
  $region6: #{lstmvae_forward.1} parent=0 // pred_check
    _
  $region7: #{lstmvae_forward.1} parent=0 // pred_check_branch
    %35 = sbr.rel (0) target = $region9
  $region8: #{lstmvae_forward.1} parent=0 // pred_region
    _
  $region9: #{lstmvae_forward.1} parent=0 // pred_fallthru
    _
  // Predicated region
  $region10: #{lstmvae_forward.1} parent=0 // pred_check
    _
  $region11: #{lstmvae_forward.1} parent=0 // pred_check_branch
    %37 = sbr.rel (0) target = $region13
  $region12: #{lstmvae_forward.1} parent=0 // pred_region
    _
  $region13: #{lstmvae_forward.1} parent=0 // pred_fallthru
    _
  // Predicated region
  $region14: #{lstmvae_forward.1} parent=0 // pred_check
    _
  $region15: #{lstmvae_forward.1} parent=0 // pred_check_branch
    %39 = sbr.rel (0) target = $region17
  $region16: #{lstmvae_forward.1} parent=0 // pred_region
    _
  $region17: #{lstmvae_forward.1} parent=0 // pred_fallthru
    _
  // Predicated region
  $region18: #{lstmvae_forward.1} parent=0 // pred_check
    _
  $region19: #{lstmvae_forward.1} parent=0 // pred_check_branch
    %41 = sbr.rel (0) target = $region21
  $region20: #{lstmvae_forward.1} parent=0 // pred_region
    _
  $region21: #{lstmvae_forward.1} parent=0 // pred_fallthru
    _
  // Predicated region
  $region22: #{lstmvae_forward.1} parent=0 // pred_check
    _
  $region23: #{lstmvae_forward.1} parent=0 // pred_check_branch
    %43 = sbr.rel (0) target = $region25
  $region24: #{lstmvae_forward.1} parent=0 // pred_region
    _
  $region25: #{lstmvae_forward.1} parent=0 // pred_fallthru
    _
  // Predicated region
  $region26: #{lstmvae_forward.1} parent=0 // pred_check
    _
  $region27: #{lstmvae_forward.1} parent=0 // pred_check_branch
    %45 = sbr.rel (0) target = $region29
  $region28: #{lstmvae_forward.1} parent=0 // pred_region
    _
  $region29: #{lstmvae_forward.1} parent=0 // pred_fallthru
    _
  // Predicated region
  $region30: #{lstmvae_forward.1} parent=0 // pred_check
    _
  $region31: #{lstmvae_forward.1} parent=0 // pred_check_branch
    %47 = sbr.rel (0) target = $region33
  $region32: #{lstmvae_forward.1} parent=0 // pred_region
    _
  $region33: #{lstmvae_forward.1} parent=0 // pred_fallthru
    _
  // Predicated region
  $region34: #{lstmvae_forward.1} parent=0 // pred_check
    _
  $region35: #{lstmvae_forward.1} parent=0 // pred_check_branch
    %49 = sbr.rel (0) target = $region37
  $region36: #{lstmvae_forward.1} parent=0 // pred_region
    _
  $region37: #{lstmvae_forward.1} parent=0 // pred_fallthru
    _
  // Predicated region
  $region38: #{lstmvae_forward.1} parent=0 // pred_check
    _
  $region39: #{lstmvae_forward.1} parent=0 // pred_check_branch
    %51 = sbr.rel (0) target = $region41
  $region40: #{lstmvae_forward.1} parent=0 // pred_region
    _
  $region41: #{lstmvae_forward.1} parent=0 // pred_fallthru
    _
  // Predicated region
  $region42: #{lstmvae_forward.1} parent=0 // pred_check
    _
  $region43: #{lstmvae_forward.1} parent=0 // pred_check_branch
    %53 = sbr.rel (0) target = $region45
  $region44: #{lstmvae_forward.1} parent=0 // pred_region
    _
  $region45: #{lstmvae_forward.1} parent=0 // pred_fallthru
    _
  // Predicated region
  $region46: #{lstmvae_forward.1} parent=0 // pred_check
    _
  $region47: #{lstmvae_forward.1} parent=0 // pred_check_branch
    %55 = sbr.rel (0) target = $region49
  $region48: #{lstmvae_forward.1} parent=0 // pred_region
    _
  $region49: #{lstmvae_forward.1} parent=0 // pred_fallthru
    _
  // Predicated region
  $region50: #{lstmvae_forward.1} parent=0 // pred_check
    _
  $region51: #{lstmvae_forward.1} parent=0 // pred_check_branch
    %57 = sbr.rel (0) target = $region53
  $region52: #{lstmvae_forward.1} parent=0 // pred_region
    _
  $region53: #{lstmvae_forward.1} parent=0 // pred_fallthru
    _
  // Predicated region
  $region54: #{lstmvae_forward.1} parent=0 // pred_check
    _
  $region55: #{lstmvae_forward.1} parent=0 // pred_check_branch
    %59 = sbr.rel (0) target = $region57
  $region56: #{lstmvae_forward.1} parent=0 // pred_region
    _
  $region57: #{lstmvae_forward.1} parent=0 // pred_fallthru
    _
  // Predicated region
  $region58: #{lstmvae_forward.1} parent=0 // pred_check
    _
  $region59: #{lstmvae_forward.1} parent=0 // pred_check_branch
    %61 = sbr.rel (0) target = $region61
  $region60: #{lstmvae_forward.1} parent=0 // pred_region
    _
  $region61: #{lstmvae_forward.1} parent=0 // pred_fallthru
    _
  // Predicated region
  $region62: #{lstmvae_forward.1} parent=0 // pred_check
    _
  $region63: #{lstmvae_forward.1} parent=0 // pred_check_branch
    %63 = sbr.rel (0) target = $region65
  $region64: #{lstmvae_forward.1} parent=0 // pred_region
    _
  $region65: #{lstmvae_forward.1} parent=0 // pred_fallthru
    _
  // Predicated region
  $region66: #{lstmvae_forward.1} parent=0 // pred_check
    _
  $region67: #{lstmvae_forward.1} parent=0 // pred_check_branch
    %65 = sbr.rel (0) target = $region69
  $region68: #{lstmvae_forward.1} parent=0 // pred_region
    _
  $region69: #{lstmvae_forward.1} parent=0 // pred_fallthru
    _
  // Predicated region
  $region70: #{lstmvae_forward.1} parent=0 // pred_check
    _
  $region71: #{lstmvae_forward.1} parent=0 // pred_check_branch
    %67 = sbr.rel (0) target = $region73
  $region72: #{lstmvae_forward.1} parent=0 // pred_region
    _
  $region73: #{lstmvae_forward.1} parent=0 // pred_fallthru
    _
  // Predicated region
  $region74: #{lstmvae_forward.1} parent=0 // pred_check
    _
  $region75: #{lstmvae_forward.1} parent=0 // pred_check_branch
    %69 = sbr.rel (0) target = $region77
  $region76: #{lstmvae_forward.1} parent=0 // pred_region
    _
  $region77: #{lstmvae_forward.1} parent=0 // pred_fallthru
    _
  // Predicated region
  $region78: #{lstmvae_forward.1} parent=0 // pred_check
    _
  $region79: #{lstmvae_forward.1} parent=0 // pred_check_branch
    %71 = sbr.rel (0) target = $region81
  $region80: #{lstmvae_forward.1} parent=0 // pred_region
    _
  $region81: #{lstmvae_forward.1} parent=0 // pred_fallthru
    _
  // Predicated region
  $region82: #{lstmvae_forward.1} parent=0 // pred_check
    _
  $region83: #{lstmvae_forward.1} parent=0 // pred_check_branch
    %73 = sbr.rel (0) target = $region85
  $region84: #{lstmvae_forward.1} parent=0 // pred_region
    _
  $region85: #{lstmvae_forward.1} parent=0 // pred_fallthru
    _
  // Predicated region
  $region86: #{lstmvae_forward.1} parent=0 // pred_check
    _
  $region87: #{lstmvae_forward.1} parent=0 // pred_check_branch
    %75 = sbr.rel (0) target = $region89
  $region88: #{lstmvae_forward.1} parent=0 // pred_region
    _
  $region89: #{lstmvae_forward.1} parent=0 // pred_fallthru
    _
  // Predicated region
  $region90: #{lstmvae_forward.1} parent=0 // pred_check
    _
  $region91: #{lstmvae_forward.1} parent=0 // pred_check_branch
    %77 = sbr.rel (0) target = $region93
  $region92: #{lstmvae_forward.1} parent=0 // pred_region
    _
  $region93: #{lstmvae_forward.1} parent=0 // pred_fallthru
    _
  // Predicated region
  $region94: #{lstmvae_forward.1} parent=0 // pred_check
    _
  $region95: #{lstmvae_forward.1} parent=0 // pred_check_branch
    %79 = sbr.rel (0) target = $region97
  $region96: #{lstmvae_forward.1} parent=0 // pred_region
    _
  $region97: #{lstmvae_forward.1} parent=0 // pred_fallthru
    _
  %v80 = vld [vmem:[%s0] sm:$0xff]
  %v81 = vld [vmem:[%s0 + $0x8] sm:$0xff]
  %v82 = vld [vmem:[%s0 + $0x10] sm:$0xff]
  %v83 = vld [vmem:[%s0 + $0x18] sm:$0xff]
  %v84 = vld [vmem:[%s0 + $0x20] sm:$0xff]
  %v85 = vld [vmem:[%s0 + $0x28] sm:$0xff]
  %v86 = vld [vmem:[%s0 + $0x30] sm:$0xff]
  %v87 = vld [vmem:[%s0 + $0x38] sm:$0xff]
  %v88 = vld [vmem:[%s2] sm:$0xff]
  %v89 = vld [vmem:[%s4] sm:$0x1]
  %v91 = vlaneseq
  %v92 = vshrl.u32 %v91, 7
  %v93 = vsub.s32 0, %v92
  %v94 = vrot.slane %v89, %v93
  %vm96 = vcmask 64512
  %v98 = vsel %vm96, %v80, 0
  %v101 = vsel %vm96, %v81, 0
  %v104 = vsel %vm96, %v82, 0
  %v107 = vsel %vm96, %v83, 0
  %v110 = vsel %vm96, %v84, 0
  %v113 = vsel %vm96, %v85, 0
  %v116 = vsel %vm96, %v86, 0
  %v119 = vsel %vm96, %v87, 0
  %121 = vmatprep.subr.mxu0 0.0
  %122 = vmatpush1.msra.mxu0 %v88
  %123 = vmatprep.subr.mxu0 0.0
  %124 = vmatpush1.msra.mxu0 0.0
  %125 = vmatprep.subr.mxu0 0.0
  %126 = vmatpush1.msra.mxu0 0.0
  %127 = vmatprep.subr.mxu0 0.0
  %128 = vmatpush1.msra.mxu0 0.0
  %129 = vmatprep.subr.mxu0 0.0
  %130 = vmatpush1.msra.mxu0 0.0
  %131 = vmatprep.subr.mxu0 0.0
  %132 = vmatpush1.msra.mxu0 0.0
  %133 = vmatprep.subr.mxu0 0.0
  %134 = vmatpush1.msra.mxu0 0.0
  %135 = vmatprep.subr.mxu0 0.0
  %136 = vmatpush1.msra.mxu0 0.0
  %137 = vmatprep.subr.mxu0 0.0
  %138 = vmatpush1.msra.mxu0 0.0
  %139 = vmatprep.subr.mxu0 0.0
  %140 = vmatpush1.msra.mxu0 0.0
  %141 = vmatprep.subr.mxu0 0.0
  %142 = vmatpush1.msra.mxu0 0.0
  %143 = vmatprep.subr.mxu0 0.0
  %144 = vmatpush1.msra.mxu0 0.0
  %145 = vmatprep.subr.mxu0 0.0
  %146 = vmatpush1.msra.mxu0 0.0
  %147 = vmatprep.subr.mxu0 0.0
  %148 = vmatpush1.msra.mxu0 0.0
  %149 = vmatprep.subr.mxu0 0.0
  %150 = vmatpush1.msra.mxu0 0.0
  %151 = vmatprep.subr.mxu0 0.0
  %152 = vmatpush1.msra.mxu0 0.0
  %153 = vmatprep.subr.mxu0 0.0
  %154 = vmatpush1.msra.mxu0 0.0
  %155 = vmatprep.subr.mxu0 0.0
  %156 = vmatpush1.msra.mxu0 0.0
  %157 = vmatprep.subr.mxu0 0.0
  %158 = vmatpush1.msra.mxu0 0.0
  %159 = vmatprep.subr.mxu0 0.0
  %160 = vmatpush1.msra.mxu0 0.0
  %161 = vmatprep.subr.mxu0 0.0
  %162 = vmatpush1.msra.mxu0 0.0
  %163 = vmatprep.subr.mxu0 0.0
  %164 = vmatpush1.msra.mxu0 0.0
  %165 = vmatprep.subr.mxu0 0.0
  %166 = vmatpush1.msra.mxu0 0.0
  %167 = vmatprep.subr.mxu0 0.0
  %168 = vmatpush1.msra.mxu0 0.0
  %169 = vmatprep.subr.mxu0 0.0
  %170 = vmatpush1.msra.mxu0 0.0
  %171 = vmatprep.subr.mxu0 0.0
  %172 = vmatpush1.msra.mxu0 0.0
  %173 = vmatprep.subr.mxu0 0.0
  %174 = vmatpush1.msra.mxu0 0.0
  %175 = vmatprep.subr.mxu0 0.0
  %176 = vmatpush1.msra.mxu0 0.0
  %177 = vmatprep.subr.mxu0 0.0
  %178 = vmatpush1.msra.mxu0 0.0
  %179 = vmatprep.subr.mxu0 0.0
  %180 = vmatpush1.msra.mxu0 0.0
  %181 = vmatprep.subr.mxu0 0.0
  %182 = vmatpush1.msra.mxu0 0.0
  %183 = vmatprep.subr.mxu0 0.0
  %184 = vmatpush1.msra.mxu0 0.0
  %185 = vmatprep.mubr.f32.mxu0 0.0
  %186 = vmatmul.mubr.f32.gmra.mrb[0].mxu0 %v98
  %v187 = vpop.f32.mrb[0].mxu0
  %v188 = vadd.f32 %v94, %v187
  %v189 = vpop.f32.mrb[0].mxu0
  %190 = vmatprep.mubr.f32.mxu0 0.0
  %191 = vmatmul.mubr.f32.gmra.mrb[0].mxu0 %v101
  %v192 = vpop.f32.mrb[0].mxu0
  %v193 = vadd.f32 %v94, %v192
  %v194 = vpop.f32.mrb[0].mxu0
  %195 = vmatprep.mubr.f32.mxu0 0.0
  %196 = vmatmul.mubr.f32.gmra.mrb[0].mxu0 %v104
  %v197 = vpop.f32.mrb[0].mxu0
  %v198 = vadd.f32 %v94, %v197
  %v199 = vpop.f32.mrb[0].mxu0
  %200 = vmatprep.mubr.f32.mxu0 0.0
  %201 = vmatmul.mubr.f32.gmra.mrb[0].mxu0 %v107
  %v202 = vpop.f32.mrb[0].mxu0
  %v203 = vadd.f32 %v94, %v202
  %v204 = vpop.f32.mrb[0].mxu0
  %205 = vmatprep.mubr.f32.mxu0 0.0
  %206 = vmatmul.mubr.f32.gmra.mrb[0].mxu0 %v110
  %v207 = vpop.f32.mrb[0].mxu0
  %v208 = vadd.f32 %v94, %v207
  %v209 = vpop.f32.mrb[0].mxu0
  %210 = vmatprep.mubr.f32.mxu0 0.0
  %211 = vmatmul.mubr.f32.gmra.mrb[0].mxu0 %v113
  %v212 = vpop.f32.mrb[0].mxu0
  %v213 = vadd.f32 %v94, %v212
  %v214 = vpop.f32.mrb[0].mxu0
  %215 = vmatprep.mubr.f32.mxu0 0.0
  %216 = vmatmul.mubr.f32.gmra.mrb[0].mxu0 %v116
  %v217 = vpop.f32.mrb[0].mxu0
  %v218 = vadd.f32 %v94, %v217
  %v219 = vpop.f32.mrb[0].mxu0
  %220 = vmatprep.mubr.f32.mxu0 0.0
  %221 = vmatmul.mubr.f32.gmra.mrb[0].mxu0 %v119
  %v222 = vpop.f32.mrb[0].mxu0
  %v223 = vadd.f32 %v94, %v222
  %v224 = vpop.f32.mrb[0].mxu0
  %225 = vdwg.mxu0
  %226 = vst [vmem:[#allocation2] sm:$0xff] %v188
  %227 = vst [vmem:[#allocation2 + $0x8] sm:$0xff] %v193
  %228 = vst [vmem:[#allocation2 + $0x10] sm:$0xff] %v198
  %229 = vst [vmem:[#allocation2 + $0x18] sm:$0xff] %v203
  %230 = vst [vmem:[#allocation2 + $0x20] sm:$0xff] %v208
  %231 = vst [vmem:[#allocation2 + $0x28] sm:$0xff] %v213
  %232 = vst [vmem:[#allocation2 + $0x30] sm:$0xff] %v218
  %233 = vst [vmem:[#allocation2 + $0x38] sm:$0xff] %v223
  %v234 = vld [vmem:[%s3] sm:$0xff]
  %v235 = vld [vmem:[%s3 + $0x8] sm:$0xff]
  %v236 = vld [vmem:[%s3 + $0x10] sm:$0xff]
  %v237 = vld [vmem:[%s3 + $0x18] sm:$0xff]
  %v238 = vld [vmem:[#allocation2] sm:$0xff]
  %vm239 = vcmask 261120
  %v241 = vsel %vm239, 0.0, 0
  %243 = vmatprep.subr.mxu0 0.0
  %244 = vmatpush1.msra.mxu0 %v234
  %245 = vmatprep.subr.mxu0 0.0
  %246 = vmatpush1.msra.mxu0 %v235
  %247 = vmatprep.subr.mxu0 0.0
  %248 = vmatpush1.msra.mxu0 %v236
  %249 = vmatprep.subr.mxu0 0.0
  %250 = vmatpush1.msra.mxu0 %v237
  %251 = vmatprep.subr.mxu0 0.0
  %252 = vmatpush1.msra.mxu0 0.0
  %253 = vmatprep.subr.mxu0 0.0
  %254 = vmatpush1.msra.mxu0 0.0
  %255 = vmatprep.subr.mxu0 0.0
  %256 = vmatpush1.msra.mxu0 0.0
  %257 = vmatprep.subr.mxu0 0.0
  %258 = vmatpush1.msra.mxu0 0.0
  %259 = vmatprep.subr.mxu0 0.0
  %260 = vmatpush1.msra.mxu0 0.0
  %261 = vmatprep.subr.mxu0 0.0
  %262 = vmatpush1.msra.mxu0 0.0
  %263 = vmatprep.subr.mxu0 0.0
  %264 = vmatpush1.msra.mxu0 0.0
  %265 = vmatprep.subr.mxu0 0.0
  %266 = vmatpush1.msra.mxu0 0.0
  %267 = vmatprep.subr.mxu0 0.0
  %268 = vmatpush1.msra.mxu0 0.0
  %269 = vmatprep.subr.mxu0 0.0
  %270 = vmatpush1.msra.mxu0 0.0
  %271 = vmatprep.subr.mxu0 0.0
  %272 = vmatpush1.msra.mxu0 0.0
  %273 = vmatprep.subr.mxu0 0.0
  %274 = vmatpush1.msra.mxu0 0.0
  %275 = vmatprep.subr.mxu0 0.0
  %276 = vmatpush1.msra.mxu0 0.0
  %277 = vmatprep.subr.mxu0 0.0
  %278 = vmatpush1.msra.mxu0 0.0
  %279 = vmatprep.subr.mxu0 0.0
  %280 = vmatpush1.msra.mxu0 0.0
  %281 = vmatprep.subr.mxu0 0.0
  %282 = vmatpush1.msra.mxu0 0.0
  %283 = vmatprep.subr.mxu0 0.0
  %284 = vmatpush1.msra.mxu0 0.0
  %285 = vmatprep.subr.mxu0 0.0
  %286 = vmatpush1.msra.mxu0 0.0
  %287 = vmatprep.subr.mxu0 0.0
  %288 = vmatpush1.msra.mxu0 0.0
  %289 = vmatprep.subr.mxu0 0.0
  %290 = vmatpush1.msra.mxu0 0.0
  %291 = vmatprep.subr.mxu0 0.0
  %292 = vmatpush1.msra.mxu0 0.0
  %293 = vmatprep.subr.mxu0 0.0
  %294 = vmatpush1.msra.mxu0 0.0
  %295 = vmatprep.subr.mxu0 0.0
  %296 = vmatpush1.msra.mxu0 0.0
  %297 = vmatprep.subr.mxu0 0.0
  %298 = vmatpush1.msra.mxu0 0.0
  %299 = vmatprep.subr.mxu0 0.0
  %300 = vmatpush1.msra.mxu0 0.0
  %301 = vmatprep.subr.mxu0 0.0
  %302 = vmatpush1.msra.mxu0 0.0
  %303 = vmatprep.subr.mxu0 0.0
  %304 = vmatpush1.msra.mxu0 0.0
  %305 = vmatprep.subr.mxu0 0.0
  %306 = vmatpush1.msra.mxu0 0.0
  %307 = vmatprep.mubr.f32.mxu0 0.0
  %308 = vmatmul.mubr.f32.gmra.mrb[0].mxu0 %v241
  %v309 = vpop.f32.mrb[0].mxu0
  %v310 = vadd.f32 0.0, %v309
  %v311 = vpop.f32.mrb[0].mxu0
  %312 = vdwg.mxu0
  %v313 = vadd.f32 %v238, %v310
  %v314 = vxor.u32 %v313, 2147483648
  %v315 = vmul.f32 %v314, 1.442695
  %v316 = vpow.pop %v315
  %v317 = vadd.f32 %v316, 1.0
  %v318 = vrcp.pop %v317
  %v319 = vmul.f32 1.0, %v318
  %v320 = vtanh.pop %v313
  %v321 = vmul.f32 %v319, 0.0
  %323 = vrot.lane.b32.xlu0 %v320, 64
  %v324 = vpop.permute.xlu0 %323
  %v326 = vmul.f32 %v319, %v324
  %328 = vrot.lane.b32.xlu0 %v326, 32
  %v329 = vpop.permute.xlu0 %328
  %v331 = vadd.f32 %v321, %v329
  %v332 = vtanh.pop %v331
  %334 = vrot.lane.b32.xlu0 %v332, 64
  %v335 = vpop.permute.xlu0 %334
  %v337 = vmul.f32 %v319, %v335
  %339 = vrot.lane.b32.xlu0 %v337, 32
  %v340 = vpop.permute.xlu0 %339
  %342 = vst.msk [vmem:[#allocation3] sm:$0xff] %vm239, %v340
  %v343 = vld [vmem:[#allocation2 + $0x8] sm:$0xff]
  %v344 = vsel %vm239, %v340, 0
  %346 = vmatprep.subr.mxu0 0.0
  %347 = vmatpush1.msra.mxu0 %v234
  %348 = vmatprep.subr.mxu0 0.0
  %349 = vmatpush1.msra.mxu0 %v235
  %350 = vmatprep.subr.mxu0 0.0
  %351 = vmatpush1.msra.mxu0 %v236
  %352 = vmatprep.subr.mxu0 0.0
  %353 = vmatpush1.msra.mxu0 %v237
  %354 = vmatprep.subr.mxu0 0.0
  %355 = vmatpush1.msra.mxu0 0.0
  %356 = vmatprep.subr.mxu0 0.0
  %357 = vmatpush1.msra.mxu0 0.0
  %358 = vmatprep.subr.mxu0 0.0
  %359 = vmatpush1.msra.mxu0 0.0
  %360 = vmatprep.subr.mxu0 0.0
  %361 = vmatpush1.msra.mxu0 0.0
  %362 = vmatprep.subr.mxu0 0.0
  %363 = vmatpush1.msra.mxu0 0.0
  %364 = vmatprep.subr.mxu0 0.0
  %365 = vmatpush1.msra.mxu0 0.0
  %366 = vmatprep.subr.mxu0 0.0
  %367 = vmatpush1.msra.mxu0 0.0
  %368 = vmatprep.subr.mxu0 0.0
  %369 = vmatpush1.msra.mxu0 0.0
  %370 = vmatprep.subr.mxu0 0.0
  %371 = vmatpush1.msra.mxu0 0.0
  %372 = vmatprep.subr.mxu0 0.0
  %373 = vmatpush1.msra.mxu0 0.0
  %374 = vmatprep.subr.mxu0 0.0
  %375 = vmatpush1.msra.mxu0 0.0
  %376 = vmatprep.subr.mxu0 0.0
  %377 = vmatpush1.msra.mxu0 0.0
  %378 = vmatprep.subr.mxu0 0.0
  %379 = vmatpush1.msra.mxu0 0.0
  %380 = vmatprep.subr.mxu0 0.0
  %381 = vmatpush1.msra.mxu0 0.0
  %382 = vmatprep.subr.mxu0 0.0
  %383 = vmatpush1.msra.mxu0 0.0
  %384 = vmatprep.subr.mxu0 0.0
  %385 = vmatpush1.msra.mxu0 0.0
  %386 = vmatprep.subr.mxu0 0.0
  %387 = vmatpush1.msra.mxu0 0.0
  %388 = vmatprep.subr.mxu0 0.0
  %389 = vmatpush1.msra.mxu0 0.0
  %390 = vmatprep.subr.mxu0 0.0
  %391 = vmatpush1.msra.mxu0 0.0
  %392 = vmatprep.subr.mxu0 0.0
  %393 = vmatpush1.msra.mxu0 0.0
  %394 = vmatprep.subr.mxu0 0.0
  %395 = vmatpush1.msra.mxu0 0.0
  %396 = vmatprep.subr.mxu0 0.0
  %397 = vmatpush1.msra.mxu0 0.0
  %398 = vmatprep.subr.mxu0 0.0
  %399 = vmatpush1.msra.mxu0 0.0
  %400 = vmatprep.subr.mxu0 0.0
  %401 = vmatpush1.msra.mxu0 0.0
  %402 = vmatprep.subr.mxu0 0.0
  %403 = vmatpush1.msra.mxu0 0.0
  %404 = vmatprep.subr.mxu0 0.0
  %405 = vmatpush1.msra.mxu0 0.0
  %406 = vmatprep.subr.mxu0 0.0
  %407 = vmatpush1.msra.mxu0 0.0
  %408 = vmatprep.subr.mxu0 0.0
  %409 = vmatpush1.msra.mxu0 0.0
  %410 = vmatprep.mubr.f32.mxu0 0.0
  %411 = vmatmul.mubr.f32.gmra.mrb[0].mxu0 %v344
  %v412 = vpop.f32.mrb[0].mxu0
  %v413 = vadd.f32 0.0, %v412
  %v414 = vpop.f32.mrb[0].mxu0
  %415 = vdwg.mxu0
  %v416 = vadd.f32 %v343, %v413
  %v417 = vxor.u32 %v416, 2147483648
  %v418 = vmul.f32 %v417, 1.442695
  %v419 = vpow.pop %v418
  %v420 = vadd.f32 %v419, 1.0
  %v421 = vrcp.pop %v420
  %v422 = vmul.f32 1.0, %v421
  %v423 = vtanh.pop %v416
  %v424 = vmul.f32 %v422, %v331
  %426 = vrot.lane.b32.xlu0 %v423, 64
  %v427 = vpop.permute.xlu0 %426
  %v429 = vmul.f32 %v422, %v427
  %431 = vrot.lane.b32.xlu0 %v429, 32
  %v432 = vpop.permute.xlu0 %431
  %v434 = vadd.f32 %v424, %v432
  %v435 = vtanh.pop %v434
  %437 = vrot.lane.b32.xlu0 %v435, 64
  %v438 = vpop.permute.xlu0 %437
  %v440 = vmul.f32 %v422, %v438
  %442 = vrot.lane.b32.xlu0 %v440, 32
  %v443 = vpop.permute.xlu0 %442
  %445 = vst.msk [vmem:[#allocation3 + $0x8] sm:$0xff] %vm239, %v443
  %v446 = vld [vmem:[#allocation2 + $0x10] sm:$0xff]
  %v447 = vsel %vm239, %v443, 0
  %449 = vmatprep.subr.mxu0 0.0
  %450 = vmatpush1.msra.mxu0 %v234
  %451 = vmatprep.subr.mxu0 0.0
  %452 = vmatpush1.msra.mxu0 %v235
  %453 = vmatprep.subr.mxu0 0.0
  %454 = vmatpush1.msra.mxu0 %v236
  %455 = vmatprep.subr.mxu0 0.0
  %456 = vmatpush1.msra.mxu0 %v237
  %457 = vmatprep.subr.mxu0 0.0
  %458 = vmatpush1.msra.mxu0 0.0
  %459 = vmatprep.subr.mxu0 0.0
  %460 = vmatpush1.msra.mxu0 0.0
  %461 = vmatprep.subr.mxu0 0.0
  %462 = vmatpush1.msra.mxu0 0.0
  %463 = vmatprep.subr.mxu0 0.0
  %464 = vmatpush1.msra.mxu0 0.0
  %465 = vmatprep.subr.mxu0 0.0
  %466 = vmatpush1.msra.mxu0 0.0
  %467 = vmatprep.subr.mxu0 0.0
  %468 = vmatpush1.msra.mxu0 0.0
  %469 = vmatprep.subr.mxu0 0.0
  %470 = vmatpush1.msra.mxu0 0.0
  %471 = vmatprep.subr.mxu0 0.0
  %472 = vmatpush1.msra.mxu0 0.0
  %473 = vmatprep.subr.mxu0 0.0
  %474 = vmatpush1.msra.mxu0 0.0
  %475 = vmatprep.subr.mxu0 0.0
  %476 = vmatpush1.msra.mxu0 0.0
  %477 = vmatprep.subr.mxu0 0.0
  %478 = vmatpush1.msra.mxu0 0.0
  %479 = vmatprep.subr.mxu0 0.0
  %480 = vmatpush1.msra.mxu0 0.0
  %481 = vmatprep.subr.mxu0 0.0
  %482 = vmatpush1.msra.mxu0 0.0
  %483 = vmatprep.subr.mxu0 0.0
  %484 = vmatpush1.msra.mxu0 0.0
  %485 = vmatprep.subr.mxu0 0.0
  %486 = vmatpush1.msra.mxu0 0.0
  %487 = vmatprep.subr.mxu0 0.0
  %488 = vmatpush1.msra.mxu0 0.0
  %489 = vmatprep.subr.mxu0 0.0
  %490 = vmatpush1.msra.mxu0 0.0
  %491 = vmatprep.subr.mxu0 0.0
  %492 = vmatpush1.msra.mxu0 0.0
  %493 = vmatprep.subr.mxu0 0.0
  %494 = vmatpush1.msra.mxu0 0.0
  %495 = vmatprep.subr.mxu0 0.0
  %496 = vmatpush1.msra.mxu0 0.0
  %497 = vmatprep.subr.mxu0 0.0
  %498 = vmatpush1.msra.mxu0 0.0
  %499 = vmatprep.subr.mxu0 0.0
  %500 = vmatpush1.msra.mxu0 0.0
  %501 = vmatprep.subr.mxu0 0.0
  %502 = vmatpush1.msra.mxu0 0.0
  %503 = vmatprep.subr.mxu0 0.0
  %504 = vmatpush1.msra.mxu0 0.0
  %505 = vmatprep.subr.mxu0 0.0
  %506 = vmatpush1.msra.mxu0 0.0
  %507 = vmatprep.subr.mxu0 0.0
  %508 = vmatpush1.msra.mxu0 0.0
  %509 = vmatprep.subr.mxu0 0.0
  %510 = vmatpush1.msra.mxu0 0.0
  %511 = vmatprep.subr.mxu0 0.0
  %512 = vmatpush1.msra.mxu0 0.0
  %513 = vmatprep.mubr.f32.mxu0 0.0
  %514 = vmatmul.mubr.f32.gmra.mrb[0].mxu0 %v447
  %v515 = vpop.f32.mrb[0].mxu0
  %v516 = vadd.f32 0.0, %v515
  %v517 = vpop.f32.mrb[0].mxu0
  %518 = vdwg.mxu0
  %v519 = vadd.f32 %v446, %v516
  %v520 = vxor.u32 %v519, 2147483648
  %v521 = vmul.f32 %v520, 1.442695
  %v522 = vpow.pop %v521
  %v523 = vadd.f32 %v522, 1.0
  %v524 = vrcp.pop %v523
  %v525 = vmul.f32 1.0, %v524
  %v526 = vtanh.pop %v519
  %v527 = vmul.f32 %v525, %v434
  %529 = vrot.lane.b32.xlu0 %v526, 64
  %v530 = vpop.permute.xlu0 %529
  %v532 = vmul.f32 %v525, %v530
  %534 = vrot.lane.b32.xlu0 %v532, 32
  %v535 = vpop.permute.xlu0 %534
  %v537 = vadd.f32 %v527, %v535
  %v538 = vtanh.pop %v537
  %540 = vrot.lane.b32.xlu0 %v538, 64
  %v541 = vpop.permute.xlu0 %540
  %v543 = vmul.f32 %v525, %v541
  %545 = vrot.lane.b32.xlu0 %v543, 32
  %v546 = vpop.permute.xlu0 %545
  %548 = vst.msk [vmem:[#allocation3 + $0x10] sm:$0xff] %vm239, %v546
  %v549 = vld [vmem:[#allocation2 + $0x18] sm:$0xff]
  %v550 = vsel %vm239, %v546, 0
  %552 = vmatprep.subr.mxu0 0.0
  %553 = vmatpush1.msra.mxu0 %v234
  %554 = vmatprep.subr.mxu0 0.0
  %555 = vmatpush1.msra.mxu0 %v235
  %556 = vmatprep.subr.mxu0 0.0
  %557 = vmatpush1.msra.mxu0 %v236
  %558 = vmatprep.subr.mxu0 0.0
  %559 = vmatpush1.msra.mxu0 %v237
  %560 = vmatprep.subr.mxu0 0.0
  %561 = vmatpush1.msra.mxu0 0.0
  %562 = vmatprep.subr.mxu0 0.0
  %563 = vmatpush1.msra.mxu0 0.0
  %564 = vmatprep.subr.mxu0 0.0
  %565 = vmatpush1.msra.mxu0 0.0
  %566 = vmatprep.subr.mxu0 0.0
  %567 = vmatpush1.msra.mxu0 0.0
  %568 = vmatprep.subr.mxu0 0.0
  %569 = vmatpush1.msra.mxu0 0.0
  %570 = vmatprep.subr.mxu0 0.0
  %571 = vmatpush1.msra.mxu0 0.0
  %572 = vmatprep.subr.mxu0 0.0
  %573 = vmatpush1.msra.mxu0 0.0
  %574 = vmatprep.subr.mxu0 0.0
  %575 = vmatpush1.msra.mxu0 0.0
  %576 = vmatprep.subr.mxu0 0.0
  %577 = vmatpush1.msra.mxu0 0.0
  %578 = vmatprep.subr.mxu0 0.0
  %579 = vmatpush1.msra.mxu0 0.0
  %580 = vmatprep.subr.mxu0 0.0
  %581 = vmatpush1.msra.mxu0 0.0
  %582 = vmatprep.subr.mxu0 0.0
  %583 = vmatpush1.msra.mxu0 0.0
  %584 = vmatprep.subr.mxu0 0.0
  %585 = vmatpush1.msra.mxu0 0.0
  %586 = vmatprep.subr.mxu0 0.0
  %587 = vmatpush1.msra.mxu0 0.0
  %588 = vmatprep.subr.mxu0 0.0
  %589 = vmatpush1.msra.mxu0 0.0
  %590 = vmatprep.subr.mxu0 0.0
  %591 = vmatpush1.msra.mxu0 0.0
  %592 = vmatprep.subr.mxu0 0.0
  %593 = vmatpush1.msra.mxu0 0.0
  %594 = vmatprep.subr.mxu0 0.0
  %595 = vmatpush1.msra.mxu0 0.0
  %596 = vmatprep.subr.mxu0 0.0
  %597 = vmatpush1.msra.mxu0 0.0
  %598 = vmatprep.subr.mxu0 0.0
  %599 = vmatpush1.msra.mxu0 0.0
  %600 = vmatprep.subr.mxu0 0.0
  %601 = vmatpush1.msra.mxu0 0.0
  %602 = vmatprep.subr.mxu0 0.0
  %603 = vmatpush1.msra.mxu0 0.0
  %604 = vmatprep.subr.mxu0 0.0
  %605 = vmatpush1.msra.mxu0 0.0
  %606 = vmatprep.subr.mxu0 0.0
  %607 = vmatpush1.msra.mxu0 0.0
  %608 = vmatprep.subr.mxu0 0.0
  %609 = vmatpush1.msra.mxu0 0.0
  %610 = vmatprep.subr.mxu0 0.0
  %611 = vmatpush1.msra.mxu0 0.0
  %612 = vmatprep.subr.mxu0 0.0
  %613 = vmatpush1.msra.mxu0 0.0
  %614 = vmatprep.subr.mxu0 0.0
  %615 = vmatpush1.msra.mxu0 0.0
  %616 = vmatprep.mubr.f32.mxu0 0.0
  %617 = vmatmul.mubr.f32.gmra.mrb[0].mxu0 %v550
  %v618 = vpop.f32.mrb[0].mxu0
  %v619 = vadd.f32 0.0, %v618
  %v620 = vpop.f32.mrb[0].mxu0
  %621 = vdwg.mxu0
  %v622 = vadd.f32 %v549, %v619
  %v623 = vxor.u32 %v622, 2147483648
  %v624 = vmul.f32 %v623, 1.442695
  %v625 = vpow.pop %v624
  %v626 = vadd.f32 %v625, 1.0
  %v627 = vrcp.pop %v626
  %v628 = vmul.f32 1.0, %v627
  %v629 = vtanh.pop %v622
  %v630 = vmul.f32 %v628, %v537
  %632 = vrot.lane.b32.xlu0 %v629, 64
  %v633 = vpop.permute.xlu0 %632
  %v635 = vmul.f32 %v628, %v633
  %637 = vrot.lane.b32.xlu0 %v635, 32
  %v638 = vpop.permute.xlu0 %637
  %v640 = vadd.f32 %v630, %v638
  %v641 = vtanh.pop %v640
  %643 = vrot.lane.b32.xlu0 %v641, 64
  %v644 = vpop.permute.xlu0 %643
  %v646 = vmul.f32 %v628, %v644
  %648 = vrot.lane.b32.xlu0 %v646, 32
  %v649 = vpop.permute.xlu0 %648
  %651 = vst.msk [vmem:[#allocation3 + $0x18] sm:$0xff] %vm239, %v649
  %v652 = vld [vmem:[#allocation2 + $0x20] sm:$0xff]
  %v653 = vsel %vm239, %v649, 0
  %655 = vmatprep.subr.mxu0 0.0
  %656 = vmatpush1.msra.mxu0 %v234
  %657 = vmatprep.subr.mxu0 0.0
  %658 = vmatpush1.msra.mxu0 %v235
  %659 = vmatprep.subr.mxu0 0.0
  %660 = vmatpush1.msra.mxu0 %v236
  %661 = vmatprep.subr.mxu0 0.0
  %662 = vmatpush1.msra.mxu0 %v237
  %663 = vmatprep.subr.mxu0 0.0
  %664 = vmatpush1.msra.mxu0 0.0
  %665 = vmatprep.subr.mxu0 0.0
  %666 = vmatpush1.msra.mxu0 0.0
  %667 = vmatprep.subr.mxu0 0.0
  %668 = vmatpush1.msra.mxu0 0.0
  %669 = vmatprep.subr.mxu0 0.0
  %670 = vmatpush1.msra.mxu0 0.0
  %671 = vmatprep.subr.mxu0 0.0
  %672 = vmatpush1.msra.mxu0 0.0
  %673 = vmatprep.subr.mxu0 0.0
  %674 = vmatpush1.msra.mxu0 0.0
  %675 = vmatprep.subr.mxu0 0.0
  %676 = vmatpush1.msra.mxu0 0.0
  %677 = vmatprep.subr.mxu0 0.0
  %678 = vmatpush1.msra.mxu0 0.0
  %679 = vmatprep.subr.mxu0 0.0
  %680 = vmatpush1.msra.mxu0 0.0
  %681 = vmatprep.subr.mxu0 0.0
  %682 = vmatpush1.msra.mxu0 0.0
  %683 = vmatprep.subr.mxu0 0.0
  %684 = vmatpush1.msra.mxu0 0.0
  %685 = vmatprep.subr.mxu0 0.0
  %686 = vmatpush1.msra.mxu0 0.0
  %687 = vmatprep.subr.mxu0 0.0
  %688 = vmatpush1.msra.mxu0 0.0
  %689 = vmatprep.subr.mxu0 0.0
  %690 = vmatpush1.msra.mxu0 0.0
  %691 = vmatprep.subr.mxu0 0.0
  %692 = vmatpush1.msra.mxu0 0.0
  %693 = vmatprep.subr.mxu0 0.0
  %694 = vmatpush1.msra.mxu0 0.0
  %695 = vmatprep.subr.mxu0 0.0
  %696 = vmatpush1.msra.mxu0 0.0
  %697 = vmatprep.subr.mxu0 0.0
  %698 = vmatpush1.msra.mxu0 0.0
  %699 = vmatprep.subr.mxu0 0.0
  %700 = vmatpush1.msra.mxu0 0.0
  %701 = vmatprep.subr.mxu0 0.0
  %702 = vmatpush1.msra.mxu0 0.0
  %703 = vmatprep.subr.mxu0 0.0
  %704 = vmatpush1.msra.mxu0 0.0
  %705 = vmatprep.subr.mxu0 0.0
  %706 = vmatpush1.msra.mxu0 0.0
  %707 = vmatprep.subr.mxu0 0.0
  %708 = vmatpush1.msra.mxu0 0.0
  %709 = vmatprep.subr.mxu0 0.0
  %710 = vmatpush1.msra.mxu0 0.0
  %711 = vmatprep.subr.mxu0 0.0
  %712 = vmatpush1.msra.mxu0 0.0
  %713 = vmatprep.subr.mxu0 0.0
  %714 = vmatpush1.msra.mxu0 0.0
  %715 = vmatprep.subr.mxu0 0.0
  %716 = vmatpush1.msra.mxu0 0.0
  %717 = vmatprep.subr.mxu0 0.0
  %718 = vmatpush1.msra.mxu0 0.0
  %719 = vmatprep.mubr.f32.mxu0 0.0
  %720 = vmatmul.mubr.f32.gmra.mrb[0].mxu0 %v653
  %v721 = vpop.f32.mrb[0].mxu0
  %v722 = vadd.f32 0.0, %v721
  %v723 = vpop.f32.mrb[0].mxu0
  %724 = vdwg.mxu0
  %v725 = vadd.f32 %v652, %v722
  %v726 = vxor.u32 %v725, 2147483648
  %v727 = vmul.f32 %v726, 1.442695
  %v728 = vpow.pop %v727
  %v729 = vadd.f32 %v728, 1.0
  %v730 = vrcp.pop %v729
  %v731 = vmul.f32 1.0, %v730
  %v732 = vtanh.pop %v725
  %v733 = vmul.f32 %v731, %v640
  %735 = vrot.lane.b32.xlu0 %v732, 64
  %v736 = vpop.permute.xlu0 %735
  %v738 = vmul.f32 %v731, %v736
  %740 = vrot.lane.b32.xlu0 %v738, 32
  %v741 = vpop.permute.xlu0 %740
  %v743 = vadd.f32 %v733, %v741
  %v744 = vtanh.pop %v743
  %746 = vrot.lane.b32.xlu0 %v744, 64
  %v747 = vpop.permute.xlu0 %746
  %v749 = vmul.f32 %v731, %v747
  %751 = vrot.lane.b32.xlu0 %v749, 32
  %v752 = vpop.permute.xlu0 %751
  %754 = vst.msk [vmem:[#allocation3 + $0x20] sm:$0xff] %vm239, %v752
  %v755 = vld [vmem:[#allocation2 + $0x28] sm:$0xff]
  %v756 = vsel %vm239, %v752, 0
  %758 = vmatprep.subr.mxu0 0.0
  %759 = vmatpush1.msra.mxu0 %v234
  %760 = vmatprep.subr.mxu0 0.0
  %761 = vmatpush1.msra.mxu0 %v235
  %762 = vmatprep.subr.mxu0 0.0
  %763 = vmatpush1.msra.mxu0 %v236
  %764 = vmatprep.subr.mxu0 0.0
  %765 = vmatpush1.msra.mxu0 %v237
  %766 = vmatprep.subr.mxu0 0.0
  %767 = vmatpush1.msra.mxu0 0.0
  %768 = vmatprep.subr.mxu0 0.0
  %769 = vmatpush1.msra.mxu0 0.0
  %770 = vmatprep.subr.mxu0 0.0
  %771 = vmatpush1.msra.mxu0 0.0
  %772 = vmatprep.subr.mxu0 0.0
  %773 = vmatpush1.msra.mxu0 0.0
  %774 = vmatprep.subr.mxu0 0.0
  %775 = vmatpush1.msra.mxu0 0.0
  %776 = vmatprep.subr.mxu0 0.0
  %777 = vmatpush1.msra.mxu0 0.0
  %778 = vmatprep.subr.mxu0 0.0
  %779 = vmatpush1.msra.mxu0 0.0
  %780 = vmatprep.subr.mxu0 0.0
  %781 = vmatpush1.msra.mxu0 0.0
  %782 = vmatprep.subr.mxu0 0.0
  %783 = vmatpush1.msra.mxu0 0.0
  %784 = vmatprep.subr.mxu0 0.0
  %785 = vmatpush1.msra.mxu0 0.0
  %786 = vmatprep.subr.mxu0 0.0
  %787 = vmatpush1.msra.mxu0 0.0
  %788 = vmatprep.subr.mxu0 0.0
  %789 = vmatpush1.msra.mxu0 0.0
  %790 = vmatprep.subr.mxu0 0.0
  %791 = vmatpush1.msra.mxu0 0.0
  %792 = vmatprep.subr.mxu0 0.0
  %793 = vmatpush1.msra.mxu0 0.0
  %794 = vmatprep.subr.mxu0 0.0
  %795 = vmatpush1.msra.mxu0 0.0
  %796 = vmatprep.subr.mxu0 0.0
  %797 = vmatpush1.msra.mxu0 0.0
  %798 = vmatprep.subr.mxu0 0.0
  %799 = vmatpush1.msra.mxu0 0.0
  %800 = vmatprep.subr.mxu0 0.0
  %801 = vmatpush1.msra.mxu0 0.0
  %802 = vmatprep.subr.mxu0 0.0
  %803 = vmatpush1.msra.mxu0 0.0
  %804 = vmatprep.subr.mxu0 0.0
  %805 = vmatpush1.msra.mxu0 0.0
  %806 = vmatprep.subr.mxu0 0.0
  %807 = vmatpush1.msra.mxu0 0.0
  %808 = vmatprep.subr.mxu0 0.0
  %809 = vmatpush1.msra.mxu0 0.0
  %810 = vmatprep.subr.mxu0 0.0
  %811 = vmatpush1.msra.mxu0 0.0
  %812 = vmatprep.subr.mxu0 0.0
  %813 = vmatpush1.msra.mxu0 0.0
  %814 = vmatprep.subr.mxu0 0.0
  %815 = vmatpush1.msra.mxu0 0.0
  %816 = vmatprep.subr.mxu0 0.0
  %817 = vmatpush1.msra.mxu0 0.0
  %818 = vmatprep.subr.mxu0 0.0
  %819 = vmatpush1.msra.mxu0 0.0
  %820 = vmatprep.subr.mxu0 0.0
  %821 = vmatpush1.msra.mxu0 0.0
  %822 = vmatprep.mubr.f32.mxu0 0.0
  %823 = vmatmul.mubr.f32.gmra.mrb[0].mxu0 %v756
  %v824 = vpop.f32.mrb[0].mxu0
  %v825 = vadd.f32 0.0, %v824
  %v826 = vpop.f32.mrb[0].mxu0
  %827 = vdwg.mxu0
  %v828 = vadd.f32 %v755, %v825
  %v829 = vxor.u32 %v828, 2147483648
  %v830 = vmul.f32 %v829, 1.442695
  %v831 = vpow.pop %v830
  %v832 = vadd.f32 %v831, 1.0
  %v833 = vrcp.pop %v832
  %v834 = vmul.f32 1.0, %v833
  %v835 = vtanh.pop %v828
  %v836 = vmul.f32 %v834, %v743
  %838 = vrot.lane.b32.xlu0 %v835, 64
  %v839 = vpop.permute.xlu0 %838
  %v841 = vmul.f32 %v834, %v839
  %843 = vrot.lane.b32.xlu0 %v841, 32
  %v844 = vpop.permute.xlu0 %843
  %v846 = vadd.f32 %v836, %v844
  %v847 = vtanh.pop %v846
  %849 = vrot.lane.b32.xlu0 %v847, 64
  %v850 = vpop.permute.xlu0 %849
  %v852 = vmul.f32 %v834, %v850
  %854 = vrot.lane.b32.xlu0 %v852, 32
  %v855 = vpop.permute.xlu0 %854
  %857 = vst.msk [vmem:[#allocation3 + $0x28] sm:$0xff] %vm239, %v855
  %v858 = vld [vmem:[#allocation2 + $0x30] sm:$0xff]
  %v859 = vsel %vm239, %v855, 0
  %861 = vmatprep.subr.mxu0 0.0
  %862 = vmatpush1.msra.mxu0 %v234
  %863 = vmatprep.subr.mxu0 0.0
  %864 = vmatpush1.msra.mxu0 %v235
  %865 = vmatprep.subr.mxu0 0.0
  %866 = vmatpush1.msra.mxu0 %v236
  %867 = vmatprep.subr.mxu0 0.0
  %868 = vmatpush1.msra.mxu0 %v237
  %869 = vmatprep.subr.mxu0 0.0
  %870 = vmatpush1.msra.mxu0 0.0
  %871 = vmatprep.subr.mxu0 0.0
  %872 = vmatpush1.msra.mxu0 0.0
  %873 = vmatprep.subr.mxu0 0.0
  %874 = vmatpush1.msra.mxu0 0.0
  %875 = vmatprep.subr.mxu0 0.0
  %876 = vmatpush1.msra.mxu0 0.0
  %877 = vmatprep.subr.mxu0 0.0
  %878 = vmatpush1.msra.mxu0 0.0
  %879 = vmatprep.subr.mxu0 0.0
  %880 = vmatpush1.msra.mxu0 0.0
  %881 = vmatprep.subr.mxu0 0.0
  %882 = vmatpush1.msra.mxu0 0.0
  %883 = vmatprep.subr.mxu0 0.0
  %884 = vmatpush1.msra.mxu0 0.0
  %885 = vmatprep.subr.mxu0 0.0
  %886 = vmatpush1.msra.mxu0 0.0
  %887 = vmatprep.subr.mxu0 0.0
  %888 = vmatpush1.msra.mxu0 0.0
  %889 = vmatprep.subr.mxu0 0.0
  %890 = vmatpush1.msra.mxu0 0.0
  %891 = vmatprep.subr.mxu0 0.0
  %892 = vmatpush1.msra.mxu0 0.0
  %893 = vmatprep.subr.mxu0 0.0
  %894 = vmatpush1.msra.mxu0 0.0
  %895 = vmatprep.subr.mxu0 0.0
  %896 = vmatpush1.msra.mxu0 0.0
  %897 = vmatprep.subr.mxu0 0.0
  %898 = vmatpush1.msra.mxu0 0.0
  %899 = vmatprep.subr.mxu0 0.0
  %900 = vmatpush1.msra.mxu0 0.0
  %901 = vmatprep.subr.mxu0 0.0
  %902 = vmatpush1.msra.mxu0 0.0
  %903 = vmatprep.subr.mxu0 0.0
  %904 = vmatpush1.msra.mxu0 0.0
  %905 = vmatprep.subr.mxu0 0.0
  %906 = vmatpush1.msra.mxu0 0.0
  %907 = vmatprep.subr.mxu0 0.0
  %908 = vmatpush1.msra.mxu0 0.0
  %909 = vmatprep.subr.mxu0 0.0
  %910 = vmatpush1.msra.mxu0 0.0
  %911 = vmatprep.subr.mxu0 0.0
  %912 = vmatpush1.msra.mxu0 0.0
  %913 = vmatprep.subr.mxu0 0.0
  %914 = vmatpush1.msra.mxu0 0.0
  %915 = vmatprep.subr.mxu0 0.0
  %916 = vmatpush1.msra.mxu0 0.0
  %917 = vmatprep.subr.mxu0 0.0
  %918 = vmatpush1.msra.mxu0 0.0
  %919 = vmatprep.subr.mxu0 0.0
  %920 = vmatpush1.msra.mxu0 0.0
  %921 = vmatprep.subr.mxu0 0.0
  %922 = vmatpush1.msra.mxu0 0.0
  %923 = vmatprep.subr.mxu0 0.0
  %924 = vmatpush1.msra.mxu0 0.0
  %925 = vmatprep.mubr.f32.mxu0 0.0
  %926 = vmatmul.mubr.f32.gmra.mrb[0].mxu0 %v859
  %v927 = vpop.f32.mrb[0].mxu0
  %v928 = vadd.f32 0.0, %v927
  %v929 = vpop.f32.mrb[0].mxu0
  %930 = vdwg.mxu0
  %v931 = vadd.f32 %v858, %v928
  %v932 = vxor.u32 %v931, 2147483648
  %v933 = vmul.f32 %v932, 1.442695
  %v934 = vpow.pop %v933
  %v935 = vadd.f32 %v934, 1.0
  %v936 = vrcp.pop %v935
  %v937 = vmul.f32 1.0, %v936
  %v938 = vtanh.pop %v931
  %v939 = vmul.f32 %v937, %v846
  %941 = vrot.lane.b32.xlu0 %v938, 64
  %v942 = vpop.permute.xlu0 %941
  %v944 = vmul.f32 %v937, %v942
  %946 = vrot.lane.b32.xlu0 %v944, 32
  %v947 = vpop.permute.xlu0 %946
  %v949 = vadd.f32 %v939, %v947
  %v950 = vtanh.pop %v949
  %952 = vrot.lane.b32.xlu0 %v950, 64
  %v953 = vpop.permute.xlu0 %952
  %v955 = vmul.f32 %v937, %v953
  %957 = vrot.lane.b32.xlu0 %v955, 32
  %v958 = vpop.permute.xlu0 %957
  %960 = vst.msk [vmem:[#allocation3 + $0x30] sm:$0xff] %vm239, %v958
  %v961 = vld [vmem:[#allocation2 + $0x38] sm:$0xff]
  %v962 = vsel %vm239, %v958, 0
  %964 = vmatprep.subr.mxu0 0.0
  %965 = vmatpush1.msra.mxu0 %v234
  %966 = vmatprep.subr.mxu0 0.0
  %967 = vmatpush1.msra.mxu0 %v235
  %968 = vmatprep.subr.mxu0 0.0
  %969 = vmatpush1.msra.mxu0 %v236
  %970 = vmatprep.subr.mxu0 0.0
  %971 = vmatpush1.msra.mxu0 %v237
  %972 = vmatprep.subr.mxu0 0.0
  %973 = vmatpush1.msra.mxu0 0.0
  %974 = vmatprep.subr.mxu0 0.0
  %975 = vmatpush1.msra.mxu0 0.0
  %976 = vmatprep.subr.mxu0 0.0
  %977 = vmatpush1.msra.mxu0 0.0
  %978 = vmatprep.subr.mxu0 0.0
  %979 = vmatpush1.msra.mxu0 0.0
  %980 = vmatprep.subr.mxu0 0.0
  %981 = vmatpush1.msra.mxu0 0.0
  %982 = vmatprep.subr.mxu0 0.0
  %983 = vmatpush1.msra.mxu0 0.0
  %984 = vmatprep.subr.mxu0 0.0
  %985 = vmatpush1.msra.mxu0 0.0
  %986 = vmatprep.subr.mxu0 0.0
  %987 = vmatpush1.msra.mxu0 0.0
  %988 = vmatprep.subr.mxu0 0.0
  %989 = vmatpush1.msra.mxu0 0.0
  %990 = vmatprep.subr.mxu0 0.0
  %991 = vmatpush1.msra.mxu0 0.0
  %992 = vmatprep.subr.mxu0 0.0
  %993 = vmatpush1.msra.mxu0 0.0
  %994 = vmatprep.subr.mxu0 0.0
  %995 = vmatpush1.msra.mxu0 0.0
  %996 = vmatprep.subr.mxu0 0.0
  %997 = vmatpush1.msra.mxu0 0.0
  %998 = vmatprep.subr.mxu0 0.0
  %999 = vmatpush1.msra.mxu0 0.0
  %1000 = vmatprep.subr.mxu0 0.0
  %1001 = vmatpush1.msra.mxu0 0.0
  %1002 = vmatprep.subr.mxu0 0.0
  %1003 = vmatpush1.msra.mxu0 0.0
  %1004 = vmatprep.subr.mxu0 0.0
  %1005 = vmatpush1.msra.mxu0 0.0
  %1006 = vmatprep.subr.mxu0 0.0
  %1007 = vmatpush1.msra.mxu0 0.0
  %1008 = vmatprep.subr.mxu0 0.0
  %1009 = vmatpush1.msra.mxu0 0.0
  %1010 = vmatprep.subr.mxu0 0.0
  %1011 = vmatpush1.msra.mxu0 0.0
  %1012 = vmatprep.subr.mxu0 0.0
  %1013 = vmatpush1.msra.mxu0 0.0
  %1014 = vmatprep.subr.mxu0 0.0
  %1015 = vmatpush1.msra.mxu0 0.0
  %1016 = vmatprep.subr.mxu0 0.0
  %1017 = vmatpush1.msra.mxu0 0.0
  %1018 = vmatprep.subr.mxu0 0.0
  %1019 = vmatpush1.msra.mxu0 0.0
  %1020 = vmatprep.subr.mxu0 0.0
  %1021 = vmatpush1.msra.mxu0 0.0
  %1022 = vmatprep.subr.mxu0 0.0
  %1023 = vmatpush1.msra.mxu0 0.0
  %1024 = vmatprep.subr.mxu0 0.0
  %1025 = vmatpush1.msra.mxu0 0.0
  %1026 = vmatprep.subr.mxu0 0.0
  %1027 = vmatpush1.msra.mxu0 0.0
  %1028 = vmatprep.mubr.f32.mxu0 0.0
  %1029 = vmatmul.mubr.f32.gmra.mrb[0].mxu0 %v962
  %v1030 = vpop.f32.mrb[0].mxu0
  %v1031 = vadd.f32 0.0, %v1030
  %v1032 = vpop.f32.mrb[0].mxu0
  %1033 = vdwg.mxu0
  %v1034 = vadd.f32 %v961, %v1031
  %v1035 = vxor.u32 %v1034, 2147483648
  %v1036 = vmul.f32 %v1035, 1.442695
  %v1037 = vpow.pop %v1036
  %v1038 = vadd.f32 %v1037, 1.0
  %v1039 = vrcp.pop %v1038
  %v1040 = vmul.f32 1.0, %v1039
  %v1041 = vtanh.pop %v1034
  %v1042 = vmul.f32 %v1040, %v949
  %1044 = vrot.lane.b32.xlu0 %v1041, 64
  %v1045 = vpop.permute.xlu0 %1044
  %v1047 = vmul.f32 %v1040, %v1045
  %1049 = vrot.lane.b32.xlu0 %v1047, 32
  %v1050 = vpop.permute.xlu0 %1049
  %v1052 = vadd.f32 %v1042, %v1050
  %v1053 = vtanh.pop %v1052
  %1055 = vrot.lane.b32.xlu0 %v1053, 64
  %v1056 = vpop.permute.xlu0 %1055
  %v1058 = vmul.f32 %v1040, %v1056
  %1060 = vrot.lane.b32.xlu0 %v1058, 32
  %v1061 = vpop.permute.xlu0 %1060
  %1063 = vst.msk [vmem:[#allocation3 + $0x38] sm:$0xff] %vm239, %v1061
  %v1064 = vld [vmem:[#allocation3] sm:$0xff]
  %v1065 = vld [vmem:[#allocation3 + $0x8] sm:$0xff]
  %v1066 = vld [vmem:[#allocation3 + $0x10] sm:$0xff]
  %v1067 = vld [vmem:[#allocation3 + $0x18] sm:$0xff]
  %v1068 = vld [vmem:[#allocation3 + $0x20] sm:$0xff]
  %v1069 = vld [vmem:[#allocation3 + $0x28] sm:$0xff]
  %v1070 = vld [vmem:[#allocation3 + $0x30] sm:$0xff]
  %v1071 = vld [vmem:[#allocation3 + $0x38] sm:$0xff]
  %v1072 = vld [vmem:[%s5] sm:$0xff]
  %v1073 = vld [vmem:[%s5 + $0x8] sm:$0xff]
  %v1074 = vld [vmem:[%s5 + $0x10] sm:$0xff]
  %v1075 = vld [vmem:[%s5 + $0x18] sm:$0xff]
  %v1076 = vld [vmem:[%s7] sm:$0x1]
  %v1078 = vlaneseq
  %v1079 = vshrl.u32 %v1078, 7
  %v1080 = vsub.s32 0, %v1079
  %v1081 = vrot.slane %v1076, %v1080
  %v1084 = vsel %vm239, %v1064, 0
  %v1087 = vsel %vm239, %v1065, 0
  %v1090 = vsel %vm239, %v1066, 0
  %v1093 = vsel %vm239, %v1067, 0
  %v1096 = vsel %vm239, %v1068, 0
  %v1099 = vsel %vm239, %v1069, 0
  %v1102 = vsel %vm239, %v1070, 0
  %v1105 = vsel %vm239, %v1071, 0
  %1107 = vmatprep.subr.mxu0 0.0
  %1108 = vmatpush1.msra.mxu0 %v1072
  %1109 = vmatprep.subr.mxu0 0.0
  %1110 = vmatpush1.msra.mxu0 %v1073
  %1111 = vmatprep.subr.mxu0 0.0
  %1112 = vmatpush1.msra.mxu0 %v1074
  %1113 = vmatprep.subr.mxu0 0.0
  %1114 = vmatpush1.msra.mxu0 %v1075
  %1115 = vmatprep.subr.mxu0 0.0
  %1116 = vmatpush1.msra.mxu0 0.0
  %1117 = vmatprep.subr.mxu0 0.0
  %1118 = vmatpush1.msra.mxu0 0.0
  %1119 = vmatprep.subr.mxu0 0.0
  %1120 = vmatpush1.msra.mxu0 0.0
  %1121 = vmatprep.subr.mxu0 0.0
  %1122 = vmatpush1.msra.mxu0 0.0
  %1123 = vmatprep.subr.mxu0 0.0
  %1124 = vmatpush1.msra.mxu0 0.0
  %1125 = vmatprep.subr.mxu0 0.0
  %1126 = vmatpush1.msra.mxu0 0.0
  %1127 = vmatprep.subr.mxu0 0.0
  %1128 = vmatpush1.msra.mxu0 0.0
  %1129 = vmatprep.subr.mxu0 0.0
  %1130 = vmatpush1.msra.mxu0 0.0
  %1131 = vmatprep.subr.mxu0 0.0
  %1132 = vmatpush1.msra.mxu0 0.0
  %1133 = vmatprep.subr.mxu0 0.0
  %1134 = vmatpush1.msra.mxu0 0.0
  %1135 = vmatprep.subr.mxu0 0.0
  %1136 = vmatpush1.msra.mxu0 0.0
  %1137 = vmatprep.subr.mxu0 0.0
  %1138 = vmatpush1.msra.mxu0 0.0
  %1139 = vmatprep.subr.mxu0 0.0
  %1140 = vmatpush1.msra.mxu0 0.0
  %1141 = vmatprep.subr.mxu0 0.0
  %1142 = vmatpush1.msra.mxu0 0.0
  %1143 = vmatprep.subr.mxu0 0.0
  %1144 = vmatpush1.msra.mxu0 0.0
  %1145 = vmatprep.subr.mxu0 0.0
  %1146 = vmatpush1.msra.mxu0 0.0
  %1147 = vmatprep.subr.mxu0 0.0
  %1148 = vmatpush1.msra.mxu0 0.0
  %1149 = vmatprep.subr.mxu0 0.0
  %1150 = vmatpush1.msra.mxu0 0.0
  %1151 = vmatprep.subr.mxu0 0.0
  %1152 = vmatpush1.msra.mxu0 0.0
  %1153 = vmatprep.subr.mxu0 0.0
  %1154 = vmatpush1.msra.mxu0 0.0
  %1155 = vmatprep.subr.mxu0 0.0
  %1156 = vmatpush1.msra.mxu0 0.0
  %1157 = vmatprep.subr.mxu0 0.0
  %1158 = vmatpush1.msra.mxu0 0.0
  %1159 = vmatprep.subr.mxu0 0.0
  %1160 = vmatpush1.msra.mxu0 0.0
  %1161 = vmatprep.subr.mxu0 0.0
  %1162 = vmatpush1.msra.mxu0 0.0
  %1163 = vmatprep.subr.mxu0 0.0
  %1164 = vmatpush1.msra.mxu0 0.0
  %1165 = vmatprep.subr.mxu0 0.0
  %1166 = vmatpush1.msra.mxu0 0.0
  %1167 = vmatprep.subr.mxu0 0.0
  %1168 = vmatpush1.msra.mxu0 0.0
  %1169 = vmatprep.subr.mxu0 0.0
  %1170 = vmatpush1.msra.mxu0 0.0
  %1171 = vmatprep.mubr.f32.mxu0 0.0
  %1172 = vmatmul.mubr.f32.gmra.mrb[0].mxu0 %v1084
  %v1173 = vpop.f32.mrb[0].mxu0
  %v1174 = vadd.f32 %v1081, %v1173
  %v1175 = vpop.f32.mrb[0].mxu0
  %1176 = vmatprep.mubr.f32.mxu0 0.0
  %1177 = vmatmul.mubr.f32.gmra.mrb[0].mxu0 %v1087
  %v1178 = vpop.f32.mrb[0].mxu0
  %v1179 = vadd.f32 %v1081, %v1178
  %v1180 = vpop.f32.mrb[0].mxu0
  %1181 = vmatprep.mubr.f32.mxu0 0.0
  %1182 = vmatmul.mubr.f32.gmra.mrb[0].mxu0 %v1090
  %v1183 = vpop.f32.mrb[0].mxu0
  %v1184 = vadd.f32 %v1081, %v1183
  %v1185 = vpop.f32.mrb[0].mxu0
  %1186 = vmatprep.mubr.f32.mxu0 0.0
  %1187 = vmatmul.mubr.f32.gmra.mrb[0].mxu0 %v1093
  %v1188 = vpop.f32.mrb[0].mxu0
  %v1189 = vadd.f32 %v1081, %v1188
  %v1190 = vpop.f32.mrb[0].mxu0
  %1191 = vmatprep.mubr.f32.mxu0 0.0
  %1192 = vmatmul.mubr.f32.gmra.mrb[0].mxu0 %v1096
  %v1193 = vpop.f32.mrb[0].mxu0
  %v1194 = vadd.f32 %v1081, %v1193
  %v1195 = vpop.f32.mrb[0].mxu0
  %1196 = vmatprep.mubr.f32.mxu0 0.0
  %1197 = vmatmul.mubr.f32.gmra.mrb[0].mxu0 %v1099
  %v1198 = vpop.f32.mrb[0].mxu0
  %v1199 = vadd.f32 %v1081, %v1198
  %v1200 = vpop.f32.mrb[0].mxu0
  %1201 = vmatprep.mubr.f32.mxu0 0.0
  %1202 = vmatmul.mubr.f32.gmra.mrb[0].mxu0 %v1102
  %v1203 = vpop.f32.mrb[0].mxu0
  %v1204 = vadd.f32 %v1081, %v1203
  %v1205 = vpop.f32.mrb[0].mxu0
  %1206 = vmatprep.mubr.f32.mxu0 0.0
  %1207 = vmatmul.mubr.f32.gmra.mrb[0].mxu0 %v1105
  %v1208 = vpop.f32.mrb[0].mxu0
  %v1209 = vadd.f32 %v1081, %v1208
  %v1210 = vpop.f32.mrb[0].mxu0
  %1211 = vdwg.mxu0
  %1212 = vst [vmem:[#allocation2] sm:$0xff] %v1174
  %1213 = vst [vmem:[#allocation2 + $0x8] sm:$0xff] %v1179
  %1214 = vst [vmem:[#allocation2 + $0x10] sm:$0xff] %v1184
  %1215 = vst [vmem:[#allocation2 + $0x18] sm:$0xff] %v1189
  %1216 = vst [vmem:[#allocation2 + $0x20] sm:$0xff] %v1194
  %1217 = vst [vmem:[#allocation2 + $0x28] sm:$0xff] %v1199
  %1218 = vst [vmem:[#allocation2 + $0x30] sm:$0xff] %v1204
  %1219 = vst [vmem:[#allocation2 + $0x38] sm:$0xff] %v1209
  %v1220 = vld [vmem:[%s6] sm:$0xff]
  %v1221 = vld [vmem:[%s6 + $0x8] sm:$0xff]
  %v1222 = vld [vmem:[%s6 + $0x10] sm:$0xff]
  %v1223 = vld [vmem:[%s6 + $0x18] sm:$0xff]
  %v1224 = vld [vmem:[#allocation2] sm:$0xff]
  %1225 = vmatprep.subr.mxu0 0.0
  %1226 = vmatpush1.msra.mxu0 %v1220
  %1227 = vmatprep.subr.mxu0 0.0
  %1228 = vmatpush1.msra.mxu0 %v1221
  %1229 = vmatprep.subr.mxu0 0.0
  %1230 = vmatpush1.msra.mxu0 %v1222
  %1231 = vmatprep.subr.mxu0 0.0
  %1232 = vmatpush1.msra.mxu0 %v1223
  %1233 = vmatprep.subr.mxu0 0.0
  %1234 = vmatpush1.msra.mxu0 0.0
  %1235 = vmatprep.subr.mxu0 0.0
  %1236 = vmatpush1.msra.mxu0 0.0
  %1237 = vmatprep.subr.mxu0 0.0
  %1238 = vmatpush1.msra.mxu0 0.0
  %1239 = vmatprep.subr.mxu0 0.0
  %1240 = vmatpush1.msra.mxu0 0.0
  %1241 = vmatprep.subr.mxu0 0.0
  %1242 = vmatpush1.msra.mxu0 0.0
  %1243 = vmatprep.subr.mxu0 0.0
  %1244 = vmatpush1.msra.mxu0 0.0
  %1245 = vmatprep.subr.mxu0 0.0
  %1246 = vmatpush1.msra.mxu0 0.0
  %1247 = vmatprep.subr.mxu0 0.0
  %1248 = vmatpush1.msra.mxu0 0.0
  %1249 = vmatprep.subr.mxu0 0.0
  %1250 = vmatpush1.msra.mxu0 0.0
  %1251 = vmatprep.subr.mxu0 0.0
  %1252 = vmatpush1.msra.mxu0 0.0
  %1253 = vmatprep.subr.mxu0 0.0
  %1254 = vmatpush1.msra.mxu0 0.0
  %1255 = vmatprep.subr.mxu0 0.0
  %1256 = vmatpush1.msra.mxu0 0.0
  %1257 = vmatprep.subr.mxu0 0.0
  %1258 = vmatpush1.msra.mxu0 0.0
  %1259 = vmatprep.subr.mxu0 0.0
  %1260 = vmatpush1.msra.mxu0 0.0
  %1261 = vmatprep.subr.mxu0 0.0
  %1262 = vmatpush1.msra.mxu0 0.0
  %1263 = vmatprep.subr.mxu0 0.0
  %1264 = vmatpush1.msra.mxu0 0.0
  %1265 = vmatprep.subr.mxu0 0.0
  %1266 = vmatpush1.msra.mxu0 0.0
  %1267 = vmatprep.subr.mxu0 0.0
  %1268 = vmatpush1.msra.mxu0 0.0
  %1269 = vmatprep.subr.mxu0 0.0
  %1270 = vmatpush1.msra.mxu0 0.0
  %1271 = vmatprep.subr.mxu0 0.0
  %1272 = vmatpush1.msra.mxu0 0.0
  %1273 = vmatprep.subr.mxu0 0.0
  %1274 = vmatpush1.msra.mxu0 0.0
  %1275 = vmatprep.subr.mxu0 0.0
  %1276 = vmatpush1.msra.mxu0 0.0
  %1277 = vmatprep.subr.mxu0 0.0
  %1278 = vmatpush1.msra.mxu0 0.0
  %1279 = vmatprep.subr.mxu0 0.0
  %1280 = vmatpush1.msra.mxu0 0.0
  %1281 = vmatprep.subr.mxu0 0.0
  %1282 = vmatpush1.msra.mxu0 0.0
  %1283 = vmatprep.subr.mxu0 0.0
  %1284 = vmatpush1.msra.mxu0 0.0
  %1285 = vmatprep.subr.mxu0 0.0
  %1286 = vmatpush1.msra.mxu0 0.0
  %1287 = vmatprep.subr.mxu0 0.0
  %1288 = vmatpush1.msra.mxu0 0.0
  %1289 = vmatprep.mubr.f32.mxu0 0.0
  %1290 = vmatmul.mubr.f32.gmra.mrb[0].mxu0 %v241
  %v1291 = vpop.f32.mrb[0].mxu0
  %v1292 = vadd.f32 0.0, %v1291
  %v1293 = vpop.f32.mrb[0].mxu0
  %1294 = vdwg.mxu0
  %v1295 = vadd.f32 %v1224, %v1292
  %v1296 = vxor.u32 %v1295, 2147483648
  %v1297 = vmul.f32 %v1296, 1.442695
  %v1298 = vpow.pop %v1297
  %v1299 = vadd.f32 %v1298, 1.0
  %v1300 = vrcp.pop %v1299
  %v1301 = vmul.f32 1.0, %v1300
  %v1302 = vtanh.pop %v1295
  %v1303 = vmul.f32 %v1301, 0.0
  %1305 = vrot.lane.b32.xlu0 %v1302, 64
  %v1306 = vpop.permute.xlu0 %1305
  %v1308 = vmul.f32 %v1301, %v1306
  %1310 = vrot.lane.b32.xlu0 %v1308, 32
  %v1311 = vpop.permute.xlu0 %1310
  %v1313 = vadd.f32 %v1303, %v1311
  %v1314 = vtanh.pop %v1313
  %1316 = vrot.lane.b32.xlu0 %v1314, 64
  %v1317 = vpop.permute.xlu0 %1316
  %v1319 = vmul.f32 %v1301, %v1317
  %v1320 = vld [vmem:[#allocation2 + $0x8] sm:$0xff]
  %1322 = vrot.lane.b32.xlu0 %v1319, 32
  %v1323 = vpop.permute.xlu0 %1322
  %v1324 = vsel %vm239, %v1323, 0
  %1326 = vmatprep.subr.mxu0 0.0
  %1327 = vmatpush1.msra.mxu0 %v1220
  %1328 = vmatprep.subr.mxu0 0.0
  %1329 = vmatpush1.msra.mxu0 %v1221
  %1330 = vmatprep.subr.mxu0 0.0
  %1331 = vmatpush1.msra.mxu0 %v1222
  %1332 = vmatprep.subr.mxu0 0.0
  %1333 = vmatpush1.msra.mxu0 %v1223
  %1334 = vmatprep.subr.mxu0 0.0
  %1335 = vmatpush1.msra.mxu0 0.0
  %1336 = vmatprep.subr.mxu0 0.0
  %1337 = vmatpush1.msra.mxu0 0.0
  %1338 = vmatprep.subr.mxu0 0.0
  %1339 = vmatpush1.msra.mxu0 0.0
  %1340 = vmatprep.subr.mxu0 0.0
  %1341 = vmatpush1.msra.mxu0 0.0
  %1342 = vmatprep.subr.mxu0 0.0
  %1343 = vmatpush1.msra.mxu0 0.0
  %1344 = vmatprep.subr.mxu0 0.0
  %1345 = vmatpush1.msra.mxu0 0.0
  %1346 = vmatprep.subr.mxu0 0.0
  %1347 = vmatpush1.msra.mxu0 0.0
  %1348 = vmatprep.subr.mxu0 0.0
  %1349 = vmatpush1.msra.mxu0 0.0
  %1350 = vmatprep.subr.mxu0 0.0
  %1351 = vmatpush1.msra.mxu0 0.0
  %1352 = vmatprep.subr.mxu0 0.0
  %1353 = vmatpush1.msra.mxu0 0.0
  %1354 = vmatprep.subr.mxu0 0.0
  %1355 = vmatpush1.msra.mxu0 0.0
  %1356 = vmatprep.subr.mxu0 0.0
  %1357 = vmatpush1.msra.mxu0 0.0
  %1358 = vmatprep.subr.mxu0 0.0
  %1359 = vmatpush1.msra.mxu0 0.0
  %1360 = vmatprep.subr.mxu0 0.0
  %1361 = vmatpush1.msra.mxu0 0.0
  %1362 = vmatprep.subr.mxu0 0.0
  %1363 = vmatpush1.msra.mxu0 0.0
  %1364 = vmatprep.subr.mxu0 0.0
  %1365 = vmatpush1.msra.mxu0 0.0
  %1366 = vmatprep.subr.mxu0 0.0
  %1367 = vmatpush1.msra.mxu0 0.0
  %1368 = vmatprep.subr.mxu0 0.0
  %1369 = vmatpush1.msra.mxu0 0.0
  %1370 = vmatprep.subr.mxu0 0.0
  %1371 = vmatpush1.msra.mxu0 0.0
  %1372 = vmatprep.subr.mxu0 0.0
  %1373 = vmatpush1.msra.mxu0 0.0
  %1374 = vmatprep.subr.mxu0 0.0
  %1375 = vmatpush1.msra.mxu0 0.0
  %1376 = vmatprep.subr.mxu0 0.0
  %1377 = vmatpush1.msra.mxu0 0.0
  %1378 = vmatprep.subr.mxu0 0.0
  %1379 = vmatpush1.msra.mxu0 0.0
  %1380 = vmatprep.subr.mxu0 0.0
  %1381 = vmatpush1.msra.mxu0 0.0
  %1382 = vmatprep.subr.mxu0 0.0
  %1383 = vmatpush1.msra.mxu0 0.0
  %1384 = vmatprep.subr.mxu0 0.0
  %1385 = vmatpush1.msra.mxu0 0.0
  %1386 = vmatprep.subr.mxu0 0.0
  %1387 = vmatpush1.msra.mxu0 0.0
  %1388 = vmatprep.subr.mxu0 0.0
  %1389 = vmatpush1.msra.mxu0 0.0
  %1390 = vmatprep.mubr.f32.mxu0 0.0
  %1391 = vmatmul.mubr.f32.gmra.mrb[0].mxu0 %v1324
  %v1392 = vpop.f32.mrb[0].mxu0
  %v1393 = vadd.f32 0.0, %v1392
  %v1394 = vpop.f32.mrb[0].mxu0
  %1395 = vdwg.mxu0
  %v1396 = vadd.f32 %v1320, %v1393
  %v1397 = vxor.u32 %v1396, 2147483648
  %v1398 = vmul.f32 %v1397, 1.442695
  %v1399 = vpow.pop %v1398
  %v1400 = vadd.f32 %v1399, 1.0
  %v1401 = vrcp.pop %v1400
  %v1402 = vmul.f32 1.0, %v1401
  %v1403 = vtanh.pop %v1396
  %v1404 = vmul.f32 %v1402, %v1313
  %1406 = vrot.lane.b32.xlu0 %v1403, 64
  %v1407 = vpop.permute.xlu0 %1406
  %v1409 = vmul.f32 %v1402, %v1407
  %1411 = vrot.lane.b32.xlu0 %v1409, 32
  %v1412 = vpop.permute.xlu0 %1411
  %v1414 = vadd.f32 %v1404, %v1412
  %v1415 = vtanh.pop %v1414
  %1417 = vrot.lane.b32.xlu0 %v1415, 64
  %v1418 = vpop.permute.xlu0 %1417
  %v1420 = vmul.f32 %v1402, %v1418
  %v1421 = vld [vmem:[#allocation2 + $0x10] sm:$0xff]
  %1423 = vrot.lane.b32.xlu0 %v1420, 32
  %v1424 = vpop.permute.xlu0 %1423
  %v1425 = vsel %vm239, %v1424, 0
  %1427 = vmatprep.subr.mxu0 0.0
  %1428 = vmatpush1.msra.mxu0 %v1220
  %1429 = vmatprep.subr.mxu0 0.0
  %1430 = vmatpush1.msra.mxu0 %v1221
  %1431 = vmatprep.subr.mxu0 0.0
  %1432 = vmatpush1.msra.mxu0 %v1222
  %1433 = vmatprep.subr.mxu0 0.0
  %1434 = vmatpush1.msra.mxu0 %v1223
  %1435 = vmatprep.subr.mxu0 0.0
  %1436 = vmatpush1.msra.mxu0 0.0
  %1437 = vmatprep.subr.mxu0 0.0
  %1438 = vmatpush1.msra.mxu0 0.0
  %1439 = vmatprep.subr.mxu0 0.0
  %1440 = vmatpush1.msra.mxu0 0.0
  %1441 = vmatprep.subr.mxu0 0.0
  %1442 = vmatpush1.msra.mxu0 0.0
  %1443 = vmatprep.subr.mxu0 0.0
  %1444 = vmatpush1.msra.mxu0 0.0
  %1445 = vmatprep.subr.mxu0 0.0
  %1446 = vmatpush1.msra.mxu0 0.0
  %1447 = vmatprep.subr.mxu0 0.0
  %1448 = vmatpush1.msra.mxu0 0.0
  %1449 = vmatprep.subr.mxu0 0.0
  %1450 = vmatpush1.msra.mxu0 0.0
  %1451 = vmatprep.subr.mxu0 0.0
  %1452 = vmatpush1.msra.mxu0 0.0
  %1453 = vmatprep.subr.mxu0 0.0
  %1454 = vmatpush1.msra.mxu0 0.0
  %1455 = vmatprep.subr.mxu0 0.0
  %1456 = vmatpush1.msra.mxu0 0.0
  %1457 = vmatprep.subr.mxu0 0.0
  %1458 = vmatpush1.msra.mxu0 0.0
  %1459 = vmatprep.subr.mxu0 0.0
  %1460 = vmatpush1.msra.mxu0 0.0
  %1461 = vmatprep.subr.mxu0 0.0
  %1462 = vmatpush1.msra.mxu0 0.0
  %1463 = vmatprep.subr.mxu0 0.0
  %1464 = vmatpush1.msra.mxu0 0.0
  %1465 = vmatprep.subr.mxu0 0.0
  %1466 = vmatpush1.msra.mxu0 0.0
  %1467 = vmatprep.subr.mxu0 0.0
  %1468 = vmatpush1.msra.mxu0 0.0
  %1469 = vmatprep.subr.mxu0 0.0
  %1470 = vmatpush1.msra.mxu0 0.0
  %1471 = vmatprep.subr.mxu0 0.0
  %1472 = vmatpush1.msra.mxu0 0.0
  %1473 = vmatprep.subr.mxu0 0.0
  %1474 = vmatpush1.msra.mxu0 0.0
  %1475 = vmatprep.subr.mxu0 0.0
  %1476 = vmatpush1.msra.mxu0 0.0
  %1477 = vmatprep.subr.mxu0 0.0
  %1478 = vmatpush1.msra.mxu0 0.0
  %1479 = vmatprep.subr.mxu0 0.0
  %1480 = vmatpush1.msra.mxu0 0.0
  %1481 = vmatprep.subr.mxu0 0.0
  %1482 = vmatpush1.msra.mxu0 0.0
  %1483 = vmatprep.subr.mxu0 0.0
  %1484 = vmatpush1.msra.mxu0 0.0
  %1485 = vmatprep.subr.mxu0 0.0
  %1486 = vmatpush1.msra.mxu0 0.0
  %1487 = vmatprep.subr.mxu0 0.0
  %1488 = vmatpush1.msra.mxu0 0.0
  %1489 = vmatprep.subr.mxu0 0.0
  %1490 = vmatpush1.msra.mxu0 0.0
  %1491 = vmatprep.mubr.f32.mxu0 0.0
  %1492 = vmatmul.mubr.f32.gmra.mrb[0].mxu0 %v1425
  %v1493 = vpop.f32.mrb[0].mxu0
  %v1494 = vadd.f32 0.0, %v1493
  %v1495 = vpop.f32.mrb[0].mxu0
  %1496 = vdwg.mxu0
  %v1497 = vadd.f32 %v1421, %v1494
  %v1498 = vxor.u32 %v1497, 2147483648
  %v1499 = vmul.f32 %v1498, 1.442695
  %v1500 = vpow.pop %v1499
  %v1501 = vadd.f32 %v1500, 1.0
  %v1502 = vrcp.pop %v1501
  %v1503 = vmul.f32 1.0, %v1502
  %v1504 = vtanh.pop %v1497
  %v1505 = vmul.f32 %v1503, %v1414
  %1507 = vrot.lane.b32.xlu0 %v1504, 64
  %v1508 = vpop.permute.xlu0 %1507
  %v1510 = vmul.f32 %v1503, %v1508
  %1512 = vrot.lane.b32.xlu0 %v1510, 32
  %v1513 = vpop.permute.xlu0 %1512
  %v1515 = vadd.f32 %v1505, %v1513
  %v1516 = vtanh.pop %v1515
  %1518 = vrot.lane.b32.xlu0 %v1516, 64
  %v1519 = vpop.permute.xlu0 %1518
  %v1521 = vmul.f32 %v1503, %v1519
  %v1522 = vld [vmem:[#allocation2 + $0x18] sm:$0xff]
  %1524 = vrot.lane.b32.xlu0 %v1521, 32
  %v1525 = vpop.permute.xlu0 %1524
  %v1526 = vsel %vm239, %v1525, 0
  %1528 = vmatprep.subr.mxu0 0.0
  %1529 = vmatpush1.msra.mxu0 %v1220
  %1530 = vmatprep.subr.mxu0 0.0
  %1531 = vmatpush1.msra.mxu0 %v1221
  %1532 = vmatprep.subr.mxu0 0.0
  %1533 = vmatpush1.msra.mxu0 %v1222
  %1534 = vmatprep.subr.mxu0 0.0
  %1535 = vmatpush1.msra.mxu0 %v1223
  %1536 = vmatprep.subr.mxu0 0.0
  %1537 = vmatpush1.msra.mxu0 0.0
  %1538 = vmatprep.subr.mxu0 0.0
  %1539 = vmatpush1.msra.mxu0 0.0
  %1540 = vmatprep.subr.mxu0 0.0
  %1541 = vmatpush1.msra.mxu0 0.0
  %1542 = vmatprep.subr.mxu0 0.0
  %1543 = vmatpush1.msra.mxu0 0.0
  %1544 = vmatprep.subr.mxu0 0.0
  %1545 = vmatpush1.msra.mxu0 0.0
  %1546 = vmatprep.subr.mxu0 0.0
  %1547 = vmatpush1.msra.mxu0 0.0
  %1548 = vmatprep.subr.mxu0 0.0
  %1549 = vmatpush1.msra.mxu0 0.0
  %1550 = vmatprep.subr.mxu0 0.0
  %1551 = vmatpush1.msra.mxu0 0.0
  %1552 = vmatprep.subr.mxu0 0.0
  %1553 = vmatpush1.msra.mxu0 0.0
  %1554 = vmatprep.subr.mxu0 0.0
  %1555 = vmatpush1.msra.mxu0 0.0
  %1556 = vmatprep.subr.mxu0 0.0
  %1557 = vmatpush1.msra.mxu0 0.0
  %1558 = vmatprep.subr.mxu0 0.0
  %1559 = vmatpush1.msra.mxu0 0.0
  %1560 = vmatprep.subr.mxu0 0.0
  %1561 = vmatpush1.msra.mxu0 0.0
  %1562 = vmatprep.subr.mxu0 0.0
  %1563 = vmatpush1.msra.mxu0 0.0
  %1564 = vmatprep.subr.mxu0 0.0
  %1565 = vmatpush1.msra.mxu0 0.0
  %1566 = vmatprep.subr.mxu0 0.0
  %1567 = vmatpush1.msra.mxu0 0.0
  %1568 = vmatprep.subr.mxu0 0.0
  %1569 = vmatpush1.msra.mxu0 0.0
  %1570 = vmatprep.subr.mxu0 0.0
  %1571 = vmatpush1.msra.mxu0 0.0
  %1572 = vmatprep.subr.mxu0 0.0
  %1573 = vmatpush1.msra.mxu0 0.0
  %1574 = vmatprep.subr.mxu0 0.0
  %1575 = vmatpush1.msra.mxu0 0.0
  %1576 = vmatprep.subr.mxu0 0.0
  %1577 = vmatpush1.msra.mxu0 0.0
  %1578 = vmatprep.subr.mxu0 0.0
  %1579 = vmatpush1.msra.mxu0 0.0
  %1580 = vmatprep.subr.mxu0 0.0
  %1581 = vmatpush1.msra.mxu0 0.0
  %1582 = vmatprep.subr.mxu0 0.0
  %1583 = vmatpush1.msra.mxu0 0.0
  %1584 = vmatprep.subr.mxu0 0.0
  %1585 = vmatpush1.msra.mxu0 0.0
  %1586 = vmatprep.subr.mxu0 0.0
  %1587 = vmatpush1.msra.mxu0 0.0
  %1588 = vmatprep.subr.mxu0 0.0
  %1589 = vmatpush1.msra.mxu0 0.0
  %1590 = vmatprep.subr.mxu0 0.0
  %1591 = vmatpush1.msra.mxu0 0.0
  %1592 = vmatprep.mubr.f32.mxu0 0.0
  %1593 = vmatmul.mubr.f32.gmra.mrb[0].mxu0 %v1526
  %v1594 = vpop.f32.mrb[0].mxu0
  %v1595 = vadd.f32 0.0, %v1594
  %v1596 = vpop.f32.mrb[0].mxu0
  %1597 = vdwg.mxu0
  %v1598 = vadd.f32 %v1522, %v1595
  %v1599 = vxor.u32 %v1598, 2147483648
  %v1600 = vmul.f32 %v1599, 1.442695
  %v1601 = vpow.pop %v1600
  %v1602 = vadd.f32 %v1601, 1.0
  %v1603 = vrcp.pop %v1602
  %v1604 = vmul.f32 1.0, %v1603
  %v1605 = vtanh.pop %v1598
  %v1606 = vmul.f32 %v1604, %v1515
  %1608 = vrot.lane.b32.xlu0 %v1605, 64
  %v1609 = vpop.permute.xlu0 %1608
  %v1611 = vmul.f32 %v1604, %v1609
  %1613 = vrot.lane.b32.xlu0 %v1611, 32
  %v1614 = vpop.permute.xlu0 %1613
  %v1616 = vadd.f32 %v1606, %v1614
  %v1617 = vtanh.pop %v1616
  %1619 = vrot.lane.b32.xlu0 %v1617, 64
  %v1620 = vpop.permute.xlu0 %1619
  %v1622 = vmul.f32 %v1604, %v1620
  %v1623 = vld [vmem:[#allocation2 + $0x20] sm:$0xff]
  %1625 = vrot.lane.b32.xlu0 %v1622, 32
  %v1626 = vpop.permute.xlu0 %1625
  %v1627 = vsel %vm239, %v1626, 0
  %1629 = vmatprep.subr.mxu0 0.0
  %1630 = vmatpush1.msra.mxu0 %v1220
  %1631 = vmatprep.subr.mxu0 0.0
  %1632 = vmatpush1.msra.mxu0 %v1221
  %1633 = vmatprep.subr.mxu0 0.0
  %1634 = vmatpush1.msra.mxu0 %v1222
  %1635 = vmatprep.subr.mxu0 0.0
  %1636 = vmatpush1.msra.mxu0 %v1223
  %1637 = vmatprep.subr.mxu0 0.0
  %1638 = vmatpush1.msra.mxu0 0.0
  %1639 = vmatprep.subr.mxu0 0.0
  %1640 = vmatpush1.msra.mxu0 0.0
  %1641 = vmatprep.subr.mxu0 0.0
  %1642 = vmatpush1.msra.mxu0 0.0
  %1643 = vmatprep.subr.mxu0 0.0
  %1644 = vmatpush1.msra.mxu0 0.0
  %1645 = vmatprep.subr.mxu0 0.0
  %1646 = vmatpush1.msra.mxu0 0.0
  %1647 = vmatprep.subr.mxu0 0.0
  %1648 = vmatpush1.msra.mxu0 0.0
  %1649 = vmatprep.subr.mxu0 0.0
  %1650 = vmatpush1.msra.mxu0 0.0
  %1651 = vmatprep.subr.mxu0 0.0
  %1652 = vmatpush1.msra.mxu0 0.0
  %1653 = vmatprep.subr.mxu0 0.0
  %1654 = vmatpush1.msra.mxu0 0.0
  %1655 = vmatprep.subr.mxu0 0.0
  %1656 = vmatpush1.msra.mxu0 0.0
  %1657 = vmatprep.subr.mxu0 0.0
  %1658 = vmatpush1.msra.mxu0 0.0
  %1659 = vmatprep.subr.mxu0 0.0
  %1660 = vmatpush1.msra.mxu0 0.0
  %1661 = vmatprep.subr.mxu0 0.0
  %1662 = vmatpush1.msra.mxu0 0.0
  %1663 = vmatprep.subr.mxu0 0.0
  %1664 = vmatpush1.msra.mxu0 0.0
  %1665 = vmatprep.subr.mxu0 0.0
  %1666 = vmatpush1.msra.mxu0 0.0
  %1667 = vmatprep.subr.mxu0 0.0
  %1668 = vmatpush1.msra.mxu0 0.0
  %1669 = vmatprep.subr.mxu0 0.0
  %1670 = vmatpush1.msra.mxu0 0.0
  %1671 = vmatprep.subr.mxu0 0.0
  %1672 = vmatpush1.msra.mxu0 0.0
  %1673 = vmatprep.subr.mxu0 0.0
  %1674 = vmatpush1.msra.mxu0 0.0
  %1675 = vmatprep.subr.mxu0 0.0
  %1676 = vmatpush1.msra.mxu0 0.0
  %1677 = vmatprep.subr.mxu0 0.0
  %1678 = vmatpush1.msra.mxu0 0.0
  %1679 = vmatprep.subr.mxu0 0.0
  %1680 = vmatpush1.msra.mxu0 0.0
  %1681 = vmatprep.subr.mxu0 0.0
  %1682 = vmatpush1.msra.mxu0 0.0
  %1683 = vmatprep.subr.mxu0 0.0
  %1684 = vmatpush1.msra.mxu0 0.0
  %1685 = vmatprep.subr.mxu0 0.0
  %1686 = vmatpush1.msra.mxu0 0.0
  %1687 = vmatprep.subr.mxu0 0.0
  %1688 = vmatpush1.msra.mxu0 0.0
  %1689 = vmatprep.subr.mxu0 0.0
  %1690 = vmatpush1.msra.mxu0 0.0
  %1691 = vmatprep.subr.mxu0 0.0
  %1692 = vmatpush1.msra.mxu0 0.0
  %1693 = vmatprep.mubr.f32.mxu0 0.0
  %1694 = vmatmul.mubr.f32.gmra.mrb[0].mxu0 %v1627
  %v1695 = vpop.f32.mrb[0].mxu0
  %v1696 = vadd.f32 0.0, %v1695
  %v1697 = vpop.f32.mrb[0].mxu0
  %1698 = vdwg.mxu0
  %v1699 = vadd.f32 %v1623, %v1696
  %v1700 = vxor.u32 %v1699, 2147483648
  %v1701 = vmul.f32 %v1700, 1.442695
  %v1702 = vpow.pop %v1701
  %v1703 = vadd.f32 %v1702, 1.0
  %v1704 = vrcp.pop %v1703
  %v1705 = vmul.f32 1.0, %v1704
  %v1706 = vtanh.pop %v1699
  %v1707 = vmul.f32 %v1705, %v1616
  %1709 = vrot.lane.b32.xlu0 %v1706, 64
  %v1710 = vpop.permute.xlu0 %1709
  %v1712 = vmul.f32 %v1705, %v1710
  %1714 = vrot.lane.b32.xlu0 %v1712, 32
  %v1715 = vpop.permute.xlu0 %1714
  %v1717 = vadd.f32 %v1707, %v1715
  %v1718 = vtanh.pop %v1717
  %1720 = vrot.lane.b32.xlu0 %v1718, 64
  %v1721 = vpop.permute.xlu0 %1720
  %v1723 = vmul.f32 %v1705, %v1721
  %v1724 = vld [vmem:[#allocation2 + $0x28] sm:$0xff]
  %1726 = vrot.lane.b32.xlu0 %v1723, 32
  %v1727 = vpop.permute.xlu0 %1726
  %v1728 = vsel %vm239, %v1727, 0
  %1730 = vmatprep.subr.mxu0 0.0
  %1731 = vmatpush1.msra.mxu0 %v1220
  %1732 = vmatprep.subr.mxu0 0.0
  %1733 = vmatpush1.msra.mxu0 %v1221
  %1734 = vmatprep.subr.mxu0 0.0
  %1735 = vmatpush1.msra.mxu0 %v1222
  %1736 = vmatprep.subr.mxu0 0.0
  %1737 = vmatpush1.msra.mxu0 %v1223
  %1738 = vmatprep.subr.mxu0 0.0
  %1739 = vmatpush1.msra.mxu0 0.0
  %1740 = vmatprep.subr.mxu0 0.0
  %1741 = vmatpush1.msra.mxu0 0.0
  %1742 = vmatprep.subr.mxu0 0.0
  %1743 = vmatpush1.msra.mxu0 0.0
  %1744 = vmatprep.subr.mxu0 0.0
  %1745 = vmatpush1.msra.mxu0 0.0
  %1746 = vmatprep.subr.mxu0 0.0
  %1747 = vmatpush1.msra.mxu0 0.0
  %1748 = vmatprep.subr.mxu0 0.0
  %1749 = vmatpush1.msra.mxu0 0.0
  %1750 = vmatprep.subr.mxu0 0.0
  %1751 = vmatpush1.msra.mxu0 0.0
  %1752 = vmatprep.subr.mxu0 0.0
  %1753 = vmatpush1.msra.mxu0 0.0
  %1754 = vmatprep.subr.mxu0 0.0
  %1755 = vmatpush1.msra.mxu0 0.0
  %1756 = vmatprep.subr.mxu0 0.0
  %1757 = vmatpush1.msra.mxu0 0.0
  %1758 = vmatprep.subr.mxu0 0.0
  %1759 = vmatpush1.msra.mxu0 0.0
  %1760 = vmatprep.subr.mxu0 0.0
  %1761 = vmatpush1.msra.mxu0 0.0
  %1762 = vmatprep.subr.mxu0 0.0
  %1763 = vmatpush1.msra.mxu0 0.0
  %1764 = vmatprep.subr.mxu0 0.0
  %1765 = vmatpush1.msra.mxu0 0.0
  %1766 = vmatprep.subr.mxu0 0.0
  %1767 = vmatpush1.msra.mxu0 0.0
  %1768 = vmatprep.subr.mxu0 0.0
  %1769 = vmatpush1.msra.mxu0 0.0
  %1770 = vmatprep.subr.mxu0 0.0
  %1771 = vmatpush1.msra.mxu0 0.0
  %1772 = vmatprep.subr.mxu0 0.0
  %1773 = vmatpush1.msra.mxu0 0.0
  %1774 = vmatprep.subr.mxu0 0.0
  %1775 = vmatpush1.msra.mxu0 0.0
  %1776 = vmatprep.subr.mxu0 0.0
  %1777 = vmatpush1.msra.mxu0 0.0
  %1778 = vmatprep.subr.mxu0 0.0
  %1779 = vmatpush1.msra.mxu0 0.0
  %1780 = vmatprep.subr.mxu0 0.0
  %1781 = vmatpush1.msra.mxu0 0.0
  %1782 = vmatprep.subr.mxu0 0.0
  %1783 = vmatpush1.msra.mxu0 0.0
  %1784 = vmatprep.subr.mxu0 0.0
  %1785 = vmatpush1.msra.mxu0 0.0
  %1786 = vmatprep.subr.mxu0 0.0
  %1787 = vmatpush1.msra.mxu0 0.0
  %1788 = vmatprep.subr.mxu0 0.0
  %1789 = vmatpush1.msra.mxu0 0.0
  %1790 = vmatprep.subr.mxu0 0.0
  %1791 = vmatpush1.msra.mxu0 0.0
  %1792 = vmatprep.subr.mxu0 0.0
  %1793 = vmatpush1.msra.mxu0 0.0
  %1794 = vmatprep.mubr.f32.mxu0 0.0
  %1795 = vmatmul.mubr.f32.gmra.mrb[0].mxu0 %v1728
  %v1796 = vpop.f32.mrb[0].mxu0
  %v1797 = vadd.f32 0.0, %v1796
  %v1798 = vpop.f32.mrb[0].mxu0
  %1799 = vdwg.mxu0
  %v1800 = vadd.f32 %v1724, %v1797
  %v1801 = vxor.u32 %v1800, 2147483648
  %v1802 = vmul.f32 %v1801, 1.442695
  %v1803 = vpow.pop %v1802
  %v1804 = vadd.f32 %v1803, 1.0
  %v1805 = vrcp.pop %v1804
  %v1806 = vmul.f32 1.0, %v1805
  %v1807 = vtanh.pop %v1800
  %v1808 = vmul.f32 %v1806, %v1717
  %1810 = vrot.lane.b32.xlu0 %v1807, 64
  %v1811 = vpop.permute.xlu0 %1810
  %v1813 = vmul.f32 %v1806, %v1811
  %1815 = vrot.lane.b32.xlu0 %v1813, 32
  %v1816 = vpop.permute.xlu0 %1815
  %v1818 = vadd.f32 %v1808, %v1816
  %v1819 = vtanh.pop %v1818
  %1821 = vrot.lane.b32.xlu0 %v1819, 64
  %v1822 = vpop.permute.xlu0 %1821
  %v1824 = vmul.f32 %v1806, %v1822
  %v1825 = vld [vmem:[#allocation2 + $0x30] sm:$0xff]
  %1827 = vrot.lane.b32.xlu0 %v1824, 32
  %v1828 = vpop.permute.xlu0 %1827
  %v1829 = vsel %vm239, %v1828, 0
  %1831 = vmatprep.subr.mxu0 0.0
  %1832 = vmatpush1.msra.mxu0 %v1220
  %1833 = vmatprep.subr.mxu0 0.0
  %1834 = vmatpush1.msra.mxu0 %v1221
  %1835 = vmatprep.subr.mxu0 0.0
  %1836 = vmatpush1.msra.mxu0 %v1222
  %1837 = vmatprep.subr.mxu0 0.0
  %1838 = vmatpush1.msra.mxu0 %v1223
  %1839 = vmatprep.subr.mxu0 0.0
  %1840 = vmatpush1.msra.mxu0 0.0
  %1841 = vmatprep.subr.mxu0 0.0
  %1842 = vmatpush1.msra.mxu0 0.0
  %1843 = vmatprep.subr.mxu0 0.0
  %1844 = vmatpush1.msra.mxu0 0.0
  %1845 = vmatprep.subr.mxu0 0.0
  %1846 = vmatpush1.msra.mxu0 0.0
  %1847 = vmatprep.subr.mxu0 0.0
  %1848 = vmatpush1.msra.mxu0 0.0
  %1849 = vmatprep.subr.mxu0 0.0
  %1850 = vmatpush1.msra.mxu0 0.0
  %1851 = vmatprep.subr.mxu0 0.0
  %1852 = vmatpush1.msra.mxu0 0.0
  %1853 = vmatprep.subr.mxu0 0.0
  %1854 = vmatpush1.msra.mxu0 0.0
  %1855 = vmatprep.subr.mxu0 0.0
  %1856 = vmatpush1.msra.mxu0 0.0
  %1857 = vmatprep.subr.mxu0 0.0
  %1858 = vmatpush1.msra.mxu0 0.0
  %1859 = vmatprep.subr.mxu0 0.0
  %1860 = vmatpush1.msra.mxu0 0.0
  %1861 = vmatprep.subr.mxu0 0.0
  %1862 = vmatpush1.msra.mxu0 0.0
  %1863 = vmatprep.subr.mxu0 0.0
  %1864 = vmatpush1.msra.mxu0 0.0
  %1865 = vmatprep.subr.mxu0 0.0
  %1866 = vmatpush1.msra.mxu0 0.0
  %1867 = vmatprep.subr.mxu0 0.0
  %1868 = vmatpush1.msra.mxu0 0.0
  %1869 = vmatprep.subr.mxu0 0.0
  %1870 = vmatpush1.msra.mxu0 0.0
  %1871 = vmatprep.subr.mxu0 0.0
  %1872 = vmatpush1.msra.mxu0 0.0
  %1873 = vmatprep.subr.mxu0 0.0
  %1874 = vmatpush1.msra.mxu0 0.0
  %1875 = vmatprep.subr.mxu0 0.0
  %1876 = vmatpush1.msra.mxu0 0.0
  %1877 = vmatprep.subr.mxu0 0.0
  %1878 = vmatpush1.msra.mxu0 0.0
  %1879 = vmatprep.subr.mxu0 0.0
  %1880 = vmatpush1.msra.mxu0 0.0
  %1881 = vmatprep.subr.mxu0 0.0
  %1882 = vmatpush1.msra.mxu0 0.0
  %1883 = vmatprep.subr.mxu0 0.0
  %1884 = vmatpush1.msra.mxu0 0.0
  %1885 = vmatprep.subr.mxu0 0.0
  %1886 = vmatpush1.msra.mxu0 0.0
  %1887 = vmatprep.subr.mxu0 0.0
  %1888 = vmatpush1.msra.mxu0 0.0
  %1889 = vmatprep.subr.mxu0 0.0
  %1890 = vmatpush1.msra.mxu0 0.0
  %1891 = vmatprep.subr.mxu0 0.0
  %1892 = vmatpush1.msra.mxu0 0.0
  %1893 = vmatprep.subr.mxu0 0.0
  %1894 = vmatpush1.msra.mxu0 0.0
  %1895 = vmatprep.mubr.f32.mxu0 0.0
  %1896 = vmatmul.mubr.f32.gmra.mrb[0].mxu0 %v1829
  %v1897 = vpop.f32.mrb[0].mxu0
  %v1898 = vadd.f32 0.0, %v1897
  %v1899 = vpop.f32.mrb[0].mxu0
  %1900 = vdwg.mxu0
  %v1901 = vadd.f32 %v1825, %v1898
  %v1902 = vxor.u32 %v1901, 2147483648
  %v1903 = vmul.f32 %v1902, 1.442695
  %v1904 = vpow.pop %v1903
  %v1905 = vadd.f32 %v1904, 1.0
  %v1906 = vrcp.pop %v1905
  %v1907 = vmul.f32 1.0, %v1906
  %v1908 = vtanh.pop %v1901
  %v1909 = vmul.f32 %v1907, %v1818
  %1911 = vrot.lane.b32.xlu0 %v1908, 64
  %v1912 = vpop.permute.xlu0 %1911
  %v1914 = vmul.f32 %v1907, %v1912
  %1916 = vrot.lane.b32.xlu0 %v1914, 32
  %v1917 = vpop.permute.xlu0 %1916
  %v1919 = vadd.f32 %v1909, %v1917
  %v1920 = vtanh.pop %v1919
  %1922 = vrot.lane.b32.xlu0 %v1920, 64
  %v1923 = vpop.permute.xlu0 %1922
  %v1925 = vmul.f32 %v1907, %v1923
  %v1926 = vld [vmem:[#allocation2 + $0x38] sm:$0xff]
  %1928 = vrot.lane.b32.xlu0 %v1925, 32
  %v1929 = vpop.permute.xlu0 %1928
  %v1930 = vsel %vm239, %v1929, 0
  %1932 = vmatprep.subr.mxu0 0.0
  %1933 = vmatpush1.msra.mxu0 %v1220
  %1934 = vmatprep.subr.mxu0 0.0
  %1935 = vmatpush1.msra.mxu0 %v1221
  %1936 = vmatprep.subr.mxu0 0.0
  %1937 = vmatpush1.msra.mxu0 %v1222
  %1938 = vmatprep.subr.mxu0 0.0
  %1939 = vmatpush1.msra.mxu0 %v1223
  %1940 = vmatprep.subr.mxu0 0.0
  %1941 = vmatpush1.msra.mxu0 0.0
  %1942 = vmatprep.subr.mxu0 0.0
  %1943 = vmatpush1.msra.mxu0 0.0
  %1944 = vmatprep.subr.mxu0 0.0
  %1945 = vmatpush1.msra.mxu0 0.0
  %1946 = vmatprep.subr.mxu0 0.0
  %1947 = vmatpush1.msra.mxu0 0.0
  %1948 = vmatprep.subr.mxu0 0.0
  %1949 = vmatpush1.msra.mxu0 0.0
  %1950 = vmatprep.subr.mxu0 0.0
  %1951 = vmatpush1.msra.mxu0 0.0
  %1952 = vmatprep.subr.mxu0 0.0
  %1953 = vmatpush1.msra.mxu0 0.0
  %1954 = vmatprep.subr.mxu0 0.0
  %1955 = vmatpush1.msra.mxu0 0.0
  %1956 = vmatprep.subr.mxu0 0.0
  %1957 = vmatpush1.msra.mxu0 0.0
  %1958 = vmatprep.subr.mxu0 0.0
  %1959 = vmatpush1.msra.mxu0 0.0
  %1960 = vmatprep.subr.mxu0 0.0
  %1961 = vmatpush1.msra.mxu0 0.0
  %1962 = vmatprep.subr.mxu0 0.0
  %1963 = vmatpush1.msra.mxu0 0.0
  %1964 = vmatprep.subr.mxu0 0.0
  %1965 = vmatpush1.msra.mxu0 0.0
  %1966 = vmatprep.subr.mxu0 0.0
  %1967 = vmatpush1.msra.mxu0 0.0
  %1968 = vmatprep.subr.mxu0 0.0
  %1969 = vmatpush1.msra.mxu0 0.0
  %1970 = vmatprep.subr.mxu0 0.0
  %1971 = vmatpush1.msra.mxu0 0.0
  %1972 = vmatprep.subr.mxu0 0.0
  %1973 = vmatpush1.msra.mxu0 0.0
  %1974 = vmatprep.subr.mxu0 0.0
  %1975 = vmatpush1.msra.mxu0 0.0
  %1976 = vmatprep.subr.mxu0 0.0
  %1977 = vmatpush1.msra.mxu0 0.0
  %1978 = vmatprep.subr.mxu0 0.0
  %1979 = vmatpush1.msra.mxu0 0.0
  %1980 = vmatprep.subr.mxu0 0.0
  %1981 = vmatpush1.msra.mxu0 0.0
  %1982 = vmatprep.subr.mxu0 0.0
  %1983 = vmatpush1.msra.mxu0 0.0
  %1984 = vmatprep.subr.mxu0 0.0
  %1985 = vmatpush1.msra.mxu0 0.0
  %1986 = vmatprep.subr.mxu0 0.0
  %1987 = vmatpush1.msra.mxu0 0.0
  %1988 = vmatprep.subr.mxu0 0.0
  %1989 = vmatpush1.msra.mxu0 0.0
  %1990 = vmatprep.subr.mxu0 0.0
  %1991 = vmatpush1.msra.mxu0 0.0
  %1992 = vmatprep.subr.mxu0 0.0
  %1993 = vmatpush1.msra.mxu0 0.0
  %1994 = vmatprep.subr.mxu0 0.0
  %1995 = vmatpush1.msra.mxu0 0.0
  %1996 = vmatprep.mubr.f32.mxu0 0.0
  %1997 = vmatmul.mubr.f32.gmra.mrb[0].mxu0 %v1930
  %v1998 = vpop.f32.mrb[0].mxu0
  %v1999 = vadd.f32 0.0, %v1998
  %v2000 = vpop.f32.mrb[0].mxu0
  %2001 = vdwg.mxu0
  %v2002 = vadd.f32 %v1926, %v1999
  %v2003 = vxor.u32 %v2002, 2147483648
  %v2004 = vmul.f32 %v2003, 1.442695
  %v2005 = vpow.pop %v2004
  %v2006 = vadd.f32 %v2005, 1.0
  %v2007 = vrcp.pop %v2006
  %v2008 = vmul.f32 1.0, %v2007
  %v2009 = vtanh.pop %v2002
  %v2010 = vmul.f32 %v2008, %v1919
  %2012 = vrot.lane.b32.xlu0 %v2009, 64
  %v2013 = vpop.permute.xlu0 %2012
  %v2015 = vmul.f32 %v2008, %v2013
  %2017 = vrot.lane.b32.xlu0 %v2015, 32
  %v2018 = vpop.permute.xlu0 %2017
  %v2020 = vadd.f32 %v2010, %v2018
  %v2021 = vtanh.pop %v2020
  %2023 = vrot.lane.b32.xlu0 %v2021, 64
  %v2024 = vpop.permute.xlu0 %2023
  %v2026 = vmul.f32 %v2008, %v2024
  %v2027 = vtanh.pop %v2026
  %v2028 = vld [vmem:[%s8] sm:$0xff]
  %v2029 = vld [vmem:[%s8 + $0x8] sm:$0xff]
  %v2030 = vld [vmem:[%s8 + $0x10] sm:$0xff]
  %v2031 = vld [vmem:[%s8 + $0x18] sm:$0xff]
  %v2032 = vld [vmem:[%s9] sm:$0x1]
  %v2034 = vlaneseq
  %v2035 = vshrl.u32 %v2034, 7
  %v2036 = vsub.s32 0, %v2035
  %v2037 = vrot.slane %v2032, %v2036
  %2040 = vrot.lane.b32.xlu0 %v2027, 32
  %v2041 = vpop.permute.xlu0 %2040
  %v2042 = vsel %vm239, %v2041, 0
  %2044 = vmatprep.subr.mxu0 0.0
  %2045 = vmatpush1.msra.mxu0 %v2028
  %2046 = vmatprep.subr.mxu0 0.0
  %2047 = vmatpush1.msra.mxu0 %v2029
  %2048 = vmatprep.subr.mxu0 0.0
  %2049 = vmatpush1.msra.mxu0 %v2030
  %2050 = vmatprep.subr.mxu0 0.0
  %2051 = vmatpush1.msra.mxu0 %v2031
  %2052 = vmatprep.subr.mxu0 0.0
  %2053 = vmatpush1.msra.mxu0 0.0
  %2054 = vmatprep.subr.mxu0 0.0
  %2055 = vmatpush1.msra.mxu0 0.0
  %2056 = vmatprep.subr.mxu0 0.0
  %2057 = vmatpush1.msra.mxu0 0.0
  %2058 = vmatprep.subr.mxu0 0.0
  %2059 = vmatpush1.msra.mxu0 0.0
  %2060 = vmatprep.subr.mxu0 0.0
  %2061 = vmatpush1.msra.mxu0 0.0
  %2062 = vmatprep.subr.mxu0 0.0
  %2063 = vmatpush1.msra.mxu0 0.0
  %2064 = vmatprep.subr.mxu0 0.0
  %2065 = vmatpush1.msra.mxu0 0.0
  %2066 = vmatprep.subr.mxu0 0.0
  %2067 = vmatpush1.msra.mxu0 0.0
  %2068 = vmatprep.subr.mxu0 0.0
  %2069 = vmatpush1.msra.mxu0 0.0
  %2070 = vmatprep.subr.mxu0 0.0
  %2071 = vmatpush1.msra.mxu0 0.0
  %2072 = vmatprep.subr.mxu0 0.0
  %2073 = vmatpush1.msra.mxu0 0.0
  %2074 = vmatprep.subr.mxu0 0.0
  %2075 = vmatpush1.msra.mxu0 0.0
  %2076 = vmatprep.subr.mxu0 0.0
  %2077 = vmatpush1.msra.mxu0 0.0
  %2078 = vmatprep.subr.mxu0 0.0
  %2079 = vmatpush1.msra.mxu0 0.0
  %2080 = vmatprep.subr.mxu0 0.0
  %2081 = vmatpush1.msra.mxu0 0.0
  %2082 = vmatprep.subr.mxu0 0.0
  %2083 = vmatpush1.msra.mxu0 0.0
  %2084 = vmatprep.subr.mxu0 0.0
  %2085 = vmatpush1.msra.mxu0 0.0
  %2086 = vmatprep.subr.mxu0 0.0
  %2087 = vmatpush1.msra.mxu0 0.0
  %2088 = vmatprep.subr.mxu0 0.0
  %2089 = vmatpush1.msra.mxu0 0.0
  %2090 = vmatprep.subr.mxu0 0.0
  %2091 = vmatpush1.msra.mxu0 0.0
  %2092 = vmatprep.subr.mxu0 0.0
  %2093 = vmatpush1.msra.mxu0 0.0
  %2094 = vmatprep.subr.mxu0 0.0
  %2095 = vmatpush1.msra.mxu0 0.0
  %2096 = vmatprep.subr.mxu0 0.0
  %2097 = vmatpush1.msra.mxu0 0.0
  %2098 = vmatprep.subr.mxu0 0.0
  %2099 = vmatpush1.msra.mxu0 0.0
  %2100 = vmatprep.subr.mxu0 0.0
  %2101 = vmatpush1.msra.mxu0 0.0
  %2102 = vmatprep.subr.mxu0 0.0
  %2103 = vmatpush1.msra.mxu0 0.0
  %2104 = vmatprep.subr.mxu0 0.0
  %2105 = vmatpush1.msra.mxu0 0.0
  %2106 = vmatprep.subr.mxu0 0.0
  %2107 = vmatpush1.msra.mxu0 0.0
  %2108 = vmatprep.mubr.f32.mxu0 0.0
  %2109 = vmatmul.mubr.f32.gmra.mrb[0].mxu0 %v2042
  %v2110 = vpop.f32.mrb[0].mxu0
  %v2111 = vadd.f32 %v2037, %v2110
  %v2112 = vpop.f32.mrb[0].mxu0
  %2113 = vdwg.mxu0
  %v2114 = vmax.f32 %v2111, 0.0
  %v2115 = vld [vmem:[%s10] sm:$0xff]
  %v2116 = vld [vmem:[%s10 + $0x8] sm:$0xff]
  %v2117 = vld [vmem:[%s10 + $0x10] sm:$0xff]
  %v2118 = vld [vmem:[%s10 + $0x18] sm:$0xff]
  %v2119 = vld [vmem:[%s11] sm:$0x1]
  %v2121 = vlaneseq
  %v2122 = vshrl.u32 %v2121, 7
  %v2123 = vsub.s32 0, %v2122
  %v2124 = vrot.slane %v2119, %v2123
  %2126 = vmatprep.subr.mxu0 0.0
  %2127 = vmatpush1.msra.mxu0 %v2115
  %2128 = vmatprep.subr.mxu0 0.0
  %2129 = vmatpush1.msra.mxu0 %v2116
  %2130 = vmatprep.subr.mxu0 0.0
  %2131 = vmatpush1.msra.mxu0 %v2117
  %2132 = vmatprep.subr.mxu0 0.0
  %2133 = vmatpush1.msra.mxu0 %v2118
  %2134 = vmatprep.subr.mxu0 0.0
  %2135 = vmatpush1.msra.mxu0 0.0
  %2136 = vmatprep.subr.mxu0 0.0
  %2137 = vmatpush1.msra.mxu0 0.0
  %2138 = vmatprep.subr.mxu0 0.0
  %2139 = vmatpush1.msra.mxu0 0.0
  %2140 = vmatprep.subr.mxu0 0.0
  %2141 = vmatpush1.msra.mxu0 0.0
  %2142 = vmatprep.subr.mxu0 0.0
  %2143 = vmatpush1.msra.mxu0 0.0
  %2144 = vmatprep.subr.mxu0 0.0
  %2145 = vmatpush1.msra.mxu0 0.0
  %2146 = vmatprep.subr.mxu0 0.0
  %2147 = vmatpush1.msra.mxu0 0.0
  %2148 = vmatprep.subr.mxu0 0.0
  %2149 = vmatpush1.msra.mxu0 0.0
  %2150 = vmatprep.subr.mxu0 0.0
  %2151 = vmatpush1.msra.mxu0 0.0
  %2152 = vmatprep.subr.mxu0 0.0
  %2153 = vmatpush1.msra.mxu0 0.0
  %2154 = vmatprep.subr.mxu0 0.0
  %2155 = vmatpush1.msra.mxu0 0.0
  %2156 = vmatprep.subr.mxu0 0.0
  %2157 = vmatpush1.msra.mxu0 0.0
  %2158 = vmatprep.subr.mxu0 0.0
  %2159 = vmatpush1.msra.mxu0 0.0
  %2160 = vmatprep.subr.mxu0 0.0
  %2161 = vmatpush1.msra.mxu0 0.0
  %2162 = vmatprep.subr.mxu0 0.0
  %2163 = vmatpush1.msra.mxu0 0.0
  %2164 = vmatprep.subr.mxu0 0.0
  %2165 = vmatpush1.msra.mxu0 0.0
  %2166 = vmatprep.subr.mxu0 0.0
  %2167 = vmatpush1.msra.mxu0 0.0
  %2168 = vmatprep.subr.mxu0 0.0
  %2169 = vmatpush1.msra.mxu0 0.0
  %2170 = vmatprep.subr.mxu0 0.0
  %2171 = vmatpush1.msra.mxu0 0.0
  %2172 = vmatprep.subr.mxu0 0.0
  %2173 = vmatpush1.msra.mxu0 0.0
  %2174 = vmatprep.subr.mxu0 0.0
  %2175 = vmatpush1.msra.mxu0 0.0
  %2176 = vmatprep.subr.mxu0 0.0
  %2177 = vmatpush1.msra.mxu0 0.0
  %2178 = vmatprep.subr.mxu0 0.0
  %2179 = vmatpush1.msra.mxu0 0.0
  %2180 = vmatprep.subr.mxu0 0.0
  %2181 = vmatpush1.msra.mxu0 0.0
  %2182 = vmatprep.subr.mxu0 0.0
  %2183 = vmatpush1.msra.mxu0 0.0
  %2184 = vmatprep.subr.mxu0 0.0
  %2185 = vmatpush1.msra.mxu0 0.0
  %2186 = vmatprep.subr.mxu0 0.0
  %2187 = vmatpush1.msra.mxu0 0.0
  %2188 = vmatprep.subr.mxu0 0.0
  %2189 = vmatpush1.msra.mxu0 0.0
  %2190 = vmatprep.mubr.f32.mxu0 0.0
  %2191 = vmatmul.mubr.f32.gmra.mrb[0].mxu0 %v2042
  %v2192 = vpop.f32.mrb[0].mxu0
  %v2193 = vadd.f32 %v2124, %v2192
  %v2194 = vpop.f32.mrb[0].mxu0
  %2195 = vdwg.mxu0
  %v2196 = vmax.f32 %v2193, 0.0
  %v2197 = vmul.f32 %v2196, 0.5
  %v2198 = vmul.f32 %v2197, 1.442695
  %v2199 = vpow.pop %v2198
  %v2200 = vld [vmem:[%s1] sm:$0xff]
  %v2201 = vmul.f32 %v2199, %v2200
  %v2202 = vadd.f32 %v2114, %v2201
  %vm2203 = vcmask 130048
  %2204 = vst.msk [vmem:[%s25] sm:$0xff] %vm2203, %v2114
  %2205 = vst.msk [vmem:[%s26] sm:$0xff] %vm2203, %v2196
  %v2206 = vld [vmem:[%s12] sm:$0xff]
  %v2207 = vld [vmem:[%s12 + $0x8] sm:$0xff]
  %v2208 = vld [vmem:[%s14] sm:$0x1]
  %v2210 = vlaneseq
  %v2211 = vshrl.u32 %v2210, 7
  %v2212 = vsub.s32 0, %v2211
  %v2213 = vrot.slane %v2208, %v2212
  %v2216 = vsel %vm2203, %v2202, 0
  %2218 = vmatprep.subr.mxu0 0.0
  %2219 = vmatpush1.msra.mxu0 %v2206
  %2220 = vmatprep.subr.mxu0 0.0
  %2221 = vmatpush1.msra.mxu0 %v2207
  %2222 = vmatprep.subr.mxu0 0.0
  %2223 = vmatpush1.msra.mxu0 0.0
  %2224 = vmatprep.subr.mxu0 0.0
  %2225 = vmatpush1.msra.mxu0 0.0
  %2226 = vmatprep.subr.mxu0 0.0
  %2227 = vmatpush1.msra.mxu0 0.0
  %2228 = vmatprep.subr.mxu0 0.0
  %2229 = vmatpush1.msra.mxu0 0.0
  %2230 = vmatprep.subr.mxu0 0.0
  %2231 = vmatpush1.msra.mxu0 0.0
  %2232 = vmatprep.subr.mxu0 0.0
  %2233 = vmatpush1.msra.mxu0 0.0
  %2234 = vmatprep.subr.mxu0 0.0
  %2235 = vmatpush1.msra.mxu0 0.0
  %2236 = vmatprep.subr.mxu0 0.0
  %2237 = vmatpush1.msra.mxu0 0.0
  %2238 = vmatprep.subr.mxu0 0.0
  %2239 = vmatpush1.msra.mxu0 0.0
  %2240 = vmatprep.subr.mxu0 0.0
  %2241 = vmatpush1.msra.mxu0 0.0
  %2242 = vmatprep.subr.mxu0 0.0
  %2243 = vmatpush1.msra.mxu0 0.0
  %2244 = vmatprep.subr.mxu0 0.0
  %2245 = vmatpush1.msra.mxu0 0.0
  %2246 = vmatprep.subr.mxu0 0.0
  %2247 = vmatpush1.msra.mxu0 0.0
  %2248 = vmatprep.subr.mxu0 0.0
  %2249 = vmatpush1.msra.mxu0 0.0
  %2250 = vmatprep.subr.mxu0 0.0
  %2251 = vmatpush1.msra.mxu0 0.0
  %2252 = vmatprep.subr.mxu0 0.0
  %2253 = vmatpush1.msra.mxu0 0.0
  %2254 = vmatprep.subr.mxu0 0.0
  %2255 = vmatpush1.msra.mxu0 0.0
  %2256 = vmatprep.subr.mxu0 0.0
  %2257 = vmatpush1.msra.mxu0 0.0
  %2258 = vmatprep.subr.mxu0 0.0
  %2259 = vmatpush1.msra.mxu0 0.0
  %2260 = vmatprep.subr.mxu0 0.0
  %2261 = vmatpush1.msra.mxu0 0.0
  %2262 = vmatprep.subr.mxu0 0.0
  %2263 = vmatpush1.msra.mxu0 0.0
  %2264 = vmatprep.subr.mxu0 0.0
  %2265 = vmatpush1.msra.mxu0 0.0
  %2266 = vmatprep.subr.mxu0 0.0
  %2267 = vmatpush1.msra.mxu0 0.0
  %2268 = vmatprep.subr.mxu0 0.0
  %2269 = vmatpush1.msra.mxu0 0.0
  %2270 = vmatprep.subr.mxu0 0.0
  %2271 = vmatpush1.msra.mxu0 0.0
  %2272 = vmatprep.subr.mxu0 0.0
  %2273 = vmatpush1.msra.mxu0 0.0
  %2274 = vmatprep.subr.mxu0 0.0
  %2275 = vmatpush1.msra.mxu0 0.0
  %2276 = vmatprep.subr.mxu0 0.0
  %2277 = vmatpush1.msra.mxu0 0.0
  %2278 = vmatprep.subr.mxu0 0.0
  %2279 = vmatpush1.msra.mxu0 0.0
  %2280 = vmatprep.subr.mxu0 0.0
  %2281 = vmatpush1.msra.mxu0 0.0
  %2282 = vmatprep.mubr.f32.mxu0 0.0
  %2283 = vmatmul.mubr.f32.gmra.mrb[0].mxu0 %v2216
  %v2284 = vpop.f32.mrb[0].mxu0
  %v2285 = vadd.f32 %v2213, %v2284
  %v2286 = vpop.f32.mrb[0].mxu0
  %2287 = vdwg.mxu0
  %v2288 = vld [vmem:[%s13] sm:$0xff]
  %v2289 = vld [vmem:[%s13 + $0x8] sm:$0xff]
  %v2290 = vld [vmem:[%s13 + $0x10] sm:$0xff]
  %v2291 = vld [vmem:[%s13 + $0x18] sm:$0xff]
  %v2292 = vsel %vm239, %v1061, 0
  %2294 = vmatprep.subr.mxu0 0.0
  %2295 = vmatpush1.msra.mxu0 %v2288
  %2296 = vmatprep.subr.mxu0 0.0
  %2297 = vmatpush1.msra.mxu0 %v2289
  %2298 = vmatprep.subr.mxu0 0.0
  %2299 = vmatpush1.msra.mxu0 %v2290
  %2300 = vmatprep.subr.mxu0 0.0
  %2301 = vmatpush1.msra.mxu0 %v2291
  %2302 = vmatprep.subr.mxu0 0.0
  %2303 = vmatpush1.msra.mxu0 0.0
  %2304 = vmatprep.subr.mxu0 0.0
  %2305 = vmatpush1.msra.mxu0 0.0
  %2306 = vmatprep.subr.mxu0 0.0
  %2307 = vmatpush1.msra.mxu0 0.0
  %2308 = vmatprep.subr.mxu0 0.0
  %2309 = vmatpush1.msra.mxu0 0.0
  %2310 = vmatprep.subr.mxu0 0.0
  %2311 = vmatpush1.msra.mxu0 0.0
  %2312 = vmatprep.subr.mxu0 0.0
  %2313 = vmatpush1.msra.mxu0 0.0
  %2314 = vmatprep.subr.mxu0 0.0
  %2315 = vmatpush1.msra.mxu0 0.0
  %2316 = vmatprep.subr.mxu0 0.0
  %2317 = vmatpush1.msra.mxu0 0.0
  %2318 = vmatprep.subr.mxu0 0.0
  %2319 = vmatpush1.msra.mxu0 0.0
  %2320 = vmatprep.subr.mxu0 0.0
  %2321 = vmatpush1.msra.mxu0 0.0
  %2322 = vmatprep.subr.mxu0 0.0
  %2323 = vmatpush1.msra.mxu0 0.0
  %2324 = vmatprep.subr.mxu0 0.0
  %2325 = vmatpush1.msra.mxu0 0.0
  %2326 = vmatprep.subr.mxu0 0.0
  %2327 = vmatpush1.msra.mxu0 0.0
  %2328 = vmatprep.subr.mxu0 0.0
  %2329 = vmatpush1.msra.mxu0 0.0
  %2330 = vmatprep.subr.mxu0 0.0
  %2331 = vmatpush1.msra.mxu0 0.0
  %2332 = vmatprep.subr.mxu0 0.0
  %2333 = vmatpush1.msra.mxu0 0.0
  %2334 = vmatprep.subr.mxu0 0.0
  %2335 = vmatpush1.msra.mxu0 0.0
  %2336 = vmatprep.subr.mxu0 0.0
  %2337 = vmatpush1.msra.mxu0 0.0
  %2338 = vmatprep.subr.mxu0 0.0
  %2339 = vmatpush1.msra.mxu0 0.0
  %2340 = vmatprep.subr.mxu0 0.0
  %2341 = vmatpush1.msra.mxu0 0.0
  %2342 = vmatprep.subr.mxu0 0.0
  %2343 = vmatpush1.msra.mxu0 0.0
  %2344 = vmatprep.subr.mxu0 0.0
  %2345 = vmatpush1.msra.mxu0 0.0
  %2346 = vmatprep.subr.mxu0 0.0
  %2347 = vmatpush1.msra.mxu0 0.0
  %2348 = vmatprep.subr.mxu0 0.0
  %2349 = vmatpush1.msra.mxu0 0.0
  %2350 = vmatprep.subr.mxu0 0.0
  %2351 = vmatpush1.msra.mxu0 0.0
  %2352 = vmatprep.subr.mxu0 0.0
  %2353 = vmatpush1.msra.mxu0 0.0
  %2354 = vmatprep.subr.mxu0 0.0
  %2355 = vmatpush1.msra.mxu0 0.0
  %2356 = vmatprep.subr.mxu0 0.0
  %2357 = vmatpush1.msra.mxu0 0.0
  %2358 = vmatprep.mubr.f32.mxu0 0.0
  %2359 = vmatmul.mubr.f32.gmra.mrb[0].mxu0 %v2292
  %v2360 = vpop.f32.mrb[0].mxu0
  %v2361 = vadd.f32 0.0, %v2360
  %v2362 = vpop.f32.mrb[0].mxu0
  %2363 = vdwg.mxu0
  %v2364 = vadd.f32 %v2285, %v2361
  %v2365 = vxor.u32 %v2364, 2147483648
  %v2366 = vmul.f32 %v2365, 1.442695
  %v2367 = vpow.pop %v2366
  %v2368 = vadd.f32 %v2367, 1.0
  %v2369 = vrcp.pop %v2368
  %v2370 = vmul.f32 1.0, %v2369
  %v2371 = vtanh.pop %v2364
  %v2372 = vmul.f32 %v2370, %v1052
  %2374 = vrot.lane.b32.xlu0 %v2371, 64
  %v2375 = vpop.permute.xlu0 %2374
  %v2377 = vmul.f32 %v2370, %v2375
  %2379 = vrot.lane.b32.xlu0 %v2377, 32
  %v2380 = vpop.permute.xlu0 %2379
  %v2382 = vadd.f32 %v2372, %v2380
  %v2383 = vtanh.pop %v2382
  %2385 = vrot.lane.b32.xlu0 %v2383, 64
  %v2386 = vpop.permute.xlu0 %2385
  %v2388 = vmul.f32 %v2370, %v2386
  %2390 = vrot.lane.b32.xlu0 %v2388, 32
  %v2391 = vpop.permute.xlu0 %2390
  %2393 = vst.msk [vmem:[#allocation3] sm:$0xff] %vm239, %v2391
  %v2394 = vsel %vm239, %v2391, 0
  %2396 = vmatprep.subr.mxu0 0.0
  %2397 = vmatpush1.msra.mxu0 %v2288
  %2398 = vmatprep.subr.mxu0 0.0
  %2399 = vmatpush1.msra.mxu0 %v2289
  %2400 = vmatprep.subr.mxu0 0.0
  %2401 = vmatpush1.msra.mxu0 %v2290
  %2402 = vmatprep.subr.mxu0 0.0
  %2403 = vmatpush1.msra.mxu0 %v2291
  %2404 = vmatprep.subr.mxu0 0.0
  %2405 = vmatpush1.msra.mxu0 0.0
  %2406 = vmatprep.subr.mxu0 0.0
  %2407 = vmatpush1.msra.mxu0 0.0
  %2408 = vmatprep.subr.mxu0 0.0
  %2409 = vmatpush1.msra.mxu0 0.0
  %2410 = vmatprep.subr.mxu0 0.0
  %2411 = vmatpush1.msra.mxu0 0.0
  %2412 = vmatprep.subr.mxu0 0.0
  %2413 = vmatpush1.msra.mxu0 0.0
  %2414 = vmatprep.subr.mxu0 0.0
  %2415 = vmatpush1.msra.mxu0 0.0
  %2416 = vmatprep.subr.mxu0 0.0
  %2417 = vmatpush1.msra.mxu0 0.0
  %2418 = vmatprep.subr.mxu0 0.0
  %2419 = vmatpush1.msra.mxu0 0.0
  %2420 = vmatprep.subr.mxu0 0.0
  %2421 = vmatpush1.msra.mxu0 0.0
  %2422 = vmatprep.subr.mxu0 0.0
  %2423 = vmatpush1.msra.mxu0 0.0
  %2424 = vmatprep.subr.mxu0 0.0
  %2425 = vmatpush1.msra.mxu0 0.0
  %2426 = vmatprep.subr.mxu0 0.0
  %2427 = vmatpush1.msra.mxu0 0.0
  %2428 = vmatprep.subr.mxu0 0.0
  %2429 = vmatpush1.msra.mxu0 0.0
  %2430 = vmatprep.subr.mxu0 0.0
  %2431 = vmatpush1.msra.mxu0 0.0
  %2432 = vmatprep.subr.mxu0 0.0
  %2433 = vmatpush1.msra.mxu0 0.0
  %2434 = vmatprep.subr.mxu0 0.0
  %2435 = vmatpush1.msra.mxu0 0.0
  %2436 = vmatprep.subr.mxu0 0.0
  %2437 = vmatpush1.msra.mxu0 0.0
  %2438 = vmatprep.subr.mxu0 0.0
  %2439 = vmatpush1.msra.mxu0 0.0
  %2440 = vmatprep.subr.mxu0 0.0
  %2441 = vmatpush1.msra.mxu0 0.0
  %2442 = vmatprep.subr.mxu0 0.0
  %2443 = vmatpush1.msra.mxu0 0.0
  %2444 = vmatprep.subr.mxu0 0.0
  %2445 = vmatpush1.msra.mxu0 0.0
  %2446 = vmatprep.subr.mxu0 0.0
  %2447 = vmatpush1.msra.mxu0 0.0
  %2448 = vmatprep.subr.mxu0 0.0
  %2449 = vmatpush1.msra.mxu0 0.0
  %2450 = vmatprep.subr.mxu0 0.0
  %2451 = vmatpush1.msra.mxu0 0.0
  %2452 = vmatprep.subr.mxu0 0.0
  %2453 = vmatpush1.msra.mxu0 0.0
  %2454 = vmatprep.subr.mxu0 0.0
  %2455 = vmatpush1.msra.mxu0 0.0
  %2456 = vmatprep.subr.mxu0 0.0
  %2457 = vmatpush1.msra.mxu0 0.0
  %2458 = vmatprep.subr.mxu0 0.0
  %2459 = vmatpush1.msra.mxu0 0.0
  %2460 = vmatprep.mubr.f32.mxu0 0.0
  %2461 = vmatmul.mubr.f32.gmra.mrb[0].mxu0 %v2394
  %v2462 = vpop.f32.mrb[0].mxu0
  %v2463 = vadd.f32 0.0, %v2462
  %v2464 = vpop.f32.mrb[0].mxu0
  %2465 = vdwg.mxu0
  %v2466 = vadd.f32 %v2285, %v2463
  %v2467 = vxor.u32 %v2466, 2147483648
  %v2468 = vmul.f32 %v2467, 1.442695
  %v2469 = vpow.pop %v2468
  %v2470 = vadd.f32 %v2469, 1.0
  %v2471 = vrcp.pop %v2470
  %v2472 = vmul.f32 1.0, %v2471
  %v2473 = vtanh.pop %v2466
  %v2474 = vmul.f32 %v2472, %v2382
  %2476 = vrot.lane.b32.xlu0 %v2473, 64
  %v2477 = vpop.permute.xlu0 %2476
  %v2479 = vmul.f32 %v2472, %v2477
  %2481 = vrot.lane.b32.xlu0 %v2479, 32
  %v2482 = vpop.permute.xlu0 %2481
  %v2484 = vadd.f32 %v2474, %v2482
  %v2485 = vtanh.pop %v2484
  %2487 = vrot.lane.b32.xlu0 %v2485, 64
  %v2488 = vpop.permute.xlu0 %2487
  %v2490 = vmul.f32 %v2472, %v2488
  %2492 = vrot.lane.b32.xlu0 %v2490, 32
  %v2493 = vpop.permute.xlu0 %2492
  %2495 = vst.msk [vmem:[#allocation3 + $0x8] sm:$0xff] %vm239, %v2493
  %v2496 = vsel %vm239, %v2493, 0
  %2498 = vmatprep.subr.mxu0 0.0
  %2499 = vmatpush1.msra.mxu0 %v2288
  %2500 = vmatprep.subr.mxu0 0.0
  %2501 = vmatpush1.msra.mxu0 %v2289
  %2502 = vmatprep.subr.mxu0 0.0
  %2503 = vmatpush1.msra.mxu0 %v2290
  %2504 = vmatprep.subr.mxu0 0.0
  %2505 = vmatpush1.msra.mxu0 %v2291
  %2506 = vmatprep.subr.mxu0 0.0
  %2507 = vmatpush1.msra.mxu0 0.0
  %2508 = vmatprep.subr.mxu0 0.0
  %2509 = vmatpush1.msra.mxu0 0.0
  %2510 = vmatprep.subr.mxu0 0.0
  %2511 = vmatpush1.msra.mxu0 0.0
  %2512 = vmatprep.subr.mxu0 0.0
  %2513 = vmatpush1.msra.mxu0 0.0
  %2514 = vmatprep.subr.mxu0 0.0
  %2515 = vmatpush1.msra.mxu0 0.0
  %2516 = vmatprep.subr.mxu0 0.0
  %2517 = vmatpush1.msra.mxu0 0.0
  %2518 = vmatprep.subr.mxu0 0.0
  %2519 = vmatpush1.msra.mxu0 0.0
  %2520 = vmatprep.subr.mxu0 0.0
  %2521 = vmatpush1.msra.mxu0 0.0
  %2522 = vmatprep.subr.mxu0 0.0
  %2523 = vmatpush1.msra.mxu0 0.0
  %2524 = vmatprep.subr.mxu0 0.0
  %2525 = vmatpush1.msra.mxu0 0.0
  %2526 = vmatprep.subr.mxu0 0.0
  %2527 = vmatpush1.msra.mxu0 0.0
  %2528 = vmatprep.subr.mxu0 0.0
  %2529 = vmatpush1.msra.mxu0 0.0
  %2530 = vmatprep.subr.mxu0 0.0
  %2531 = vmatpush1.msra.mxu0 0.0
  %2532 = vmatprep.subr.mxu0 0.0
  %2533 = vmatpush1.msra.mxu0 0.0
  %2534 = vmatprep.subr.mxu0 0.0
  %2535 = vmatpush1.msra.mxu0 0.0
  %2536 = vmatprep.subr.mxu0 0.0
  %2537 = vmatpush1.msra.mxu0 0.0
  %2538 = vmatprep.subr.mxu0 0.0
  %2539 = vmatpush1.msra.mxu0 0.0
  %2540 = vmatprep.subr.mxu0 0.0
  %2541 = vmatpush1.msra.mxu0 0.0
  %2542 = vmatprep.subr.mxu0 0.0
  %2543 = vmatpush1.msra.mxu0 0.0
  %2544 = vmatprep.subr.mxu0 0.0
  %2545 = vmatpush1.msra.mxu0 0.0
  %2546 = vmatprep.subr.mxu0 0.0
  %2547 = vmatpush1.msra.mxu0 0.0
  %2548 = vmatprep.subr.mxu0 0.0
  %2549 = vmatpush1.msra.mxu0 0.0
  %2550 = vmatprep.subr.mxu0 0.0
  %2551 = vmatpush1.msra.mxu0 0.0
  %2552 = vmatprep.subr.mxu0 0.0
  %2553 = vmatpush1.msra.mxu0 0.0
  %2554 = vmatprep.subr.mxu0 0.0
  %2555 = vmatpush1.msra.mxu0 0.0
  %2556 = vmatprep.subr.mxu0 0.0
  %2557 = vmatpush1.msra.mxu0 0.0
  %2558 = vmatprep.subr.mxu0 0.0
  %2559 = vmatpush1.msra.mxu0 0.0
  %2560 = vmatprep.subr.mxu0 0.0
  %2561 = vmatpush1.msra.mxu0 0.0
  %2562 = vmatprep.mubr.f32.mxu0 0.0
  %2563 = vmatmul.mubr.f32.gmra.mrb[0].mxu0 %v2496
  %v2564 = vpop.f32.mrb[0].mxu0
  %v2565 = vadd.f32 0.0, %v2564
  %v2566 = vpop.f32.mrb[0].mxu0
  %2567 = vdwg.mxu0
  %v2568 = vadd.f32 %v2285, %v2565
  %v2569 = vxor.u32 %v2568, 2147483648
  %v2570 = vmul.f32 %v2569, 1.442695
  %v2571 = vpow.pop %v2570
  %v2572 = vadd.f32 %v2571, 1.0
  %v2573 = vrcp.pop %v2572
  %v2574 = vmul.f32 1.0, %v2573
  %v2575 = vtanh.pop %v2568
  %v2576 = vmul.f32 %v2574, %v2484
  %2578 = vrot.lane.b32.xlu0 %v2575, 64
  %v2579 = vpop.permute.xlu0 %2578
  %v2581 = vmul.f32 %v2574, %v2579
  %2583 = vrot.lane.b32.xlu0 %v2581, 32
  %v2584 = vpop.permute.xlu0 %2583
  %v2586 = vadd.f32 %v2576, %v2584
  %v2587 = vtanh.pop %v2586
  %2589 = vrot.lane.b32.xlu0 %v2587, 64
  %v2590 = vpop.permute.xlu0 %2589
  %v2592 = vmul.f32 %v2574, %v2590
  %2594 = vrot.lane.b32.xlu0 %v2592, 32
  %v2595 = vpop.permute.xlu0 %2594
  %2597 = vst.msk [vmem:[#allocation3 + $0x10] sm:$0xff] %vm239, %v2595
  %v2598 = vsel %vm239, %v2595, 0
  %2600 = vmatprep.subr.mxu0 0.0
  %2601 = vmatpush1.msra.mxu0 %v2288
  %2602 = vmatprep.subr.mxu0 0.0
  %2603 = vmatpush1.msra.mxu0 %v2289
  %2604 = vmatprep.subr.mxu0 0.0
  %2605 = vmatpush1.msra.mxu0 %v2290
  %2606 = vmatprep.subr.mxu0 0.0
  %2607 = vmatpush1.msra.mxu0 %v2291
  %2608 = vmatprep.subr.mxu0 0.0
  %2609 = vmatpush1.msra.mxu0 0.0
  %2610 = vmatprep.subr.mxu0 0.0
  %2611 = vmatpush1.msra.mxu0 0.0
  %2612 = vmatprep.subr.mxu0 0.0
  %2613 = vmatpush1.msra.mxu0 0.0
  %2614 = vmatprep.subr.mxu0 0.0
  %2615 = vmatpush1.msra.mxu0 0.0
  %2616 = vmatprep.subr.mxu0 0.0
  %2617 = vmatpush1.msra.mxu0 0.0
  %2618 = vmatprep.subr.mxu0 0.0
  %2619 = vmatpush1.msra.mxu0 0.0
  %2620 = vmatprep.subr.mxu0 0.0
  %2621 = vmatpush1.msra.mxu0 0.0
  %2622 = vmatprep.subr.mxu0 0.0
  %2623 = vmatpush1.msra.mxu0 0.0
  %2624 = vmatprep.subr.mxu0 0.0
  %2625 = vmatpush1.msra.mxu0 0.0
  %2626 = vmatprep.subr.mxu0 0.0
  %2627 = vmatpush1.msra.mxu0 0.0
  %2628 = vmatprep.subr.mxu0 0.0
  %2629 = vmatpush1.msra.mxu0 0.0
  %2630 = vmatprep.subr.mxu0 0.0
  %2631 = vmatpush1.msra.mxu0 0.0
  %2632 = vmatprep.subr.mxu0 0.0
  %2633 = vmatpush1.msra.mxu0 0.0
  %2634 = vmatprep.subr.mxu0 0.0
  %2635 = vmatpush1.msra.mxu0 0.0
  %2636 = vmatprep.subr.mxu0 0.0
  %2637 = vmatpush1.msra.mxu0 0.0
  %2638 = vmatprep.subr.mxu0 0.0
  %2639 = vmatpush1.msra.mxu0 0.0
  %2640 = vmatprep.subr.mxu0 0.0
  %2641 = vmatpush1.msra.mxu0 0.0
  %2642 = vmatprep.subr.mxu0 0.0
  %2643 = vmatpush1.msra.mxu0 0.0
  %2644 = vmatprep.subr.mxu0 0.0
  %2645 = vmatpush1.msra.mxu0 0.0
  %2646 = vmatprep.subr.mxu0 0.0
  %2647 = vmatpush1.msra.mxu0 0.0
  %2648 = vmatprep.subr.mxu0 0.0
  %2649 = vmatpush1.msra.mxu0 0.0
  %2650 = vmatprep.subr.mxu0 0.0
  %2651 = vmatpush1.msra.mxu0 0.0
  %2652 = vmatprep.subr.mxu0 0.0
  %2653 = vmatpush1.msra.mxu0 0.0
  %2654 = vmatprep.subr.mxu0 0.0
  %2655 = vmatpush1.msra.mxu0 0.0
  %2656 = vmatprep.subr.mxu0 0.0
  %2657 = vmatpush1.msra.mxu0 0.0
  %2658 = vmatprep.subr.mxu0 0.0
  %2659 = vmatpush1.msra.mxu0 0.0
  %2660 = vmatprep.subr.mxu0 0.0
  %2661 = vmatpush1.msra.mxu0 0.0
  %2662 = vmatprep.subr.mxu0 0.0
  %2663 = vmatpush1.msra.mxu0 0.0
  %2664 = vmatprep.mubr.f32.mxu0 0.0
  %2665 = vmatmul.mubr.f32.gmra.mrb[0].mxu0 %v2598
  %v2666 = vpop.f32.mrb[0].mxu0
  %v2667 = vadd.f32 0.0, %v2666
  %v2668 = vpop.f32.mrb[0].mxu0
  %2669 = vdwg.mxu0
  %v2670 = vadd.f32 %v2285, %v2667
  %v2671 = vxor.u32 %v2670, 2147483648
  %v2672 = vmul.f32 %v2671, 1.442695
  %v2673 = vpow.pop %v2672
  %v2674 = vadd.f32 %v2673, 1.0
  %v2675 = vrcp.pop %v2674
  %v2676 = vmul.f32 1.0, %v2675
  %v2677 = vtanh.pop %v2670
  %v2678 = vmul.f32 %v2676, %v2586
  %2680 = vrot.lane.b32.xlu0 %v2677, 64
  %v2681 = vpop.permute.xlu0 %2680
  %v2683 = vmul.f32 %v2676, %v2681
  %2685 = vrot.lane.b32.xlu0 %v2683, 32
  %v2686 = vpop.permute.xlu0 %2685
  %v2688 = vadd.f32 %v2678, %v2686
  %v2689 = vtanh.pop %v2688
  %2691 = vrot.lane.b32.xlu0 %v2689, 64
  %v2692 = vpop.permute.xlu0 %2691
  %v2694 = vmul.f32 %v2676, %v2692
  %2696 = vrot.lane.b32.xlu0 %v2694, 32
  %v2697 = vpop.permute.xlu0 %2696
  %2699 = vst.msk [vmem:[#allocation3 + $0x18] sm:$0xff] %vm239, %v2697
  %v2700 = vsel %vm239, %v2697, 0
  %2702 = vmatprep.subr.mxu0 0.0
  %2703 = vmatpush1.msra.mxu0 %v2288
  %2704 = vmatprep.subr.mxu0 0.0
  %2705 = vmatpush1.msra.mxu0 %v2289
  %2706 = vmatprep.subr.mxu0 0.0
  %2707 = vmatpush1.msra.mxu0 %v2290
  %2708 = vmatprep.subr.mxu0 0.0
  %2709 = vmatpush1.msra.mxu0 %v2291
  %2710 = vmatprep.subr.mxu0 0.0
  %2711 = vmatpush1.msra.mxu0 0.0
  %2712 = vmatprep.subr.mxu0 0.0
  %2713 = vmatpush1.msra.mxu0 0.0
  %2714 = vmatprep.subr.mxu0 0.0
  %2715 = vmatpush1.msra.mxu0 0.0
  %2716 = vmatprep.subr.mxu0 0.0
  %2717 = vmatpush1.msra.mxu0 0.0
  %2718 = vmatprep.subr.mxu0 0.0
  %2719 = vmatpush1.msra.mxu0 0.0
  %2720 = vmatprep.subr.mxu0 0.0
  %2721 = vmatpush1.msra.mxu0 0.0
  %2722 = vmatprep.subr.mxu0 0.0
  %2723 = vmatpush1.msra.mxu0 0.0
  %2724 = vmatprep.subr.mxu0 0.0
  %2725 = vmatpush1.msra.mxu0 0.0
  %2726 = vmatprep.subr.mxu0 0.0
  %2727 = vmatpush1.msra.mxu0 0.0
  %2728 = vmatprep.subr.mxu0 0.0
  %2729 = vmatpush1.msra.mxu0 0.0
  %2730 = vmatprep.subr.mxu0 0.0
  %2731 = vmatpush1.msra.mxu0 0.0
  %2732 = vmatprep.subr.mxu0 0.0
  %2733 = vmatpush1.msra.mxu0 0.0
  %2734 = vmatprep.subr.mxu0 0.0
  %2735 = vmatpush1.msra.mxu0 0.0
  %2736 = vmatprep.subr.mxu0 0.0
  %2737 = vmatpush1.msra.mxu0 0.0
  %2738 = vmatprep.subr.mxu0 0.0
  %2739 = vmatpush1.msra.mxu0 0.0
  %2740 = vmatprep.subr.mxu0 0.0
  %2741 = vmatpush1.msra.mxu0 0.0
  %2742 = vmatprep.subr.mxu0 0.0
  %2743 = vmatpush1.msra.mxu0 0.0
  %2744 = vmatprep.subr.mxu0 0.0
  %2745 = vmatpush1.msra.mxu0 0.0
  %2746 = vmatprep.subr.mxu0 0.0
  %2747 = vmatpush1.msra.mxu0 0.0
  %2748 = vmatprep.subr.mxu0 0.0
  %2749 = vmatpush1.msra.mxu0 0.0
  %2750 = vmatprep.subr.mxu0 0.0
  %2751 = vmatpush1.msra.mxu0 0.0
  %2752 = vmatprep.subr.mxu0 0.0
  %2753 = vmatpush1.msra.mxu0 0.0
  %2754 = vmatprep.subr.mxu0 0.0
  %2755 = vmatpush1.msra.mxu0 0.0
  %2756 = vmatprep.subr.mxu0 0.0
  %2757 = vmatpush1.msra.mxu0 0.0
  %2758 = vmatprep.subr.mxu0 0.0
  %2759 = vmatpush1.msra.mxu0 0.0
  %2760 = vmatprep.subr.mxu0 0.0
  %2761 = vmatpush1.msra.mxu0 0.0
  %2762 = vmatprep.subr.mxu0 0.0
  %2763 = vmatpush1.msra.mxu0 0.0
  %2764 = vmatprep.subr.mxu0 0.0
  %2765 = vmatpush1.msra.mxu0 0.0
  %2766 = vmatprep.mubr.f32.mxu0 0.0
  %2767 = vmatmul.mubr.f32.gmra.mrb[0].mxu0 %v2700
  %v2768 = vpop.f32.mrb[0].mxu0
  %v2769 = vadd.f32 0.0, %v2768
  %v2770 = vpop.f32.mrb[0].mxu0
  %2771 = vdwg.mxu0
  %v2772 = vadd.f32 %v2285, %v2769
  %v2773 = vxor.u32 %v2772, 2147483648
  %v2774 = vmul.f32 %v2773, 1.442695
  %v2775 = vpow.pop %v2774
  %v2776 = vadd.f32 %v2775, 1.0
  %v2777 = vrcp.pop %v2776
  %v2778 = vmul.f32 1.0, %v2777
  %v2779 = vtanh.pop %v2772
  %v2780 = vmul.f32 %v2778, %v2688
  %2782 = vrot.lane.b32.xlu0 %v2779, 64
  %v2783 = vpop.permute.xlu0 %2782
  %v2785 = vmul.f32 %v2778, %v2783
  %2787 = vrot.lane.b32.xlu0 %v2785, 32
  %v2788 = vpop.permute.xlu0 %2787
  %v2790 = vadd.f32 %v2780, %v2788
  %v2791 = vtanh.pop %v2790
  %2793 = vrot.lane.b32.xlu0 %v2791, 64
  %v2794 = vpop.permute.xlu0 %2793
  %v2796 = vmul.f32 %v2778, %v2794
  %2798 = vrot.lane.b32.xlu0 %v2796, 32
  %v2799 = vpop.permute.xlu0 %2798
  %2801 = vst.msk [vmem:[#allocation3 + $0x20] sm:$0xff] %vm239, %v2799
  %v2802 = vsel %vm239, %v2799, 0
  %2804 = vmatprep.subr.mxu0 0.0
  %2805 = vmatpush1.msra.mxu0 %v2288
  %2806 = vmatprep.subr.mxu0 0.0
  %2807 = vmatpush1.msra.mxu0 %v2289
  %2808 = vmatprep.subr.mxu0 0.0
  %2809 = vmatpush1.msra.mxu0 %v2290
  %2810 = vmatprep.subr.mxu0 0.0
  %2811 = vmatpush1.msra.mxu0 %v2291
  %2812 = vmatprep.subr.mxu0 0.0
  %2813 = vmatpush1.msra.mxu0 0.0
  %2814 = vmatprep.subr.mxu0 0.0
  %2815 = vmatpush1.msra.mxu0 0.0
  %2816 = vmatprep.subr.mxu0 0.0
  %2817 = vmatpush1.msra.mxu0 0.0
  %2818 = vmatprep.subr.mxu0 0.0
  %2819 = vmatpush1.msra.mxu0 0.0
  %2820 = vmatprep.subr.mxu0 0.0
  %2821 = vmatpush1.msra.mxu0 0.0
  %2822 = vmatprep.subr.mxu0 0.0
  %2823 = vmatpush1.msra.mxu0 0.0
  %2824 = vmatprep.subr.mxu0 0.0
  %2825 = vmatpush1.msra.mxu0 0.0
  %2826 = vmatprep.subr.mxu0 0.0
  %2827 = vmatpush1.msra.mxu0 0.0
  %2828 = vmatprep.subr.mxu0 0.0
  %2829 = vmatpush1.msra.mxu0 0.0
  %2830 = vmatprep.subr.mxu0 0.0
  %2831 = vmatpush1.msra.mxu0 0.0
  %2832 = vmatprep.subr.mxu0 0.0
  %2833 = vmatpush1.msra.mxu0 0.0
  %2834 = vmatprep.subr.mxu0 0.0
  %2835 = vmatpush1.msra.mxu0 0.0
  %2836 = vmatprep.subr.mxu0 0.0
  %2837 = vmatpush1.msra.mxu0 0.0
  %2838 = vmatprep.subr.mxu0 0.0
  %2839 = vmatpush1.msra.mxu0 0.0
  %2840 = vmatprep.subr.mxu0 0.0
  %2841 = vmatpush1.msra.mxu0 0.0
  %2842 = vmatprep.subr.mxu0 0.0
  %2843 = vmatpush1.msra.mxu0 0.0
  %2844 = vmatprep.subr.mxu0 0.0
  %2845 = vmatpush1.msra.mxu0 0.0
  %2846 = vmatprep.subr.mxu0 0.0
  %2847 = vmatpush1.msra.mxu0 0.0
  %2848 = vmatprep.subr.mxu0 0.0
  %2849 = vmatpush1.msra.mxu0 0.0
  %2850 = vmatprep.subr.mxu0 0.0
  %2851 = vmatpush1.msra.mxu0 0.0
  %2852 = vmatprep.subr.mxu0 0.0
  %2853 = vmatpush1.msra.mxu0 0.0
  %2854 = vmatprep.subr.mxu0 0.0
  %2855 = vmatpush1.msra.mxu0 0.0
  %2856 = vmatprep.subr.mxu0 0.0
  %2857 = vmatpush1.msra.mxu0 0.0
  %2858 = vmatprep.subr.mxu0 0.0
  %2859 = vmatpush1.msra.mxu0 0.0
  %2860 = vmatprep.subr.mxu0 0.0
  %2861 = vmatpush1.msra.mxu0 0.0
  %2862 = vmatprep.subr.mxu0 0.0
  %2863 = vmatpush1.msra.mxu0 0.0
  %2864 = vmatprep.subr.mxu0 0.0
  %2865 = vmatpush1.msra.mxu0 0.0
  %2866 = vmatprep.subr.mxu0 0.0
  %2867 = vmatpush1.msra.mxu0 0.0
  %2868 = vmatprep.mubr.f32.mxu0 0.0
  %2869 = vmatmul.mubr.f32.gmra.mrb[0].mxu0 %v2802
  %v2870 = vpop.f32.mrb[0].mxu0
  %v2871 = vadd.f32 0.0, %v2870
  %v2872 = vpop.f32.mrb[0].mxu0
  %2873 = vdwg.mxu0
  %v2874 = vadd.f32 %v2285, %v2871
  %v2875 = vxor.u32 %v2874, 2147483648
  %v2876 = vmul.f32 %v2875, 1.442695
  %v2877 = vpow.pop %v2876
  %v2878 = vadd.f32 %v2877, 1.0
  %v2879 = vrcp.pop %v2878
  %v2880 = vmul.f32 1.0, %v2879
  %v2881 = vtanh.pop %v2874
  %v2882 = vmul.f32 %v2880, %v2790
  %2884 = vrot.lane.b32.xlu0 %v2881, 64
  %v2885 = vpop.permute.xlu0 %2884
  %v2887 = vmul.f32 %v2880, %v2885
  %2889 = vrot.lane.b32.xlu0 %v2887, 32
  %v2890 = vpop.permute.xlu0 %2889
  %v2892 = vadd.f32 %v2882, %v2890
  %v2893 = vtanh.pop %v2892
  %2895 = vrot.lane.b32.xlu0 %v2893, 64
  %v2896 = vpop.permute.xlu0 %2895
  %v2898 = vmul.f32 %v2880, %v2896
  %2900 = vrot.lane.b32.xlu0 %v2898, 32
  %v2901 = vpop.permute.xlu0 %2900
  %2903 = vst.msk [vmem:[#allocation3 + $0x28] sm:$0xff] %vm239, %v2901
  %v2904 = vsel %vm239, %v2901, 0
  %2906 = vmatprep.subr.mxu0 0.0
  %2907 = vmatpush1.msra.mxu0 %v2288
  %2908 = vmatprep.subr.mxu0 0.0
  %2909 = vmatpush1.msra.mxu0 %v2289
  %2910 = vmatprep.subr.mxu0 0.0
  %2911 = vmatpush1.msra.mxu0 %v2290
  %2912 = vmatprep.subr.mxu0 0.0
  %2913 = vmatpush1.msra.mxu0 %v2291
  %2914 = vmatprep.subr.mxu0 0.0
  %2915 = vmatpush1.msra.mxu0 0.0
  %2916 = vmatprep.subr.mxu0 0.0
  %2917 = vmatpush1.msra.mxu0 0.0
  %2918 = vmatprep.subr.mxu0 0.0
  %2919 = vmatpush1.msra.mxu0 0.0
  %2920 = vmatprep.subr.mxu0 0.0
  %2921 = vmatpush1.msra.mxu0 0.0
  %2922 = vmatprep.subr.mxu0 0.0
  %2923 = vmatpush1.msra.mxu0 0.0
  %2924 = vmatprep.subr.mxu0 0.0
  %2925 = vmatpush1.msra.mxu0 0.0
  %2926 = vmatprep.subr.mxu0 0.0
  %2927 = vmatpush1.msra.mxu0 0.0
  %2928 = vmatprep.subr.mxu0 0.0
  %2929 = vmatpush1.msra.mxu0 0.0
  %2930 = vmatprep.subr.mxu0 0.0
  %2931 = vmatpush1.msra.mxu0 0.0
  %2932 = vmatprep.subr.mxu0 0.0
  %2933 = vmatpush1.msra.mxu0 0.0
  %2934 = vmatprep.subr.mxu0 0.0
  %2935 = vmatpush1.msra.mxu0 0.0
  %2936 = vmatprep.subr.mxu0 0.0
  %2937 = vmatpush1.msra.mxu0 0.0
  %2938 = vmatprep.subr.mxu0 0.0
  %2939 = vmatpush1.msra.mxu0 0.0
  %2940 = vmatprep.subr.mxu0 0.0
  %2941 = vmatpush1.msra.mxu0 0.0
  %2942 = vmatprep.subr.mxu0 0.0
  %2943 = vmatpush1.msra.mxu0 0.0
  %2944 = vmatprep.subr.mxu0 0.0
  %2945 = vmatpush1.msra.mxu0 0.0
  %2946 = vmatprep.subr.mxu0 0.0
  %2947 = vmatpush1.msra.mxu0 0.0
  %2948 = vmatprep.subr.mxu0 0.0
  %2949 = vmatpush1.msra.mxu0 0.0
  %2950 = vmatprep.subr.mxu0 0.0
  %2951 = vmatpush1.msra.mxu0 0.0
  %2952 = vmatprep.subr.mxu0 0.0
  %2953 = vmatpush1.msra.mxu0 0.0
  %2954 = vmatprep.subr.mxu0 0.0
  %2955 = vmatpush1.msra.mxu0 0.0
  %2956 = vmatprep.subr.mxu0 0.0
  %2957 = vmatpush1.msra.mxu0 0.0
  %2958 = vmatprep.subr.mxu0 0.0
  %2959 = vmatpush1.msra.mxu0 0.0
  %2960 = vmatprep.subr.mxu0 0.0
  %2961 = vmatpush1.msra.mxu0 0.0
  %2962 = vmatprep.subr.mxu0 0.0
  %2963 = vmatpush1.msra.mxu0 0.0
  %2964 = vmatprep.subr.mxu0 0.0
  %2965 = vmatpush1.msra.mxu0 0.0
  %2966 = vmatprep.subr.mxu0 0.0
  %2967 = vmatpush1.msra.mxu0 0.0
  %2968 = vmatprep.subr.mxu0 0.0
  %2969 = vmatpush1.msra.mxu0 0.0
  %2970 = vmatprep.mubr.f32.mxu0 0.0
  %2971 = vmatmul.mubr.f32.gmra.mrb[0].mxu0 %v2904
  %v2972 = vpop.f32.mrb[0].mxu0
  %v2973 = vadd.f32 0.0, %v2972
  %v2974 = vpop.f32.mrb[0].mxu0
  %2975 = vdwg.mxu0
  %v2976 = vadd.f32 %v2285, %v2973
  %v2977 = vxor.u32 %v2976, 2147483648
  %v2978 = vmul.f32 %v2977, 1.442695
  %v2979 = vpow.pop %v2978
  %v2980 = vadd.f32 %v2979, 1.0
  %v2981 = vrcp.pop %v2980
  %v2982 = vmul.f32 1.0, %v2981
  %v2983 = vtanh.pop %v2976
  %v2984 = vmul.f32 %v2982, %v2892
  %2986 = vrot.lane.b32.xlu0 %v2983, 64
  %v2987 = vpop.permute.xlu0 %2986
  %v2989 = vmul.f32 %v2982, %v2987
  %2991 = vrot.lane.b32.xlu0 %v2989, 32
  %v2992 = vpop.permute.xlu0 %2991
  %v2994 = vadd.f32 %v2984, %v2992
  %v2995 = vtanh.pop %v2994
  %2997 = vrot.lane.b32.xlu0 %v2995, 64
  %v2998 = vpop.permute.xlu0 %2997
  %v3000 = vmul.f32 %v2982, %v2998
  %3002 = vrot.lane.b32.xlu0 %v3000, 32
  %v3003 = vpop.permute.xlu0 %3002
  %3005 = vst.msk [vmem:[#allocation3 + $0x30] sm:$0xff] %vm239, %v3003
  %v3006 = vsel %vm239, %v3003, 0
  %3008 = vmatprep.subr.mxu0 0.0
  %3009 = vmatpush1.msra.mxu0 %v2288
  %3010 = vmatprep.subr.mxu0 0.0
  %3011 = vmatpush1.msra.mxu0 %v2289
  %3012 = vmatprep.subr.mxu0 0.0
  %3013 = vmatpush1.msra.mxu0 %v2290
  %3014 = vmatprep.subr.mxu0 0.0
  %3015 = vmatpush1.msra.mxu0 %v2291
  %3016 = vmatprep.subr.mxu0 0.0
  %3017 = vmatpush1.msra.mxu0 0.0
  %3018 = vmatprep.subr.mxu0 0.0
  %3019 = vmatpush1.msra.mxu0 0.0
  %3020 = vmatprep.subr.mxu0 0.0
  %3021 = vmatpush1.msra.mxu0 0.0
  %3022 = vmatprep.subr.mxu0 0.0
  %3023 = vmatpush1.msra.mxu0 0.0
  %3024 = vmatprep.subr.mxu0 0.0
  %3025 = vmatpush1.msra.mxu0 0.0
  %3026 = vmatprep.subr.mxu0 0.0
  %3027 = vmatpush1.msra.mxu0 0.0
  %3028 = vmatprep.subr.mxu0 0.0
  %3029 = vmatpush1.msra.mxu0 0.0
  %3030 = vmatprep.subr.mxu0 0.0
  %3031 = vmatpush1.msra.mxu0 0.0
  %3032 = vmatprep.subr.mxu0 0.0
  %3033 = vmatpush1.msra.mxu0 0.0
  %3034 = vmatprep.subr.mxu0 0.0
  %3035 = vmatpush1.msra.mxu0 0.0
  %3036 = vmatprep.subr.mxu0 0.0
  %3037 = vmatpush1.msra.mxu0 0.0
  %3038 = vmatprep.subr.mxu0 0.0
  %3039 = vmatpush1.msra.mxu0 0.0
  %3040 = vmatprep.subr.mxu0 0.0
  %3041 = vmatpush1.msra.mxu0 0.0
  %3042 = vmatprep.subr.mxu0 0.0
  %3043 = vmatpush1.msra.mxu0 0.0
  %3044 = vmatprep.subr.mxu0 0.0
  %3045 = vmatpush1.msra.mxu0 0.0
  %3046 = vmatprep.subr.mxu0 0.0
  %3047 = vmatpush1.msra.mxu0 0.0
  %3048 = vmatprep.subr.mxu0 0.0
  %3049 = vmatpush1.msra.mxu0 0.0
  %3050 = vmatprep.subr.mxu0 0.0
  %3051 = vmatpush1.msra.mxu0 0.0
  %3052 = vmatprep.subr.mxu0 0.0
  %3053 = vmatpush1.msra.mxu0 0.0
  %3054 = vmatprep.subr.mxu0 0.0
  %3055 = vmatpush1.msra.mxu0 0.0
  %3056 = vmatprep.subr.mxu0 0.0
  %3057 = vmatpush1.msra.mxu0 0.0
  %3058 = vmatprep.subr.mxu0 0.0
  %3059 = vmatpush1.msra.mxu0 0.0
  %3060 = vmatprep.subr.mxu0 0.0
  %3061 = vmatpush1.msra.mxu0 0.0
  %3062 = vmatprep.subr.mxu0 0.0
  %3063 = vmatpush1.msra.mxu0 0.0
  %3064 = vmatprep.subr.mxu0 0.0
  %3065 = vmatpush1.msra.mxu0 0.0
  %3066 = vmatprep.subr.mxu0 0.0
  %3067 = vmatpush1.msra.mxu0 0.0
  %3068 = vmatprep.subr.mxu0 0.0
  %3069 = vmatpush1.msra.mxu0 0.0
  %3070 = vmatprep.subr.mxu0 0.0
  %3071 = vmatpush1.msra.mxu0 0.0
  %3072 = vmatprep.mubr.f32.mxu0 0.0
  %3073 = vmatmul.mubr.f32.gmra.mrb[0].mxu0 %v3006
  %v3074 = vpop.f32.mrb[0].mxu0
  %v3075 = vadd.f32 0.0, %v3074
  %v3076 = vpop.f32.mrb[0].mxu0
  %3077 = vdwg.mxu0
  %v3078 = vadd.f32 %v2285, %v3075
  %v3079 = vxor.u32 %v3078, 2147483648
  %v3080 = vmul.f32 %v3079, 1.442695
  %v3081 = vpow.pop %v3080
  %v3082 = vadd.f32 %v3081, 1.0
  %v3083 = vrcp.pop %v3082
  %v3084 = vmul.f32 1.0, %v3083
  %v3085 = vtanh.pop %v3078
  %v3086 = vmul.f32 %v3084, %v2994
  %3088 = vrot.lane.b32.xlu0 %v3085, 64
  %v3089 = vpop.permute.xlu0 %3088
  %v3091 = vmul.f32 %v3084, %v3089
  %3093 = vrot.lane.b32.xlu0 %v3091, 32
  %v3094 = vpop.permute.xlu0 %3093
  %v3096 = vadd.f32 %v3086, %v3094
  %v3097 = vtanh.pop %v3096
  %3099 = vrot.lane.b32.xlu0 %v3097, 64
  %v3100 = vpop.permute.xlu0 %3099
  %v3102 = vmul.f32 %v3084, %v3100
  %3104 = vrot.lane.b32.xlu0 %v3102, 32
  %v3105 = vpop.permute.xlu0 %3104
  %3107 = vst.msk [vmem:[#allocation3 + $0x38] sm:$0xff] %vm239, %v3105
  %v3108 = vld [vmem:[#allocation3] sm:$0xff]
  %v3109 = vld [vmem:[#allocation3 + $0x8] sm:$0xff]
  %v3110 = vld [vmem:[#allocation3 + $0x10] sm:$0xff]
  %v3111 = vld [vmem:[#allocation3 + $0x18] sm:$0xff]
  %v3112 = vld [vmem:[#allocation3 + $0x20] sm:$0xff]
  %v3113 = vld [vmem:[#allocation3 + $0x28] sm:$0xff]
  %v3114 = vld [vmem:[#allocation3 + $0x30] sm:$0xff]
  %v3115 = vld [vmem:[#allocation3 + $0x38] sm:$0xff]
  %v3116 = vld [vmem:[%s15] sm:$0xff]
  %v3117 = vld [vmem:[%s15 + $0x8] sm:$0xff]
  %v3118 = vld [vmem:[%s15 + $0x10] sm:$0xff]
  %v3119 = vld [vmem:[%s15 + $0x18] sm:$0xff]
  %v3120 = vld [vmem:[%s17] sm:$0x1]
  %v3122 = vlaneseq
  %v3123 = vshrl.u32 %v3122, 7
  %v3124 = vsub.s32 0, %v3123
  %v3125 = vrot.slane %v3120, %v3124
  %v3128 = vsel %vm239, %v3108, 0
  %v3131 = vsel %vm239, %v3109, 0
  %v3134 = vsel %vm239, %v3110, 0
  %v3137 = vsel %vm239, %v3111, 0
  %v3140 = vsel %vm239, %v3112, 0
  %v3143 = vsel %vm239, %v3113, 0
  %v3146 = vsel %vm239, %v3114, 0
  %v3149 = vsel %vm239, %v3115, 0
  %3151 = vmatprep.subr.mxu0 0.0
  %3152 = vmatpush1.msra.mxu0 %v3116
  %3153 = vmatprep.subr.mxu0 0.0
  %3154 = vmatpush1.msra.mxu0 %v3117
  %3155 = vmatprep.subr.mxu0 0.0
  %3156 = vmatpush1.msra.mxu0 %v3118
  %3157 = vmatprep.subr.mxu0 0.0
  %3158 = vmatpush1.msra.mxu0 %v3119
  %3159 = vmatprep.subr.mxu0 0.0
  %3160 = vmatpush1.msra.mxu0 0.0
  %3161 = vmatprep.subr.mxu0 0.0
  %3162 = vmatpush1.msra.mxu0 0.0
  %3163 = vmatprep.subr.mxu0 0.0
  %3164 = vmatpush1.msra.mxu0 0.0
  %3165 = vmatprep.subr.mxu0 0.0
  %3166 = vmatpush1.msra.mxu0 0.0
  %3167 = vmatprep.subr.mxu0 0.0
  %3168 = vmatpush1.msra.mxu0 0.0
  %3169 = vmatprep.subr.mxu0 0.0
  %3170 = vmatpush1.msra.mxu0 0.0
  %3171 = vmatprep.subr.mxu0 0.0
  %3172 = vmatpush1.msra.mxu0 0.0
  %3173 = vmatprep.subr.mxu0 0.0
  %3174 = vmatpush1.msra.mxu0 0.0
  %3175 = vmatprep.subr.mxu0 0.0
  %3176 = vmatpush1.msra.mxu0 0.0
  %3177 = vmatprep.subr.mxu0 0.0
  %3178 = vmatpush1.msra.mxu0 0.0
  %3179 = vmatprep.subr.mxu0 0.0
  %3180 = vmatpush1.msra.mxu0 0.0
  %3181 = vmatprep.subr.mxu0 0.0
  %3182 = vmatpush1.msra.mxu0 0.0
  %3183 = vmatprep.subr.mxu0 0.0
  %3184 = vmatpush1.msra.mxu0 0.0
  %3185 = vmatprep.subr.mxu0 0.0
  %3186 = vmatpush1.msra.mxu0 0.0
  %3187 = vmatprep.subr.mxu0 0.0
  %3188 = vmatpush1.msra.mxu0 0.0
  %3189 = vmatprep.subr.mxu0 0.0
  %3190 = vmatpush1.msra.mxu0 0.0
  %3191 = vmatprep.subr.mxu0 0.0
  %3192 = vmatpush1.msra.mxu0 0.0
  %3193 = vmatprep.subr.mxu0 0.0
  %3194 = vmatpush1.msra.mxu0 0.0
  %3195 = vmatprep.subr.mxu0 0.0
  %3196 = vmatpush1.msra.mxu0 0.0
  %3197 = vmatprep.subr.mxu0 0.0
  %3198 = vmatpush1.msra.mxu0 0.0
  %3199 = vmatprep.subr.mxu0 0.0
  %3200 = vmatpush1.msra.mxu0 0.0
  %3201 = vmatprep.subr.mxu0 0.0
  %3202 = vmatpush1.msra.mxu0 0.0
  %3203 = vmatprep.subr.mxu0 0.0
  %3204 = vmatpush1.msra.mxu0 0.0
  %3205 = vmatprep.subr.mxu0 0.0
  %3206 = vmatpush1.msra.mxu0 0.0
  %3207 = vmatprep.subr.mxu0 0.0
  %3208 = vmatpush1.msra.mxu0 0.0
  %3209 = vmatprep.subr.mxu0 0.0
  %3210 = vmatpush1.msra.mxu0 0.0
  %3211 = vmatprep.subr.mxu0 0.0
  %3212 = vmatpush1.msra.mxu0 0.0
  %3213 = vmatprep.subr.mxu0 0.0
  %3214 = vmatpush1.msra.mxu0 0.0
  %3215 = vmatprep.mubr.f32.mxu0 0.0
  %3216 = vmatmul.mubr.f32.gmra.mrb[0].mxu0 %v3128
  %v3217 = vpop.f32.mrb[0].mxu0
  %v3218 = vadd.f32 %v3125, %v3217
  %v3219 = vpop.f32.mrb[0].mxu0
  %3220 = vmatprep.mubr.f32.mxu0 0.0
  %3221 = vmatmul.mubr.f32.gmra.mrb[0].mxu0 %v3131
  %v3222 = vpop.f32.mrb[0].mxu0
  %v3223 = vadd.f32 %v3125, %v3222
  %v3224 = vpop.f32.mrb[0].mxu0
  %3225 = vmatprep.mubr.f32.mxu0 0.0
  %3226 = vmatmul.mubr.f32.gmra.mrb[0].mxu0 %v3134
  %v3227 = vpop.f32.mrb[0].mxu0
  %v3228 = vadd.f32 %v3125, %v3227
  %v3229 = vpop.f32.mrb[0].mxu0
  %3230 = vmatprep.mubr.f32.mxu0 0.0
  %3231 = vmatmul.mubr.f32.gmra.mrb[0].mxu0 %v3137
  %v3232 = vpop.f32.mrb[0].mxu0
  %v3233 = vadd.f32 %v3125, %v3232
  %v3234 = vpop.f32.mrb[0].mxu0
  %3235 = vmatprep.mubr.f32.mxu0 0.0
  %3236 = vmatmul.mubr.f32.gmra.mrb[0].mxu0 %v3140
  %v3237 = vpop.f32.mrb[0].mxu0
  %v3238 = vadd.f32 %v3125, %v3237
  %v3239 = vpop.f32.mrb[0].mxu0
  %3240 = vmatprep.mubr.f32.mxu0 0.0
  %3241 = vmatmul.mubr.f32.gmra.mrb[0].mxu0 %v3143
  %v3242 = vpop.f32.mrb[0].mxu0
  %v3243 = vadd.f32 %v3125, %v3242
  %v3244 = vpop.f32.mrb[0].mxu0
  %3245 = vmatprep.mubr.f32.mxu0 0.0
  %3246 = vmatmul.mubr.f32.gmra.mrb[0].mxu0 %v3146
  %v3247 = vpop.f32.mrb[0].mxu0
  %v3248 = vadd.f32 %v3125, %v3247
  %v3249 = vpop.f32.mrb[0].mxu0
  %3250 = vmatprep.mubr.f32.mxu0 0.0
  %3251 = vmatmul.mubr.f32.gmra.mrb[0].mxu0 %v3149
  %v3252 = vpop.f32.mrb[0].mxu0
  %v3253 = vadd.f32 %v3125, %v3252
  %v3254 = vpop.f32.mrb[0].mxu0
  %3255 = vdwg.mxu0
  %3256 = vst [vmem:[#allocation2] sm:$0xff] %v3218
  %3257 = vst [vmem:[#allocation2 + $0x8] sm:$0xff] %v3223
  %3258 = vst [vmem:[#allocation2 + $0x10] sm:$0xff] %v3228
  %3259 = vst [vmem:[#allocation2 + $0x18] sm:$0xff] %v3233
  %3260 = vst [vmem:[#allocation2 + $0x20] sm:$0xff] %v3238
  %3261 = vst [vmem:[#allocation2 + $0x28] sm:$0xff] %v3243
  %3262 = vst [vmem:[#allocation2 + $0x30] sm:$0xff] %v3248
  %3263 = vst [vmem:[#allocation2 + $0x38] sm:$0xff] %v3253
  %v3264 = vld [vmem:[%s16] sm:$0xff]
  %v3265 = vld [vmem:[%s16 + $0x8] sm:$0xff]
  %v3266 = vld [vmem:[%s16 + $0x10] sm:$0xff]
  %v3267 = vld [vmem:[%s16 + $0x18] sm:$0xff]
  %v3268 = vld [vmem:[#allocation2] sm:$0xff]
  %3270 = vrot.lane.b32.xlu0 %v2026, 32
  %v3271 = vpop.permute.xlu0 %3270
  %v3272 = vsel %vm239, %v3271, 0
  %3274 = vmatprep.subr.mxu0 0.0
  %3275 = vmatpush1.msra.mxu0 %v3264
  %3276 = vmatprep.subr.mxu0 0.0
  %3277 = vmatpush1.msra.mxu0 %v3265
  %3278 = vmatprep.subr.mxu0 0.0
  %3279 = vmatpush1.msra.mxu0 %v3266
  %3280 = vmatprep.subr.mxu0 0.0
  %3281 = vmatpush1.msra.mxu0 %v3267
  %3282 = vmatprep.subr.mxu0 0.0
  %3283 = vmatpush1.msra.mxu0 0.0
  %3284 = vmatprep.subr.mxu0 0.0
  %3285 = vmatpush1.msra.mxu0 0.0
  %3286 = vmatprep.subr.mxu0 0.0
  %3287 = vmatpush1.msra.mxu0 0.0
  %3288 = vmatprep.subr.mxu0 0.0
  %3289 = vmatpush1.msra.mxu0 0.0
  %3290 = vmatprep.subr.mxu0 0.0
  %3291 = vmatpush1.msra.mxu0 0.0
  %3292 = vmatprep.subr.mxu0 0.0
  %3293 = vmatpush1.msra.mxu0 0.0
  %3294 = vmatprep.subr.mxu0 0.0
  %3295 = vmatpush1.msra.mxu0 0.0
  %3296 = vmatprep.subr.mxu0 0.0
  %3297 = vmatpush1.msra.mxu0 0.0
  %3298 = vmatprep.subr.mxu0 0.0
  %3299 = vmatpush1.msra.mxu0 0.0
  %3300 = vmatprep.subr.mxu0 0.0
  %3301 = vmatpush1.msra.mxu0 0.0
  %3302 = vmatprep.subr.mxu0 0.0
  %3303 = vmatpush1.msra.mxu0 0.0
  %3304 = vmatprep.subr.mxu0 0.0
  %3305 = vmatpush1.msra.mxu0 0.0
  %3306 = vmatprep.subr.mxu0 0.0
  %3307 = vmatpush1.msra.mxu0 0.0
  %3308 = vmatprep.subr.mxu0 0.0
  %3309 = vmatpush1.msra.mxu0 0.0
  %3310 = vmatprep.subr.mxu0 0.0
  %3311 = vmatpush1.msra.mxu0 0.0
  %3312 = vmatprep.subr.mxu0 0.0
  %3313 = vmatpush1.msra.mxu0 0.0
  %3314 = vmatprep.subr.mxu0 0.0
  %3315 = vmatpush1.msra.mxu0 0.0
  %3316 = vmatprep.subr.mxu0 0.0
  %3317 = vmatpush1.msra.mxu0 0.0
  %3318 = vmatprep.subr.mxu0 0.0
  %3319 = vmatpush1.msra.mxu0 0.0
  %3320 = vmatprep.subr.mxu0 0.0
  %3321 = vmatpush1.msra.mxu0 0.0
  %3322 = vmatprep.subr.mxu0 0.0
  %3323 = vmatpush1.msra.mxu0 0.0
  %3324 = vmatprep.subr.mxu0 0.0
  %3325 = vmatpush1.msra.mxu0 0.0
  %3326 = vmatprep.subr.mxu0 0.0
  %3327 = vmatpush1.msra.mxu0 0.0
  %3328 = vmatprep.subr.mxu0 0.0
  %3329 = vmatpush1.msra.mxu0 0.0
  %3330 = vmatprep.subr.mxu0 0.0
  %3331 = vmatpush1.msra.mxu0 0.0
  %3332 = vmatprep.subr.mxu0 0.0
  %3333 = vmatpush1.msra.mxu0 0.0
  %3334 = vmatprep.subr.mxu0 0.0
  %3335 = vmatpush1.msra.mxu0 0.0
  %3336 = vmatprep.subr.mxu0 0.0
  %3337 = vmatpush1.msra.mxu0 0.0
  %3338 = vmatprep.mubr.f32.mxu0 0.0
  %3339 = vmatmul.mubr.f32.gmra.mrb[0].mxu0 %v3272
  %v3340 = vpop.f32.mrb[0].mxu0
  %v3341 = vadd.f32 0.0, %v3340
  %v3342 = vpop.f32.mrb[0].mxu0
  %3343 = vdwg.mxu0
  %v3344 = vadd.f32 %v3268, %v3341
  %v3345 = vxor.u32 %v3344, 2147483648
  %v3346 = vmul.f32 %v3345, 1.442695
  %v3347 = vpow.pop %v3346
  %v3348 = vadd.f32 %v3347, 1.0
  %v3349 = vrcp.pop %v3348
  %v3350 = vmul.f32 1.0, %v3349
  %v3351 = vtanh.pop %v3344
  %v3352 = vmul.f32 %v3350, %v2020
  %3354 = vrot.lane.b32.xlu0 %v3351, 64
  %v3355 = vpop.permute.xlu0 %3354
  %v3357 = vmul.f32 %v3350, %v3355
  %3359 = vrot.lane.b32.xlu0 %v3357, 32
  %v3360 = vpop.permute.xlu0 %3359
  %v3362 = vadd.f32 %v3352, %v3360
  %v3363 = vtanh.pop %v3362
  %3365 = vrot.lane.b32.xlu0 %v3363, 64
  %v3366 = vpop.permute.xlu0 %3365
  %v3368 = vmul.f32 %v3350, %v3366
  %v3369 = vtanh.pop %v3368
  %3371 = vrot.lane.b32.xlu0 %v3369, 32
  %v3372 = vpop.permute.xlu0 %3371
  %3374 = vst.msk [vmem:[#allocation4] sm:$0xff] %vm239, %v3372
  %v3375 = vld [vmem:[#allocation2 + $0x8] sm:$0xff]
  %3377 = vrot.lane.b32.xlu0 %v3368, 32
  %v3378 = vpop.permute.xlu0 %3377
  %v3379 = vsel %vm239, %v3378, 0
  %3381 = vmatprep.subr.mxu0 0.0
  %3382 = vmatpush1.msra.mxu0 %v3264
  %3383 = vmatprep.subr.mxu0 0.0
  %3384 = vmatpush1.msra.mxu0 %v3265
  %3385 = vmatprep.subr.mxu0 0.0
  %3386 = vmatpush1.msra.mxu0 %v3266
  %3387 = vmatprep.subr.mxu0 0.0
  %3388 = vmatpush1.msra.mxu0 %v3267
  %3389 = vmatprep.subr.mxu0 0.0
  %3390 = vmatpush1.msra.mxu0 0.0
  %3391 = vmatprep.subr.mxu0 0.0
  %3392 = vmatpush1.msra.mxu0 0.0
  %3393 = vmatprep.subr.mxu0 0.0
  %3394 = vmatpush1.msra.mxu0 0.0
  %3395 = vmatprep.subr.mxu0 0.0
  %3396 = vmatpush1.msra.mxu0 0.0
  %3397 = vmatprep.subr.mxu0 0.0
  %3398 = vmatpush1.msra.mxu0 0.0
  %3399 = vmatprep.subr.mxu0 0.0
  %3400 = vmatpush1.msra.mxu0 0.0
  %3401 = vmatprep.subr.mxu0 0.0
  %3402 = vmatpush1.msra.mxu0 0.0
  %3403 = vmatprep.subr.mxu0 0.0
  %3404 = vmatpush1.msra.mxu0 0.0
  %3405 = vmatprep.subr.mxu0 0.0
  %3406 = vmatpush1.msra.mxu0 0.0
  %3407 = vmatprep.subr.mxu0 0.0
  %3408 = vmatpush1.msra.mxu0 0.0
  %3409 = vmatprep.subr.mxu0 0.0
  %3410 = vmatpush1.msra.mxu0 0.0
  %3411 = vmatprep.subr.mxu0 0.0
  %3412 = vmatpush1.msra.mxu0 0.0
  %3413 = vmatprep.subr.mxu0 0.0
  %3414 = vmatpush1.msra.mxu0 0.0
  %3415 = vmatprep.subr.mxu0 0.0
  %3416 = vmatpush1.msra.mxu0 0.0
  %3417 = vmatprep.subr.mxu0 0.0
  %3418 = vmatpush1.msra.mxu0 0.0
  %3419 = vmatprep.subr.mxu0 0.0
  %3420 = vmatpush1.msra.mxu0 0.0
  %3421 = vmatprep.subr.mxu0 0.0
  %3422 = vmatpush1.msra.mxu0 0.0
  %3423 = vmatprep.subr.mxu0 0.0
  %3424 = vmatpush1.msra.mxu0 0.0
  %3425 = vmatprep.subr.mxu0 0.0
  %3426 = vmatpush1.msra.mxu0 0.0
  %3427 = vmatprep.subr.mxu0 0.0
  %3428 = vmatpush1.msra.mxu0 0.0
  %3429 = vmatprep.subr.mxu0 0.0
  %3430 = vmatpush1.msra.mxu0 0.0
  %3431 = vmatprep.subr.mxu0 0.0
  %3432 = vmatpush1.msra.mxu0 0.0
  %3433 = vmatprep.subr.mxu0 0.0
  %3434 = vmatpush1.msra.mxu0 0.0
  %3435 = vmatprep.subr.mxu0 0.0
  %3436 = vmatpush1.msra.mxu0 0.0
  %3437 = vmatprep.subr.mxu0 0.0
  %3438 = vmatpush1.msra.mxu0 0.0
  %3439 = vmatprep.subr.mxu0 0.0
  %3440 = vmatpush1.msra.mxu0 0.0
  %3441 = vmatprep.subr.mxu0 0.0
  %3442 = vmatpush1.msra.mxu0 0.0
  %3443 = vmatprep.subr.mxu0 0.0
  %3444 = vmatpush1.msra.mxu0 0.0
  %3445 = vmatprep.mubr.f32.mxu0 0.0
  %3446 = vmatmul.mubr.f32.gmra.mrb[0].mxu0 %v3379
  %v3447 = vpop.f32.mrb[0].mxu0
  %v3448 = vadd.f32 0.0, %v3447
  %v3449 = vpop.f32.mrb[0].mxu0
  %3450 = vdwg.mxu0
  %v3451 = vadd.f32 %v3375, %v3448
  %v3452 = vxor.u32 %v3451, 2147483648
  %v3453 = vmul.f32 %v3452, 1.442695
  %v3454 = vpow.pop %v3453
  %v3455 = vadd.f32 %v3454, 1.0
  %v3456 = vrcp.pop %v3455
  %v3457 = vmul.f32 1.0, %v3456
  %v3458 = vtanh.pop %v3451
  %v3459 = vmul.f32 %v3457, %v3362
  %3461 = vrot.lane.b32.xlu0 %v3458, 64
  %v3462 = vpop.permute.xlu0 %3461
  %v3464 = vmul.f32 %v3457, %v3462
  %3466 = vrot.lane.b32.xlu0 %v3464, 32
  %v3467 = vpop.permute.xlu0 %3466
  %v3469 = vadd.f32 %v3459, %v3467
  %v3470 = vtanh.pop %v3469
  %3472 = vrot.lane.b32.xlu0 %v3470, 64
  %v3473 = vpop.permute.xlu0 %3472
  %v3475 = vmul.f32 %v3457, %v3473
  %v3476 = vtanh.pop %v3475
  %3478 = vrot.lane.b32.xlu0 %v3476, 32
  %v3479 = vpop.permute.xlu0 %3478
  %3481 = vst.msk [vmem:[#allocation4 + $0x8] sm:$0xff] %vm239, %v3479
  %v3482 = vld [vmem:[#allocation2 + $0x10] sm:$0xff]
  %3484 = vrot.lane.b32.xlu0 %v3475, 32
  %v3485 = vpop.permute.xlu0 %3484
  %v3486 = vsel %vm239, %v3485, 0
  %3488 = vmatprep.subr.mxu0 0.0
  %3489 = vmatpush1.msra.mxu0 %v3264
  %3490 = vmatprep.subr.mxu0 0.0
  %3491 = vmatpush1.msra.mxu0 %v3265
  %3492 = vmatprep.subr.mxu0 0.0
  %3493 = vmatpush1.msra.mxu0 %v3266
  %3494 = vmatprep.subr.mxu0 0.0
  %3495 = vmatpush1.msra.mxu0 %v3267
  %3496 = vmatprep.subr.mxu0 0.0
  %3497 = vmatpush1.msra.mxu0 0.0
  %3498 = vmatprep.subr.mxu0 0.0
  %3499 = vmatpush1.msra.mxu0 0.0
  %3500 = vmatprep.subr.mxu0 0.0
  %3501 = vmatpush1.msra.mxu0 0.0
  %3502 = vmatprep.subr.mxu0 0.0
  %3503 = vmatpush1.msra.mxu0 0.0
  %3504 = vmatprep.subr.mxu0 0.0
  %3505 = vmatpush1.msra.mxu0 0.0
  %3506 = vmatprep.subr.mxu0 0.0
  %3507 = vmatpush1.msra.mxu0 0.0
  %3508 = vmatprep.subr.mxu0 0.0
  %3509 = vmatpush1.msra.mxu0 0.0
  %3510 = vmatprep.subr.mxu0 0.0
  %3511 = vmatpush1.msra.mxu0 0.0
  %3512 = vmatprep.subr.mxu0 0.0
  %3513 = vmatpush1.msra.mxu0 0.0
  %3514 = vmatprep.subr.mxu0 0.0
  %3515 = vmatpush1.msra.mxu0 0.0
  %3516 = vmatprep.subr.mxu0 0.0
  %3517 = vmatpush1.msra.mxu0 0.0
  %3518 = vmatprep.subr.mxu0 0.0
  %3519 = vmatpush1.msra.mxu0 0.0
  %3520 = vmatprep.subr.mxu0 0.0
  %3521 = vmatpush1.msra.mxu0 0.0
  %3522 = vmatprep.subr.mxu0 0.0
  %3523 = vmatpush1.msra.mxu0 0.0
  %3524 = vmatprep.subr.mxu0 0.0
  %3525 = vmatpush1.msra.mxu0 0.0
  %3526 = vmatprep.subr.mxu0 0.0
  %3527 = vmatpush1.msra.mxu0 0.0
  %3528 = vmatprep.subr.mxu0 0.0
  %3529 = vmatpush1.msra.mxu0 0.0
  %3530 = vmatprep.subr.mxu0 0.0
  %3531 = vmatpush1.msra.mxu0 0.0
  %3532 = vmatprep.subr.mxu0 0.0
  %3533 = vmatpush1.msra.mxu0 0.0
  %3534 = vmatprep.subr.mxu0 0.0
  %3535 = vmatpush1.msra.mxu0 0.0
  %3536 = vmatprep.subr.mxu0 0.0
  %3537 = vmatpush1.msra.mxu0 0.0
  %3538 = vmatprep.subr.mxu0 0.0
  %3539 = vmatpush1.msra.mxu0 0.0
  %3540 = vmatprep.subr.mxu0 0.0
  %3541 = vmatpush1.msra.mxu0 0.0
  %3542 = vmatprep.subr.mxu0 0.0
  %3543 = vmatpush1.msra.mxu0 0.0
  %3544 = vmatprep.subr.mxu0 0.0
  %3545 = vmatpush1.msra.mxu0 0.0
  %3546 = vmatprep.subr.mxu0 0.0
  %3547 = vmatpush1.msra.mxu0 0.0
  %3548 = vmatprep.subr.mxu0 0.0
  %3549 = vmatpush1.msra.mxu0 0.0
  %3550 = vmatprep.subr.mxu0 0.0
  %3551 = vmatpush1.msra.mxu0 0.0
  %3552 = vmatprep.mubr.f32.mxu0 0.0
  %3553 = vmatmul.mubr.f32.gmra.mrb[0].mxu0 %v3486
  %v3554 = vpop.f32.mrb[0].mxu0
  %v3555 = vadd.f32 0.0, %v3554
  %v3556 = vpop.f32.mrb[0].mxu0
  %3557 = vdwg.mxu0
  %v3558 = vadd.f32 %v3482, %v3555
  %v3559 = vxor.u32 %v3558, 2147483648
  %v3560 = vmul.f32 %v3559, 1.442695
  %v3561 = vpow.pop %v3560
  %v3562 = vadd.f32 %v3561, 1.0
  %v3563 = vrcp.pop %v3562
  %v3564 = vmul.f32 1.0, %v3563
  %v3565 = vtanh.pop %v3558
  %v3566 = vmul.f32 %v3564, %v3469
  %3568 = vrot.lane.b32.xlu0 %v3565, 64
  %v3569 = vpop.permute.xlu0 %3568
  %v3571 = vmul.f32 %v3564, %v3569
  %3573 = vrot.lane.b32.xlu0 %v3571, 32
  %v3574 = vpop.permute.xlu0 %3573
  %v3576 = vadd.f32 %v3566, %v3574
  %v3577 = vtanh.pop %v3576
  %3579 = vrot.lane.b32.xlu0 %v3577, 64
  %v3580 = vpop.permute.xlu0 %3579
  %v3582 = vmul.f32 %v3564, %v3580
  %v3583 = vtanh.pop %v3582
  %3585 = vrot.lane.b32.xlu0 %v3583, 32
  %v3586 = vpop.permute.xlu0 %3585
  %3588 = vst.msk [vmem:[#allocation4 + $0x10] sm:$0xff] %vm239, %v3586
  %v3589 = vld [vmem:[#allocation2 + $0x18] sm:$0xff]
  %3591 = vrot.lane.b32.xlu0 %v3582, 32
  %v3592 = vpop.permute.xlu0 %3591
  %v3593 = vsel %vm239, %v3592, 0
  %3595 = vmatprep.subr.mxu0 0.0
  %3596 = vmatpush1.msra.mxu0 %v3264
  %3597 = vmatprep.subr.mxu0 0.0
  %3598 = vmatpush1.msra.mxu0 %v3265
  %3599 = vmatprep.subr.mxu0 0.0
  %3600 = vmatpush1.msra.mxu0 %v3266
  %3601 = vmatprep.subr.mxu0 0.0
  %3602 = vmatpush1.msra.mxu0 %v3267
  %3603 = vmatprep.subr.mxu0 0.0
  %3604 = vmatpush1.msra.mxu0 0.0
  %3605 = vmatprep.subr.mxu0 0.0
  %3606 = vmatpush1.msra.mxu0 0.0
  %3607 = vmatprep.subr.mxu0 0.0
  %3608 = vmatpush1.msra.mxu0 0.0
  %3609 = vmatprep.subr.mxu0 0.0
  %3610 = vmatpush1.msra.mxu0 0.0
  %3611 = vmatprep.subr.mxu0 0.0
  %3612 = vmatpush1.msra.mxu0 0.0
  %3613 = vmatprep.subr.mxu0 0.0
  %3614 = vmatpush1.msra.mxu0 0.0
  %3615 = vmatprep.subr.mxu0 0.0
  %3616 = vmatpush1.msra.mxu0 0.0
  %3617 = vmatprep.subr.mxu0 0.0
  %3618 = vmatpush1.msra.mxu0 0.0
  %3619 = vmatprep.subr.mxu0 0.0
  %3620 = vmatpush1.msra.mxu0 0.0
  %3621 = vmatprep.subr.mxu0 0.0
  %3622 = vmatpush1.msra.mxu0 0.0
  %3623 = vmatprep.subr.mxu0 0.0
  %3624 = vmatpush1.msra.mxu0 0.0
  %3625 = vmatprep.subr.mxu0 0.0
  %3626 = vmatpush1.msra.mxu0 0.0
  %3627 = vmatprep.subr.mxu0 0.0
  %3628 = vmatpush1.msra.mxu0 0.0
  %3629 = vmatprep.subr.mxu0 0.0
  %3630 = vmatpush1.msra.mxu0 0.0
  %3631 = vmatprep.subr.mxu0 0.0
  %3632 = vmatpush1.msra.mxu0 0.0
  %3633 = vmatprep.subr.mxu0 0.0
  %3634 = vmatpush1.msra.mxu0 0.0
  %3635 = vmatprep.subr.mxu0 0.0
  %3636 = vmatpush1.msra.mxu0 0.0
  %3637 = vmatprep.subr.mxu0 0.0
  %3638 = vmatpush1.msra.mxu0 0.0
  %3639 = vmatprep.subr.mxu0 0.0
  %3640 = vmatpush1.msra.mxu0 0.0
  %3641 = vmatprep.subr.mxu0 0.0
  %3642 = vmatpush1.msra.mxu0 0.0
  %3643 = vmatprep.subr.mxu0 0.0
  %3644 = vmatpush1.msra.mxu0 0.0
  %3645 = vmatprep.subr.mxu0 0.0
  %3646 = vmatpush1.msra.mxu0 0.0
  %3647 = vmatprep.subr.mxu0 0.0
  %3648 = vmatpush1.msra.mxu0 0.0
  %3649 = vmatprep.subr.mxu0 0.0
  %3650 = vmatpush1.msra.mxu0 0.0
  %3651 = vmatprep.subr.mxu0 0.0
  %3652 = vmatpush1.msra.mxu0 0.0
  %3653 = vmatprep.subr.mxu0 0.0
  %3654 = vmatpush1.msra.mxu0 0.0
  %3655 = vmatprep.subr.mxu0 0.0
  %3656 = vmatpush1.msra.mxu0 0.0
  %3657 = vmatprep.subr.mxu0 0.0
  %3658 = vmatpush1.msra.mxu0 0.0
  %3659 = vmatprep.mubr.f32.mxu0 0.0
  %3660 = vmatmul.mubr.f32.gmra.mrb[0].mxu0 %v3593
  %v3661 = vpop.f32.mrb[0].mxu0
  %v3662 = vadd.f32 0.0, %v3661
  %v3663 = vpop.f32.mrb[0].mxu0
  %3664 = vdwg.mxu0
  %v3665 = vadd.f32 %v3589, %v3662
  %v3666 = vxor.u32 %v3665, 2147483648
  %v3667 = vmul.f32 %v3666, 1.442695
  %v3668 = vpow.pop %v3667
  %v3669 = vadd.f32 %v3668, 1.0
  %v3670 = vrcp.pop %v3669
  %v3671 = vmul.f32 1.0, %v3670
  %v3672 = vtanh.pop %v3665
  %v3673 = vmul.f32 %v3671, %v3576
  %3675 = vrot.lane.b32.xlu0 %v3672, 64
  %v3676 = vpop.permute.xlu0 %3675
  %v3678 = vmul.f32 %v3671, %v3676
  %3680 = vrot.lane.b32.xlu0 %v3678, 32
  %v3681 = vpop.permute.xlu0 %3680
  %v3683 = vadd.f32 %v3673, %v3681
  %v3684 = vtanh.pop %v3683
  %3686 = vrot.lane.b32.xlu0 %v3684, 64
  %v3687 = vpop.permute.xlu0 %3686
  %v3689 = vmul.f32 %v3671, %v3687
  %v3690 = vtanh.pop %v3689
  %3692 = vrot.lane.b32.xlu0 %v3690, 32
  %v3693 = vpop.permute.xlu0 %3692
  %3695 = vst.msk [vmem:[#allocation4 + $0x18] sm:$0xff] %vm239, %v3693
  %v3696 = vld [vmem:[#allocation2 + $0x20] sm:$0xff]
  %3698 = vrot.lane.b32.xlu0 %v3689, 32
  %v3699 = vpop.permute.xlu0 %3698
  %v3700 = vsel %vm239, %v3699, 0
  %3702 = vmatprep.subr.mxu0 0.0
  %3703 = vmatpush1.msra.mxu0 %v3264
  %3704 = vmatprep.subr.mxu0 0.0
  %3705 = vmatpush1.msra.mxu0 %v3265
  %3706 = vmatprep.subr.mxu0 0.0
  %3707 = vmatpush1.msra.mxu0 %v3266
  %3708 = vmatprep.subr.mxu0 0.0
  %3709 = vmatpush1.msra.mxu0 %v3267
  %3710 = vmatprep.subr.mxu0 0.0
  %3711 = vmatpush1.msra.mxu0 0.0
  %3712 = vmatprep.subr.mxu0 0.0
  %3713 = vmatpush1.msra.mxu0 0.0
  %3714 = vmatprep.subr.mxu0 0.0
  %3715 = vmatpush1.msra.mxu0 0.0
  %3716 = vmatprep.subr.mxu0 0.0
  %3717 = vmatpush1.msra.mxu0 0.0
  %3718 = vmatprep.subr.mxu0 0.0
  %3719 = vmatpush1.msra.mxu0 0.0
  %3720 = vmatprep.subr.mxu0 0.0
  %3721 = vmatpush1.msra.mxu0 0.0
  %3722 = vmatprep.subr.mxu0 0.0
  %3723 = vmatpush1.msra.mxu0 0.0
  %3724 = vmatprep.subr.mxu0 0.0
  %3725 = vmatpush1.msra.mxu0 0.0
  %3726 = vmatprep.subr.mxu0 0.0
  %3727 = vmatpush1.msra.mxu0 0.0
  %3728 = vmatprep.subr.mxu0 0.0
  %3729 = vmatpush1.msra.mxu0 0.0
  %3730 = vmatprep.subr.mxu0 0.0
  %3731 = vmatpush1.msra.mxu0 0.0
  %3732 = vmatprep.subr.mxu0 0.0
  %3733 = vmatpush1.msra.mxu0 0.0
  %3734 = vmatprep.subr.mxu0 0.0
  %3735 = vmatpush1.msra.mxu0 0.0
  %3736 = vmatprep.subr.mxu0 0.0
  %3737 = vmatpush1.msra.mxu0 0.0
  %3738 = vmatprep.subr.mxu0 0.0
  %3739 = vmatpush1.msra.mxu0 0.0
  %3740 = vmatprep.subr.mxu0 0.0
  %3741 = vmatpush1.msra.mxu0 0.0
  %3742 = vmatprep.subr.mxu0 0.0
  %3743 = vmatpush1.msra.mxu0 0.0
  %3744 = vmatprep.subr.mxu0 0.0
  %3745 = vmatpush1.msra.mxu0 0.0
  %3746 = vmatprep.subr.mxu0 0.0
  %3747 = vmatpush1.msra.mxu0 0.0
  %3748 = vmatprep.subr.mxu0 0.0
  %3749 = vmatpush1.msra.mxu0 0.0
  %3750 = vmatprep.subr.mxu0 0.0
  %3751 = vmatpush1.msra.mxu0 0.0
  %3752 = vmatprep.subr.mxu0 0.0
  %3753 = vmatpush1.msra.mxu0 0.0
  %3754 = vmatprep.subr.mxu0 0.0
  %3755 = vmatpush1.msra.mxu0 0.0
  %3756 = vmatprep.subr.mxu0 0.0
  %3757 = vmatpush1.msra.mxu0 0.0
  %3758 = vmatprep.subr.mxu0 0.0
  %3759 = vmatpush1.msra.mxu0 0.0
  %3760 = vmatprep.subr.mxu0 0.0
  %3761 = vmatpush1.msra.mxu0 0.0
  %3762 = vmatprep.subr.mxu0 0.0
  %3763 = vmatpush1.msra.mxu0 0.0
  %3764 = vmatprep.subr.mxu0 0.0
  %3765 = vmatpush1.msra.mxu0 0.0
  %3766 = vmatprep.mubr.f32.mxu0 0.0
  %3767 = vmatmul.mubr.f32.gmra.mrb[0].mxu0 %v3700
  %v3768 = vpop.f32.mrb[0].mxu0
  %v3769 = vadd.f32 0.0, %v3768
  %v3770 = vpop.f32.mrb[0].mxu0
  %3771 = vdwg.mxu0
  %v3772 = vadd.f32 %v3696, %v3769
  %v3773 = vxor.u32 %v3772, 2147483648
  %v3774 = vmul.f32 %v3773, 1.442695
  %v3775 = vpow.pop %v3774
  %v3776 = vadd.f32 %v3775, 1.0
  %v3777 = vrcp.pop %v3776
  %v3778 = vmul.f32 1.0, %v3777
  %v3779 = vtanh.pop %v3772
  %v3780 = vmul.f32 %v3778, %v3683
  %3782 = vrot.lane.b32.xlu0 %v3779, 64
  %v3783 = vpop.permute.xlu0 %3782
  %v3785 = vmul.f32 %v3778, %v3783
  %3787 = vrot.lane.b32.xlu0 %v3785, 32
  %v3788 = vpop.permute.xlu0 %3787
  %v3790 = vadd.f32 %v3780, %v3788
  %v3791 = vtanh.pop %v3790
  %3793 = vrot.lane.b32.xlu0 %v3791, 64
  %v3794 = vpop.permute.xlu0 %3793
  %v3796 = vmul.f32 %v3778, %v3794
  %v3797 = vtanh.pop %v3796
  %3799 = vrot.lane.b32.xlu0 %v3797, 32
  %v3800 = vpop.permute.xlu0 %3799
  %3802 = vst.msk [vmem:[#allocation4 + $0x20] sm:$0xff] %vm239, %v3800
  %v3803 = vld [vmem:[#allocation2 + $0x28] sm:$0xff]
  %3805 = vrot.lane.b32.xlu0 %v3796, 32
  %v3806 = vpop.permute.xlu0 %3805
  %v3807 = vsel %vm239, %v3806, 0
  %3809 = vmatprep.subr.mxu0 0.0
  %3810 = vmatpush1.msra.mxu0 %v3264
  %3811 = vmatprep.subr.mxu0 0.0
  %3812 = vmatpush1.msra.mxu0 %v3265
  %3813 = vmatprep.subr.mxu0 0.0
  %3814 = vmatpush1.msra.mxu0 %v3266
  %3815 = vmatprep.subr.mxu0 0.0
  %3816 = vmatpush1.msra.mxu0 %v3267
  %3817 = vmatprep.subr.mxu0 0.0
  %3818 = vmatpush1.msra.mxu0 0.0
  %3819 = vmatprep.subr.mxu0 0.0
  %3820 = vmatpush1.msra.mxu0 0.0
  %3821 = vmatprep.subr.mxu0 0.0
  %3822 = vmatpush1.msra.mxu0 0.0
  %3823 = vmatprep.subr.mxu0 0.0
  %3824 = vmatpush1.msra.mxu0 0.0
  %3825 = vmatprep.subr.mxu0 0.0
  %3826 = vmatpush1.msra.mxu0 0.0
  %3827 = vmatprep.subr.mxu0 0.0
  %3828 = vmatpush1.msra.mxu0 0.0
  %3829 = vmatprep.subr.mxu0 0.0
  %3830 = vmatpush1.msra.mxu0 0.0
  %3831 = vmatprep.subr.mxu0 0.0
  %3832 = vmatpush1.msra.mxu0 0.0
  %3833 = vmatprep.subr.mxu0 0.0
  %3834 = vmatpush1.msra.mxu0 0.0
  %3835 = vmatprep.subr.mxu0 0.0
  %3836 = vmatpush1.msra.mxu0 0.0
  %3837 = vmatprep.subr.mxu0 0.0
  %3838 = vmatpush1.msra.mxu0 0.0
  %3839 = vmatprep.subr.mxu0 0.0
  %3840 = vmatpush1.msra.mxu0 0.0
  %3841 = vmatprep.subr.mxu0 0.0
  %3842 = vmatpush1.msra.mxu0 0.0
  %3843 = vmatprep.subr.mxu0 0.0
  %3844 = vmatpush1.msra.mxu0 0.0
  %3845 = vmatprep.subr.mxu0 0.0
  %3846 = vmatpush1.msra.mxu0 0.0
  %3847 = vmatprep.subr.mxu0 0.0
  %3848 = vmatpush1.msra.mxu0 0.0
  %3849 = vmatprep.subr.mxu0 0.0
  %3850 = vmatpush1.msra.mxu0 0.0
  %3851 = vmatprep.subr.mxu0 0.0
  %3852 = vmatpush1.msra.mxu0 0.0
  %3853 = vmatprep.subr.mxu0 0.0
  %3854 = vmatpush1.msra.mxu0 0.0
  %3855 = vmatprep.subr.mxu0 0.0
  %3856 = vmatpush1.msra.mxu0 0.0
  %3857 = vmatprep.subr.mxu0 0.0
  %3858 = vmatpush1.msra.mxu0 0.0
  %3859 = vmatprep.subr.mxu0 0.0
  %3860 = vmatpush1.msra.mxu0 0.0
  %3861 = vmatprep.subr.mxu0 0.0
  %3862 = vmatpush1.msra.mxu0 0.0
  %3863 = vmatprep.subr.mxu0 0.0
  %3864 = vmatpush1.msra.mxu0 0.0
  %3865 = vmatprep.subr.mxu0 0.0
  %3866 = vmatpush1.msra.mxu0 0.0
  %3867 = vmatprep.subr.mxu0 0.0
  %3868 = vmatpush1.msra.mxu0 0.0
  %3869 = vmatprep.subr.mxu0 0.0
  %3870 = vmatpush1.msra.mxu0 0.0
  %3871 = vmatprep.subr.mxu0 0.0
  %3872 = vmatpush1.msra.mxu0 0.0
  %3873 = vmatprep.mubr.f32.mxu0 0.0
  %3874 = vmatmul.mubr.f32.gmra.mrb[0].mxu0 %v3807
  %v3875 = vpop.f32.mrb[0].mxu0
  %v3876 = vadd.f32 0.0, %v3875
  %v3877 = vpop.f32.mrb[0].mxu0
  %3878 = vdwg.mxu0
  %v3879 = vadd.f32 %v3803, %v3876
  %v3880 = vxor.u32 %v3879, 2147483648
  %v3881 = vmul.f32 %v3880, 1.442695
  %v3882 = vpow.pop %v3881
  %v3883 = vadd.f32 %v3882, 1.0
  %v3884 = vrcp.pop %v3883
  %v3885 = vmul.f32 1.0, %v3884
  %v3886 = vtanh.pop %v3879
  %v3887 = vmul.f32 %v3885, %v3790
  %3889 = vrot.lane.b32.xlu0 %v3886, 64
  %v3890 = vpop.permute.xlu0 %3889
  %v3892 = vmul.f32 %v3885, %v3890
  %3894 = vrot.lane.b32.xlu0 %v3892, 32
  %v3895 = vpop.permute.xlu0 %3894
  %v3897 = vadd.f32 %v3887, %v3895
  %v3898 = vtanh.pop %v3897
  %3900 = vrot.lane.b32.xlu0 %v3898, 64
  %v3901 = vpop.permute.xlu0 %3900
  %v3903 = vmul.f32 %v3885, %v3901
  %v3904 = vtanh.pop %v3903
  %3906 = vrot.lane.b32.xlu0 %v3904, 32
  %v3907 = vpop.permute.xlu0 %3906
  %3909 = vst.msk [vmem:[#allocation4 + $0x28] sm:$0xff] %vm239, %v3907
  %v3910 = vld [vmem:[#allocation2 + $0x30] sm:$0xff]
  %3912 = vrot.lane.b32.xlu0 %v3903, 32
  %v3913 = vpop.permute.xlu0 %3912
  %v3914 = vsel %vm239, %v3913, 0
  %3916 = vmatprep.subr.mxu0 0.0
  %3917 = vmatpush1.msra.mxu0 %v3264
  %3918 = vmatprep.subr.mxu0 0.0
  %3919 = vmatpush1.msra.mxu0 %v3265
  %3920 = vmatprep.subr.mxu0 0.0
  %3921 = vmatpush1.msra.mxu0 %v3266
  %3922 = vmatprep.subr.mxu0 0.0
  %3923 = vmatpush1.msra.mxu0 %v3267
  %3924 = vmatprep.subr.mxu0 0.0
  %3925 = vmatpush1.msra.mxu0 0.0
  %3926 = vmatprep.subr.mxu0 0.0
  %3927 = vmatpush1.msra.mxu0 0.0
  %3928 = vmatprep.subr.mxu0 0.0
  %3929 = vmatpush1.msra.mxu0 0.0
  %3930 = vmatprep.subr.mxu0 0.0
  %3931 = vmatpush1.msra.mxu0 0.0
  %3932 = vmatprep.subr.mxu0 0.0
  %3933 = vmatpush1.msra.mxu0 0.0
  %3934 = vmatprep.subr.mxu0 0.0
  %3935 = vmatpush1.msra.mxu0 0.0
  %3936 = vmatprep.subr.mxu0 0.0
  %3937 = vmatpush1.msra.mxu0 0.0
  %3938 = vmatprep.subr.mxu0 0.0
  %3939 = vmatpush1.msra.mxu0 0.0
  %3940 = vmatprep.subr.mxu0 0.0
  %3941 = vmatpush1.msra.mxu0 0.0
  %3942 = vmatprep.subr.mxu0 0.0
  %3943 = vmatpush1.msra.mxu0 0.0
  %3944 = vmatprep.subr.mxu0 0.0
  %3945 = vmatpush1.msra.mxu0 0.0
  %3946 = vmatprep.subr.mxu0 0.0
  %3947 = vmatpush1.msra.mxu0 0.0
  %3948 = vmatprep.subr.mxu0 0.0
  %3949 = vmatpush1.msra.mxu0 0.0
  %3950 = vmatprep.subr.mxu0 0.0
  %3951 = vmatpush1.msra.mxu0 0.0
  %3952 = vmatprep.subr.mxu0 0.0
  %3953 = vmatpush1.msra.mxu0 0.0
  %3954 = vmatprep.subr.mxu0 0.0
  %3955 = vmatpush1.msra.mxu0 0.0
  %3956 = vmatprep.subr.mxu0 0.0
  %3957 = vmatpush1.msra.mxu0 0.0
  %3958 = vmatprep.subr.mxu0 0.0
  %3959 = vmatpush1.msra.mxu0 0.0
  %3960 = vmatprep.subr.mxu0 0.0
  %3961 = vmatpush1.msra.mxu0 0.0
  %3962 = vmatprep.subr.mxu0 0.0
  %3963 = vmatpush1.msra.mxu0 0.0
  %3964 = vmatprep.subr.mxu0 0.0
  %3965 = vmatpush1.msra.mxu0 0.0
  %3966 = vmatprep.subr.mxu0 0.0
  %3967 = vmatpush1.msra.mxu0 0.0
  %3968 = vmatprep.subr.mxu0 0.0
  %3969 = vmatpush1.msra.mxu0 0.0
  %3970 = vmatprep.subr.mxu0 0.0
  %3971 = vmatpush1.msra.mxu0 0.0
  %3972 = vmatprep.subr.mxu0 0.0
  %3973 = vmatpush1.msra.mxu0 0.0
  %3974 = vmatprep.subr.mxu0 0.0
  %3975 = vmatpush1.msra.mxu0 0.0
  %3976 = vmatprep.subr.mxu0 0.0
  %3977 = vmatpush1.msra.mxu0 0.0
  %3978 = vmatprep.subr.mxu0 0.0
  %3979 = vmatpush1.msra.mxu0 0.0
  %3980 = vmatprep.mubr.f32.mxu0 0.0
  %3981 = vmatmul.mubr.f32.gmra.mrb[0].mxu0 %v3914
  %v3982 = vpop.f32.mrb[0].mxu0
  %v3983 = vadd.f32 0.0, %v3982
  %v3984 = vpop.f32.mrb[0].mxu0
  %3985 = vdwg.mxu0
  %v3986 = vadd.f32 %v3910, %v3983
  %v3987 = vxor.u32 %v3986, 2147483648
  %v3988 = vmul.f32 %v3987, 1.442695
  %v3989 = vpow.pop %v3988
  %v3990 = vadd.f32 %v3989, 1.0
  %v3991 = vrcp.pop %v3990
  %v3992 = vmul.f32 1.0, %v3991
  %v3993 = vtanh.pop %v3986
  %v3994 = vmul.f32 %v3992, %v3897
  %3996 = vrot.lane.b32.xlu0 %v3993, 64
  %v3997 = vpop.permute.xlu0 %3996
  %v3999 = vmul.f32 %v3992, %v3997
  %4001 = vrot.lane.b32.xlu0 %v3999, 32
  %v4002 = vpop.permute.xlu0 %4001
  %v4004 = vadd.f32 %v3994, %v4002
  %v4005 = vtanh.pop %v4004
  %4007 = vrot.lane.b32.xlu0 %v4005, 64
  %v4008 = vpop.permute.xlu0 %4007
  %v4010 = vmul.f32 %v3992, %v4008
  %v4011 = vtanh.pop %v4010
  %4013 = vrot.lane.b32.xlu0 %v4011, 32
  %v4014 = vpop.permute.xlu0 %4013
  %4016 = vst.msk [vmem:[#allocation4 + $0x30] sm:$0xff] %vm239, %v4014
  %v4017 = vld [vmem:[#allocation2 + $0x38] sm:$0xff]
  %4019 = vrot.lane.b32.xlu0 %v4010, 32
  %v4020 = vpop.permute.xlu0 %4019
  %v4021 = vsel %vm239, %v4020, 0
  %4023 = vmatprep.subr.mxu0 0.0
  %4024 = vmatpush1.msra.mxu0 %v3264
  %4025 = vmatprep.subr.mxu0 0.0
  %4026 = vmatpush1.msra.mxu0 %v3265
  %4027 = vmatprep.subr.mxu0 0.0
  %4028 = vmatpush1.msra.mxu0 %v3266
  %4029 = vmatprep.subr.mxu0 0.0
  %4030 = vmatpush1.msra.mxu0 %v3267
  %4031 = vmatprep.subr.mxu0 0.0
  %4032 = vmatpush1.msra.mxu0 0.0
  %4033 = vmatprep.subr.mxu0 0.0
  %4034 = vmatpush1.msra.mxu0 0.0
  %4035 = vmatprep.subr.mxu0 0.0
  %4036 = vmatpush1.msra.mxu0 0.0
  %4037 = vmatprep.subr.mxu0 0.0
  %4038 = vmatpush1.msra.mxu0 0.0
  %4039 = vmatprep.subr.mxu0 0.0
  %4040 = vmatpush1.msra.mxu0 0.0
  %4041 = vmatprep.subr.mxu0 0.0
  %4042 = vmatpush1.msra.mxu0 0.0
  %4043 = vmatprep.subr.mxu0 0.0
  %4044 = vmatpush1.msra.mxu0 0.0
  %4045 = vmatprep.subr.mxu0 0.0
  %4046 = vmatpush1.msra.mxu0 0.0
  %4047 = vmatprep.subr.mxu0 0.0
  %4048 = vmatpush1.msra.mxu0 0.0
  %4049 = vmatprep.subr.mxu0 0.0
  %4050 = vmatpush1.msra.mxu0 0.0
  %4051 = vmatprep.subr.mxu0 0.0
  %4052 = vmatpush1.msra.mxu0 0.0
  %4053 = vmatprep.subr.mxu0 0.0
  %4054 = vmatpush1.msra.mxu0 0.0
  %4055 = vmatprep.subr.mxu0 0.0
  %4056 = vmatpush1.msra.mxu0 0.0
  %4057 = vmatprep.subr.mxu0 0.0
  %4058 = vmatpush1.msra.mxu0 0.0
  %4059 = vmatprep.subr.mxu0 0.0
  %4060 = vmatpush1.msra.mxu0 0.0
  %4061 = vmatprep.subr.mxu0 0.0
  %4062 = vmatpush1.msra.mxu0 0.0
  %4063 = vmatprep.subr.mxu0 0.0
  %4064 = vmatpush1.msra.mxu0 0.0
  %4065 = vmatprep.subr.mxu0 0.0
  %4066 = vmatpush1.msra.mxu0 0.0
  %4067 = vmatprep.subr.mxu0 0.0
  %4068 = vmatpush1.msra.mxu0 0.0
  %4069 = vmatprep.subr.mxu0 0.0
  %4070 = vmatpush1.msra.mxu0 0.0
  %4071 = vmatprep.subr.mxu0 0.0
  %4072 = vmatpush1.msra.mxu0 0.0
  %4073 = vmatprep.subr.mxu0 0.0
  %4074 = vmatpush1.msra.mxu0 0.0
  %4075 = vmatprep.subr.mxu0 0.0
  %4076 = vmatpush1.msra.mxu0 0.0
  %4077 = vmatprep.subr.mxu0 0.0
  %4078 = vmatpush1.msra.mxu0 0.0
  %4079 = vmatprep.subr.mxu0 0.0
  %4080 = vmatpush1.msra.mxu0 0.0
  %4081 = vmatprep.subr.mxu0 0.0
  %4082 = vmatpush1.msra.mxu0 0.0
  %4083 = vmatprep.subr.mxu0 0.0
  %4084 = vmatpush1.msra.mxu0 0.0
  %4085 = vmatprep.subr.mxu0 0.0
  %4086 = vmatpush1.msra.mxu0 0.0
  %4087 = vmatprep.mubr.f32.mxu0 0.0
  %4088 = vmatmul.mubr.f32.gmra.mrb[0].mxu0 %v4021
  %v4089 = vpop.f32.mrb[0].mxu0
  %v4090 = vadd.f32 0.0, %v4089
  %v4091 = vpop.f32.mrb[0].mxu0
  %4092 = vdwg.mxu0
  %v4093 = vadd.f32 %v4017, %v4090
  %v4094 = vxor.u32 %v4093, 2147483648
  %v4095 = vmul.f32 %v4094, 1.442695
  %v4096 = vpow.pop %v4095
  %v4097 = vadd.f32 %v4096, 1.0
  %v4098 = vrcp.pop %v4097
  %v4099 = vmul.f32 1.0, %v4098
  %v4100 = vtanh.pop %v4093
  %v4101 = vmul.f32 %v4099, %v4004
  %4103 = vrot.lane.b32.xlu0 %v4100, 64
  %v4104 = vpop.permute.xlu0 %4103
  %v4106 = vmul.f32 %v4099, %v4104
  %4108 = vrot.lane.b32.xlu0 %v4106, 32
  %v4109 = vpop.permute.xlu0 %4108
  %v4111 = vadd.f32 %v4101, %v4109
  %v4112 = vtanh.pop %v4111
  %4114 = vrot.lane.b32.xlu0 %v4112, 64
  %v4115 = vpop.permute.xlu0 %4114
  %v4117 = vmul.f32 %v4099, %v4115
  %v4118 = vtanh.pop %v4117
  %4120 = vrot.lane.b32.xlu0 %v4118, 32
  %v4121 = vpop.permute.xlu0 %4120
  %4123 = vst.msk [vmem:[#allocation4 + $0x38] sm:$0xff] %vm239, %v4121
  %v4124 = vld [vmem:[#allocation4] sm:$0xff]
  %v4125 = vld [vmem:[#allocation4 + $0x8] sm:$0xff]
  %v4126 = vld [vmem:[#allocation4 + $0x10] sm:$0xff]
  %v4127 = vld [vmem:[#allocation4 + $0x18] sm:$0xff]
  %v4128 = vld [vmem:[#allocation4 + $0x20] sm:$0xff]
  %v4129 = vld [vmem:[#allocation4 + $0x28] sm:$0xff]
  %v4130 = vld [vmem:[#allocation4 + $0x30] sm:$0xff]
  %v4131 = vld [vmem:[#allocation4 + $0x38] sm:$0xff]
  %v4132 = vld [vmem:[%s18] sm:$0xff]
  %v4133 = vld [vmem:[%s18 + $0x8] sm:$0xff]
  %v4134 = vld [vmem:[%s18 + $0x10] sm:$0xff]
  %v4135 = vld [vmem:[%s18 + $0x18] sm:$0xff]
  %v4136 = vld [vmem:[%s20] sm:$0x1]
  %v4138 = vlaneseq
  %v4139 = vshrl.u32 %v4138, 7
  %v4140 = vsub.s32 0, %v4139
  %v4141 = vrot.slane %v4136, %v4140
  %v4144 = vsel %vm239, %v4124, 0
  %v4147 = vsel %vm239, %v4125, 0
  %v4150 = vsel %vm239, %v4126, 0
  %v4153 = vsel %vm239, %v4127, 0
  %v4156 = vsel %vm239, %v4128, 0
  %v4159 = vsel %vm239, %v4129, 0
  %v4162 = vsel %vm239, %v4130, 0
  %v4165 = vsel %vm239, %v4131, 0
  %4167 = vmatprep.subr.mxu0 0.0
  %4168 = vmatpush1.msra.mxu0 %v4132
  %4169 = vmatprep.subr.mxu0 0.0
  %4170 = vmatpush1.msra.mxu0 %v4133
  %4171 = vmatprep.subr.mxu0 0.0
  %4172 = vmatpush1.msra.mxu0 %v4134
  %4173 = vmatprep.subr.mxu0 0.0
  %4174 = vmatpush1.msra.mxu0 %v4135
  %4175 = vmatprep.subr.mxu0 0.0
  %4176 = vmatpush1.msra.mxu0 0.0
  %4177 = vmatprep.subr.mxu0 0.0
  %4178 = vmatpush1.msra.mxu0 0.0
  %4179 = vmatprep.subr.mxu0 0.0
  %4180 = vmatpush1.msra.mxu0 0.0
  %4181 = vmatprep.subr.mxu0 0.0
  %4182 = vmatpush1.msra.mxu0 0.0
  %4183 = vmatprep.subr.mxu0 0.0
  %4184 = vmatpush1.msra.mxu0 0.0
  %4185 = vmatprep.subr.mxu0 0.0
  %4186 = vmatpush1.msra.mxu0 0.0
  %4187 = vmatprep.subr.mxu0 0.0
  %4188 = vmatpush1.msra.mxu0 0.0
  %4189 = vmatprep.subr.mxu0 0.0
  %4190 = vmatpush1.msra.mxu0 0.0
  %4191 = vmatprep.subr.mxu0 0.0
  %4192 = vmatpush1.msra.mxu0 0.0
  %4193 = vmatprep.subr.mxu0 0.0
  %4194 = vmatpush1.msra.mxu0 0.0
  %4195 = vmatprep.subr.mxu0 0.0
  %4196 = vmatpush1.msra.mxu0 0.0
  %4197 = vmatprep.subr.mxu0 0.0
  %4198 = vmatpush1.msra.mxu0 0.0
  %4199 = vmatprep.subr.mxu0 0.0
  %4200 = vmatpush1.msra.mxu0 0.0
  %4201 = vmatprep.subr.mxu0 0.0
  %4202 = vmatpush1.msra.mxu0 0.0
  %4203 = vmatprep.subr.mxu0 0.0
  %4204 = vmatpush1.msra.mxu0 0.0
  %4205 = vmatprep.subr.mxu0 0.0
  %4206 = vmatpush1.msra.mxu0 0.0
  %4207 = vmatprep.subr.mxu0 0.0
  %4208 = vmatpush1.msra.mxu0 0.0
  %4209 = vmatprep.subr.mxu0 0.0
  %4210 = vmatpush1.msra.mxu0 0.0
  %4211 = vmatprep.subr.mxu0 0.0
  %4212 = vmatpush1.msra.mxu0 0.0
  %4213 = vmatprep.subr.mxu0 0.0
  %4214 = vmatpush1.msra.mxu0 0.0
  %4215 = vmatprep.subr.mxu0 0.0
  %4216 = vmatpush1.msra.mxu0 0.0
  %4217 = vmatprep.subr.mxu0 0.0
  %4218 = vmatpush1.msra.mxu0 0.0
  %4219 = vmatprep.subr.mxu0 0.0
  %4220 = vmatpush1.msra.mxu0 0.0
  %4221 = vmatprep.subr.mxu0 0.0
  %4222 = vmatpush1.msra.mxu0 0.0
  %4223 = vmatprep.subr.mxu0 0.0
  %4224 = vmatpush1.msra.mxu0 0.0
  %4225 = vmatprep.subr.mxu0 0.0
  %4226 = vmatpush1.msra.mxu0 0.0
  %4227 = vmatprep.subr.mxu0 0.0
  %4228 = vmatpush1.msra.mxu0 0.0
  %4229 = vmatprep.subr.mxu0 0.0
  %4230 = vmatpush1.msra.mxu0 0.0
  %4231 = vmatprep.mubr.f32.mxu0 0.0
  %4232 = vmatmul.mubr.f32.gmra.mrb[0].mxu0 %v4144
  %v4233 = vpop.f32.mrb[0].mxu0
  %v4234 = vadd.f32 %v4141, %v4233
  %v4235 = vpop.f32.mrb[0].mxu0
  %4236 = vmatprep.mubr.f32.mxu0 0.0
  %4237 = vmatmul.mubr.f32.gmra.mrb[0].mxu0 %v4147
  %v4238 = vpop.f32.mrb[0].mxu0
  %v4239 = vadd.f32 %v4141, %v4238
  %v4240 = vpop.f32.mrb[0].mxu0
  %4241 = vmatprep.mubr.f32.mxu0 0.0
  %4242 = vmatmul.mubr.f32.gmra.mrb[0].mxu0 %v4150
  %v4243 = vpop.f32.mrb[0].mxu0
  %v4244 = vadd.f32 %v4141, %v4243
  %v4245 = vpop.f32.mrb[0].mxu0
  %4246 = vmatprep.mubr.f32.mxu0 0.0
  %4247 = vmatmul.mubr.f32.gmra.mrb[0].mxu0 %v4153
  %v4248 = vpop.f32.mrb[0].mxu0
  %v4249 = vadd.f32 %v4141, %v4248
  %v4250 = vpop.f32.mrb[0].mxu0
  %4251 = vmatprep.mubr.f32.mxu0 0.0
  %4252 = vmatmul.mubr.f32.gmra.mrb[0].mxu0 %v4156
  %v4253 = vpop.f32.mrb[0].mxu0
  %v4254 = vadd.f32 %v4141, %v4253
  %v4255 = vpop.f32.mrb[0].mxu0
  %4256 = vmatprep.mubr.f32.mxu0 0.0
  %4257 = vmatmul.mubr.f32.gmra.mrb[0].mxu0 %v4159
  %v4258 = vpop.f32.mrb[0].mxu0
  %v4259 = vadd.f32 %v4141, %v4258
  %v4260 = vpop.f32.mrb[0].mxu0
  %4261 = vmatprep.mubr.f32.mxu0 0.0
  %4262 = vmatmul.mubr.f32.gmra.mrb[0].mxu0 %v4162
  %v4263 = vpop.f32.mrb[0].mxu0
  %v4264 = vadd.f32 %v4141, %v4263
  %v4265 = vpop.f32.mrb[0].mxu0
  %4266 = vmatprep.mubr.f32.mxu0 0.0
  %4267 = vmatmul.mubr.f32.gmra.mrb[0].mxu0 %v4165
  %v4268 = vpop.f32.mrb[0].mxu0
  %v4269 = vadd.f32 %v4141, %v4268
  %v4270 = vpop.f32.mrb[0].mxu0
  %4271 = vdwg.mxu0
  %vm4272 = vcmask 523264
  %4273 = vst.msk [vmem:[#allocation5] sm:$0xff] %vm4272, %v4234
  %4274 = vst.msk [vmem:[#allocation5 + $0x8] sm:$0xff] %vm4272, %v4239
  %4275 = vst.msk [vmem:[#allocation5 + $0x10] sm:$0xff] %vm4272, %v4244
  %4276 = vst.msk [vmem:[#allocation5 + $0x18] sm:$0xff] %vm4272, %v4249
  %4277 = vst.msk [vmem:[#allocation5 + $0x20] sm:$0xff] %vm4272, %v4254
  %4278 = vst.msk [vmem:[#allocation5 + $0x28] sm:$0xff] %vm4272, %v4259
  %4279 = vst.msk [vmem:[#allocation5 + $0x30] sm:$0xff] %vm4272, %v4264
  %4280 = vst.msk [vmem:[#allocation5 + $0x38] sm:$0xff] %vm4272, %v4269
  %v4281 = vld [vmem:[%s19] sm:$0xff]
  %v4282 = vld [vmem:[%s19 + $0x8] sm:$0xff]
  %v4283 = vld [vmem:[#allocation5] sm:$0xff]
  %v4284 = vsel %vm2203, 0.0, 0
  %4286 = vmatprep.subr.mxu0 0.0
  %4287 = vmatpush1.msra.mxu0 %v4281
  %4288 = vmatprep.subr.mxu0 0.0
  %4289 = vmatpush1.msra.mxu0 %v4282
  %4290 = vmatprep.subr.mxu0 0.0
  %4291 = vmatpush1.msra.mxu0 0.0
  %4292 = vmatprep.subr.mxu0 0.0
  %4293 = vmatpush1.msra.mxu0 0.0
  %4294 = vmatprep.subr.mxu0 0.0
  %4295 = vmatpush1.msra.mxu0 0.0
  %4296 = vmatprep.subr.mxu0 0.0
  %4297 = vmatpush1.msra.mxu0 0.0
  %4298 = vmatprep.subr.mxu0 0.0
  %4299 = vmatpush1.msra.mxu0 0.0
  %4300 = vmatprep.subr.mxu0 0.0
  %4301 = vmatpush1.msra.mxu0 0.0
  %4302 = vmatprep.subr.mxu0 0.0
  %4303 = vmatpush1.msra.mxu0 0.0
  %4304 = vmatprep.subr.mxu0 0.0
  %4305 = vmatpush1.msra.mxu0 0.0
  %4306 = vmatprep.subr.mxu0 0.0
  %4307 = vmatpush1.msra.mxu0 0.0
  %4308 = vmatprep.subr.mxu0 0.0
  %4309 = vmatpush1.msra.mxu0 0.0
  %4310 = vmatprep.subr.mxu0 0.0
  %4311 = vmatpush1.msra.mxu0 0.0
  %4312 = vmatprep.subr.mxu0 0.0
  %4313 = vmatpush1.msra.mxu0 0.0
  %4314 = vmatprep.subr.mxu0 0.0
  %4315 = vmatpush1.msra.mxu0 0.0
  %4316 = vmatprep.subr.mxu0 0.0
  %4317 = vmatpush1.msra.mxu0 0.0
  %4318 = vmatprep.subr.mxu0 0.0
  %4319 = vmatpush1.msra.mxu0 0.0
  %4320 = vmatprep.subr.mxu0 0.0
  %4321 = vmatpush1.msra.mxu0 0.0
  %4322 = vmatprep.subr.mxu0 0.0
  %4323 = vmatpush1.msra.mxu0 0.0
  %4324 = vmatprep.subr.mxu0 0.0
  %4325 = vmatpush1.msra.mxu0 0.0
  %4326 = vmatprep.subr.mxu0 0.0
  %4327 = vmatpush1.msra.mxu0 0.0
  %4328 = vmatprep.subr.mxu0 0.0
  %4329 = vmatpush1.msra.mxu0 0.0
  %4330 = vmatprep.subr.mxu0 0.0
  %4331 = vmatpush1.msra.mxu0 0.0
  %4332 = vmatprep.subr.mxu0 0.0
  %4333 = vmatpush1.msra.mxu0 0.0
  %4334 = vmatprep.subr.mxu0 0.0
  %4335 = vmatpush1.msra.mxu0 0.0
  %4336 = vmatprep.subr.mxu0 0.0
  %4337 = vmatpush1.msra.mxu0 0.0
  %4338 = vmatprep.subr.mxu0 0.0
  %4339 = vmatpush1.msra.mxu0 0.0
  %4340 = vmatprep.subr.mxu0 0.0
  %4341 = vmatpush1.msra.mxu0 0.0
  %4342 = vmatprep.subr.mxu0 0.0
  %4343 = vmatpush1.msra.mxu0 0.0
  %4344 = vmatprep.subr.mxu0 0.0
  %4345 = vmatpush1.msra.mxu0 0.0
  %4346 = vmatprep.subr.mxu0 0.0
  %4347 = vmatpush1.msra.mxu0 0.0
  %4348 = vmatprep.subr.mxu0 0.0
  %4349 = vmatpush1.msra.mxu0 0.0
  %4350 = vmatprep.mubr.f32.mxu0 0.0
  %4351 = vmatmul.mubr.f32.gmra.mrb[0].mxu0 %v4284
  %v4352 = vpop.f32.mrb[0].mxu0
  %v4353 = vadd.f32 0.0, %v4352
  %v4354 = vpop.f32.mrb[0].mxu0
  %4355 = vdwg.mxu0
  %v4356 = vadd.f32 %v4283, %v4353
  %v4357 = vxor.u32 %v4356, 2147483648
  %v4358 = vmul.f32 %v4357, 1.442695
  %v4359 = vpow.pop %v4358
  %v4360 = vadd.f32 %v4359, 1.0
  %v4361 = vrcp.pop %v4360
  %v4362 = vmul.f32 1.0, %v4361
  %v4363 = vtanh.pop %v4356
  %v4364 = vmul.f32 %v4362, 0.0
  %4366 = vrot.lane.b32.xlu0 %v4363, 96
  %v4367 = vpop.permute.xlu0 %4366
  %v4369 = vmul.f32 %v4362, %v4367
  %4371 = vrot.lane.b32.xlu0 %v4369, 16
  %v4372 = vpop.permute.xlu0 %4371
  %v4374 = vadd.f32 %v4364, %v4372
  %v4375 = vtanh.pop %v4374
  %4377 = vrot.lane.b32.xlu0 %v4375, 32
  %v4378 = vpop.permute.xlu0 %4377
  %v4380 = vmul.f32 %v4362, %v4378
  %4382 = vrot.lane.b32.xlu0 %v4380, 80
  %v4383 = vpop.permute.xlu0 %4382
  %4385 = vst.msk [vmem:[#allocation6] sm:$0xff] %vm2203, %v4383
  %v4386 = vld [vmem:[#allocation5 + $0x8] sm:$0xff]
  %v4387 = vsel %vm2203, %v4383, 0
  %4389 = vmatprep.subr.mxu0 0.0
  %4390 = vmatpush1.msra.mxu0 %v4281
  %4391 = vmatprep.subr.mxu0 0.0
  %4392 = vmatpush1.msra.mxu0 %v4282
  %4393 = vmatprep.subr.mxu0 0.0
  %4394 = vmatpush1.msra.mxu0 0.0
  %4395 = vmatprep.subr.mxu0 0.0
  %4396 = vmatpush1.msra.mxu0 0.0
  %4397 = vmatprep.subr.mxu0 0.0
  %4398 = vmatpush1.msra.mxu0 0.0
  %4399 = vmatprep.subr.mxu0 0.0
  %4400 = vmatpush1.msra.mxu0 0.0
  %4401 = vmatprep.subr.mxu0 0.0
  %4402 = vmatpush1.msra.mxu0 0.0
  %4403 = vmatprep.subr.mxu0 0.0
  %4404 = vmatpush1.msra.mxu0 0.0
  %4405 = vmatprep.subr.mxu0 0.0
  %4406 = vmatpush1.msra.mxu0 0.0
  %4407 = vmatprep.subr.mxu0 0.0
  %4408 = vmatpush1.msra.mxu0 0.0
  %4409 = vmatprep.subr.mxu0 0.0
  %4410 = vmatpush1.msra.mxu0 0.0
  %4411 = vmatprep.subr.mxu0 0.0
  %4412 = vmatpush1.msra.mxu0 0.0
  %4413 = vmatprep.subr.mxu0 0.0
  %4414 = vmatpush1.msra.mxu0 0.0
  %4415 = vmatprep.subr.mxu0 0.0
  %4416 = vmatpush1.msra.mxu0 0.0
  %4417 = vmatprep.subr.mxu0 0.0
  %4418 = vmatpush1.msra.mxu0 0.0
  %4419 = vmatprep.subr.mxu0 0.0
  %4420 = vmatpush1.msra.mxu0 0.0
  %4421 = vmatprep.subr.mxu0 0.0
  %4422 = vmatpush1.msra.mxu0 0.0
  %4423 = vmatprep.subr.mxu0 0.0
  %4424 = vmatpush1.msra.mxu0 0.0
  %4425 = vmatprep.subr.mxu0 0.0
  %4426 = vmatpush1.msra.mxu0 0.0
  %4427 = vmatprep.subr.mxu0 0.0
  %4428 = vmatpush1.msra.mxu0 0.0
  %4429 = vmatprep.subr.mxu0 0.0
  %4430 = vmatpush1.msra.mxu0 0.0
  %4431 = vmatprep.subr.mxu0 0.0
  %4432 = vmatpush1.msra.mxu0 0.0
  %4433 = vmatprep.subr.mxu0 0.0
  %4434 = vmatpush1.msra.mxu0 0.0
  %4435 = vmatprep.subr.mxu0 0.0
  %4436 = vmatpush1.msra.mxu0 0.0
  %4437 = vmatprep.subr.mxu0 0.0
  %4438 = vmatpush1.msra.mxu0 0.0
  %4439 = vmatprep.subr.mxu0 0.0
  %4440 = vmatpush1.msra.mxu0 0.0
  %4441 = vmatprep.subr.mxu0 0.0
  %4442 = vmatpush1.msra.mxu0 0.0
  %4443 = vmatprep.subr.mxu0 0.0
  %4444 = vmatpush1.msra.mxu0 0.0
  %4445 = vmatprep.subr.mxu0 0.0
  %4446 = vmatpush1.msra.mxu0 0.0
  %4447 = vmatprep.subr.mxu0 0.0
  %4448 = vmatpush1.msra.mxu0 0.0
  %4449 = vmatprep.subr.mxu0 0.0
  %4450 = vmatpush1.msra.mxu0 0.0
  %4451 = vmatprep.subr.mxu0 0.0
  %4452 = vmatpush1.msra.mxu0 0.0
  %4453 = vmatprep.mubr.f32.mxu0 0.0
  %4454 = vmatmul.mubr.f32.gmra.mrb[0].mxu0 %v4387
  %v4455 = vpop.f32.mrb[0].mxu0
  %v4456 = vadd.f32 0.0, %v4455
  %v4457 = vpop.f32.mrb[0].mxu0
  %4458 = vdwg.mxu0
  %v4459 = vadd.f32 %v4386, %v4456
  %v4460 = vxor.u32 %v4459, 2147483648
  %v4461 = vmul.f32 %v4460, 1.442695
  %v4462 = vpow.pop %v4461
  %v4463 = vadd.f32 %v4462, 1.0
  %v4464 = vrcp.pop %v4463
  %v4465 = vmul.f32 1.0, %v4464
  %v4466 = vtanh.pop %v4459
  %v4467 = vmul.f32 %v4465, %v4374
  %4469 = vrot.lane.b32.xlu0 %v4466, 96
  %v4470 = vpop.permute.xlu0 %4469
  %v4472 = vmul.f32 %v4465, %v4470
  %4474 = vrot.lane.b32.xlu0 %v4472, 16
  %v4475 = vpop.permute.xlu0 %4474
  %v4477 = vadd.f32 %v4467, %v4475
  %v4478 = vtanh.pop %v4477
  %4480 = vrot.lane.b32.xlu0 %v4478, 32
  %v4481 = vpop.permute.xlu0 %4480
  %v4483 = vmul.f32 %v4465, %v4481
  %4485 = vrot.lane.b32.xlu0 %v4483, 80
  %v4486 = vpop.permute.xlu0 %4485
  %4488 = vst.msk [vmem:[#allocation6 + $0x8] sm:$0xff] %vm2203, %v4486
  %v4489 = vld [vmem:[#allocation5 + $0x10] sm:$0xff]
  %v4490 = vsel %vm2203, %v4486, 0
  %4492 = vmatprep.subr.mxu0 0.0
  %4493 = vmatpush1.msra.mxu0 %v4281
  %4494 = vmatprep.subr.mxu0 0.0
  %4495 = vmatpush1.msra.mxu0 %v4282
  %4496 = vmatprep.subr.mxu0 0.0
  %4497 = vmatpush1.msra.mxu0 0.0
  %4498 = vmatprep.subr.mxu0 0.0
  %4499 = vmatpush1.msra.mxu0 0.0
  %4500 = vmatprep.subr.mxu0 0.0
  %4501 = vmatpush1.msra.mxu0 0.0
  %4502 = vmatprep.subr.mxu0 0.0
  %4503 = vmatpush1.msra.mxu0 0.0
  %4504 = vmatprep.subr.mxu0 0.0
  %4505 = vmatpush1.msra.mxu0 0.0
  %4506 = vmatprep.subr.mxu0 0.0
  %4507 = vmatpush1.msra.mxu0 0.0
  %4508 = vmatprep.subr.mxu0 0.0
  %4509 = vmatpush1.msra.mxu0 0.0
  %4510 = vmatprep.subr.mxu0 0.0
  %4511 = vmatpush1.msra.mxu0 0.0
  %4512 = vmatprep.subr.mxu0 0.0
  %4513 = vmatpush1.msra.mxu0 0.0
  %4514 = vmatprep.subr.mxu0 0.0
  %4515 = vmatpush1.msra.mxu0 0.0
  %4516 = vmatprep.subr.mxu0 0.0
  %4517 = vmatpush1.msra.mxu0 0.0
  %4518 = vmatprep.subr.mxu0 0.0
  %4519 = vmatpush1.msra.mxu0 0.0
  %4520 = vmatprep.subr.mxu0 0.0
  %4521 = vmatpush1.msra.mxu0 0.0
  %4522 = vmatprep.subr.mxu0 0.0
  %4523 = vmatpush1.msra.mxu0 0.0
  %4524 = vmatprep.subr.mxu0 0.0
  %4525 = vmatpush1.msra.mxu0 0.0
  %4526 = vmatprep.subr.mxu0 0.0
  %4527 = vmatpush1.msra.mxu0 0.0
  %4528 = vmatprep.subr.mxu0 0.0
  %4529 = vmatpush1.msra.mxu0 0.0
  %4530 = vmatprep.subr.mxu0 0.0
  %4531 = vmatpush1.msra.mxu0 0.0
  %4532 = vmatprep.subr.mxu0 0.0
  %4533 = vmatpush1.msra.mxu0 0.0
  %4534 = vmatprep.subr.mxu0 0.0
  %4535 = vmatpush1.msra.mxu0 0.0
  %4536 = vmatprep.subr.mxu0 0.0
  %4537 = vmatpush1.msra.mxu0 0.0
  %4538 = vmatprep.subr.mxu0 0.0
  %4539 = vmatpush1.msra.mxu0 0.0
  %4540 = vmatprep.subr.mxu0 0.0
  %4541 = vmatpush1.msra.mxu0 0.0
  %4542 = vmatprep.subr.mxu0 0.0
  %4543 = vmatpush1.msra.mxu0 0.0
  %4544 = vmatprep.subr.mxu0 0.0
  %4545 = vmatpush1.msra.mxu0 0.0
  %4546 = vmatprep.subr.mxu0 0.0
  %4547 = vmatpush1.msra.mxu0 0.0
  %4548 = vmatprep.subr.mxu0 0.0
  %4549 = vmatpush1.msra.mxu0 0.0
  %4550 = vmatprep.subr.mxu0 0.0
  %4551 = vmatpush1.msra.mxu0 0.0
  %4552 = vmatprep.subr.mxu0 0.0
  %4553 = vmatpush1.msra.mxu0 0.0
  %4554 = vmatprep.subr.mxu0 0.0
  %4555 = vmatpush1.msra.mxu0 0.0
  %4556 = vmatprep.mubr.f32.mxu0 0.0
  %4557 = vmatmul.mubr.f32.gmra.mrb[0].mxu0 %v4490
  %v4558 = vpop.f32.mrb[0].mxu0
  %v4559 = vadd.f32 0.0, %v4558
  %v4560 = vpop.f32.mrb[0].mxu0
  %4561 = vdwg.mxu0
  %v4562 = vadd.f32 %v4489, %v4559
  %v4563 = vxor.u32 %v4562, 2147483648
  %v4564 = vmul.f32 %v4563, 1.442695
  %v4565 = vpow.pop %v4564
  %v4566 = vadd.f32 %v4565, 1.0
  %v4567 = vrcp.pop %v4566
  %v4568 = vmul.f32 1.0, %v4567
  %v4569 = vtanh.pop %v4562
  %v4570 = vmul.f32 %v4568, %v4477
  %4572 = vrot.lane.b32.xlu0 %v4569, 96
  %v4573 = vpop.permute.xlu0 %4572
  %v4575 = vmul.f32 %v4568, %v4573
  %4577 = vrot.lane.b32.xlu0 %v4575, 16
  %v4578 = vpop.permute.xlu0 %4577
  %v4580 = vadd.f32 %v4570, %v4578
  %v4581 = vtanh.pop %v4580
  %4583 = vrot.lane.b32.xlu0 %v4581, 32
  %v4584 = vpop.permute.xlu0 %4583
  %v4586 = vmul.f32 %v4568, %v4584
  %4588 = vrot.lane.b32.xlu0 %v4586, 80
  %v4589 = vpop.permute.xlu0 %4588
  %4591 = vst.msk [vmem:[#allocation6 + $0x10] sm:$0xff] %vm2203, %v4589
  %v4592 = vld [vmem:[#allocation5 + $0x18] sm:$0xff]
  %v4593 = vsel %vm2203, %v4589, 0
  %4595 = vmatprep.subr.mxu0 0.0
  %4596 = vmatpush1.msra.mxu0 %v4281
  %4597 = vmatprep.subr.mxu0 0.0
  %4598 = vmatpush1.msra.mxu0 %v4282
  %4599 = vmatprep.subr.mxu0 0.0
  %4600 = vmatpush1.msra.mxu0 0.0
  %4601 = vmatprep.subr.mxu0 0.0
  %4602 = vmatpush1.msra.mxu0 0.0
  %4603 = vmatprep.subr.mxu0 0.0
  %4604 = vmatpush1.msra.mxu0 0.0
  %4605 = vmatprep.subr.mxu0 0.0
  %4606 = vmatpush1.msra.mxu0 0.0
  %4607 = vmatprep.subr.mxu0 0.0
  %4608 = vmatpush1.msra.mxu0 0.0
  %4609 = vmatprep.subr.mxu0 0.0
  %4610 = vmatpush1.msra.mxu0 0.0
  %4611 = vmatprep.subr.mxu0 0.0
  %4612 = vmatpush1.msra.mxu0 0.0
  %4613 = vmatprep.subr.mxu0 0.0
  %4614 = vmatpush1.msra.mxu0 0.0
  %4615 = vmatprep.subr.mxu0 0.0
  %4616 = vmatpush1.msra.mxu0 0.0
  %4617 = vmatprep.subr.mxu0 0.0
  %4618 = vmatpush1.msra.mxu0 0.0
  %4619 = vmatprep.subr.mxu0 0.0
  %4620 = vmatpush1.msra.mxu0 0.0
  %4621 = vmatprep.subr.mxu0 0.0
  %4622 = vmatpush1.msra.mxu0 0.0
  %4623 = vmatprep.subr.mxu0 0.0
  %4624 = vmatpush1.msra.mxu0 0.0
  %4625 = vmatprep.subr.mxu0 0.0
  %4626 = vmatpush1.msra.mxu0 0.0
  %4627 = vmatprep.subr.mxu0 0.0
  %4628 = vmatpush1.msra.mxu0 0.0
  %4629 = vmatprep.subr.mxu0 0.0
  %4630 = vmatpush1.msra.mxu0 0.0
  %4631 = vmatprep.subr.mxu0 0.0
  %4632 = vmatpush1.msra.mxu0 0.0
  %4633 = vmatprep.subr.mxu0 0.0
  %4634 = vmatpush1.msra.mxu0 0.0
  %4635 = vmatprep.subr.mxu0 0.0
  %4636 = vmatpush1.msra.mxu0 0.0
  %4637 = vmatprep.subr.mxu0 0.0
  %4638 = vmatpush1.msra.mxu0 0.0
  %4639 = vmatprep.subr.mxu0 0.0
  %4640 = vmatpush1.msra.mxu0 0.0
  %4641 = vmatprep.subr.mxu0 0.0
  %4642 = vmatpush1.msra.mxu0 0.0
  %4643 = vmatprep.subr.mxu0 0.0
  %4644 = vmatpush1.msra.mxu0 0.0
  %4645 = vmatprep.subr.mxu0 0.0
  %4646 = vmatpush1.msra.mxu0 0.0
  %4647 = vmatprep.subr.mxu0 0.0
  %4648 = vmatpush1.msra.mxu0 0.0
  %4649 = vmatprep.subr.mxu0 0.0
  %4650 = vmatpush1.msra.mxu0 0.0
  %4651 = vmatprep.subr.mxu0 0.0
  %4652 = vmatpush1.msra.mxu0 0.0
  %4653 = vmatprep.subr.mxu0 0.0
  %4654 = vmatpush1.msra.mxu0 0.0
  %4655 = vmatprep.subr.mxu0 0.0
  %4656 = vmatpush1.msra.mxu0 0.0
  %4657 = vmatprep.subr.mxu0 0.0
  %4658 = vmatpush1.msra.mxu0 0.0
  %4659 = vmatprep.mubr.f32.mxu0 0.0
  %4660 = vmatmul.mubr.f32.gmra.mrb[0].mxu0 %v4593
  %v4661 = vpop.f32.mrb[0].mxu0
  %v4662 = vadd.f32 0.0, %v4661
  %v4663 = vpop.f32.mrb[0].mxu0
  %4664 = vdwg.mxu0
  %v4665 = vadd.f32 %v4592, %v4662
  %v4666 = vxor.u32 %v4665, 2147483648
  %v4667 = vmul.f32 %v4666, 1.442695
  %v4668 = vpow.pop %v4667
  %v4669 = vadd.f32 %v4668, 1.0
  %v4670 = vrcp.pop %v4669
  %v4671 = vmul.f32 1.0, %v4670
  %v4672 = vtanh.pop %v4665
  %v4673 = vmul.f32 %v4671, %v4580
  %4675 = vrot.lane.b32.xlu0 %v4672, 96
  %v4676 = vpop.permute.xlu0 %4675
  %v4678 = vmul.f32 %v4671, %v4676
  %4680 = vrot.lane.b32.xlu0 %v4678, 16
  %v4681 = vpop.permute.xlu0 %4680
  %v4683 = vadd.f32 %v4673, %v4681
  %v4684 = vtanh.pop %v4683
  %4686 = vrot.lane.b32.xlu0 %v4684, 32
  %v4687 = vpop.permute.xlu0 %4686
  %v4689 = vmul.f32 %v4671, %v4687
  %4691 = vrot.lane.b32.xlu0 %v4689, 80
  %v4692 = vpop.permute.xlu0 %4691
  %4694 = vst.msk [vmem:[#allocation6 + $0x18] sm:$0xff] %vm2203, %v4692
  %v4695 = vld [vmem:[#allocation5 + $0x20] sm:$0xff]
  %v4696 = vsel %vm2203, %v4692, 0
  %4698 = vmatprep.subr.mxu0 0.0
  %4699 = vmatpush1.msra.mxu0 %v4281
  %4700 = vmatprep.subr.mxu0 0.0
  %4701 = vmatpush1.msra.mxu0 %v4282
  %4702 = vmatprep.subr.mxu0 0.0
  %4703 = vmatpush1.msra.mxu0 0.0
  %4704 = vmatprep.subr.mxu0 0.0
  %4705 = vmatpush1.msra.mxu0 0.0
  %4706 = vmatprep.subr.mxu0 0.0
  %4707 = vmatpush1.msra.mxu0 0.0
  %4708 = vmatprep.subr.mxu0 0.0
  %4709 = vmatpush1.msra.mxu0 0.0
  %4710 = vmatprep.subr.mxu0 0.0
  %4711 = vmatpush1.msra.mxu0 0.0
  %4712 = vmatprep.subr.mxu0 0.0
  %4713 = vmatpush1.msra.mxu0 0.0
  %4714 = vmatprep.subr.mxu0 0.0
  %4715 = vmatpush1.msra.mxu0 0.0
  %4716 = vmatprep.subr.mxu0 0.0
  %4717 = vmatpush1.msra.mxu0 0.0
  %4718 = vmatprep.subr.mxu0 0.0
  %4719 = vmatpush1.msra.mxu0 0.0
  %4720 = vmatprep.subr.mxu0 0.0
  %4721 = vmatpush1.msra.mxu0 0.0
  %4722 = vmatprep.subr.mxu0 0.0
  %4723 = vmatpush1.msra.mxu0 0.0
  %4724 = vmatprep.subr.mxu0 0.0
  %4725 = vmatpush1.msra.mxu0 0.0
  %4726 = vmatprep.subr.mxu0 0.0
  %4727 = vmatpush1.msra.mxu0 0.0
  %4728 = vmatprep.subr.mxu0 0.0
  %4729 = vmatpush1.msra.mxu0 0.0
  %4730 = vmatprep.subr.mxu0 0.0
  %4731 = vmatpush1.msra.mxu0 0.0
  %4732 = vmatprep.subr.mxu0 0.0
  %4733 = vmatpush1.msra.mxu0 0.0
  %4734 = vmatprep.subr.mxu0 0.0
  %4735 = vmatpush1.msra.mxu0 0.0
  %4736 = vmatprep.subr.mxu0 0.0
  %4737 = vmatpush1.msra.mxu0 0.0
  %4738 = vmatprep.subr.mxu0 0.0
  %4739 = vmatpush1.msra.mxu0 0.0
  %4740 = vmatprep.subr.mxu0 0.0
  %4741 = vmatpush1.msra.mxu0 0.0
  %4742 = vmatprep.subr.mxu0 0.0
  %4743 = vmatpush1.msra.mxu0 0.0
  %4744 = vmatprep.subr.mxu0 0.0
  %4745 = vmatpush1.msra.mxu0 0.0
  %4746 = vmatprep.subr.mxu0 0.0
  %4747 = vmatpush1.msra.mxu0 0.0
  %4748 = vmatprep.subr.mxu0 0.0
  %4749 = vmatpush1.msra.mxu0 0.0
  %4750 = vmatprep.subr.mxu0 0.0
  %4751 = vmatpush1.msra.mxu0 0.0
  %4752 = vmatprep.subr.mxu0 0.0
  %4753 = vmatpush1.msra.mxu0 0.0
  %4754 = vmatprep.subr.mxu0 0.0
  %4755 = vmatpush1.msra.mxu0 0.0
  %4756 = vmatprep.subr.mxu0 0.0
  %4757 = vmatpush1.msra.mxu0 0.0
  %4758 = vmatprep.subr.mxu0 0.0
  %4759 = vmatpush1.msra.mxu0 0.0
  %4760 = vmatprep.subr.mxu0 0.0
  %4761 = vmatpush1.msra.mxu0 0.0
  %4762 = vmatprep.mubr.f32.mxu0 0.0
  %4763 = vmatmul.mubr.f32.gmra.mrb[0].mxu0 %v4696
  %v4764 = vpop.f32.mrb[0].mxu0
  %v4765 = vadd.f32 0.0, %v4764
  %v4766 = vpop.f32.mrb[0].mxu0
  %4767 = vdwg.mxu0
  %v4768 = vadd.f32 %v4695, %v4765
  %v4769 = vxor.u32 %v4768, 2147483648
  %v4770 = vmul.f32 %v4769, 1.442695
  %v4771 = vpow.pop %v4770
  %v4772 = vadd.f32 %v4771, 1.0
  %v4773 = vrcp.pop %v4772
  %v4774 = vmul.f32 1.0, %v4773
  %v4775 = vtanh.pop %v4768
  %v4776 = vmul.f32 %v4774, %v4683
  %4778 = vrot.lane.b32.xlu0 %v4775, 96
  %v4779 = vpop.permute.xlu0 %4778
  %v4781 = vmul.f32 %v4774, %v4779
  %4783 = vrot.lane.b32.xlu0 %v4781, 16
  %v4784 = vpop.permute.xlu0 %4783
  %v4786 = vadd.f32 %v4776, %v4784
  %v4787 = vtanh.pop %v4786
  %4789 = vrot.lane.b32.xlu0 %v4787, 32
  %v4790 = vpop.permute.xlu0 %4789
  %v4792 = vmul.f32 %v4774, %v4790
  %4794 = vrot.lane.b32.xlu0 %v4792, 80
  %v4795 = vpop.permute.xlu0 %4794
  %4797 = vst.msk [vmem:[#allocation6 + $0x20] sm:$0xff] %vm2203, %v4795
  %v4798 = vld [vmem:[#allocation5 + $0x28] sm:$0xff]
  %v4799 = vsel %vm2203, %v4795, 0
  %4801 = vmatprep.subr.mxu0 0.0
  %4802 = vmatpush1.msra.mxu0 %v4281
  %4803 = vmatprep.subr.mxu0 0.0
  %4804 = vmatpush1.msra.mxu0 %v4282
  %4805 = vmatprep.subr.mxu0 0.0
  %4806 = vmatpush1.msra.mxu0 0.0
  %4807 = vmatprep.subr.mxu0 0.0
  %4808 = vmatpush1.msra.mxu0 0.0
  %4809 = vmatprep.subr.mxu0 0.0
  %4810 = vmatpush1.msra.mxu0 0.0
  %4811 = vmatprep.subr.mxu0 0.0
  %4812 = vmatpush1.msra.mxu0 0.0
  %4813 = vmatprep.subr.mxu0 0.0
  %4814 = vmatpush1.msra.mxu0 0.0
  %4815 = vmatprep.subr.mxu0 0.0
  %4816 = vmatpush1.msra.mxu0 0.0
  %4817 = vmatprep.subr.mxu0 0.0
  %4818 = vmatpush1.msra.mxu0 0.0
  %4819 = vmatprep.subr.mxu0 0.0
  %4820 = vmatpush1.msra.mxu0 0.0
  %4821 = vmatprep.subr.mxu0 0.0
  %4822 = vmatpush1.msra.mxu0 0.0
  %4823 = vmatprep.subr.mxu0 0.0
  %4824 = vmatpush1.msra.mxu0 0.0
  %4825 = vmatprep.subr.mxu0 0.0
  %4826 = vmatpush1.msra.mxu0 0.0
  %4827 = vmatprep.subr.mxu0 0.0
  %4828 = vmatpush1.msra.mxu0 0.0
  %4829 = vmatprep.subr.mxu0 0.0
  %4830 = vmatpush1.msra.mxu0 0.0
  %4831 = vmatprep.subr.mxu0 0.0
  %4832 = vmatpush1.msra.mxu0 0.0
  %4833 = vmatprep.subr.mxu0 0.0
  %4834 = vmatpush1.msra.mxu0 0.0
  %4835 = vmatprep.subr.mxu0 0.0
  %4836 = vmatpush1.msra.mxu0 0.0
  %4837 = vmatprep.subr.mxu0 0.0
  %4838 = vmatpush1.msra.mxu0 0.0
  %4839 = vmatprep.subr.mxu0 0.0
  %4840 = vmatpush1.msra.mxu0 0.0
  %4841 = vmatprep.subr.mxu0 0.0
  %4842 = vmatpush1.msra.mxu0 0.0
  %4843 = vmatprep.subr.mxu0 0.0
  %4844 = vmatpush1.msra.mxu0 0.0
  %4845 = vmatprep.subr.mxu0 0.0
  %4846 = vmatpush1.msra.mxu0 0.0
  %4847 = vmatprep.subr.mxu0 0.0
  %4848 = vmatpush1.msra.mxu0 0.0
  %4849 = vmatprep.subr.mxu0 0.0
  %4850 = vmatpush1.msra.mxu0 0.0
  %4851 = vmatprep.subr.mxu0 0.0
  %4852 = vmatpush1.msra.mxu0 0.0
  %4853 = vmatprep.subr.mxu0 0.0
  %4854 = vmatpush1.msra.mxu0 0.0
  %4855 = vmatprep.subr.mxu0 0.0
  %4856 = vmatpush1.msra.mxu0 0.0
  %4857 = vmatprep.subr.mxu0 0.0
  %4858 = vmatpush1.msra.mxu0 0.0
  %4859 = vmatprep.subr.mxu0 0.0
  %4860 = vmatpush1.msra.mxu0 0.0
  %4861 = vmatprep.subr.mxu0 0.0
  %4862 = vmatpush1.msra.mxu0 0.0
  %4863 = vmatprep.subr.mxu0 0.0
  %4864 = vmatpush1.msra.mxu0 0.0
  %4865 = vmatprep.mubr.f32.mxu0 0.0
  %4866 = vmatmul.mubr.f32.gmra.mrb[0].mxu0 %v4799
  %v4867 = vpop.f32.mrb[0].mxu0
  %v4868 = vadd.f32 0.0, %v4867
  %v4869 = vpop.f32.mrb[0].mxu0
  %4870 = vdwg.mxu0
  %v4871 = vadd.f32 %v4798, %v4868
  %v4872 = vxor.u32 %v4871, 2147483648
  %v4873 = vmul.f32 %v4872, 1.442695
  %v4874 = vpow.pop %v4873
  %v4875 = vadd.f32 %v4874, 1.0
  %v4876 = vrcp.pop %v4875
  %v4877 = vmul.f32 1.0, %v4876
  %v4878 = vtanh.pop %v4871
  %v4879 = vmul.f32 %v4877, %v4786
  %4881 = vrot.lane.b32.xlu0 %v4878, 96
  %v4882 = vpop.permute.xlu0 %4881
  %v4884 = vmul.f32 %v4877, %v4882
  %4886 = vrot.lane.b32.xlu0 %v4884, 16
  %v4887 = vpop.permute.xlu0 %4886
  %v4889 = vadd.f32 %v4879, %v4887
  %v4890 = vtanh.pop %v4889
  %4892 = vrot.lane.b32.xlu0 %v4890, 32
  %v4893 = vpop.permute.xlu0 %4892
  %v4895 = vmul.f32 %v4877, %v4893
  %4897 = vrot.lane.b32.xlu0 %v4895, 80
  %v4898 = vpop.permute.xlu0 %4897
  %4900 = vst.msk [vmem:[#allocation6 + $0x28] sm:$0xff] %vm2203, %v4898
  %v4901 = vld [vmem:[#allocation5 + $0x30] sm:$0xff]
  %v4902 = vsel %vm2203, %v4898, 0
  %4904 = vmatprep.subr.mxu0 0.0
  %4905 = vmatpush1.msra.mxu0 %v4281
  %4906 = vmatprep.subr.mxu0 0.0
  %4907 = vmatpush1.msra.mxu0 %v4282
  %4908 = vmatprep.subr.mxu0 0.0
  %4909 = vmatpush1.msra.mxu0 0.0
  %4910 = vmatprep.subr.mxu0 0.0
  %4911 = vmatpush1.msra.mxu0 0.0
  %4912 = vmatprep.subr.mxu0 0.0
  %4913 = vmatpush1.msra.mxu0 0.0
  %4914 = vmatprep.subr.mxu0 0.0
  %4915 = vmatpush1.msra.mxu0 0.0
  %4916 = vmatprep.subr.mxu0 0.0
  %4917 = vmatpush1.msra.mxu0 0.0
  %4918 = vmatprep.subr.mxu0 0.0
  %4919 = vmatpush1.msra.mxu0 0.0
  %4920 = vmatprep.subr.mxu0 0.0
  %4921 = vmatpush1.msra.mxu0 0.0
  %4922 = vmatprep.subr.mxu0 0.0
  %4923 = vmatpush1.msra.mxu0 0.0
  %4924 = vmatprep.subr.mxu0 0.0
  %4925 = vmatpush1.msra.mxu0 0.0
  %4926 = vmatprep.subr.mxu0 0.0
  %4927 = vmatpush1.msra.mxu0 0.0
  %4928 = vmatprep.subr.mxu0 0.0
  %4929 = vmatpush1.msra.mxu0 0.0
  %4930 = vmatprep.subr.mxu0 0.0
  %4931 = vmatpush1.msra.mxu0 0.0
  %4932 = vmatprep.subr.mxu0 0.0
  %4933 = vmatpush1.msra.mxu0 0.0
  %4934 = vmatprep.subr.mxu0 0.0
  %4935 = vmatpush1.msra.mxu0 0.0
  %4936 = vmatprep.subr.mxu0 0.0
  %4937 = vmatpush1.msra.mxu0 0.0
  %4938 = vmatprep.subr.mxu0 0.0
  %4939 = vmatpush1.msra.mxu0 0.0
  %4940 = vmatprep.subr.mxu0 0.0
  %4941 = vmatpush1.msra.mxu0 0.0
  %4942 = vmatprep.subr.mxu0 0.0
  %4943 = vmatpush1.msra.mxu0 0.0
  %4944 = vmatprep.subr.mxu0 0.0
  %4945 = vmatpush1.msra.mxu0 0.0
  %4946 = vmatprep.subr.mxu0 0.0
  %4947 = vmatpush1.msra.mxu0 0.0
  %4948 = vmatprep.subr.mxu0 0.0
  %4949 = vmatpush1.msra.mxu0 0.0
  %4950 = vmatprep.subr.mxu0 0.0
  %4951 = vmatpush1.msra.mxu0 0.0
  %4952 = vmatprep.subr.mxu0 0.0
  %4953 = vmatpush1.msra.mxu0 0.0
  %4954 = vmatprep.subr.mxu0 0.0
  %4955 = vmatpush1.msra.mxu0 0.0
  %4956 = vmatprep.subr.mxu0 0.0
  %4957 = vmatpush1.msra.mxu0 0.0
  %4958 = vmatprep.subr.mxu0 0.0
  %4959 = vmatpush1.msra.mxu0 0.0
  %4960 = vmatprep.subr.mxu0 0.0
  %4961 = vmatpush1.msra.mxu0 0.0
  %4962 = vmatprep.subr.mxu0 0.0
  %4963 = vmatpush1.msra.mxu0 0.0
  %4964 = vmatprep.subr.mxu0 0.0
  %4965 = vmatpush1.msra.mxu0 0.0
  %4966 = vmatprep.subr.mxu0 0.0
  %4967 = vmatpush1.msra.mxu0 0.0
  %4968 = vmatprep.mubr.f32.mxu0 0.0
  %4969 = vmatmul.mubr.f32.gmra.mrb[0].mxu0 %v4902
  %v4970 = vpop.f32.mrb[0].mxu0
  %v4971 = vadd.f32 0.0, %v4970
  %v4972 = vpop.f32.mrb[0].mxu0
  %4973 = vdwg.mxu0
  %v4974 = vadd.f32 %v4901, %v4971
  %v4975 = vxor.u32 %v4974, 2147483648
  %v4976 = vmul.f32 %v4975, 1.442695
  %v4977 = vpow.pop %v4976
  %v4978 = vadd.f32 %v4977, 1.0
  %v4979 = vrcp.pop %v4978
  %v4980 = vmul.f32 1.0, %v4979
  %v4981 = vtanh.pop %v4974
  %v4982 = vmul.f32 %v4980, %v4889
  %4984 = vrot.lane.b32.xlu0 %v4981, 96
  %v4985 = vpop.permute.xlu0 %4984
  %v4987 = vmul.f32 %v4980, %v4985
  %4989 = vrot.lane.b32.xlu0 %v4987, 16
  %v4990 = vpop.permute.xlu0 %4989
  %v4992 = vadd.f32 %v4982, %v4990
  %v4993 = vtanh.pop %v4992
  %4995 = vrot.lane.b32.xlu0 %v4993, 32
  %v4996 = vpop.permute.xlu0 %4995
  %v4998 = vmul.f32 %v4980, %v4996
  %5000 = vrot.lane.b32.xlu0 %v4998, 80
  %v5001 = vpop.permute.xlu0 %5000
  %5003 = vst.msk [vmem:[#allocation6 + $0x30] sm:$0xff] %vm2203, %v5001
  %v5004 = vld [vmem:[#allocation5 + $0x38] sm:$0xff]
  %v5005 = vsel %vm2203, %v5001, 0
  %5007 = vmatprep.subr.mxu0 0.0
  %5008 = vmatpush1.msra.mxu0 %v4281
  %5009 = vmatprep.subr.mxu0 0.0
  %5010 = vmatpush1.msra.mxu0 %v4282
  %5011 = vmatprep.subr.mxu0 0.0
  %5012 = vmatpush1.msra.mxu0 0.0
  %5013 = vmatprep.subr.mxu0 0.0
  %5014 = vmatpush1.msra.mxu0 0.0
  %5015 = vmatprep.subr.mxu0 0.0
  %5016 = vmatpush1.msra.mxu0 0.0
  %5017 = vmatprep.subr.mxu0 0.0
  %5018 = vmatpush1.msra.mxu0 0.0
  %5019 = vmatprep.subr.mxu0 0.0
  %5020 = vmatpush1.msra.mxu0 0.0
  %5021 = vmatprep.subr.mxu0 0.0
  %5022 = vmatpush1.msra.mxu0 0.0
  %5023 = vmatprep.subr.mxu0 0.0
  %5024 = vmatpush1.msra.mxu0 0.0
  %5025 = vmatprep.subr.mxu0 0.0
  %5026 = vmatpush1.msra.mxu0 0.0
  %5027 = vmatprep.subr.mxu0 0.0
  %5028 = vmatpush1.msra.mxu0 0.0
  %5029 = vmatprep.subr.mxu0 0.0
  %5030 = vmatpush1.msra.mxu0 0.0
  %5031 = vmatprep.subr.mxu0 0.0
  %5032 = vmatpush1.msra.mxu0 0.0
  %5033 = vmatprep.subr.mxu0 0.0
  %5034 = vmatpush1.msra.mxu0 0.0
  %5035 = vmatprep.subr.mxu0 0.0
  %5036 = vmatpush1.msra.mxu0 0.0
  %5037 = vmatprep.subr.mxu0 0.0
  %5038 = vmatpush1.msra.mxu0 0.0
  %5039 = vmatprep.subr.mxu0 0.0
  %5040 = vmatpush1.msra.mxu0 0.0
  %5041 = vmatprep.subr.mxu0 0.0
  %5042 = vmatpush1.msra.mxu0 0.0
  %5043 = vmatprep.subr.mxu0 0.0
  %5044 = vmatpush1.msra.mxu0 0.0
  %5045 = vmatprep.subr.mxu0 0.0
  %5046 = vmatpush1.msra.mxu0 0.0
  %5047 = vmatprep.subr.mxu0 0.0
  %5048 = vmatpush1.msra.mxu0 0.0
  %5049 = vmatprep.subr.mxu0 0.0
  %5050 = vmatpush1.msra.mxu0 0.0
  %5051 = vmatprep.subr.mxu0 0.0
  %5052 = vmatpush1.msra.mxu0 0.0
  %5053 = vmatprep.subr.mxu0 0.0
  %5054 = vmatpush1.msra.mxu0 0.0
  %5055 = vmatprep.subr.mxu0 0.0
  %5056 = vmatpush1.msra.mxu0 0.0
  %5057 = vmatprep.subr.mxu0 0.0
  %5058 = vmatpush1.msra.mxu0 0.0
  %5059 = vmatprep.subr.mxu0 0.0
  %5060 = vmatpush1.msra.mxu0 0.0
  %5061 = vmatprep.subr.mxu0 0.0
  %5062 = vmatpush1.msra.mxu0 0.0
  %5063 = vmatprep.subr.mxu0 0.0
  %5064 = vmatpush1.msra.mxu0 0.0
  %5065 = vmatprep.subr.mxu0 0.0
  %5066 = vmatpush1.msra.mxu0 0.0
  %5067 = vmatprep.subr.mxu0 0.0
  %5068 = vmatpush1.msra.mxu0 0.0
  %5069 = vmatprep.subr.mxu0 0.0
  %5070 = vmatpush1.msra.mxu0 0.0
  %5071 = vmatprep.mubr.f32.mxu0 0.0
  %5072 = vmatmul.mubr.f32.gmra.mrb[0].mxu0 %v5005
  %v5073 = vpop.f32.mrb[0].mxu0
  %v5074 = vadd.f32 0.0, %v5073
  %v5075 = vpop.f32.mrb[0].mxu0
  %5076 = vdwg.mxu0
  %v5077 = vadd.f32 %v5004, %v5074
  %v5078 = vxor.u32 %v5077, 2147483648
  %v5079 = vmul.f32 %v5078, 1.442695
  %v5080 = vpow.pop %v5079
  %v5081 = vadd.f32 %v5080, 1.0
  %v5082 = vrcp.pop %v5081
  %v5083 = vmul.f32 1.0, %v5082
  %v5084 = vtanh.pop %v5077
  %v5085 = vmul.f32 %v5083, %v4992
  %5087 = vrot.lane.b32.xlu0 %v5084, 96
  %v5088 = vpop.permute.xlu0 %5087
  %v5090 = vmul.f32 %v5083, %v5088
  %5092 = vrot.lane.b32.xlu0 %v5090, 16
  %v5093 = vpop.permute.xlu0 %5092
  %v5095 = vadd.f32 %v5085, %v5093
  %v5096 = vtanh.pop %v5095
  %5098 = vrot.lane.b32.xlu0 %v5096, 32
  %v5099 = vpop.permute.xlu0 %5098
  %v5101 = vmul.f32 %v5083, %v5099
  %5103 = vrot.lane.b32.xlu0 %v5101, 80
  %v5104 = vpop.permute.xlu0 %5103
  %5106 = vst.msk [vmem:[#allocation6 + $0x38] sm:$0xff] %vm2203, %v5104
  %v5107 = vld [vmem:[#allocation6] sm:$0xff]
  %v5108 = vld [vmem:[#allocation6 + $0x8] sm:$0xff]
  %v5109 = vld [vmem:[#allocation6 + $0x10] sm:$0xff]
  %v5110 = vld [vmem:[#allocation6 + $0x18] sm:$0xff]
  %v5111 = vld [vmem:[#allocation6 + $0x20] sm:$0xff]
  %v5112 = vld [vmem:[#allocation6 + $0x28] sm:$0xff]
  %v5113 = vld [vmem:[#allocation6 + $0x30] sm:$0xff]
  %v5114 = vld [vmem:[#allocation6 + $0x38] sm:$0xff]
  %v5115 = vld [vmem:[%s21] sm:$0xff]
  %v5116 = vld [vmem:[%s21 + $0x8] sm:$0xff]
  %v5117 = vld [vmem:[%s23] sm:$0x1]
  %v5119 = vlaneseq
  %v5120 = vshrl.u32 %v5119, 7
  %v5121 = vsub.s32 0, %v5120
  %v5122 = vrot.slane %v5117, %v5121
  %v5125 = vsel %vm2203, %v5107, 0
  %v5128 = vsel %vm2203, %v5108, 0
  %v5131 = vsel %vm2203, %v5109, 0
  %v5134 = vsel %vm2203, %v5110, 0
  %v5137 = vsel %vm2203, %v5111, 0
  %v5140 = vsel %vm2203, %v5112, 0
  %v5143 = vsel %vm2203, %v5113, 0
  %v5146 = vsel %vm2203, %v5114, 0
  %5148 = vmatprep.subr.mxu0 0.0
  %5149 = vmatpush1.msra.mxu0 %v5115
  %5150 = vmatprep.subr.mxu0 0.0
  %5151 = vmatpush1.msra.mxu0 %v5116
  %5152 = vmatprep.subr.mxu0 0.0
  %5153 = vmatpush1.msra.mxu0 0.0
  %5154 = vmatprep.subr.mxu0 0.0
  %5155 = vmatpush1.msra.mxu0 0.0
  %5156 = vmatprep.subr.mxu0 0.0
  %5157 = vmatpush1.msra.mxu0 0.0
  %5158 = vmatprep.subr.mxu0 0.0
  %5159 = vmatpush1.msra.mxu0 0.0
  %5160 = vmatprep.subr.mxu0 0.0
  %5161 = vmatpush1.msra.mxu0 0.0
  %5162 = vmatprep.subr.mxu0 0.0
  %5163 = vmatpush1.msra.mxu0 0.0
  %5164 = vmatprep.subr.mxu0 0.0
  %5165 = vmatpush1.msra.mxu0 0.0
  %5166 = vmatprep.subr.mxu0 0.0
  %5167 = vmatpush1.msra.mxu0 0.0
  %5168 = vmatprep.subr.mxu0 0.0
  %5169 = vmatpush1.msra.mxu0 0.0
  %5170 = vmatprep.subr.mxu0 0.0
  %5171 = vmatpush1.msra.mxu0 0.0
  %5172 = vmatprep.subr.mxu0 0.0
  %5173 = vmatpush1.msra.mxu0 0.0
  %5174 = vmatprep.subr.mxu0 0.0
  %5175 = vmatpush1.msra.mxu0 0.0
  %5176 = vmatprep.subr.mxu0 0.0
  %5177 = vmatpush1.msra.mxu0 0.0
  %5178 = vmatprep.subr.mxu0 0.0
  %5179 = vmatpush1.msra.mxu0 0.0
  %5180 = vmatprep.subr.mxu0 0.0
  %5181 = vmatpush1.msra.mxu0 0.0
  %5182 = vmatprep.subr.mxu0 0.0
  %5183 = vmatpush1.msra.mxu0 0.0
  %5184 = vmatprep.subr.mxu0 0.0
  %5185 = vmatpush1.msra.mxu0 0.0
  %5186 = vmatprep.subr.mxu0 0.0
  %5187 = vmatpush1.msra.mxu0 0.0
  %5188 = vmatprep.subr.mxu0 0.0
  %5189 = vmatpush1.msra.mxu0 0.0
  %5190 = vmatprep.subr.mxu0 0.0
  %5191 = vmatpush1.msra.mxu0 0.0
  %5192 = vmatprep.subr.mxu0 0.0
  %5193 = vmatpush1.msra.mxu0 0.0
  %5194 = vmatprep.subr.mxu0 0.0
  %5195 = vmatpush1.msra.mxu0 0.0
  %5196 = vmatprep.subr.mxu0 0.0
  %5197 = vmatpush1.msra.mxu0 0.0
  %5198 = vmatprep.subr.mxu0 0.0
  %5199 = vmatpush1.msra.mxu0 0.0
  %5200 = vmatprep.subr.mxu0 0.0
  %5201 = vmatpush1.msra.mxu0 0.0
  %5202 = vmatprep.subr.mxu0 0.0
  %5203 = vmatpush1.msra.mxu0 0.0
  %5204 = vmatprep.subr.mxu0 0.0
  %5205 = vmatpush1.msra.mxu0 0.0
  %5206 = vmatprep.subr.mxu0 0.0
  %5207 = vmatpush1.msra.mxu0 0.0
  %5208 = vmatprep.subr.mxu0 0.0
  %5209 = vmatpush1.msra.mxu0 0.0
  %5210 = vmatprep.subr.mxu0 0.0
  %5211 = vmatpush1.msra.mxu0 0.0
  %5212 = vmatprep.mubr.f32.mxu0 0.0
  %5213 = vmatmul.mubr.f32.gmra.mrb[0].mxu0 %v5125
  %v5214 = vpop.f32.mrb[0].mxu0
  %v5215 = vadd.f32 %v5122, %v5214
  %v5216 = vpop.f32.mrb[0].mxu0
  %5217 = vmatprep.mubr.f32.mxu0 0.0
  %5218 = vmatmul.mubr.f32.gmra.mrb[0].mxu0 %v5128
  %v5219 = vpop.f32.mrb[0].mxu0
  %v5220 = vadd.f32 %v5122, %v5219
  %v5221 = vpop.f32.mrb[0].mxu0
  %5222 = vmatprep.mubr.f32.mxu0 0.0
  %5223 = vmatmul.mubr.f32.gmra.mrb[0].mxu0 %v5131
  %v5224 = vpop.f32.mrb[0].mxu0
  %v5225 = vadd.f32 %v5122, %v5224
  %v5226 = vpop.f32.mrb[0].mxu0
  %5227 = vmatprep.mubr.f32.mxu0 0.0
  %5228 = vmatmul.mubr.f32.gmra.mrb[0].mxu0 %v5134
  %v5229 = vpop.f32.mrb[0].mxu0
  %v5230 = vadd.f32 %v5122, %v5229
  %v5231 = vpop.f32.mrb[0].mxu0
  %5232 = vmatprep.mubr.f32.mxu0 0.0
  %5233 = vmatmul.mubr.f32.gmra.mrb[0].mxu0 %v5137
  %v5234 = vpop.f32.mrb[0].mxu0
  %v5235 = vadd.f32 %v5122, %v5234
  %v5236 = vpop.f32.mrb[0].mxu0
  %5237 = vmatprep.mubr.f32.mxu0 0.0
  %5238 = vmatmul.mubr.f32.gmra.mrb[0].mxu0 %v5140
  %v5239 = vpop.f32.mrb[0].mxu0
  %v5240 = vadd.f32 %v5122, %v5239
  %v5241 = vpop.f32.mrb[0].mxu0
  %5242 = vmatprep.mubr.f32.mxu0 0.0
  %5243 = vmatmul.mubr.f32.gmra.mrb[0].mxu0 %v5143
  %v5244 = vpop.f32.mrb[0].mxu0
  %v5245 = vadd.f32 %v5122, %v5244
  %v5246 = vpop.f32.mrb[0].mxu0
  %5247 = vmatprep.mubr.f32.mxu0 0.0
  %5248 = vmatmul.mubr.f32.gmra.mrb[0].mxu0 %v5146
  %v5249 = vpop.f32.mrb[0].mxu0
  %v5250 = vadd.f32 %v5122, %v5249
  %v5251 = vpop.f32.mrb[0].mxu0
  %5252 = vdwg.mxu0
  %5253 = vst.msk [vmem:[#allocation5] sm:$0xff] %vm4272, %v5215
  %5254 = vst.msk [vmem:[#allocation5 + $0x8] sm:$0xff] %vm4272, %v5220
  %5255 = vst.msk [vmem:[#allocation5 + $0x10] sm:$0xff] %vm4272, %v5225
  %5256 = vst.msk [vmem:[#allocation5 + $0x18] sm:$0xff] %vm4272, %v5230
  %5257 = vst.msk [vmem:[#allocation5 + $0x20] sm:$0xff] %vm4272, %v5235
  %5258 = vst.msk [vmem:[#allocation5 + $0x28] sm:$0xff] %vm4272, %v5240
  %5259 = vst.msk [vmem:[#allocation5 + $0x30] sm:$0xff] %vm4272, %v5245
  %5260 = vst.msk [vmem:[#allocation5 + $0x38] sm:$0xff] %vm4272, %v5250
  %v5261 = vld [vmem:[%s22] sm:$0xff]
  %v5262 = vld [vmem:[%s22 + $0x8] sm:$0xff]
  %v5263 = vld [vmem:[#allocation5] sm:$0xff]
  %5264 = vmatprep.subr.mxu0 0.0
  %5265 = vmatpush1.msra.mxu0 %v5261
  %5266 = vmatprep.subr.mxu0 0.0
  %5267 = vmatpush1.msra.mxu0 %v5262
  %5268 = vmatprep.subr.mxu0 0.0
  %5269 = vmatpush1.msra.mxu0 0.0
  %5270 = vmatprep.subr.mxu0 0.0
  %5271 = vmatpush1.msra.mxu0 0.0
  %5272 = vmatprep.subr.mxu0 0.0
  %5273 = vmatpush1.msra.mxu0 0.0
  %5274 = vmatprep.subr.mxu0 0.0
  %5275 = vmatpush1.msra.mxu0 0.0
  %5276 = vmatprep.subr.mxu0 0.0
  %5277 = vmatpush1.msra.mxu0 0.0
  %5278 = vmatprep.subr.mxu0 0.0
  %5279 = vmatpush1.msra.mxu0 0.0
  %5280 = vmatprep.subr.mxu0 0.0
  %5281 = vmatpush1.msra.mxu0 0.0
  %5282 = vmatprep.subr.mxu0 0.0
  %5283 = vmatpush1.msra.mxu0 0.0
  %5284 = vmatprep.subr.mxu0 0.0
  %5285 = vmatpush1.msra.mxu0 0.0
  %5286 = vmatprep.subr.mxu0 0.0
  %5287 = vmatpush1.msra.mxu0 0.0
  %5288 = vmatprep.subr.mxu0 0.0
  %5289 = vmatpush1.msra.mxu0 0.0
  %5290 = vmatprep.subr.mxu0 0.0
  %5291 = vmatpush1.msra.mxu0 0.0
  %5292 = vmatprep.subr.mxu0 0.0
  %5293 = vmatpush1.msra.mxu0 0.0
  %5294 = vmatprep.subr.mxu0 0.0
  %5295 = vmatpush1.msra.mxu0 0.0
  %5296 = vmatprep.subr.mxu0 0.0
  %5297 = vmatpush1.msra.mxu0 0.0
  %5298 = vmatprep.subr.mxu0 0.0
  %5299 = vmatpush1.msra.mxu0 0.0
  %5300 = vmatprep.subr.mxu0 0.0
  %5301 = vmatpush1.msra.mxu0 0.0
  %5302 = vmatprep.subr.mxu0 0.0
  %5303 = vmatpush1.msra.mxu0 0.0
  %5304 = vmatprep.subr.mxu0 0.0
  %5305 = vmatpush1.msra.mxu0 0.0
  %5306 = vmatprep.subr.mxu0 0.0
  %5307 = vmatpush1.msra.mxu0 0.0
  %5308 = vmatprep.subr.mxu0 0.0
  %5309 = vmatpush1.msra.mxu0 0.0
  %5310 = vmatprep.subr.mxu0 0.0
  %5311 = vmatpush1.msra.mxu0 0.0
  %5312 = vmatprep.subr.mxu0 0.0
  %5313 = vmatpush1.msra.mxu0 0.0
  %5314 = vmatprep.subr.mxu0 0.0
  %5315 = vmatpush1.msra.mxu0 0.0
  %5316 = vmatprep.subr.mxu0 0.0
  %5317 = vmatpush1.msra.mxu0 0.0
  %5318 = vmatprep.subr.mxu0 0.0
  %5319 = vmatpush1.msra.mxu0 0.0
  %5320 = vmatprep.subr.mxu0 0.0
  %5321 = vmatpush1.msra.mxu0 0.0
  %5322 = vmatprep.subr.mxu0 0.0
  %5323 = vmatpush1.msra.mxu0 0.0
  %5324 = vmatprep.subr.mxu0 0.0
  %5325 = vmatpush1.msra.mxu0 0.0
  %5326 = vmatprep.subr.mxu0 0.0
  %5327 = vmatpush1.msra.mxu0 0.0
  %5328 = vmatprep.mubr.f32.mxu0 0.0
  %5329 = vmatmul.mubr.f32.gmra.mrb[0].mxu0 %v4284
  %v5330 = vpop.f32.mrb[0].mxu0
  %v5331 = vadd.f32 0.0, %v5330
  %v5332 = vpop.f32.mrb[0].mxu0
  %5333 = vdwg.mxu0
  %v5334 = vadd.f32 %v5263, %v5331
  %v5335 = vxor.u32 %v5334, 2147483648
  %v5336 = vmul.f32 %v5335, 1.442695
  %v5337 = vpow.pop %v5336
  %v5338 = vadd.f32 %v5337, 1.0
  %v5339 = vrcp.pop %v5338
  %v5340 = vmul.f32 1.0, %v5339
  %v5341 = vtanh.pop %v5334
  %v5342 = vmul.f32 %v5340, 0.0
  %5344 = vrot.lane.b32.xlu0 %v5341, 96
  %v5345 = vpop.permute.xlu0 %5344
  %v5347 = vmul.f32 %v5340, %v5345
  %5349 = vrot.lane.b32.xlu0 %v5347, 16
  %v5350 = vpop.permute.xlu0 %5349
  %v5352 = vadd.f32 %v5342, %v5350
  %v5353 = vtanh.pop %v5352
  %5355 = vrot.lane.b32.xlu0 %v5353, 32
  %v5356 = vpop.permute.xlu0 %5355
  %v5358 = vmul.f32 %v5340, %v5356
  %v5359 = vtanh.pop %v5358
  %5361 = vrot.lane.b32.xlu0 %v5359, 80
  %v5362 = vpop.permute.xlu0 %5361
  %5364 = vst.msk [vmem:[%s24] sm:$0xff] %vm2203, %v5362
  %v5365 = vld [vmem:[#allocation5 + $0x8] sm:$0xff]
  %5367 = vrot.lane.b32.xlu0 %v5358, 80
  %v5368 = vpop.permute.xlu0 %5367
  %v5369 = vsel %vm2203, %v5368, 0
  %5371 = vmatprep.subr.mxu0 0.0
  %5372 = vmatpush1.msra.mxu0 %v5261
  %5373 = vmatprep.subr.mxu0 0.0
  %5374 = vmatpush1.msra.mxu0 %v5262
  %5375 = vmatprep.subr.mxu0 0.0
  %5376 = vmatpush1.msra.mxu0 0.0
  %5377 = vmatprep.subr.mxu0 0.0
  %5378 = vmatpush1.msra.mxu0 0.0
  %5379 = vmatprep.subr.mxu0 0.0
  %5380 = vmatpush1.msra.mxu0 0.0
  %5381 = vmatprep.subr.mxu0 0.0
  %5382 = vmatpush1.msra.mxu0 0.0
  %5383 = vmatprep.subr.mxu0 0.0
  %5384 = vmatpush1.msra.mxu0 0.0
  %5385 = vmatprep.subr.mxu0 0.0
  %5386 = vmatpush1.msra.mxu0 0.0
  %5387 = vmatprep.subr.mxu0 0.0
  %5388 = vmatpush1.msra.mxu0 0.0
  %5389 = vmatprep.subr.mxu0 0.0
  %5390 = vmatpush1.msra.mxu0 0.0
  %5391 = vmatprep.subr.mxu0 0.0
  %5392 = vmatpush1.msra.mxu0 0.0
  %5393 = vmatprep.subr.mxu0 0.0
  %5394 = vmatpush1.msra.mxu0 0.0
  %5395 = vmatprep.subr.mxu0 0.0
  %5396 = vmatpush1.msra.mxu0 0.0
  %5397 = vmatprep.subr.mxu0 0.0
  %5398 = vmatpush1.msra.mxu0 0.0
  %5399 = vmatprep.subr.mxu0 0.0
  %5400 = vmatpush1.msra.mxu0 0.0
  %5401 = vmatprep.subr.mxu0 0.0
  %5402 = vmatpush1.msra.mxu0 0.0
  %5403 = vmatprep.subr.mxu0 0.0
  %5404 = vmatpush1.msra.mxu0 0.0
  %5405 = vmatprep.subr.mxu0 0.0
  %5406 = vmatpush1.msra.mxu0 0.0
  %5407 = vmatprep.subr.mxu0 0.0
  %5408 = vmatpush1.msra.mxu0 0.0
  %5409 = vmatprep.subr.mxu0 0.0
  %5410 = vmatpush1.msra.mxu0 0.0
  %5411 = vmatprep.subr.mxu0 0.0
  %5412 = vmatpush1.msra.mxu0 0.0
  %5413 = vmatprep.subr.mxu0 0.0
  %5414 = vmatpush1.msra.mxu0 0.0
  %5415 = vmatprep.subr.mxu0 0.0
  %5416 = vmatpush1.msra.mxu0 0.0
  %5417 = vmatprep.subr.mxu0 0.0
  %5418 = vmatpush1.msra.mxu0 0.0
  %5419 = vmatprep.subr.mxu0 0.0
  %5420 = vmatpush1.msra.mxu0 0.0
  %5421 = vmatprep.subr.mxu0 0.0
  %5422 = vmatpush1.msra.mxu0 0.0
  %5423 = vmatprep.subr.mxu0 0.0
  %5424 = vmatpush1.msra.mxu0 0.0
  %5425 = vmatprep.subr.mxu0 0.0
  %5426 = vmatpush1.msra.mxu0 0.0
  %5427 = vmatprep.subr.mxu0 0.0
  %5428 = vmatpush1.msra.mxu0 0.0
  %5429 = vmatprep.subr.mxu0 0.0
  %5430 = vmatpush1.msra.mxu0 0.0
  %5431 = vmatprep.subr.mxu0 0.0
  %5432 = vmatpush1.msra.mxu0 0.0
  %5433 = vmatprep.subr.mxu0 0.0
  %5434 = vmatpush1.msra.mxu0 0.0
  %5435 = vmatprep.mubr.f32.mxu0 0.0
  %5436 = vmatmul.mubr.f32.gmra.mrb[0].mxu0 %v5369
  %v5437 = vpop.f32.mrb[0].mxu0
  %v5438 = vadd.f32 0.0, %v5437
  %v5439 = vpop.f32.mrb[0].mxu0
  %5440 = vdwg.mxu0
  %v5441 = vadd.f32 %v5365, %v5438
  %v5442 = vxor.u32 %v5441, 2147483648
  %v5443 = vmul.f32 %v5442, 1.442695
  %v5444 = vpow.pop %v5443
  %v5445 = vadd.f32 %v5444, 1.0
  %v5446 = vrcp.pop %v5445
  %v5447 = vmul.f32 1.0, %v5446
  %v5448 = vtanh.pop %v5441
  %v5449 = vmul.f32 %v5447, %v5352
  %5451 = vrot.lane.b32.xlu0 %v5448, 96
  %v5452 = vpop.permute.xlu0 %5451
  %v5454 = vmul.f32 %v5447, %v5452
  %5456 = vrot.lane.b32.xlu0 %v5454, 16
  %v5457 = vpop.permute.xlu0 %5456
  %v5459 = vadd.f32 %v5449, %v5457
  %v5460 = vtanh.pop %v5459
  %5462 = vrot.lane.b32.xlu0 %v5460, 32
  %v5463 = vpop.permute.xlu0 %5462
  %v5465 = vmul.f32 %v5447, %v5463
  %v5466 = vtanh.pop %v5465
  %5468 = vrot.lane.b32.xlu0 %v5466, 80
  %v5469 = vpop.permute.xlu0 %5468
  %5471 = vst.msk [vmem:[%s24 + $0x8] sm:$0xff] %vm2203, %v5469
  %v5472 = vld [vmem:[#allocation5 + $0x10] sm:$0xff]
  %5474 = vrot.lane.b32.xlu0 %v5465, 80
  %v5475 = vpop.permute.xlu0 %5474
  %v5476 = vsel %vm2203, %v5475, 0
  %5478 = vmatprep.subr.mxu0 0.0
  %5479 = vmatpush1.msra.mxu0 %v5261
  %5480 = vmatprep.subr.mxu0 0.0
  %5481 = vmatpush1.msra.mxu0 %v5262
  %5482 = vmatprep.subr.mxu0 0.0
  %5483 = vmatpush1.msra.mxu0 0.0
  %5484 = vmatprep.subr.mxu0 0.0
  %5485 = vmatpush1.msra.mxu0 0.0
  %5486 = vmatprep.subr.mxu0 0.0
  %5487 = vmatpush1.msra.mxu0 0.0
  %5488 = vmatprep.subr.mxu0 0.0
  %5489 = vmatpush1.msra.mxu0 0.0
  %5490 = vmatprep.subr.mxu0 0.0
  %5491 = vmatpush1.msra.mxu0 0.0
  %5492 = vmatprep.subr.mxu0 0.0
  %5493 = vmatpush1.msra.mxu0 0.0
  %5494 = vmatprep.subr.mxu0 0.0
  %5495 = vmatpush1.msra.mxu0 0.0
  %5496 = vmatprep.subr.mxu0 0.0
  %5497 = vmatpush1.msra.mxu0 0.0
  %5498 = vmatprep.subr.mxu0 0.0
  %5499 = vmatpush1.msra.mxu0 0.0
  %5500 = vmatprep.subr.mxu0 0.0
  %5501 = vmatpush1.msra.mxu0 0.0
  %5502 = vmatprep.subr.mxu0 0.0
  %5503 = vmatpush1.msra.mxu0 0.0
  %5504 = vmatprep.subr.mxu0 0.0
  %5505 = vmatpush1.msra.mxu0 0.0
  %5506 = vmatprep.subr.mxu0 0.0
  %5507 = vmatpush1.msra.mxu0 0.0
  %5508 = vmatprep.subr.mxu0 0.0
  %5509 = vmatpush1.msra.mxu0 0.0
  %5510 = vmatprep.subr.mxu0 0.0
  %5511 = vmatpush1.msra.mxu0 0.0
  %5512 = vmatprep.subr.mxu0 0.0
  %5513 = vmatpush1.msra.mxu0 0.0
  %5514 = vmatprep.subr.mxu0 0.0
  %5515 = vmatpush1.msra.mxu0 0.0
  %5516 = vmatprep.subr.mxu0 0.0
  %5517 = vmatpush1.msra.mxu0 0.0
  %5518 = vmatprep.subr.mxu0 0.0
  %5519 = vmatpush1.msra.mxu0 0.0
  %5520 = vmatprep.subr.mxu0 0.0
  %5521 = vmatpush1.msra.mxu0 0.0
  %5522 = vmatprep.subr.mxu0 0.0
  %5523 = vmatpush1.msra.mxu0 0.0
  %5524 = vmatprep.subr.mxu0 0.0
  %5525 = vmatpush1.msra.mxu0 0.0
  %5526 = vmatprep.subr.mxu0 0.0
  %5527 = vmatpush1.msra.mxu0 0.0
  %5528 = vmatprep.subr.mxu0 0.0
  %5529 = vmatpush1.msra.mxu0 0.0
  %5530 = vmatprep.subr.mxu0 0.0
  %5531 = vmatpush1.msra.mxu0 0.0
  %5532 = vmatprep.subr.mxu0 0.0
  %5533 = vmatpush1.msra.mxu0 0.0
  %5534 = vmatprep.subr.mxu0 0.0
  %5535 = vmatpush1.msra.mxu0 0.0
  %5536 = vmatprep.subr.mxu0 0.0
  %5537 = vmatpush1.msra.mxu0 0.0
  %5538 = vmatprep.subr.mxu0 0.0
  %5539 = vmatpush1.msra.mxu0 0.0
  %5540 = vmatprep.subr.mxu0 0.0
  %5541 = vmatpush1.msra.mxu0 0.0
  %5542 = vmatprep.mubr.f32.mxu0 0.0
  %5543 = vmatmul.mubr.f32.gmra.mrb[0].mxu0 %v5476
  %v5544 = vpop.f32.mrb[0].mxu0
  %v5545 = vadd.f32 0.0, %v5544
  %v5546 = vpop.f32.mrb[0].mxu0
  %5547 = vdwg.mxu0
  %v5548 = vadd.f32 %v5472, %v5545
  %v5549 = vxor.u32 %v5548, 2147483648
  %v5550 = vmul.f32 %v5549, 1.442695
  %v5551 = vpow.pop %v5550
  %v5552 = vadd.f32 %v5551, 1.0
  %v5553 = vrcp.pop %v5552
  %v5554 = vmul.f32 1.0, %v5553
  %v5555 = vtanh.pop %v5548
  %v5556 = vmul.f32 %v5554, %v5459
  %5558 = vrot.lane.b32.xlu0 %v5555, 96
  %v5559 = vpop.permute.xlu0 %5558
  %v5561 = vmul.f32 %v5554, %v5559
  %5563 = vrot.lane.b32.xlu0 %v5561, 16
  %v5564 = vpop.permute.xlu0 %5563
  %v5566 = vadd.f32 %v5556, %v5564
  %v5567 = vtanh.pop %v5566
  %5569 = vrot.lane.b32.xlu0 %v5567, 32
  %v5570 = vpop.permute.xlu0 %5569
  %v5572 = vmul.f32 %v5554, %v5570
  %v5573 = vtanh.pop %v5572
  %5575 = vrot.lane.b32.xlu0 %v5573, 80
  %v5576 = vpop.permute.xlu0 %5575
  %5578 = vst.msk [vmem:[%s24 + $0x10] sm:$0xff] %vm2203, %v5576
  %v5579 = vld [vmem:[#allocation5 + $0x18] sm:$0xff]
  %5581 = vrot.lane.b32.xlu0 %v5572, 80
  %v5582 = vpop.permute.xlu0 %5581
  %v5583 = vsel %vm2203, %v5582, 0
  %5585 = vmatprep.subr.mxu0 0.0
  %5586 = vmatpush1.msra.mxu0 %v5261
  %5587 = vmatprep.subr.mxu0 0.0
  %5588 = vmatpush1.msra.mxu0 %v5262
  %5589 = vmatprep.subr.mxu0 0.0
  %5590 = vmatpush1.msra.mxu0 0.0
  %5591 = vmatprep.subr.mxu0 0.0
  %5592 = vmatpush1.msra.mxu0 0.0
  %5593 = vmatprep.subr.mxu0 0.0
  %5594 = vmatpush1.msra.mxu0 0.0
  %5595 = vmatprep.subr.mxu0 0.0
  %5596 = vmatpush1.msra.mxu0 0.0
  %5597 = vmatprep.subr.mxu0 0.0
  %5598 = vmatpush1.msra.mxu0 0.0
  %5599 = vmatprep.subr.mxu0 0.0
  %5600 = vmatpush1.msra.mxu0 0.0
  %5601 = vmatprep.subr.mxu0 0.0
  %5602 = vmatpush1.msra.mxu0 0.0
  %5603 = vmatprep.subr.mxu0 0.0
  %5604 = vmatpush1.msra.mxu0 0.0
  %5605 = vmatprep.subr.mxu0 0.0
  %5606 = vmatpush1.msra.mxu0 0.0
  %5607 = vmatprep.subr.mxu0 0.0
  %5608 = vmatpush1.msra.mxu0 0.0
  %5609 = vmatprep.subr.mxu0 0.0
  %5610 = vmatpush1.msra.mxu0 0.0
  %5611 = vmatprep.subr.mxu0 0.0
  %5612 = vmatpush1.msra.mxu0 0.0
  %5613 = vmatprep.subr.mxu0 0.0
  %5614 = vmatpush1.msra.mxu0 0.0
  %5615 = vmatprep.subr.mxu0 0.0
  %5616 = vmatpush1.msra.mxu0 0.0
  %5617 = vmatprep.subr.mxu0 0.0
  %5618 = vmatpush1.msra.mxu0 0.0
  %5619 = vmatprep.subr.mxu0 0.0
  %5620 = vmatpush1.msra.mxu0 0.0
  %5621 = vmatprep.subr.mxu0 0.0
  %5622 = vmatpush1.msra.mxu0 0.0
  %5623 = vmatprep.subr.mxu0 0.0
  %5624 = vmatpush1.msra.mxu0 0.0
  %5625 = vmatprep.subr.mxu0 0.0
  %5626 = vmatpush1.msra.mxu0 0.0
  %5627 = vmatprep.subr.mxu0 0.0
  %5628 = vmatpush1.msra.mxu0 0.0
  %5629 = vmatprep.subr.mxu0 0.0
  %5630 = vmatpush1.msra.mxu0 0.0
  %5631 = vmatprep.subr.mxu0 0.0
  %5632 = vmatpush1.msra.mxu0 0.0
  %5633 = vmatprep.subr.mxu0 0.0
  %5634 = vmatpush1.msra.mxu0 0.0
  %5635 = vmatprep.subr.mxu0 0.0
  %5636 = vmatpush1.msra.mxu0 0.0
  %5637 = vmatprep.subr.mxu0 0.0
  %5638 = vmatpush1.msra.mxu0 0.0
  %5639 = vmatprep.subr.mxu0 0.0
  %5640 = vmatpush1.msra.mxu0 0.0
  %5641 = vmatprep.subr.mxu0 0.0
  %5642 = vmatpush1.msra.mxu0 0.0
  %5643 = vmatprep.subr.mxu0 0.0
  %5644 = vmatpush1.msra.mxu0 0.0
  %5645 = vmatprep.subr.mxu0 0.0
  %5646 = vmatpush1.msra.mxu0 0.0
  %5647 = vmatprep.subr.mxu0 0.0
  %5648 = vmatpush1.msra.mxu0 0.0
  %5649 = vmatprep.mubr.f32.mxu0 0.0
  %5650 = vmatmul.mubr.f32.gmra.mrb[0].mxu0 %v5583
  %v5651 = vpop.f32.mrb[0].mxu0
  %v5652 = vadd.f32 0.0, %v5651
  %v5653 = vpop.f32.mrb[0].mxu0
  %5654 = vdwg.mxu0
  %v5655 = vadd.f32 %v5579, %v5652
  %v5656 = vxor.u32 %v5655, 2147483648
  %v5657 = vmul.f32 %v5656, 1.442695
  %v5658 = vpow.pop %v5657
  %v5659 = vadd.f32 %v5658, 1.0
  %v5660 = vrcp.pop %v5659
  %v5661 = vmul.f32 1.0, %v5660
  %v5662 = vtanh.pop %v5655
  %v5663 = vmul.f32 %v5661, %v5566
  %5665 = vrot.lane.b32.xlu0 %v5662, 96
  %v5666 = vpop.permute.xlu0 %5665
  %v5668 = vmul.f32 %v5661, %v5666
  %5670 = vrot.lane.b32.xlu0 %v5668, 16
  %v5671 = vpop.permute.xlu0 %5670
  %v5673 = vadd.f32 %v5663, %v5671
  %v5674 = vtanh.pop %v5673
  %5676 = vrot.lane.b32.xlu0 %v5674, 32
  %v5677 = vpop.permute.xlu0 %5676
  %v5679 = vmul.f32 %v5661, %v5677
  %v5680 = vtanh.pop %v5679
  %5682 = vrot.lane.b32.xlu0 %v5680, 80
  %v5683 = vpop.permute.xlu0 %5682
  %5685 = vst.msk [vmem:[%s24 + $0x18] sm:$0xff] %vm2203, %v5683
  %v5686 = vld [vmem:[#allocation5 + $0x20] sm:$0xff]
  %5688 = vrot.lane.b32.xlu0 %v5679, 80
  %v5689 = vpop.permute.xlu0 %5688
  %v5690 = vsel %vm2203, %v5689, 0
  %5692 = vmatprep.subr.mxu0 0.0
  %5693 = vmatpush1.msra.mxu0 %v5261
  %5694 = vmatprep.subr.mxu0 0.0
  %5695 = vmatpush1.msra.mxu0 %v5262
  %5696 = vmatprep.subr.mxu0 0.0
  %5697 = vmatpush1.msra.mxu0 0.0
  %5698 = vmatprep.subr.mxu0 0.0
  %5699 = vmatpush1.msra.mxu0 0.0
  %5700 = vmatprep.subr.mxu0 0.0
  %5701 = vmatpush1.msra.mxu0 0.0
  %5702 = vmatprep.subr.mxu0 0.0
  %5703 = vmatpush1.msra.mxu0 0.0
  %5704 = vmatprep.subr.mxu0 0.0
  %5705 = vmatpush1.msra.mxu0 0.0
  %5706 = vmatprep.subr.mxu0 0.0
  %5707 = vmatpush1.msra.mxu0 0.0
  %5708 = vmatprep.subr.mxu0 0.0
  %5709 = vmatpush1.msra.mxu0 0.0
  %5710 = vmatprep.subr.mxu0 0.0
  %5711 = vmatpush1.msra.mxu0 0.0
  %5712 = vmatprep.subr.mxu0 0.0
  %5713 = vmatpush1.msra.mxu0 0.0
  %5714 = vmatprep.subr.mxu0 0.0
  %5715 = vmatpush1.msra.mxu0 0.0
  %5716 = vmatprep.subr.mxu0 0.0
  %5717 = vmatpush1.msra.mxu0 0.0
  %5718 = vmatprep.subr.mxu0 0.0
  %5719 = vmatpush1.msra.mxu0 0.0
  %5720 = vmatprep.subr.mxu0 0.0
  %5721 = vmatpush1.msra.mxu0 0.0
  %5722 = vmatprep.subr.mxu0 0.0
  %5723 = vmatpush1.msra.mxu0 0.0
  %5724 = vmatprep.subr.mxu0 0.0
  %5725 = vmatpush1.msra.mxu0 0.0
  %5726 = vmatprep.subr.mxu0 0.0
  %5727 = vmatpush1.msra.mxu0 0.0
  %5728 = vmatprep.subr.mxu0 0.0
  %5729 = vmatpush1.msra.mxu0 0.0
  %5730 = vmatprep.subr.mxu0 0.0
  %5731 = vmatpush1.msra.mxu0 0.0
  %5732 = vmatprep.subr.mxu0 0.0
  %5733 = vmatpush1.msra.mxu0 0.0
  %5734 = vmatprep.subr.mxu0 0.0
  %5735 = vmatpush1.msra.mxu0 0.0
  %5736 = vmatprep.subr.mxu0 0.0
  %5737 = vmatpush1.msra.mxu0 0.0
  %5738 = vmatprep.subr.mxu0 0.0
  %5739 = vmatpush1.msra.mxu0 0.0
  %5740 = vmatprep.subr.mxu0 0.0
  %5741 = vmatpush1.msra.mxu0 0.0
  %5742 = vmatprep.subr.mxu0 0.0
  %5743 = vmatpush1.msra.mxu0 0.0
  %5744 = vmatprep.subr.mxu0 0.0
  %5745 = vmatpush1.msra.mxu0 0.0
  %5746 = vmatprep.subr.mxu0 0.0
  %5747 = vmatpush1.msra.mxu0 0.0
  %5748 = vmatprep.subr.mxu0 0.0
  %5749 = vmatpush1.msra.mxu0 0.0
  %5750 = vmatprep.subr.mxu0 0.0
  %5751 = vmatpush1.msra.mxu0 0.0
  %5752 = vmatprep.subr.mxu0 0.0
  %5753 = vmatpush1.msra.mxu0 0.0
  %5754 = vmatprep.subr.mxu0 0.0
  %5755 = vmatpush1.msra.mxu0 0.0
  %5756 = vmatprep.mubr.f32.mxu0 0.0
  %5757 = vmatmul.mubr.f32.gmra.mrb[0].mxu0 %v5690
  %v5758 = vpop.f32.mrb[0].mxu0
  %v5759 = vadd.f32 0.0, %v5758
  %v5760 = vpop.f32.mrb[0].mxu0
  %5761 = vdwg.mxu0
  %v5762 = vadd.f32 %v5686, %v5759
  %v5763 = vxor.u32 %v5762, 2147483648
  %v5764 = vmul.f32 %v5763, 1.442695
  %v5765 = vpow.pop %v5764
  %v5766 = vadd.f32 %v5765, 1.0
  %v5767 = vrcp.pop %v5766
  %v5768 = vmul.f32 1.0, %v5767
  %v5769 = vtanh.pop %v5762
  %v5770 = vmul.f32 %v5768, %v5673
  %5772 = vrot.lane.b32.xlu0 %v5769, 96
  %v5773 = vpop.permute.xlu0 %5772
  %v5775 = vmul.f32 %v5768, %v5773
  %5777 = vrot.lane.b32.xlu0 %v5775, 16
  %v5778 = vpop.permute.xlu0 %5777
  %v5780 = vadd.f32 %v5770, %v5778
  %v5781 = vtanh.pop %v5780
  %5783 = vrot.lane.b32.xlu0 %v5781, 32
  %v5784 = vpop.permute.xlu0 %5783
  %v5786 = vmul.f32 %v5768, %v5784
  %v5787 = vtanh.pop %v5786
  %5789 = vrot.lane.b32.xlu0 %v5787, 80
  %v5790 = vpop.permute.xlu0 %5789
  %5792 = vst.msk [vmem:[%s24 + $0x20] sm:$0xff] %vm2203, %v5790
  %v5793 = vld [vmem:[#allocation5 + $0x28] sm:$0xff]
  %5795 = vrot.lane.b32.xlu0 %v5786, 80
  %v5796 = vpop.permute.xlu0 %5795
  %v5797 = vsel %vm2203, %v5796, 0
  %5799 = vmatprep.subr.mxu0 0.0
  %5800 = vmatpush1.msra.mxu0 %v5261
  %5801 = vmatprep.subr.mxu0 0.0
  %5802 = vmatpush1.msra.mxu0 %v5262
  %5803 = vmatprep.subr.mxu0 0.0
  %5804 = vmatpush1.msra.mxu0 0.0
  %5805 = vmatprep.subr.mxu0 0.0
  %5806 = vmatpush1.msra.mxu0 0.0
  %5807 = vmatprep.subr.mxu0 0.0
  %5808 = vmatpush1.msra.mxu0 0.0
  %5809 = vmatprep.subr.mxu0 0.0
  %5810 = vmatpush1.msra.mxu0 0.0
  %5811 = vmatprep.subr.mxu0 0.0
  %5812 = vmatpush1.msra.mxu0 0.0
  %5813 = vmatprep.subr.mxu0 0.0
  %5814 = vmatpush1.msra.mxu0 0.0
  %5815 = vmatprep.subr.mxu0 0.0
  %5816 = vmatpush1.msra.mxu0 0.0
  %5817 = vmatprep.subr.mxu0 0.0
  %5818 = vmatpush1.msra.mxu0 0.0
  %5819 = vmatprep.subr.mxu0 0.0
  %5820 = vmatpush1.msra.mxu0 0.0
  %5821 = vmatprep.subr.mxu0 0.0
  %5822 = vmatpush1.msra.mxu0 0.0
  %5823 = vmatprep.subr.mxu0 0.0
  %5824 = vmatpush1.msra.mxu0 0.0
  %5825 = vmatprep.subr.mxu0 0.0
  %5826 = vmatpush1.msra.mxu0 0.0
  %5827 = vmatprep.subr.mxu0 0.0
  %5828 = vmatpush1.msra.mxu0 0.0
  %5829 = vmatprep.subr.mxu0 0.0
  %5830 = vmatpush1.msra.mxu0 0.0
  %5831 = vmatprep.subr.mxu0 0.0
  %5832 = vmatpush1.msra.mxu0 0.0
  %5833 = vmatprep.subr.mxu0 0.0
  %5834 = vmatpush1.msra.mxu0 0.0
  %5835 = vmatprep.subr.mxu0 0.0
  %5836 = vmatpush1.msra.mxu0 0.0
  %5837 = vmatprep.subr.mxu0 0.0
  %5838 = vmatpush1.msra.mxu0 0.0
  %5839 = vmatprep.subr.mxu0 0.0
  %5840 = vmatpush1.msra.mxu0 0.0
  %5841 = vmatprep.subr.mxu0 0.0
  %5842 = vmatpush1.msra.mxu0 0.0
  %5843 = vmatprep.subr.mxu0 0.0
  %5844 = vmatpush1.msra.mxu0 0.0
  %5845 = vmatprep.subr.mxu0 0.0
  %5846 = vmatpush1.msra.mxu0 0.0
  %5847 = vmatprep.subr.mxu0 0.0
  %5848 = vmatpush1.msra.mxu0 0.0
  %5849 = vmatprep.subr.mxu0 0.0
  %5850 = vmatpush1.msra.mxu0 0.0
  %5851 = vmatprep.subr.mxu0 0.0
  %5852 = vmatpush1.msra.mxu0 0.0
  %5853 = vmatprep.subr.mxu0 0.0
  %5854 = vmatpush1.msra.mxu0 0.0
  %5855 = vmatprep.subr.mxu0 0.0
  %5856 = vmatpush1.msra.mxu0 0.0
  %5857 = vmatprep.subr.mxu0 0.0
  %5858 = vmatpush1.msra.mxu0 0.0
  %5859 = vmatprep.subr.mxu0 0.0
  %5860 = vmatpush1.msra.mxu0 0.0
  %5861 = vmatprep.subr.mxu0 0.0
  %5862 = vmatpush1.msra.mxu0 0.0
  %5863 = vmatprep.mubr.f32.mxu0 0.0
  %5864 = vmatmul.mubr.f32.gmra.mrb[0].mxu0 %v5797
  %v5865 = vpop.f32.mrb[0].mxu0
  %v5866 = vadd.f32 0.0, %v5865
  %v5867 = vpop.f32.mrb[0].mxu0
  %5868 = vdwg.mxu0
  %v5869 = vadd.f32 %v5793, %v5866
  %v5870 = vxor.u32 %v5869, 2147483648
  %v5871 = vmul.f32 %v5870, 1.442695
  %v5872 = vpow.pop %v5871
  %v5873 = vadd.f32 %v5872, 1.0
  %v5874 = vrcp.pop %v5873
  %v5875 = vmul.f32 1.0, %v5874
  %v5876 = vtanh.pop %v5869
  %v5877 = vmul.f32 %v5875, %v5780
  %5879 = vrot.lane.b32.xlu0 %v5876, 96
  %v5880 = vpop.permute.xlu0 %5879
  %v5882 = vmul.f32 %v5875, %v5880
  %5884 = vrot.lane.b32.xlu0 %v5882, 16
  %v5885 = vpop.permute.xlu0 %5884
  %v5887 = vadd.f32 %v5877, %v5885
  %v5888 = vtanh.pop %v5887
  %5890 = vrot.lane.b32.xlu0 %v5888, 32
  %v5891 = vpop.permute.xlu0 %5890
  %v5893 = vmul.f32 %v5875, %v5891
  %v5894 = vtanh.pop %v5893
  %5896 = vrot.lane.b32.xlu0 %v5894, 80
  %v5897 = vpop.permute.xlu0 %5896
  %5899 = vst.msk [vmem:[%s24 + $0x28] sm:$0xff] %vm2203, %v5897
  %v5900 = vld [vmem:[#allocation5 + $0x30] sm:$0xff]
  %5902 = vrot.lane.b32.xlu0 %v5893, 80
  %v5903 = vpop.permute.xlu0 %5902
  %v5904 = vsel %vm2203, %v5903, 0
  %5906 = vmatprep.subr.mxu0 0.0
  %5907 = vmatpush1.msra.mxu0 %v5261
  %5908 = vmatprep.subr.mxu0 0.0
  %5909 = vmatpush1.msra.mxu0 %v5262
  %5910 = vmatprep.subr.mxu0 0.0
  %5911 = vmatpush1.msra.mxu0 0.0
  %5912 = vmatprep.subr.mxu0 0.0
  %5913 = vmatpush1.msra.mxu0 0.0
  %5914 = vmatprep.subr.mxu0 0.0
  %5915 = vmatpush1.msra.mxu0 0.0
  %5916 = vmatprep.subr.mxu0 0.0
  %5917 = vmatpush1.msra.mxu0 0.0
  %5918 = vmatprep.subr.mxu0 0.0
  %5919 = vmatpush1.msra.mxu0 0.0
  %5920 = vmatprep.subr.mxu0 0.0
  %5921 = vmatpush1.msra.mxu0 0.0
  %5922 = vmatprep.subr.mxu0 0.0
  %5923 = vmatpush1.msra.mxu0 0.0
  %5924 = vmatprep.subr.mxu0 0.0
  %5925 = vmatpush1.msra.mxu0 0.0
  %5926 = vmatprep.subr.mxu0 0.0
  %5927 = vmatpush1.msra.mxu0 0.0
  %5928 = vmatprep.subr.mxu0 0.0
  %5929 = vmatpush1.msra.mxu0 0.0
  %5930 = vmatprep.subr.mxu0 0.0
  %5931 = vmatpush1.msra.mxu0 0.0
  %5932 = vmatprep.subr.mxu0 0.0
  %5933 = vmatpush1.msra.mxu0 0.0
  %5934 = vmatprep.subr.mxu0 0.0
  %5935 = vmatpush1.msra.mxu0 0.0
  %5936 = vmatprep.subr.mxu0 0.0
  %5937 = vmatpush1.msra.mxu0 0.0
  %5938 = vmatprep.subr.mxu0 0.0
  %5939 = vmatpush1.msra.mxu0 0.0
  %5940 = vmatprep.subr.mxu0 0.0
  %5941 = vmatpush1.msra.mxu0 0.0
  %5942 = vmatprep.subr.mxu0 0.0
  %5943 = vmatpush1.msra.mxu0 0.0
  %5944 = vmatprep.subr.mxu0 0.0
  %5945 = vmatpush1.msra.mxu0 0.0
  %5946 = vmatprep.subr.mxu0 0.0
  %5947 = vmatpush1.msra.mxu0 0.0
  %5948 = vmatprep.subr.mxu0 0.0
  %5949 = vmatpush1.msra.mxu0 0.0
  %5950 = vmatprep.subr.mxu0 0.0
  %5951 = vmatpush1.msra.mxu0 0.0
  %5952 = vmatprep.subr.mxu0 0.0
  %5953 = vmatpush1.msra.mxu0 0.0
  %5954 = vmatprep.subr.mxu0 0.0
  %5955 = vmatpush1.msra.mxu0 0.0
  %5956 = vmatprep.subr.mxu0 0.0
  %5957 = vmatpush1.msra.mxu0 0.0
  %5958 = vmatprep.subr.mxu0 0.0
  %5959 = vmatpush1.msra.mxu0 0.0
  %5960 = vmatprep.subr.mxu0 0.0
  %5961 = vmatpush1.msra.mxu0 0.0
  %5962 = vmatprep.subr.mxu0 0.0
  %5963 = vmatpush1.msra.mxu0 0.0
  %5964 = vmatprep.subr.mxu0 0.0
  %5965 = vmatpush1.msra.mxu0 0.0
  %5966 = vmatprep.subr.mxu0 0.0
  %5967 = vmatpush1.msra.mxu0 0.0
  %5968 = vmatprep.subr.mxu0 0.0
  %5969 = vmatpush1.msra.mxu0 0.0
  %5970 = vmatprep.mubr.f32.mxu0 0.0
  %5971 = vmatmul.mubr.f32.gmra.mrb[0].mxu0 %v5904
  %v5972 = vpop.f32.mrb[0].mxu0
  %v5973 = vadd.f32 0.0, %v5972
  %v5974 = vpop.f32.mrb[0].mxu0
  %5975 = vdwg.mxu0
  %v5976 = vadd.f32 %v5900, %v5973
  %v5977 = vxor.u32 %v5976, 2147483648
  %v5978 = vmul.f32 %v5977, 1.442695
  %v5979 = vpow.pop %v5978
  %v5980 = vadd.f32 %v5979, 1.0
  %v5981 = vrcp.pop %v5980
  %v5982 = vmul.f32 1.0, %v5981
  %v5983 = vtanh.pop %v5976
  %v5984 = vmul.f32 %v5982, %v5887
  %5986 = vrot.lane.b32.xlu0 %v5983, 96
  %v5987 = vpop.permute.xlu0 %5986
  %v5989 = vmul.f32 %v5982, %v5987
  %5991 = vrot.lane.b32.xlu0 %v5989, 16
  %v5992 = vpop.permute.xlu0 %5991
  %v5994 = vadd.f32 %v5984, %v5992
  %v5995 = vtanh.pop %v5994
  %5997 = vrot.lane.b32.xlu0 %v5995, 32
  %v5998 = vpop.permute.xlu0 %5997
  %v6000 = vmul.f32 %v5982, %v5998
  %v6001 = vtanh.pop %v6000
  %6003 = vrot.lane.b32.xlu0 %v6001, 80
  %v6004 = vpop.permute.xlu0 %6003
  %6006 = vst.msk [vmem:[%s24 + $0x30] sm:$0xff] %vm2203, %v6004
  %v6007 = vld [vmem:[#allocation5 + $0x38] sm:$0xff]
  %6009 = vrot.lane.b32.xlu0 %v6000, 80
  %v6010 = vpop.permute.xlu0 %6009
  %v6011 = vsel %vm2203, %v6010, 0
  %6013 = vmatprep.subr.mxu0 0.0
  %6014 = vmatpush1.msra.mxu0 %v5261
  %6015 = vmatprep.subr.mxu0 0.0
  %6016 = vmatpush1.msra.mxu0 %v5262
  %6017 = vmatprep.subr.mxu0 0.0
  %6018 = vmatpush1.msra.mxu0 0.0
  %6019 = vmatprep.subr.mxu0 0.0
  %6020 = vmatpush1.msra.mxu0 0.0
  %6021 = vmatprep.subr.mxu0 0.0
  %6022 = vmatpush1.msra.mxu0 0.0
  %6023 = vmatprep.subr.mxu0 0.0
  %6024 = vmatpush1.msra.mxu0 0.0
  %6025 = vmatprep.subr.mxu0 0.0
  %6026 = vmatpush1.msra.mxu0 0.0
  %6027 = vmatprep.subr.mxu0 0.0
  %6028 = vmatpush1.msra.mxu0 0.0
  %6029 = vmatprep.subr.mxu0 0.0
  %6030 = vmatpush1.msra.mxu0 0.0
  %6031 = vmatprep.subr.mxu0 0.0
  %6032 = vmatpush1.msra.mxu0 0.0
  %6033 = vmatprep.subr.mxu0 0.0
  %6034 = vmatpush1.msra.mxu0 0.0
  %6035 = vmatprep.subr.mxu0 0.0
  %6036 = vmatpush1.msra.mxu0 0.0
  %6037 = vmatprep.subr.mxu0 0.0
  %6038 = vmatpush1.msra.mxu0 0.0
  %6039 = vmatprep.subr.mxu0 0.0
  %6040 = vmatpush1.msra.mxu0 0.0
  %6041 = vmatprep.subr.mxu0 0.0
  %6042 = vmatpush1.msra.mxu0 0.0
  %6043 = vmatprep.subr.mxu0 0.0
  %6044 = vmatpush1.msra.mxu0 0.0
  %6045 = vmatprep.subr.mxu0 0.0
  %6046 = vmatpush1.msra.mxu0 0.0
  %6047 = vmatprep.subr.mxu0 0.0
  %6048 = vmatpush1.msra.mxu0 0.0
  %6049 = vmatprep.subr.mxu0 0.0
  %6050 = vmatpush1.msra.mxu0 0.0
  %6051 = vmatprep.subr.mxu0 0.0
  %6052 = vmatpush1.msra.mxu0 0.0
  %6053 = vmatprep.subr.mxu0 0.0
  %6054 = vmatpush1.msra.mxu0 0.0
  %6055 = vmatprep.subr.mxu0 0.0
  %6056 = vmatpush1.msra.mxu0 0.0
  %6057 = vmatprep.subr.mxu0 0.0
  %6058 = vmatpush1.msra.mxu0 0.0
  %6059 = vmatprep.subr.mxu0 0.0
  %6060 = vmatpush1.msra.mxu0 0.0
  %6061 = vmatprep.subr.mxu0 0.0
  %6062 = vmatpush1.msra.mxu0 0.0
  %6063 = vmatprep.subr.mxu0 0.0
  %6064 = vmatpush1.msra.mxu0 0.0
  %6065 = vmatprep.subr.mxu0 0.0
  %6066 = vmatpush1.msra.mxu0 0.0
  %6067 = vmatprep.subr.mxu0 0.0
  %6068 = vmatpush1.msra.mxu0 0.0
  %6069 = vmatprep.subr.mxu0 0.0
  %6070 = vmatpush1.msra.mxu0 0.0
  %6071 = vmatprep.subr.mxu0 0.0
  %6072 = vmatpush1.msra.mxu0 0.0
  %6073 = vmatprep.subr.mxu0 0.0
  %6074 = vmatpush1.msra.mxu0 0.0
  %6075 = vmatprep.subr.mxu0 0.0
  %6076 = vmatpush1.msra.mxu0 0.0
  %6077 = vmatprep.mubr.f32.mxu0 0.0
  %6078 = vmatmul.mubr.f32.gmra.mrb[0].mxu0 %v6011
  %v6079 = vpop.f32.mrb[0].mxu0
  %v6080 = vadd.f32 0.0, %v6079
  %v6081 = vpop.f32.mrb[0].mxu0
  %6082 = vdwg.mxu0
  %v6083 = vadd.f32 %v6007, %v6080
  %v6084 = vxor.u32 %v6083, 2147483648
  %v6085 = vmul.f32 %v6084, 1.442695
  %v6086 = vpow.pop %v6085
  %v6087 = vadd.f32 %v6086, 1.0
  %v6088 = vrcp.pop %v6087
  %v6089 = vmul.f32 1.0, %v6088
  %v6090 = vtanh.pop %v6083
  %v6091 = vmul.f32 %v6089, %v5994
  %6093 = vrot.lane.b32.xlu0 %v6090, 96
  %v6094 = vpop.permute.xlu0 %6093
  %v6096 = vmul.f32 %v6089, %v6094
  %6098 = vrot.lane.b32.xlu0 %v6096, 16
  %v6099 = vpop.permute.xlu0 %6098
  %v6101 = vadd.f32 %v6091, %v6099
  %v6102 = vtanh.pop %v6101
  %6104 = vrot.lane.b32.xlu0 %v6102, 32
  %v6105 = vpop.permute.xlu0 %6104
  %v6107 = vmul.f32 %v6089, %v6105
  %v6108 = vtanh.pop %v6107
  %6110 = vrot.lane.b32.xlu0 %v6108, 80
  %v6111 = vpop.permute.xlu0 %6110
  %6113 = vst.msk [vmem:[%s24 + $0x38] sm:$0xff] %vm2203, %v6111
  // Predicated region
  $region98: #{lstmvae_forward.1} parent=0 // pred_check
    _
  $region99: #{lstmvae_forward.1} parent=0 // pred_check_branch
    %6115 = sbr.rel (0) target = $region101
  $region100: #{lstmvae_forward.1} parent=0 // pred_region
    _
  $region101: #{lstmvae_forward.1} parent=0 // pred_fallthru
    _
  // Predicated region
  $region102: #{lstmvae_forward.1} parent=0 // pred_check
    _
  $region103: #{lstmvae_forward.1} parent=0 // pred_check_branch
    %6117 = sbr.rel (0) target = $region105
  $region104: #{lstmvae_forward.1} parent=0 // pred_region
    _
  $region105: #{lstmvae_forward.1} parent=0 // pred_fallthru
    _
  // Predicated region
  $region106: #{lstmvae_forward.1} parent=0 // pred_check
    _
  $region107: #{lstmvae_forward.1} parent=0 // pred_check_branch
    %6119 = sbr.rel (0) target = $region109
  $region108: #{lstmvae_forward.1} parent=0 // pred_region
    _
  $region109: #{lstmvae_forward.1} parent=0 // pred_fallthru
    _
  // Predicated region
  $region110: #{lstmvae_forward.1} parent=0 // pred_check
    _
  $region111: #{lstmvae_forward.1} parent=0 // pred_check_branch
    %6121 = sbr.rel (0) target = $region113
  $region112: #{lstmvae_forward.1} parent=0 // pred_region
    _
  $region113: #{lstmvae_forward.1} parent=0 // pred_fallthru
    _
  // Predicated region
  $region114: #{lstmvae_forward.1} parent=0 // pred_check
    _
  $region115: #{lstmvae_forward.1} parent=0 // pred_check_branch
    %6123 = sbr.rel (0) target = $region117
  $region116: #{lstmvae_forward.1} parent=0 // pred_region
    _
  $region117: #{lstmvae_forward.1} parent=0 // pred_fallthru
    _
  // Predicated region
  $region118: #{lstmvae_forward.1} parent=0 // pred_check
    _
  $region119: #{lstmvae_forward.1} parent=0 // pred_check_branch
    %6125 = sbr.rel (0) target = $region121
  $region120: #{lstmvae_forward.1} parent=0 // pred_region
    _
  $region121: #{lstmvae_forward.1} parent=0 // pred_fallthru
    _

</llo_original>
